<compile_context>
chip_gen: v7x
topology: tpu7x:2x2x1
jax: 0.10.0
libtpu: 0.0.40
codegen_flags: <defaults>
</compile_context>

<pallas_src>
import numpy as np
import jax
import jax.numpy as jnp
from jax import lax
from jax.experimental import pallas as pl
from jax.experimental.pallas import tpu as pltpu

# Problem sizes.  The module only accepts in_channels in {512, 2048}; use the
# small configuration (512 -> out_channels 128) with a small spatial extent.
N, H, W = 2, 16, 16
CIN = 512
COUT = 128            # fixed by the module for in_channels == 512
NCLASS = 8
RATES = (12, 24, 36)  # atrous rates fixed by _DeepLabHead
BN_EPS = 1e-5


# --------------------------- trace-time tap analysis ---------------------------

def _offcenter_taps(h, w, rate):
    """Off-center 3x3 taps that can ever contribute at spatial size (h, w)."""
    taps = []
    for ky in range(3):
        for kx in range(3):
            if ky == 1 and kx == 1:
                continue
            oy, ox = (ky - 1) * rate, (kx - 1) * rate
            oy0, oy1 = max(0, -oy), min(h, h - oy)
            ox0, ox1 = max(0, -ox), min(w, w - ox)
            if oy1 > oy0 and ox1 > ox0:
                taps.append((ky, kx, oy, ox, oy0, oy1, ox0, ox1))
    return tuple(taps)


# --------------------------------- kernel --------------------------------------

def _make_head_kernel(h, w, cin, cout, off_taps, ncls_pad):
    m = h * w
    n_off = tuple(len(t) for t in off_taps)
    # Column offset of each branch's off-center taps inside the fused weight.
    off_col, c = [], 4 * cout
    for i in range(3):
        off_col.append(c)
        c += n_off[i] * cout

    def kernel(x_ref, pool_ref, wfused_ref, wp_ref, wprp_ref, wprm_ref,
               wb_ref, wc_ref, sh_ref, logits_ref, feat_ref, acc_ref, slab_ref):
        bf16 = jnp.bfloat16

        def relu_shift(y, row):
            # BN scale is folded into the conv weights (wrapper, f32), so
            # inference BatchNorm + ReLU reduces to max(y + shift, 0).
            return jnp.maximum(y + sh_ref[row:row + 1, :], 0.0)

        # --- ONE wide MXU matmul: b0 1x1, the center taps of b1/b2/b3 and every
        #     contributing off-center dilated tap all share the same LHS.
        x2b = x_ref[...].reshape(m, cin)                       # (m, cin) bf16
        base = jnp.dot(x2b, wfused_ref[...],
                       preferred_element_type=jnp.float32)     # (m, Ctot) f32

        feats = [relu_shift(base[:, :cout], 0).astype(bf16)]   # b0
        for i in range(3):                                     # b1..b3 (dilated 3x3)
            center = base[:, (i + 1) * cout:(i + 2) * cout]
            if n_off[i] == 0:
                # at this (H, W, rate) the dilated conv degenerates to its center tap
                feats.append(relu_shift(center, i + 1).astype(bf16))
                continue
            acc_ref[...] = center.reshape(h, w, cout)
            for t_idx, (ky, kx, oy, ox, oy0, oy1, ox0, ox1) in enumerate(off_taps[i]):
                c0 = off_col[i] + t_idx * cout
                ft = base[:, c0:c0 + cout].reshape(h, w, cout)
                # shifted window of the full-image tap product
                acc_ref[oy0:oy1, ox0:ox1, :] += ft[oy0 + oy:oy1 + oy,
                                                   ox0 + ox:ox1 + ox, :]
            feats.append(relu_shift(acc_ref[...].reshape(m, cout),
                                    i + 1).astype(bf16))

        # --- b4 (global-pool branch): spatially constant, so its projection
        #     through the 1x1 project conv is a per-channel constant bias.
        #     (bilinear upsample of a 1x1 map with align_corners=True == broadcast)
        pooled = pool_ref[...].reshape(1, cin)                 # f32 mean from XLA
        pv = jnp.maximum(jnp.dot(pooled.astype(bf16), wp_ref[...],
                                 preferred_element_type=jnp.float32)
                         + sh_ref[4:5, :], 0.0)                # (1, cout)
        pool_bias = jnp.dot(pv.astype(bf16), wprp_ref[...],
                            preferred_element_type=jnp.float32)  # (1, cout)

        # --- project: concat(b0..b3) + 1x1 conv + pooled bias + BN shift + ReLU.
        # TODO(synk): training-mode Dropout(0.5)/Dropout(0.1) not implemented; eval identity.
        cat = jnp.concatenate(feats, axis=-1)                  # (m, 4*cout) bf16
        proj = jnp.maximum(jnp.dot(cat, wprm_ref[...],
                                   preferred_element_type=jnp.float32)
                           + pool_bias + sh_ref[5:6, :], 0.0)  # (m, cout) f32

        # --- head block[0:4]: 3x3 conv (pad=1) via im2col + BN + ReLU.
        #     Only the untouched 1-px border strips are zeroed; every slab element
        #     is written each grid step (no cross-step staleness).
        projb = proj.astype(bf16).reshape(h, w, cout)
        for ky in range(3):
            for kx in range(3):
                oy, ox = ky - 1, kx - 1
                oy0, oy1 = max(0, -oy), min(h, h - oy)
                ox0, ox1 = max(0, -ox), min(w, w - ox)
                t = ky * 3 + kx
                c0, c1 = t * cout, (t + 1) * cout
                if oy0 > 0:
                    slab_ref[0:oy0, :, c0:c1] = jnp.zeros((oy0, w, cout), bf16)
                if oy1 < h:
                    slab_ref[oy1:h, :, c0:c1] = jnp.zeros((h - oy1, w, cout), bf16)
                if ox0 > 0:
                    slab_ref[:, 0:ox0, c0:c1] = jnp.zeros((h, ox0, cout), bf16)
                if ox1 < w:
                    slab_ref[:, ox1:w, c0:c1] = jnp.zeros((h, w - ox1, cout), bf16)
                slab_ref[oy0:oy1, ox0:ox1, c0:c1] = projb[oy0 + oy:oy1 + oy,
                                                          ox0 + ox:ox1 + ox, :]
        featb = jnp.maximum(jnp.dot(slab_ref[...].reshape(m, 9 * cout), wb_ref[...],
                                    preferred_element_type=jnp.float32)
                            + sh_ref[6:7, :], 0.0)             # (m, cout) f32
        feat_ref[...] = featb.reshape(1, m, cout)

        # --- head block[4]: 1x1 conv with bias -> lane-padded class logits.
        logits = (jnp.dot(featb.astype(bf16), wc_ref[...],
                          preferred_element_type=jnp.float32) + sh_ref[7:8, :])
        logits_ref[...] = logits.reshape(1, m, ncls_pad)

    return kernel


# -------------------------------- wrapper ---------------------------------------

def deeplab_head_forward(x_nchw, p):
    """x_nchw: (N, CIN, H, W) float32 -> (logits NCHW, feat_after_aspp NCHW)."""
    n, cin, h, w = x_nchw.shape
    m = h * w
    cout = COUT
    ncls_pad = max(128, -(-NCLASS // 128) * 128)
    assert cout == 128 and ncls_pad == 128  # in_channels==512 configuration
    bf16, f32 = jnp.bfloat16, jnp.float32

    x_nhwc = jnp.transpose(x_nchw, (0, 2, 3, 1)).astype(f32)
    x_bf = x_nhwc.astype(bf16)                          # halves per-step input DMA
    pooled = jnp.mean(x_nhwc, axis=(1, 2)).reshape(n, 1, cin)   # f32 global pool

    # Which off-center taps can contribute, derived from (H, W, rate) at trace time.
    off_taps = tuple(_offcenter_taps(h, w, r) for r in RATES)

    # Fold BN scales into the conv weights (f32 math, then cast bf16 once).
    cols = [p['w0'] * p['s0'], p['w1'][1, 1] * p['s1'],
            p['w2'][1, 1] * p['s2'], p['w3'][1, 1] * p['s3']]
    for key, skey, taps in zip(('w1', 'w2', 'w3'), ('s1', 's2', 's3'), off_taps):
        for (ky, kx, *_r) in taps:
            cols.append(p[key][ky, kx] * p[skey])
    w_fused = jnp.concatenate(cols, axis=1).astype(bf16)       # (cin, 4c + n_off*c)

    wp_f = (p['wp'] * p['sp']).astype(bf16)                    # pool 1x1
    wpr_f = p['wpr'] * p['spr']                                # project 1x1 (5c, c)
    wpr_main = wpr_f[:4 * cout].astype(bf16)
    wpr_pool = wpr_f[4 * cout:].astype(bf16)
    wb_f = (p['wb'].reshape(9 * cout, cout) * p['sb']).astype(bf16)   # head 3x3
    wc_pad = jnp.zeros((cout, ncls_pad), f32).at[:, :NCLASS].set(
        p['wc']).astype(bf16)                                  # classifier, padded

    # BN shifts + classifier bias packed into ONE lane-dense (8, 128) f32 operand.
    bc_row = jnp.zeros((1, ncls_pad), f32).at[:, :NCLASS].set(p['bc'])
    shifts = jnp.concatenate([p['t0'], p['t1'], p['t2'], p['t3'],
                              p['tp'], p['tpr'], p['tb'], bc_row], axis=0)

    res2 = lambda b: (0, 0)   # weights resident across grid steps
    in_specs = [
        pl.BlockSpec((1, h, w, cin), lambda b: (b, 0, 0, 0)),
        pl.BlockSpec((1, 1, cin), lambda b: (b, 0, 0)),
        pl.BlockSpec(w_fused.shape, res2),
        pl.BlockSpec(wp_f.shape, res2),
        pl.BlockSpec(wpr_pool.shape, res2),
        pl.BlockSpec(wpr_main.shape, res2),
        pl.BlockSpec(wb_f.shape, res2),
        pl.BlockSpec(wc_pad.shape, res2),
        pl.BlockSpec(shifts.shape, res2),
    ]

    kernel = _make_head_kernel(h, w, cin, cout, off_taps, ncls_pad)
    logits3, feat3 = pl.pallas_call(
        kernel,
        out_shape=(jax.ShapeDtypeStruct((n, m, ncls_pad), jnp.float32),
                   jax.ShapeDtypeStruct((n, m, cout), jnp.float32)),
        grid_spec=pltpu.PrefetchScalarGridSpec(
            num_scalar_prefetch=0,
            grid=(n,),
            in_specs=in_specs,
            out_specs=(pl.BlockSpec((1, m, ncls_pad), lambda b: (b, 0, 0)),
                       pl.BlockSpec((1, m, cout), lambda b: (b, 0, 0))),
            scratch_shapes=[pltpu.VMEM((h, w, cout), jnp.float32),
                            pltpu.VMEM((h, w, 9 * cout), jnp.bfloat16)]),
        compiler_params=pltpu.CompilerParams(
            dimension_semantics=("parallel",),
            vmem_limit_bytes=24 * 1024 * 1024),
    )(x_bf, pooled, w_fused, wp_f, wpr_pool, wpr_main, wb_f, wc_pad, shifts)

    logits = jnp.transpose(logits3.reshape(n, h, w, ncls_pad)[..., :NCLASS],
                           (0, 3, 1, 2))
    feat = jnp.transpose(feat3.reshape(n, h, w, cout), (0, 3, 1, 2))
    return logits, feat


# ---------------------- parameter init (deterministic, synthetic) --------------------

def _bn_fold(key, c):
    k1, k2, k3, k4 = jax.random.split(key, 4)
    gamma = jax.random.uniform(k1, (c,), jnp.float32, 0.5, 1.5)
    beta = 0.1 * jax.random.normal(k2, (c,), jnp.float32)
    mean = 0.1 * jax.random.normal(k3, (c,), jnp.float32)
    var = jax.random.uniform(k4, (c,), jnp.float32, 0.5, 1.5)
    scale = gamma / jnp.sqrt(var + BN_EPS)
    shift = beta - mean * scale
    return scale.reshape(1, c), shift.reshape(1, c)


def init_params(key):
    ks = jax.random.split(key, 16)
    nrm = lambda k, shape, fan: (jax.random.normal(k, shape, jnp.float32)
                                 / np.float32(np.sqrt(fan)))
    p = {}
    p['w0'] = nrm(ks[0], (CIN, COUT), CIN)                 # b0 1x1
    p['s0'], p['t0'] = _bn_fold(ks[1], COUT)
    p['w1'] = nrm(ks[2], (3, 3, CIN, COUT), 9 * CIN)       # b1 3x3 d=12 (HWIO)
    p['s1'], p['t1'] = _bn_fold(ks[3], COUT)
    p['w2'] = nrm(ks[4], (3, 3, CIN, COUT), 9 * CIN)       # b2 3x3 d=24
    p['s2'], p['t2'] = _bn_fold(ks[5], COUT)
    p['w3'] = nrm(ks[6], (3, 3, CIN, COUT), 9 * CIN)       # b3 3x3 d=36
    p['s3'], p['t3'] = _bn_fold(ks[7], COUT)
    p['wp'] = nrm(ks[8], (CIN, COUT), CIN)                 # pooling 1x1
    p['sp'], p['tp'] = _bn_fold(ks[9], COUT)
    p['wpr'] = nrm(ks[10], (5 * COUT, COUT), 5 * COUT)     # project 1x1
    p['spr'], p['tpr'] = _bn_fold(ks[11], COUT)
    p['wb'] = nrm(ks[12], (3, 3, COUT, COUT), 9 * COUT)    # head 3x3
    p['sb'], p['tb'] = _bn_fold(ks[13], COUT)
    p['wc'] = nrm(ks[14], (COUT, NCLASS), COUT)            # classifier 1x1
    p['bc'] = 0.1 * jax.random.normal(ks[15], (1, NCLASS), jnp.float32)
    return p


# ---------------------- pure-JAX reference (for correctness check) -------------------

def ref_forward(x_nchw, p):
    x = jnp.transpose(x_nchw, (0, 2, 3, 1)).astype(jnp.float32)
    dn = ('NHWC', 'HWIO', 'NHWC')
    c1 = lambda xx, ww: lax.conv_general_dilated(xx, ww[None, None, :, :], (1, 1),
                                                 'VALID', dimension_numbers=dn)
    c3 = lambda xx, ww, r: lax.conv_general_dilated(xx, ww, (1, 1), [(r, r), (r, r)],
                                                    rhs_dilation=(r, r),
                                                    dimension_numbers=dn)
    bnrelu = lambda y, s, t: jnp.maximum(y * s.reshape(1, 1, 1, -1)
                                         + t.reshape(1, 1, 1, -1), 0.0)
    f1 = bnrelu(c1(x, p['w0']), p['s0'], p['t0'])
    f2 = bnrelu(c3(x, p['w1'], RATES[0]), p['s1'], p['t1'])
    f3 = bnrelu(c3(x, p['w2'], RATES[1]), p['s2'], p['t2'])
    f4 = bnrelu(c3(x, p['w3'], RATES[2]), p['s3'], p['t3'])
    pooled = jnp.mean(x, axis=(1, 2), keepdims=True)
    f5 = jnp.broadcast_to(bnrelu(c1(pooled, p['wp']), p['sp'], p['tp']), f1.shape)
    cat = jnp.concatenate([f1, f2, f3, f4, f5], axis=-1)
    proj = bnrelu(c1(cat, p['wpr']), p['spr'], p['tpr'])
    featb = bnrelu(c3(proj, p['wb'], 1), p['sb'], p['tb'])
    logits = c1(featb, p['wc']) + p['bc'].reshape(1, 1, 1, -1)
    return (jnp.transpose(logits, (0, 3, 1, 2)), jnp.transpose(featb, (0, 3, 1, 2)))


if __name__ == "__main__":
    key = jax.random.PRNGKey(0)
    kx, kp = jax.random.split(key)
    params = init_params(kp)
    x = jax.random.normal(kx, (N, CIN, H, W), jnp.float32)   # NCHW, like PyTorch

    logits, feat = jax.jit(deeplab_head_forward)(x, params)
    jax.block_until_ready((logits, feat))

    ref_logits, ref_feat = ref_forward(x, params)
    assert logits.shape == (N, NCLASS, H, W)
    assert feat.shape == (N, COUT, H, W)
    np.testing.assert_allclose(np.asarray(feat), np.asarray(ref_feat),
                               rtol=2e-2, atol=2e-2)
    np.testing.assert_allclose(np.asarray(logits), np.asarray(ref_logits),
                               rtol=2e-2, atol=2e-2)
    print("KERNEL_OK")
</pallas_src>

<mosaic_0001>
module attributes {stable_mosaic.version = 11 : i64} {
  func.func @kernel(%arg0: i32, %arg1: memref<1x16x16x512xbf16, #tpu.memory_space<vmem>>, %arg2: memref<1x1x512xf32, #tpu.memory_space<vmem>>, %arg3: memref<512x1536xbf16, #tpu.memory_space<vmem>>, %arg4: memref<512x128xbf16, #tpu.memory_space<vmem>>, %arg5: memref<128x128xbf16, #tpu.memory_space<vmem>>, %arg6: memref<512x128xbf16, #tpu.memory_space<vmem>>, %arg7: memref<1152x128xbf16, #tpu.memory_space<vmem>>, %arg8: memref<128x128xbf16, #tpu.memory_space<vmem>>, %arg9: memref<8x128xf32, #tpu.memory_space<vmem>>, %arg10: memref<1x256x128xf32, #tpu.memory_space<vmem>>, %arg11: memref<1x256x128xf32, #tpu.memory_space<vmem>>, %arg12: memref<16x16x128xf32, #tpu.memory_space<vmem>>, %arg13: memref<16x16x1152xbf16, #tpu.memory_space<vmem>>) attributes {dimension_semantics = [#tpu.dimension_semantics<parallel>], iteration_bounds = array<i64: 2>, scalar_prefetch = 0 : i64, scratch_operands = 2 : i64, tpu.core_type = #tpu.core_type<tc>, window_params = [{transform_indices = @transform_0, window_bounds = array<i64: 1, 16, 16, 512>}, {transform_indices = @transform_1, window_bounds = array<i64: 1, 1, 512>}, {pipeline_mode = #tpu.pipeline_mode<synchronous>, transform_indices = @transform_2, window_bounds = array<i64: 512, 1536>}, {pipeline_mode = #tpu.pipeline_mode<synchronous>, transform_indices = @transform_3, window_bounds = array<i64: 512, 128>}, {pipeline_mode = #tpu.pipeline_mode<synchronous>, transform_indices = @transform_4, window_bounds = array<i64: 128, 128>}, {pipeline_mode = #tpu.pipeline_mode<synchronous>, transform_indices = @transform_5, window_bounds = array<i64: 512, 128>}, {pipeline_mode = #tpu.pipeline_mode<synchronous>, transform_indices = @transform_6, window_bounds = array<i64: 1152, 128>}, {pipeline_mode = #tpu.pipeline_mode<synchronous>, transform_indices = @transform_7, window_bounds = array<i64: 128, 128>}, {pipeline_mode = #tpu.pipeline_mode<synchronous>, transform_indices = @transform_8, window_bounds = array<i64: 8, 128>}, {transform_indices = @transform_9, window_bounds = array<i64: 1, 256, 128>}, {transform_indices = @transform_10, window_bounds = array<i64: 1, 256, 128>}]} {
    %c0 = arith.constant 0 : index
    %c0_0 = arith.constant 0 : index
    %c0_1 = arith.constant 0 : index
    %c0_2 = arith.constant 0 : index
    %0 = vector.load %arg1[%c0, %c0_0, %c0_1, %c0_2] : memref<1x16x16x512xbf16, #tpu.memory_space<vmem>>, vector<1x16x16x512xbf16>
    %1 = vector.shape_cast %0 : vector<1x16x16x512xbf16> to vector<256x512xbf16>
    %c0_3 = arith.constant 0 : index
    %c0_4 = arith.constant 0 : index
    %2 = vector.load %arg3[%c0_3, %c0_4] : memref<512x1536xbf16, #tpu.memory_space<vmem>>, vector<512x1536xbf16>
    %cst = arith.constant dense<0.000000e+00> : vector<256x1536xf32>
    %3 = tpu.matmul %1, %2, %cst {dimension_numbers = #tpu.dot_dimension_numbers<[1], [0], [0], [1], [0, 0, 1, 1], [], []>} : vector<256x512xbf16>, vector<512x1536xbf16>, vector<256x1536xf32> -> vector<256x1536xf32>
    %4 = vector.extract_strided_slice %3 {offsets = [0, 0], sizes = [256, 128], strides = [1, 1]} : vector<256x1536xf32> to vector<256x128xf32>
    %c0_5 = arith.constant 0 : index
    %c0_6 = arith.constant 0 : index
    %5 = vector.load %arg9[%c0_5, %c0_6] : memref<8x128xf32, #tpu.memory_space<vmem>>, vector<1x128xf32>
    %6 = vector.broadcast %5 : vector<1x128xf32> to vector<256x128xf32>
    %7 = arith.addf %4, %6 : vector<256x128xf32>
    %cst_7 = arith.constant 0.000000e+00 : f32
    %8 = vector.broadcast %cst_7 : f32 to vector<256x128xf32>
    %9 = arith.maximumf %7, %8 : vector<256x128xf32>
    %10 = arith.truncf %9 : vector<256x128xf32> to vector<256x128xbf16>
    %11 = vector.extract_strided_slice %3 {offsets = [0, 128], sizes = [256, 128], strides = [1, 1]} : vector<256x1536xf32> to vector<256x128xf32>
    %12 = vector.shape_cast %11 : vector<256x128xf32> to vector<16x16x128xf32>
    %c0_8 = arith.constant 0 : index
    %c0_9 = arith.constant 0 : index
    %c0_10 = arith.constant 0 : index
    %13 = vector.load %arg12[%c0_8, %c0_9, %c0_10] : memref<16x16x128xf32, #tpu.memory_space<vmem>>, vector<16x16x128xf32>
    tpu.vector_store %arg12[%c0_8, %c0_9, %c0_10], %12 {strides = array<i32>} : memref<16x16x128xf32, #tpu.memory_space<vmem>>, vector<16x16x128xf32>,
    %14 = vector.extract_strided_slice %3 {offsets = [0, 512], sizes = [256, 128], strides = [1, 1]} : vector<256x1536xf32> to vector<256x128xf32>
    %15 = vector.shape_cast %14 : vector<256x128xf32> to vector<16x16x128xf32>
    %c12 = arith.constant 12 : index
    %c12_11 = arith.constant 12 : index
    %c0_12 = arith.constant 0 : index
    %16 = vector.load %arg12[%c12, %c12_11, %c0_12] : memref<16x16x128xf32, #tpu.memory_space<vmem>>, vector<4x4x128xf32>
    %17 = vector.extract_strided_slice %15 {offsets = [0, 0, 0], sizes = [4, 4, 128], strides = [1, 1, 1]} : vector<16x16x128xf32> to vector<4x4x128xf32>
    %18 = arith.addf %16, %17 : vector<4x4x128xf32>
    %c12_13 = arith.constant 12 : index
    %c12_14 = arith.constant 12 : index
    %c0_15 = arith.constant 0 : index
    %19 = vector.load %arg12[%c12_13, %c12_14, %c0_15] : memref<16x16x128xf32, #tpu.memory_space<vmem>>, vector<4x4x128xf32>
    tpu.vector_store %arg12[%c12_13, %c12_14, %c0_15], %18 {strides = array<i32>} : memref<16x16x128xf32, #tpu.memory_space<vmem>>, vector<4x4x128xf32>,
    %20 = vector.extract_strided_slice %3 {offsets = [0, 640], sizes = [256, 128], strides = [1, 1]} : vector<256x1536xf32> to vector<256x128xf32>
    %21 = vector.shape_cast %20 : vector<256x128xf32> to vector<16x16x128xf32>
    %c12_16 = arith.constant 12 : index
    %c0_17 = arith.constant 0 : index
    %c0_18 = arith.constant 0 : index
    %22 = vector.load %arg12[%c12_16, %c0_17, %c0_18] : memref<16x16x128xf32, #tpu.memory_space<vmem>>, vector<4x16x128xf32>
    %23 = vector.extract_strided_slice %21 {offsets = [0, 0, 0], sizes = [4, 16, 128], strides = [1, 1, 1]} : vector<16x16x128xf32> to vector<4x16x128xf32>
    %24 = arith.addf %22, %23 : vector<4x16x128xf32>
    %c12_19 = arith.constant 12 : index
    %c0_20 = arith.constant 0 : index
    %c0_21 = arith.constant 0 : index
    %25 = vector.load %arg12[%c12_19, %c0_20, %c0_21] : memref<16x16x128xf32, #tpu.memory_space<vmem>>, vector<4x16x128xf32>
    tpu.vector_store %arg12[%c12_19, %c0_20, %c0_21], %24 {strides = array<i32>} : memref<16x16x128xf32, #tpu.memory_space<vmem>>, vector<4x16x128xf32>,
    %26 = vector.extract_strided_slice %3 {offsets = [0, 768], sizes = [256, 128], strides = [1, 1]} : vector<256x1536xf32> to vector<256x128xf32>
    %27 = vector.shape_cast %26 : vector<256x128xf32> to vector<16x16x128xf32>
    %c12_22 = arith.constant 12 : index
    %c0_23 = arith.constant 0 : index
    %c0_24 = arith.constant 0 : index
    %28 = vector.load %arg12[%c12_22, %c0_23, %c0_24] : memref<16x16x128xf32, #tpu.memory_space<vmem>>, vector<4x4x128xf32>
    %29 = vector.extract_strided_slice %27 {offsets = [0, 12, 0], sizes = [4, 4, 128], strides = [1, 1, 1]} : vector<16x16x128xf32> to vector<4x4x128xf32>
    %30 = arith.addf %28, %29 : vector<4x4x128xf32>
    %c12_25 = arith.constant 12 : index
    %c0_26 = arith.constant 0 : index
    %c0_27 = arith.constant 0 : index
    %31 = vector.load %arg12[%c12_25, %c0_26, %c0_27] : memref<16x16x128xf32, #tpu.memory_space<vmem>>, vector<4x4x128xf32>
    tpu.vector_store %arg12[%c12_25, %c0_26, %c0_27], %30 {strides = array<i32>} : memref<16x16x128xf32, #tpu.memory_space<vmem>>, vector<4x4x128xf32>,
    %32 = vector.extract_strided_slice %3 {offsets = [0, 896], sizes = [256, 128], strides = [1, 1]} : vector<256x1536xf32> to vector<256x128xf32>
    %33 = vector.shape_cast %32 : vector<256x128xf32> to vector<16x16x128xf32>
    %c0_28 = arith.constant 0 : index
    %c12_29 = arith.constant 12 : index
    %c0_30 = arith.constant 0 : index
    %34 = vector.load %arg12[%c0_28, %c12_29, %c0_30] : memref<16x16x128xf32, #tpu.memory_space<vmem>>, vector<16x4x128xf32>
    %35 = vector.extract_strided_slice %33 {offsets = [0, 0, 0], sizes = [16, 4, 128], strides = [1, 1, 1]} : vector<16x16x128xf32> to vector<16x4x128xf32>
    %36 = arith.addf %34, %35 : vector<16x4x128xf32>
    %c0_31 = arith.constant 0 : index
    %c12_32 = arith.constant 12 : index
    %c0_33 = arith.constant 0 : index
    %37 = vector.load %arg12[%c0_31, %c12_32, %c0_33] : memref<16x16x128xf32, #tpu.memory_space<vmem>>, vector<16x4x128xf32>
    tpu.vector_store %arg12[%c0_31, %c12_32, %c0_33], %36 {strides = array<i32>} : memref<16x16x128xf32, #tpu.memory_space<vmem>>, vector<16x4x128xf32>,
    %38 = vector.extract_strided_slice %3 {offsets = [0, 1024], sizes = [256, 128], strides = [1, 1]} : vector<256x1536xf32> to vector<256x128xf32>
    %39 = vector.shape_cast %38 : vector<256x128xf32> to vector<16x16x128xf32>
    %c0_34 = arith.constant 0 : index
    %c0_35 = arith.constant 0 : index
    %c0_36 = arith.constant 0 : index
    %40 = vector.load %arg12[%c0_34, %c0_35, %c0_36] : memref<16x16x128xf32, #tpu.memory_space<vmem>>, vector<16x4x128xf32>
    %41 = vector.extract_strided_slice %39 {offsets = [0, 12, 0], sizes = [16, 4, 128], strides = [1, 1, 1]} : vector<16x16x128xf32> to vector<16x4x128xf32>
    %42 = arith.addf %40, %41 : vector<16x4x128xf32>
    %c0_37 = arith.constant 0 : index
    %c0_38 = arith.constant 0 : index
    %c0_39 = arith.constant 0 : index
    %43 = vector.load %arg12[%c0_37, %c0_38, %c0_39] : memref<16x16x128xf32, #tpu.memory_space<vmem>>, vector<16x4x128xf32>
    tpu.vector_store %arg12[%c0_37, %c0_38, %c0_39], %42 {strides = array<i32>} : memref<16x16x128xf32, #tpu.memory_space<vmem>>, vector<16x4x128xf32>,
    %44 = vector.extract_strided_slice %3 {offsets = [0, 1152], sizes = [256, 128], strides = [1, 1]} : vector<256x1536xf32> to vector<256x128xf32>
    %45 = vector.shape_cast %44 : vector<256x128xf32> to vector<16x16x128xf32>
    %c0_40 = arith.constant 0 : index
    %c12_41 = arith.constant 12 : index
    %c0_42 = arith.constant 0 : index
    %46 = vector.load %arg12[%c0_40, %c12_41, %c0_42] : memref<16x16x128xf32, #tpu.memory_space<vmem>>, vector<4x4x128xf32>
    %47 = vector.extract_strided_slice %45 {offsets = [12, 0, 0], sizes = [4, 4, 128], strides = [1, 1, 1]} : vector<16x16x128xf32> to vector<4x4x128xf32>
    %48 = arith.addf %46, %47 : vector<4x4x128xf32>
    %c0_43 = arith.constant 0 : index
    %c12_44 = arith.constant 12 : index
    %c0_45 = arith.constant 0 : index
    %49 = vector.load %arg12[%c0_43, %c12_44, %c0_45] : memref<16x16x128xf32, #tpu.memory_space<vmem>>, vector<4x4x128xf32>
    tpu.vector_store %arg12[%c0_43, %c12_44, %c0_45], %48 {strides = array<i32>} : memref<16x16x128xf32, #tpu.memory_space<vmem>>, vector<4x4x128xf32>,
    %50 = vector.extract_strided_slice %3 {offsets = [0, 1280], sizes = [256, 128], strides = [1, 1]} : vector<256x1536xf32> to vector<256x128xf32>
    %51 = vector.shape_cast %50 : vector<256x128xf32> to vector<16x16x128xf32>
    %c0_46 = arith.constant 0 : index
    %c0_47 = arith.constant 0 : index
    %c0_48 = arith.constant 0 : index
    %52 = vector.load %arg12[%c0_46, %c0_47, %c0_48] : memref<16x16x128xf32, #tpu.memory_space<vmem>>, vector<4x16x128xf32>
    %53 = vector.extract_strided_slice %51 {offsets = [12, 0, 0], sizes = [4, 16, 128], strides = [1, 1, 1]} : vector<16x16x128xf32> to vector<4x16x128xf32>
    %54 = arith.addf %52, %53 : vector<4x16x128xf32>
    %c0_49 = arith.constant 0 : index
    %c0_50 = arith.constant 0 : index
    %c0_51 = arith.constant 0 : index
    %55 = vector.load %arg12[%c0_49, %c0_50, %c0_51] : memref<16x16x128xf32, #tpu.memory_space<vmem>>, vector<4x16x128xf32>
    tpu.vector_store %arg12[%c0_49, %c0_50, %c0_51], %54 {strides = array<i32>} : memref<16x16x128xf32, #tpu.memory_space<vmem>>, vector<4x16x128xf32>,
    %56 = vector.extract_strided_slice %3 {offsets = [0, 1408], sizes = [256, 128], strides = [1, 1]} : vector<256x1536xf32> to vector<256x128xf32>
    %57 = vector.shape_cast %56 : vector<256x128xf32> to vector<16x16x128xf32>
    %c0_52 = arith.constant 0 : index
    %c0_53 = arith.constant 0 : index
    %c0_54 = arith.constant 0 : index
    %58 = vector.load %arg12[%c0_52, %c0_53, %c0_54] : memref<16x16x128xf32, #tpu.memory_space<vmem>>, vector<4x4x128xf32>
    %59 = vector.extract_strided_slice %57 {offsets = [12, 12, 0], sizes = [4, 4, 128], strides = [1, 1, 1]} : vector<16x16x128xf32> to vector<4x4x128xf32>
    %60 = arith.addf %58, %59 : vector<4x4x128xf32>
    %c0_55 = arith.constant 0 : index
    %c0_56 = arith.constant 0 : index
    %c0_57 = arith.constant 0 : index
    %61 = vector.load %arg12[%c0_55, %c0_56, %c0_57] : memref<16x16x128xf32, #tpu.memory_space<vmem>>, vector<4x4x128xf32>
    tpu.vector_store %arg12[%c0_55, %c0_56, %c0_57], %60 {strides = array<i32>} : memref<16x16x128xf32, #tpu.memory_space<vmem>>, vector<4x4x128xf32>,
    %c0_58 = arith.constant 0 : index
    %c0_59 = arith.constant 0 : index
    %c0_60 = arith.constant 0 : index
    %62 = vector.load %arg12[%c0_58, %c0_59, %c0_60] : memref<16x16x128xf32, #tpu.memory_space<vmem>>, vector<16x16x128xf32>
    %63 = vector.shape_cast %62 : vector<16x16x128xf32> to vector<256x128xf32>
    %c1 = arith.constant 1 : index
    %c0_61 = arith.constant 0 : index
    %64 = vector.load %arg9[%c1, %c0_61] : memref<8x128xf32, #tpu.memory_space<vmem>>, vector<1x128xf32>
    %65 = vector.broadcast %64 : vector<1x128xf32> to vector<256x128xf32>
    %66 = arith.addf %63, %65 : vector<256x128xf32>
    %cst_62 = arith.constant 0.000000e+00 : f32
    %67 = vector.broadcast %cst_62 : f32 to vector<256x128xf32>
    %68 = arith.maximumf %66, %67 : vector<256x128xf32>
    %69 = arith.truncf %68 : vector<256x128xf32> to vector<256x128xbf16>
    %70 = vector.extract_strided_slice %3 {offsets = [0, 256], sizes = [256, 128], strides = [1, 1]} : vector<256x1536xf32> to vector<256x128xf32>
    %c2 = arith.constant 2 : index
    %c0_63 = arith.constant 0 : index
    %71 = vector.load %arg9[%c2, %c0_63] : memref<8x128xf32, #tpu.memory_space<vmem>>, vector<1x128xf32>
    %72 = vector.broadcast %71 : vector<1x128xf32> to vector<256x128xf32>
    %73 = arith.addf %70, %72 : vector<256x128xf32>
    %cst_64 = arith.constant 0.000000e+00 : f32
    %74 = vector.broadcast %cst_64 : f32 to vector<256x128xf32>
    %75 = arith.maximumf %73, %74 : vector<256x128xf32>
    %76 = arith.truncf %75 : vector<256x128xf32> to vector<256x128xbf16>
    %77 = vector.extract_strided_slice %3 {offsets = [0, 384], sizes = [256, 128], strides = [1, 1]} : vector<256x1536xf32> to vector<256x128xf32>
    %c3 = arith.constant 3 : index
    %c0_65 = arith.constant 0 : index
    %78 = vector.load %arg9[%c3, %c0_65] : memref<8x128xf32, #tpu.memory_space<vmem>>, vector<1x128xf32>
    %79 = vector.broadcast %78 : vector<1x128xf32> to vector<256x128xf32>
    %80 = arith.addf %77, %79 : vector<256x128xf32>
    %cst_66 = arith.constant 0.000000e+00 : f32
    %81 = vector.broadcast %cst_66 : f32 to vector<256x128xf32>
    %82 = arith.maximumf %80, %81 : vector<256x128xf32>
    %83 = arith.truncf %82 : vector<256x128xf32> to vector<256x128xbf16>
    %c0_67 = arith.constant 0 : index
    %c0_68 = arith.constant 0 : index
    %c0_69 = arith.constant 0 : index
    %84 = vector.load %arg2[%c0_67, %c0_68, %c0_69] : memref<1x1x512xf32, #tpu.memory_space<vmem>>, vector<1x1x512xf32>
    %85 = vector.shape_cast %84 : vector<1x1x512xf32> to vector<1x512xf32>
    %86 = arith.truncf %85 : vector<1x512xf32> to vector<1x512xbf16>
    %c0_70 = arith.constant 0 : index
    %c0_71 = arith.constant 0 : index
    %87 = vector.load %arg4[%c0_70, %c0_71] : memref<512x128xbf16, #tpu.memory_space<vmem>>, vector<512x128xbf16>
    %cst_72 = arith.constant dense<0.000000e+00> : vector<1x128xf32>
    %88 = tpu.matmul %86, %87, %cst_72 {dimension_numbers = #tpu.dot_dimension_numbers<[1], [0], [0], [1], [0, 0, 1, 1], [], []>} : vector<1x512xbf16>, vector<512x128xbf16>, vector<1x128xf32> -> vector<1x128xf32>
    %c4 = arith.constant 4 : index
    %c0_73 = arith.constant 0 : index
    %89 = vector.load %arg9[%c4, %c0_73] : memref<8x128xf32, #tpu.memory_space<vmem>>, vector<1x128xf32>
    %90 = arith.addf %88, %89 : vector<1x128xf32>
    %cst_74 = arith.constant 0.000000e+00 : f32
    %91 = vector.broadcast %cst_74 : f32 to vector<1x128xf32>
    %92 = arith.maximumf %90, %91 : vector<1x128xf32>
    %93 = arith.truncf %92 : vector<1x128xf32> to vector<1x128xbf16>
    %c0_75 = arith.constant 0 : index
    %c0_76 = arith.constant 0 : index
    %94 = vector.load %arg5[%c0_75, %c0_76] : memref<128x128xbf16, #tpu.memory_space<vmem>>, vector<128x128xbf16>
    %cst_77 = arith.constant dense<0.000000e+00> : vector<1x128xf32>
    %95 = tpu.matmul %93, %94, %cst_77 {dimension_numbers = #tpu.dot_dimension_numbers<[1], [0], [0], [1], [0, 0, 1, 1], [], []>} : vector<1x128xbf16>, vector<128x128xbf16>, vector<1x128xf32> -> vector<1x128xf32>
    %96 = tpu.concatenate %10, %69, %76, %83 in 1 : vector<256x128xbf16>, vector<256x128xbf16>, vector<256x128xbf16>, vector<256x128xbf16> -> vector<256x512xbf16>
    %c0_78 = arith.constant 0 : index
    %c0_79 = arith.constant 0 : index
    %97 = vector.load %arg6[%c0_78, %c0_79] : memref<512x128xbf16, #tpu.memory_space<vmem>>, vector<512x128xbf16>
    %cst_80 = arith.constant dense<0.000000e+00> : vector<256x128xf32>
    %98 = tpu.matmul %96, %97, %cst_80 {dimension_numbers = #tpu.dot_dimension_numbers<[1], [0], [0], [1], [0, 0, 1, 1], [], []>} : vector<256x512xbf16>, vector<512x128xbf16>, vector<256x128xf32> -> vector<256x128xf32>
    %99 = vector.broadcast %95 : vector<1x128xf32> to vector<256x128xf32>
    %100 = arith.addf %98, %99 : vector<256x128xf32>
    %c5 = arith.constant 5 : index
    %c0_81 = arith.constant 0 : index
    %101 = vector.load %arg9[%c5, %c0_81] : memref<8x128xf32, #tpu.memory_space<vmem>>, vector<1x128xf32>
    %102 = vector.broadcast %101 : vector<1x128xf32> to vector<256x128xf32>
    %103 = arith.addf %100, %102 : vector<256x128xf32>
    %cst_82 = arith.constant 0.000000e+00 : f32
    %104 = vector.broadcast %cst_82 : f32 to vector<256x128xf32>
    %105 = arith.maximumf %103, %104 : vector<256x128xf32>
    %106 = arith.truncf %105 : vector<256x128xf32> to vector<256x128xbf16>
    %107 = vector.shape_cast %106 : vector<256x128xbf16> to vector<16x16x128xbf16>
    %cst_83 = arith.constant 0.000000e+00 : bf16
    %108 = vector.broadcast %cst_83 : bf16 to vector<1x16x128xbf16>
    %c0_84 = arith.constant 0 : index
    %c0_85 = arith.constant 0 : index
    %c0_86 = arith.constant 0 : index
    %109 = vector.load %arg13[%c0_84, %c0_85, %c0_86] : memref<16x16x1152xbf16, #tpu.memory_space<vmem>>, vector<1x16x128xbf16>
    tpu.vector_store %arg13[%c0_84, %c0_85, %c0_86], %108 {strides = array<i32>} : memref<16x16x1152xbf16, #tpu.memory_space<vmem>>, vector<1x16x128xbf16>,
    %cst_87 = arith.constant 0.000000e+00 : bf16
    %110 = vector.broadcast %cst_87 : bf16 to vector<16x1x128xbf16>
    %c0_88 = arith.constant 0 : index
    %c0_89 = arith.constant 0 : index
    %c0_90 = arith.constant 0 : index
    %111 = vector.load %arg13[%c0_88, %c0_89, %c0_90] : memref<16x16x1152xbf16, #tpu.memory_space<vmem>>, vector<16x1x128xbf16>
    tpu.vector_store %arg13[%c0_88, %c0_89, %c0_90], %110 {strides = array<i32>} : memref<16x16x1152xbf16, #tpu.memory_space<vmem>>, vector<16x1x128xbf16>,
    %112 = vector.extract_strided_slice %107 {offsets = [0, 0, 0], sizes = [15, 15, 128], strides = [1, 1, 1]} : vector<16x16x128xbf16> to vector<15x15x128xbf16>
    %c1_91 = arith.constant 1 : index
    %c1_92 = arith.constant 1 : index
    %c0_93 = arith.constant 0 : index
    %113 = vector.load %arg13[%c1_91, %c1_92, %c0_93] : memref<16x16x1152xbf16, #tpu.memory_space<vmem>>, vector<15x15x128xbf16>
    tpu.vector_store %arg13[%c1_91, %c1_92, %c0_93], %112 {strides = array<i32>} : memref<16x16x1152xbf16, #tpu.memory_space<vmem>>, vector<15x15x128xbf16>,
    %cst_94 = arith.constant 0.000000e+00 : bf16
    %114 = vector.broadcast %cst_94 : bf16 to vector<1x16x128xbf16>
    %c0_95 = arith.constant 0 : index
    %c0_96 = arith.constant 0 : index
    %c128 = arith.constant 128 : index
    %115 = vector.load %arg13[%c0_95, %c0_96, %c128] : memref<16x16x1152xbf16, #tpu.memory_space<vmem>>, vector<1x16x128xbf16>
    tpu.vector_store %arg13[%c0_95, %c0_96, %c128], %114 {strides = array<i32>} : memref<16x16x1152xbf16, #tpu.memory_space<vmem>>, vector<1x16x128xbf16>,
    %116 = vector.extract_strided_slice %107 {offsets = [0, 0, 0], sizes = [15, 16, 128], strides = [1, 1, 1]} : vector<16x16x128xbf16> to vector<15x16x128xbf16>
    %c1_97 = arith.constant 1 : index
    %c0_98 = arith.constant 0 : index
    %c128_99 = arith.constant 128 : index
    %117 = vector.load %arg13[%c1_97, %c0_98, %c128_99] : memref<16x16x1152xbf16, #tpu.memory_space<vmem>>, vector<15x16x128xbf16>
    tpu.vector_store %arg13[%c1_97, %c0_98, %c128_99], %116 {strides = array<i32>} : memref<16x16x1152xbf16, #tpu.memory_space<vmem>>, vector<15x16x128xbf16>,
    %cst_100 = arith.constant 0.000000e+00 : bf16
    %118 = vector.broadcast %cst_100 : bf16 to vector<1x16x128xbf16>
    %c0_101 = arith.constant 0 : index
    %c0_102 = arith.constant 0 : index
    %c256 = arith.constant 256 : index
    %119 = vector.load %arg13[%c0_101, %c0_102, %c256] : memref<16x16x1152xbf16, #tpu.memory_space<vmem>>, vector<1x16x128xbf16>
    tpu.vector_store %arg13[%c0_101, %c0_102, %c256], %118 {strides = array<i32>} : memref<16x16x1152xbf16, #tpu.memory_space<vmem>>, vector<1x16x128xbf16>,
    %cst_103 = arith.constant 0.000000e+00 : bf16
    %120 = vector.broadcast %cst_103 : bf16 to vector<16x1x128xbf16>
    %c0_104 = arith.constant 0 : index
    %c15 = arith.constant 15 : index
    %c256_105 = arith.constant 256 : index
    %121 = vector.load %arg13[%c0_104, %c15, %c256_105] : memref<16x16x1152xbf16, #tpu.memory_space<vmem>>, vector<16x1x128xbf16>
    tpu.vector_store %arg13[%c0_104, %c15, %c256_105], %120 {strides = array<i32>} : memref<16x16x1152xbf16, #tpu.memory_space<vmem>>, vector<16x1x128xbf16>,
    %122 = vector.extract_strided_slice %107 {offsets = [0, 1, 0], sizes = [15, 15, 128], strides = [1, 1, 1]} : vector<16x16x128xbf16> to vector<15x15x128xbf16>
    %c1_106 = arith.constant 1 : index
    %c0_107 = arith.constant 0 : index
    %c256_108 = arith.constant 256 : index
    %123 = vector.load %arg13[%c1_106, %c0_107, %c256_108] : memref<16x16x1152xbf16, #tpu.memory_space<vmem>>, vector<15x15x128xbf16>
    tpu.vector_store %arg13[%c1_106, %c0_107, %c256_108], %122 {strides = array<i32>} : memref<16x16x1152xbf16, #tpu.memory_space<vmem>>, vector<15x15x128xbf16>,
    %cst_109 = arith.constant 0.000000e+00 : bf16
    %124 = vector.broadcast %cst_109 : bf16 to vector<16x1x128xbf16>
    %c0_110 = arith.constant 0 : index
    %c0_111 = arith.constant 0 : index
    %c384 = arith.constant 384 : index
    %125 = vector.load %arg13[%c0_110, %c0_111, %c384] : memref<16x16x1152xbf16, #tpu.memory_space<vmem>>, vector<16x1x128xbf16>
    tpu.vector_store %arg13[%c0_110, %c0_111, %c384], %124 {strides = array<i32>} : memref<16x16x1152xbf16, #tpu.memory_space<vmem>>, vector<16x1x128xbf16>,
    %126 = vector.extract_strided_slice %107 {offsets = [0, 0, 0], sizes = [16, 15, 128], strides = [1, 1, 1]} : vector<16x16x128xbf16> to vector<16x15x128xbf16>
    %c0_112 = arith.constant 0 : index
    %c1_113 = arith.constant 1 : index
    %c384_114 = arith.constant 384 : index
    %127 = vector.load %arg13[%c0_112, %c1_113, %c384_114] : memref<16x16x1152xbf16, #tpu.memory_space<vmem>>, vector<16x15x128xbf16>
    tpu.vector_store %arg13[%c0_112, %c1_113, %c384_114], %126 {strides = array<i32>} : memref<16x16x1152xbf16, #tpu.memory_space<vmem>>, vector<16x15x128xbf16>,
    %c0_115 = arith.constant 0 : index
    %c0_116 = arith.constant 0 : index
    %c512 = arith.constant 512 : index
    %128 = vector.load %arg13[%c0_115, %c0_116, %c512] : memref<16x16x1152xbf16, #tpu.memory_space<vmem>>, vector<16x16x128xbf16>
    tpu.vector_store %arg13[%c0_115, %c0_116, %c512], %107 {strides = array<i32>} : memref<16x16x1152xbf16, #tpu.memory_space<vmem>>, vector<16x16x128xbf16>,
    %cst_117 = arith.constant 0.000000e+00 : bf16
    %129 = vector.broadcast %cst_117 : bf16 to vector<16x1x128xbf16>
    %c0_118 = arith.constant 0 : index
    %c15_119 = arith.constant 15 : index
    %c640 = arith.constant 640 : index
    %130 = vector.load %arg13[%c0_118, %c15_119, %c640] : memref<16x16x1152xbf16, #tpu.memory_space<vmem>>, vector<16x1x128xbf16>
    tpu.vector_store %arg13[%c0_118, %c15_119, %c640], %129 {strides = array<i32>} : memref<16x16x1152xbf16, #tpu.memory_space<vmem>>, vector<16x1x128xbf16>,
    %131 = vector.extract_strided_slice %107 {offsets = [0, 1, 0], sizes = [16, 15, 128], strides = [1, 1, 1]} : vector<16x16x128xbf16> to vector<16x15x128xbf16>
    %c0_120 = arith.constant 0 : index
    %c0_121 = arith.constant 0 : index
    %c640_122 = arith.constant 640 : index
    %132 = vector.load %arg13[%c0_120, %c0_121, %c640_122] : memref<16x16x1152xbf16, #tpu.memory_space<vmem>>, vector<16x15x128xbf16>
    tpu.vector_store %arg13[%c0_120, %c0_121, %c640_122], %131 {strides = array<i32>} : memref<16x16x1152xbf16, #tpu.memory_space<vmem>>, vector<16x15x128xbf16>,
    %cst_123 = arith.constant 0.000000e+00 : bf16
    %133 = vector.broadcast %cst_123 : bf16 to vector<1x16x128xbf16>
    %c15_124 = arith.constant 15 : index
    %c0_125 = arith.constant 0 : index
    %c768 = arith.constant 768 : index
    %134 = vector.load %arg13[%c15_124, %c0_125, %c768] : memref<16x16x1152xbf16, #tpu.memory_space<vmem>>, vector<1x16x128xbf16>
    tpu.vector_store %arg13[%c15_124, %c0_125, %c768], %133 {strides = array<i32>} : memref<16x16x1152xbf16, #tpu.memory_space<vmem>>, vector<1x16x128xbf16>,
    %cst_126 = arith.constant 0.000000e+00 : bf16
    %135 = vector.broadcast %cst_126 : bf16 to vector<16x1x128xbf16>
    %c0_127 = arith.constant 0 : index
    %c0_128 = arith.constant 0 : index
    %c768_129 = arith.constant 768 : index
    %136 = vector.load %arg13[%c0_127, %c0_128, %c768_129] : memref<16x16x1152xbf16, #tpu.memory_space<vmem>>, vector<16x1x128xbf16>
    tpu.vector_store %arg13[%c0_127, %c0_128, %c768_129], %135 {strides = array<i32>} : memref<16x16x1152xbf16, #tpu.memory_space<vmem>>, vector<16x1x128xbf16>,
    %137 = vector.extract_strided_slice %107 {offsets = [1, 0, 0], sizes = [15, 15, 128], strides = [1, 1, 1]} : vector<16x16x128xbf16> to vector<15x15x128xbf16>
    %c0_130 = arith.constant 0 : index
    %c1_131 = arith.constant 1 : index
    %c768_132 = arith.constant 768 : index
    %138 = vector.load %arg13[%c0_130, %c1_131, %c768_132] : memref<16x16x1152xbf16, #tpu.memory_space<vmem>>, vector<15x15x128xbf16>
    tpu.vector_store %arg13[%c0_130, %c1_131, %c768_132], %137 {strides = array<i32>} : memref<16x16x1152xbf16, #tpu.memory_space<vmem>>, vector<15x15x128xbf16>,
    %cst_133 = arith.constant 0.000000e+00 : bf16
    %139 = vector.broadcast %cst_133 : bf16 to vector<1x16x128xbf16>
    %c15_134 = arith.constant 15 : index
    %c0_135 = arith.constant 0 : index
    %c896 = arith.constant 896 : index
    %140 = vector.load %arg13[%c15_134, %c0_135, %c896] : memref<16x16x1152xbf16, #tpu.memory_space<vmem>>, vector<1x16x128xbf16>
    tpu.vector_store %arg13[%c15_134, %c0_135, %c896], %139 {strides = array<i32>} : memref<16x16x1152xbf16, #tpu.memory_space<vmem>>, vector<1x16x128xbf16>,
    %141 = vector.extract_strided_slice %107 {offsets = [1, 0, 0], sizes = [15, 16, 128], strides = [1, 1, 1]} : vector<16x16x128xbf16> to vector<15x16x128xbf16>
    %c0_136 = arith.constant 0 : index
    %c0_137 = arith.constant 0 : index
    %c896_138 = arith.constant 896 : index
    %142 = vector.load %arg13[%c0_136, %c0_137, %c896_138] : memref<16x16x1152xbf16, #tpu.memory_space<vmem>>, vector<15x16x128xbf16>
    tpu.vector_store %arg13[%c0_136, %c0_137, %c896_138], %141 {strides = array<i32>} : memref<16x16x1152xbf16, #tpu.memory_space<vmem>>, vector<15x16x128xbf16>,
    %cst_139 = arith.constant 0.000000e+00 : bf16
    %143 = vector.broadcast %cst_139 : bf16 to vector<1x16x128xbf16>
    %c15_140 = arith.constant 15 : index
    %c0_141 = arith.constant 0 : index
    %c1024 = arith.constant 1024 : index
    %144 = vector.load %arg13[%c15_140, %c0_141, %c1024] : memref<16x16x1152xbf16, #tpu.memory_space<vmem>>, vector<1x16x128xbf16>
    tpu.vector_store %arg13[%c15_140, %c0_141, %c1024], %143 {strides = array<i32>} : memref<16x16x1152xbf16, #tpu.memory_space<vmem>>, vector<1x16x128xbf16>,
    %cst_142 = arith.constant 0.000000e+00 : bf16
    %145 = vector.broadcast %cst_142 : bf16 to vector<16x1x128xbf16>
    %c0_143 = arith.constant 0 : index
    %c15_144 = arith.constant 15 : index
    %c1024_145 = arith.constant 1024 : index
    %146 = vector.load %arg13[%c0_143, %c15_144, %c1024_145] : memref<16x16x1152xbf16, #tpu.memory_space<vmem>>, vector<16x1x128xbf16>
    tpu.vector_store %arg13[%c0_143, %c15_144, %c1024_145], %145 {strides = array<i32>} : memref<16x16x1152xbf16, #tpu.memory_space<vmem>>, vector<16x1x128xbf16>,
    %147 = vector.extract_strided_slice %107 {offsets = [1, 1, 0], sizes = [15, 15, 128], strides = [1, 1, 1]} : vector<16x16x128xbf16> to vector<15x15x128xbf16>
    %c0_146 = arith.constant 0 : index
    %c0_147 = arith.constant 0 : index
    %c1024_148 = arith.constant 1024 : index
    %148 = vector.load %arg13[%c0_146, %c0_147, %c1024_148] : memref<16x16x1152xbf16, #tpu.memory_space<vmem>>, vector<15x15x128xbf16>
    tpu.vector_store %arg13[%c0_146, %c0_147, %c1024_148], %147 {strides = array<i32>} : memref<16x16x1152xbf16, #tpu.memory_space<vmem>>, vector<15x15x128xbf16>,
    %c0_149 = arith.constant 0 : index
    %c0_150 = arith.constant 0 : index
    %c0_151 = arith.constant 0 : index
    %149 = vector.load %arg13[%c0_149, %c0_150, %c0_151] : memref<16x16x1152xbf16, #tpu.memory_space<vmem>>, vector<16x16x1152xbf16>
    %150 = vector.shape_cast %149 : vector<16x16x1152xbf16> to vector<256x1152xbf16>
    %c0_152 = arith.constant 0 : index
    %c0_153 = arith.constant 0 : index
    %151 = vector.load %arg7[%c0_152, %c0_153] : memref<1152x128xbf16, #tpu.memory_space<vmem>>, vector<1152x128xbf16>
    %cst_154 = arith.constant dense<0.000000e+00> : vector<256x128xf32>
    %152 = tpu.matmul %150, %151, %cst_154 {dimension_numbers = #tpu.dot_dimension_numbers<[1], [0], [0], [1], [0, 0, 1, 1], [], []>} : vector<256x1152xbf16>, vector<1152x128xbf16>, vector<256x128xf32> -> vector<256x128xf32>
    %c6 = arith.constant 6 : index
    %c0_155 = arith.constant 0 : index
    %153 = vector.load %arg9[%c6, %c0_155] : memref<8x128xf32, #tpu.memory_space<vmem>>, vector<1x128xf32>
    %154 = vector.broadcast %153 : vector<1x128xf32> to vector<256x128xf32>
    %155 = arith.addf %152, %154 : vector<256x128xf32>
    %cst_156 = arith.constant 0.000000e+00 : f32
    %156 = vector.broadcast %cst_156 : f32 to vector<256x128xf32>
    %157 = arith.maximumf %155, %156 : vector<256x128xf32>
    %158 = vector.shape_cast %157 : vector<256x128xf32> to vector<1x256x128xf32>
    %c0_157 = arith.constant 0 : index
    %c0_158 = arith.constant 0 : index
    %c0_159 = arith.constant 0 : index
    %159 = vector.load %arg11[%c0_157, %c0_158, %c0_159] : memref<1x256x128xf32, #tpu.memory_space<vmem>>, vector<1x256x128xf32>
    tpu.vector_store %arg11[%c0_157, %c0_158, %c0_159], %158 {strides = array<i32>} : memref<1x256x128xf32, #tpu.memory_space<vmem>>, vector<1x256x128xf32>,
    %160 = arith.truncf %157 : vector<256x128xf32> to vector<256x128xbf16>
    %c0_160 = arith.constant 0 : index
    %c0_161 = arith.constant 0 : index
    %161 = vector.load %arg8[%c0_160, %c0_161] : memref<128x128xbf16, #tpu.memory_space<vmem>>, vector<128x128xbf16>
    %cst_162 = arith.constant dense<0.000000e+00> : vector<256x128xf32>
    %162 = tpu.matmul %160, %161, %cst_162 {dimension_numbers = #tpu.dot_dimension_numbers<[1], [0], [0], [1], [0, 0, 1, 1], [], []>} : vector<256x128xbf16>, vector<128x128xbf16>, vector<256x128xf32> -> vector<256x128xf32>
    %c7 = arith.constant 7 : index
    %c0_163 = arith.constant 0 : index
    %163 = vector.load %arg9[%c7, %c0_163] : memref<8x128xf32, #tpu.memory_space<vmem>>, vector<1x128xf32>
    %164 = vector.broadcast %163 : vector<1x128xf32> to vector<256x128xf32>
    %165 = arith.addf %162, %164 : vector<256x128xf32>
    %166 = vector.shape_cast %165 : vector<256x128xf32> to vector<1x256x128xf32>
    %c0_164 = arith.constant 0 : index
    %c0_165 = arith.constant 0 : index
    %c0_166 = arith.constant 0 : index
    %167 = vector.load %arg10[%c0_164, %c0_165, %c0_166] : memref<1x256x128xf32, #tpu.memory_space<vmem>>, vector<1x256x128xf32>
    tpu.vector_store %arg10[%c0_164, %c0_165, %c0_166], %166 {strides = array<i32>} : memref<1x256x128xf32, #tpu.memory_space<vmem>>, vector<1x256x128xf32>,
    return
  }
  func.func @transform_0(%arg0: i32) -> (i32, i32, i32, i32) {
    %c0_i32 = arith.constant 0 : i32
    %c0_i32_0 = arith.constant 0 : i32
    %c0_i32_1 = arith.constant 0 : i32
    %c0_i32_2 = arith.constant 0 : i32
    return %arg0, %c0_i32, %c0_i32_0, %c0_i32_1 : i32, i32, i32, i32
  }
  func.func @transform_1(%arg0: i32) -> (i32, i32, i32) {
    %c0_i32 = arith.constant 0 : i32
    %c0_i32_0 = arith.constant 0 : i32
    %c0_i32_1 = arith.constant 0 : i32
    return %arg0, %c0_i32, %c0_i32_0 : i32, i32, i32
  }
  func.func @transform_2(%arg0: i32) -> (i32, i32) {
    %c0_i32 = arith.constant 0 : i32
    %c0_i32_0 = arith.constant 0 : i32
    %c0_i32_1 = arith.constant 0 : i32
    return %c0_i32, %c0_i32_0 : i32, i32
  }
  func.func @transform_3(%arg0: i32) -> (i32, i32) {
    %c0_i32 = arith.constant 0 : i32
    %c0_i32_0 = arith.constant 0 : i32
    %c0_i32_1 = arith.constant 0 : i32
    return %c0_i32, %c0_i32_0 : i32, i32
  }
  func.func @transform_4(%arg0: i32) -> (i32, i32) {
    %c0_i32 = arith.constant 0 : i32
    %c0_i32_0 = arith.constant 0 : i32
    %c0_i32_1 = arith.constant 0 : i32
    return %c0_i32, %c0_i32_0 : i32, i32
  }
  func.func @transform_5(%arg0: i32) -> (i32, i32) {
    %c0_i32 = arith.constant 0 : i32
    %c0_i32_0 = arith.constant 0 : i32
    %c0_i32_1 = arith.constant 0 : i32
    return %c0_i32, %c0_i32_0 : i32, i32
  }
  func.func @transform_6(%arg0: i32) -> (i32, i32) {
    %c0_i32 = arith.constant 0 : i32
    %c0_i32_0 = arith.constant 0 : i32
    %c0_i32_1 = arith.constant 0 : i32
    return %c0_i32, %c0_i32_0 : i32, i32
  }
  func.func @transform_7(%arg0: i32) -> (i32, i32) {
    %c0_i32 = arith.constant 0 : i32
    %c0_i32_0 = arith.constant 0 : i32
    %c0_i32_1 = arith.constant 0 : i32
    return %c0_i32, %c0_i32_0 : i32, i32
  }
  func.func @transform_8(%arg0: i32) -> (i32, i32) {
    %c0_i32 = arith.constant 0 : i32
    %c0_i32_0 = arith.constant 0 : i32
    %c0_i32_1 = arith.constant 0 : i32
    return %c0_i32, %c0_i32_0 : i32, i32
  }
  func.func @transform_9(%arg0: i32) -> (i32, i32, i32) {
    %c0_i32 = arith.constant 0 : i32
    %c0_i32_0 = arith.constant 0 : i32
    %c0_i32_1 = arith.constant 0 : i32
    return %arg0, %c0_i32, %c0_i32_0 : i32, i32, i32
  }
  func.func @transform_10(%arg0: i32) -> (i32, i32, i32) {
    %c0_i32 = arith.constant 0 : i32
    %c0_i32_0 = arith.constant 0 : i32
    %c0_i32_1 = arith.constant 0 : i32
    return %arg0, %c0_i32, %c0_i32_0 : i32, i32, i32
  }
}

</mosaic_0001>

<llo_original>
// kernel: deeplab_head_forward.1
$region0: #{deeplab_head_forward.1}
  #allocation0 [shape = 'u32[]', space=smem, size = 0x4, offset = 0x4, fixed_abs, tag = 'smem constant byte address 0x4 - core index']
  #allocation1 [shape = 'u32[144,128]{1,0:T(1,128)}', space=vmem, size = 0x12000, scoped, tag = 'internal scratch']
  #allocation2 [shape = 'f32[16,16,128]{2,1,0:T(8,128)}', space=vmem, size = 0x20000, scoped, tag = 'scratch operand']
  #allocation3 [shape = 'bf16[16,16,1152]{2,1,0:T(16,128)(2,1)}', space=vmem, size = 0x90000, scoped, tag = 'scratch operand']
  %s0 = inlined_call_operand.vmem [shape: bf16[2,16,16,512], index: 0, kind: input, shape index: {}]
  %s1 = inlined_call_operand.vmem [shape: f32[2,1,512], index: 1, kind: input, shape index: {}]
  %s2 = inlined_call_operand.vmem [shape: bf16[512,1536], index: 2, kind: input, shape index: {}]
  %s3 = inlined_call_operand.vmem [shape: bf16[512,128], index: 3, kind: input, shape index: {}]
  %s4 = inlined_call_operand.vmem [shape: bf16[128,128], index: 4, kind: input, shape index: {}]
  %s5 = inlined_call_operand.vmem [shape: bf16[512,128], index: 5, kind: input, shape index: {}]
  %s6 = inlined_call_operand.vmem [shape: bf16[1152,128], index: 6, kind: input, shape index: {}]
  %s7 = inlined_call_operand.vmem [shape: bf16[128,128], index: 7, kind: input, shape index: {}]
  %s8 = inlined_call_operand.vmem [shape: f32[8,128], index: 8, kind: input, shape index: {}]
  %s9 = inlined_call_operand.vmem [shape: f32[2,256,128], index: 9, kind: output, shape index: {0}]
  %s10 = inlined_call_operand.hbm [shape: f32[2,256,128], index: 10, kind: output, shape index: {1}]
  %11 = xla_tuple %s9, %s10
  %s12 = sld [smem:[#allocation0]]
  $region77: #{deeplab_head_forward.1} parent=0
    _
  %s14 = ssub.s32 1, %s12
  %s15 = scalar_select 0, %s14, %s12
  $region1: #{deeplab_head_forward.1} parent=0
    #allocation4 [shape = 'u8[262144]{0}', space=vmem, size = 0x40000, scoped, tag = 'output window, operand 1']
    #allocation5 [shape = 's32[2]{0}', space=sflag, size = 0x8, scoped, tag = 'scoped memory for deeplab_head_forward.1']
    %16 = vsyncpa [#allocation5], 0
    %s17 = scalar_lea.sflag [#allocation5], 1
    %18 = vsyncpa %s17, 0
    loop: start=0, step=1, limit=4
    $region2: #{deeplab_head_forward.1} parent=1 // loop_pre_header
      _
    $region3: #{deeplab_head_forward.1} parent=1 // loop_header
      %s20 = sphi 0, %s24
      %p21 = scmp.ge.s32.totalorder %s20, 4
      %s30 = sphi 0, %s32
      %s33 = sphi 0, %s30
      %s34 = sphi 0, %s33
      %s50 = sphi 0, %s34
      %s56 = sphi 0, %s58
      %s59 = sphi 0, %s56
      %s60 = sphi 0, %s59
      %s76 = sphi 0, %s60
      %s80 = sphi 0, %s80
      %s82 = sphi 0, %s80
      %s83 = sphi 0, %s82
      %s97 = sphi 0, %s83
      %s101 = sphi 0, %s101
      %s103 = sphi 0, %s101
      %s104 = sphi 0, %s103
      %s118 = sphi 0, %s104
      %s122 = sphi 0, %s122
      %s124 = sphi 0, %s122
      %s125 = sphi 0, %s124
      %s139 = sphi 0, %s125
      %s143 = sphi 0, %s143
      %s145 = sphi 0, %s143
      %s146 = sphi 0, %s145
      %s160 = sphi 0, %s146
      %s164 = sphi 0, %s164
      %s166 = sphi 0, %s164
      %s167 = sphi 0, %s166
      %s181 = sphi 0, %s167
      %s185 = sphi 0, %s185
      %s187 = sphi 0, %s185
      %s188 = sphi 0, %s187
      %s202 = sphi 0, %s188
      %s206 = sphi 0, %s206
      %s208 = sphi 0, %s206
      %s209 = sphi 0, %s208
      %s223 = sphi 0, %s209
      %s229 = sphi 0, %s231
      %s232 = sphi 0, %s229
      %s233 = sphi 0, %s232
      %s249 = sphi 0, %s233
      %s255 = sphi 0, %s257
      %s258 = sphi 0, %s255
      %s259 = sphi 0, %s258
      %s275 = sphi 0, %s259
    $region4: #{deeplab_head_forward.1} parent=1 // loop_header_branch
      %23 = sbr.rel (%p21) target = $region8
    $region5: #{deeplab_head_forward.1} parent=1 // loop_body
      %s25 = ssub.s32 %s20, 1
      %s26 = ssub.s32 %s20, 2
      %s27 = sadd.s32 %s20, 1
      %s28 = ssub.s32 %s20, %s27
      %p29 = scmp.eq.s32.totalorder %s28, 0
      %s31 = sadd.s32 %s30, 1
      %s32 = scalar_select %p29, %s30, %s31
      %p35 = pneg %p29
      %p36 = scmp.eq.s32.totalorder %s20, 1
      %p37 = por %p35, %p36
      %p38 = scmp.ne.s32.totalorder %s30, %s33
      %p39 = scmp.eq.s32.totalorder %s20, 0
      %p40 = por %p38, %p39
      %p41 = scmp.ne.s32.totalorder %s30, %s33
      %p42 = scmp.eq.s32.totalorder %s25, 1
      %p43 = por %p41, %p42
      %p44 = scmp.ne.s32.totalorder %s33, %s34
      %p45 = scmp.eq.s32.totalorder %s25, 0
      %p46 = por %p44, %p45
      %p47 = scmp.ne.s32.totalorder %s33, %s34
      %p48 = scmp.eq.s32.totalorder %s26, 1
      %p49 = por %p47, %p48
      %p51 = scmp.ne.s32.totalorder %s34, %s50
      %p52 = scmp.eq.s32.totalorder %s26, 0
      %p53 = por %p51, %p52
      %s54 = ssub.s32 %s20, %s27
      %p55 = scmp.eq.s32.totalorder %s54, 0
      %s57 = sadd.s32 %s56, 1
      %s58 = scalar_select %p55, %s56, %s57
      %p61 = pneg %p55
      %p62 = scmp.eq.s32.totalorder %s20, 1
      %p63 = por %p61, %p62
      %p64 = scmp.ne.s32.totalorder %s56, %s59
      %p65 = scmp.eq.s32.totalorder %s20, 0
      %p66 = por %p64, %p65
      %p67 = scmp.ne.s32.totalorder %s56, %s59
      %p68 = scmp.eq.s32.totalorder %s25, 1
      %p69 = por %p67, %p68
      %p70 = scmp.ne.s32.totalorder %s59, %s60
      %p71 = scmp.eq.s32.totalorder %s25, 0
      %p72 = por %p70, %p71
      %p73 = scmp.ne.s32.totalorder %s59, %s60
      %p74 = scmp.eq.s32.totalorder %s26, 1
      %p75 = por %p73, %p74
      %p77 = scmp.ne.s32.totalorder %s60, %s76
      %p78 = scmp.eq.s32.totalorder %s26, 0
      %p79 = por %p77, %p78
      %s81 = sadd.s32 %s80, 1
      %p84 = scmp.eq.s32.totalorder %s20, 1
      %p85 = scmp.ne.s32.totalorder %s80, %s82
      %p86 = scmp.eq.s32.totalorder %s20, 0
      %p87 = por %p85, %p86
      %p88 = scmp.ne.s32.totalorder %s80, %s82
      %p89 = scmp.eq.s32.totalorder %s25, 1
      %p90 = por %p88, %p89
      %p91 = scmp.ne.s32.totalorder %s82, %s83
      %p92 = scmp.eq.s32.totalorder %s25, 0
      %p93 = por %p91, %p92
      %p94 = scmp.ne.s32.totalorder %s82, %s83
      %p95 = scmp.eq.s32.totalorder %s26, 1
      %p96 = por %p94, %p95
      %p98 = scmp.ne.s32.totalorder %s83, %s97
      %p99 = scmp.eq.s32.totalorder %s26, 0
      %p100 = por %p98, %p99
      %s102 = sadd.s32 %s101, 1
      %p105 = scmp.eq.s32.totalorder %s20, 1
      %p106 = scmp.ne.s32.totalorder %s101, %s103
      %p107 = scmp.eq.s32.totalorder %s20, 0
      %p108 = por %p106, %p107
      %p109 = scmp.ne.s32.totalorder %s101, %s103
      %p110 = scmp.eq.s32.totalorder %s25, 1
      %p111 = por %p109, %p110
      %p112 = scmp.ne.s32.totalorder %s103, %s104
      %p113 = scmp.eq.s32.totalorder %s25, 0
      %p114 = por %p112, %p113
      %p115 = scmp.ne.s32.totalorder %s103, %s104
      %p116 = scmp.eq.s32.totalorder %s26, 1
      %p117 = por %p115, %p116
      %p119 = scmp.ne.s32.totalorder %s104, %s118
      %p120 = scmp.eq.s32.totalorder %s26, 0
      %p121 = por %p119, %p120
      %s123 = sadd.s32 %s122, 1
      %p126 = scmp.eq.s32.totalorder %s20, 1
      %p127 = scmp.ne.s32.totalorder %s122, %s124
      %p128 = scmp.eq.s32.totalorder %s20, 0
      %p129 = por %p127, %p128
      %p130 = scmp.ne.s32.totalorder %s122, %s124
      %p131 = scmp.eq.s32.totalorder %s25, 1
      %p132 = por %p130, %p131
      %p133 = scmp.ne.s32.totalorder %s124, %s125
      %p134 = scmp.eq.s32.totalorder %s25, 0
      %p135 = por %p133, %p134
      %p136 = scmp.ne.s32.totalorder %s124, %s125
      %p137 = scmp.eq.s32.totalorder %s26, 1
      %p138 = por %p136, %p137
      %p140 = scmp.ne.s32.totalorder %s125, %s139
      %p141 = scmp.eq.s32.totalorder %s26, 0
      %p142 = por %p140, %p141
      %s144 = sadd.s32 %s143, 1
      %p147 = scmp.eq.s32.totalorder %s20, 1
      %p148 = scmp.ne.s32.totalorder %s143, %s145
      %p149 = scmp.eq.s32.totalorder %s20, 0
      %p150 = por %p148, %p149
      %p151 = scmp.ne.s32.totalorder %s143, %s145
      %p152 = scmp.eq.s32.totalorder %s25, 1
      %p153 = por %p151, %p152
      %p154 = scmp.ne.s32.totalorder %s145, %s146
      %p155 = scmp.eq.s32.totalorder %s25, 0
      %p156 = por %p154, %p155
      %p157 = scmp.ne.s32.totalorder %s145, %s146
      %p158 = scmp.eq.s32.totalorder %s26, 1
      %p159 = por %p157, %p158
      %p161 = scmp.ne.s32.totalorder %s146, %s160
      %p162 = scmp.eq.s32.totalorder %s26, 0
      %p163 = por %p161, %p162
      %s165 = sadd.s32 %s164, 1
      %p168 = scmp.eq.s32.totalorder %s20, 1
      %p169 = scmp.ne.s32.totalorder %s164, %s166
      %p170 = scmp.eq.s32.totalorder %s20, 0
      %p171 = por %p169, %p170
      %p172 = scmp.ne.s32.totalorder %s164, %s166
      %p173 = scmp.eq.s32.totalorder %s25, 1
      %p174 = por %p172, %p173
      %p175 = scmp.ne.s32.totalorder %s166, %s167
      %p176 = scmp.eq.s32.totalorder %s25, 0
      %p177 = por %p175, %p176
      %p178 = scmp.ne.s32.totalorder %s166, %s167
      %p179 = scmp.eq.s32.totalorder %s26, 1
      %p180 = por %p178, %p179
      %p182 = scmp.ne.s32.totalorder %s167, %s181
      %p183 = scmp.eq.s32.totalorder %s26, 0
      %p184 = por %p182, %p183
      %s186 = sadd.s32 %s185, 1
      %p189 = scmp.eq.s32.totalorder %s20, 1
      %p190 = scmp.ne.s32.totalorder %s185, %s187
      %p191 = scmp.eq.s32.totalorder %s20, 0
      %p192 = por %p190, %p191
      %p193 = scmp.ne.s32.totalorder %s185, %s187
      %p194 = scmp.eq.s32.totalorder %s25, 1
      %p195 = por %p193, %p194
      %p196 = scmp.ne.s32.totalorder %s187, %s188
      %p197 = scmp.eq.s32.totalorder %s25, 0
      %p198 = por %p196, %p197
      %p199 = scmp.ne.s32.totalorder %s187, %s188
      %p200 = scmp.eq.s32.totalorder %s26, 1
      %p201 = por %p199, %p200
      %p203 = scmp.ne.s32.totalorder %s188, %s202
      %p204 = scmp.eq.s32.totalorder %s26, 0
      %p205 = por %p203, %p204
      %s207 = sadd.s32 %s206, 1
      %p210 = scmp.eq.s32.totalorder %s20, 1
      %p211 = scmp.ne.s32.totalorder %s206, %s208
      %p212 = scmp.eq.s32.totalorder %s20, 0
      %p213 = por %p211, %p212
      %p214 = scmp.ne.s32.totalorder %s206, %s208
      %p215 = scmp.eq.s32.totalorder %s25, 1
      %p216 = por %p214, %p215
      %p217 = scmp.ne.s32.totalorder %s208, %s209
      %p218 = scmp.eq.s32.totalorder %s25, 0
      %p219 = por %p217, %p218
      %p220 = scmp.ne.s32.totalorder %s208, %s209
      %p221 = scmp.eq.s32.totalorder %s26, 1
      %p222 = por %p220, %p221
      %p224 = scmp.ne.s32.totalorder %s209, %s223
      %p225 = scmp.eq.s32.totalorder %s26, 0
      %p226 = por %p224, %p225
      %s227 = ssub.s32 %s20, %s27
      %p228 = scmp.eq.s32.totalorder %s227, 0
      %s230 = sadd.s32 %s229, 1
      %s231 = scalar_select %p228, %s229, %s230
      %p234 = pneg %p228
      %p235 = scmp.eq.s32.totalorder %s20, 1
      %p236 = por %p234, %p235
      %p237 = scmp.ne.s32.totalorder %s229, %s232
      %p238 = scmp.eq.s32.totalorder %s20, 0
      %p239 = por %p237, %p238
      %p240 = scmp.ne.s32.totalorder %s229, %s232
      %p241 = scmp.eq.s32.totalorder %s25, 1
      %p242 = por %p240, %p241
      %p243 = scmp.ne.s32.totalorder %s232, %s233
      %p244 = scmp.eq.s32.totalorder %s25, 0
      %p245 = por %p243, %p244
      %p246 = scmp.ne.s32.totalorder %s232, %s233
      %p247 = scmp.eq.s32.totalorder %s26, 1
      %p248 = por %p246, %p247
      %p250 = scmp.ne.s32.totalorder %s233, %s249
      %p251 = scmp.eq.s32.totalorder %s26, 0
      %p252 = por %p250, %p251
      %s253 = ssub.s32 %s20, %s27
      %p254 = scmp.eq.s32.totalorder %s253, 0
      %s256 = sadd.s32 %s255, 1
      %s257 = scalar_select %p254, %s255, %s256
      %p260 = pneg %p254
      %p261 = scmp.eq.s32.totalorder %s20, 1
      %p262 = por %p260, %p261
      %p263 = scmp.ne.s32.totalorder %s255, %s258
      %p264 = scmp.eq.s32.totalorder %s20, 0
      %p265 = por %p263, %p264
      %p266 = scmp.ne.s32.totalorder %s255, %s258
      %p267 = scmp.eq.s32.totalorder %s25, 1
      %p268 = por %p266, %p267
      %p269 = scmp.ne.s32.totalorder %s258, %s259
      %p270 = scmp.eq.s32.totalorder %s25, 0
      %p271 = por %p269, %p270
      %p272 = scmp.ne.s32.totalorder %s258, %s259
      %p273 = scmp.eq.s32.totalorder %s26, 1
      %p274 = por %p272, %p273
      %p276 = scmp.ne.s32.totalorder %s259, %s275
      %p277 = scmp.eq.s32.totalorder %s26, 0
      %p278 = por %p276, %p277
      %p279 = scmp.le.s32.totalorder 1, %s20
      %p280 = scmp.lt.s32.totalorder %s20, 3
      %p281 = pnand %p279, %p280
      %p282 = pneg %p281
      // Predicated region
      $region9: #{deeplab_head_forward.1} parent=5 // pred_check
        _
      $region10: #{deeplab_head_forward.1} parent=5 // pred_check_branch
        %284 = sbr.rel (%p281) target = $region12
      $region11: #{deeplab_head_forward.1} parent=5 // pred_region
        %s285 = ssub.s32 %s20, 1
        // Predicated region
        $region13: #{deeplab_head_forward.1} parent=11 // pred_check
          %p286 = pneg %p93
        $region14: #{deeplab_head_forward.1} parent=11 // pred_check_branch
          %288 = sbr.rel (%p286) target = $region16
        $region15: #{deeplab_head_forward.1} parent=11 // pred_region
          _
        $region16: #{deeplab_head_forward.1} parent=11 // pred_fallthru
          _
        // Predicated region
        $region17: #{deeplab_head_forward.1} parent=11 // pred_check
          %p289 = pneg %p114
        $region18: #{deeplab_head_forward.1} parent=11 // pred_check_branch
          %291 = sbr.rel (%p289) target = $region20
        $region19: #{deeplab_head_forward.1} parent=11 // pred_region
          _
        $region20: #{deeplab_head_forward.1} parent=11 // pred_fallthru
          _
        // Predicated region
        $region21: #{deeplab_head_forward.1} parent=11 // pred_check
          %p292 = pneg %p135
        $region22: #{deeplab_head_forward.1} parent=11 // pred_check_branch
          %294 = sbr.rel (%p292) target = $region24
        $region23: #{deeplab_head_forward.1} parent=11 // pred_region
          _
        $region24: #{deeplab_head_forward.1} parent=11 // pred_fallthru
          _
        // Predicated region
        $region25: #{deeplab_head_forward.1} parent=11 // pred_check
          %p295 = pneg %p156
        $region26: #{deeplab_head_forward.1} parent=11 // pred_check_branch
          %297 = sbr.rel (%p295) target = $region28
        $region27: #{deeplab_head_forward.1} parent=11 // pred_region
          _
        $region28: #{deeplab_head_forward.1} parent=11 // pred_fallthru
          _
        // Predicated region
        $region29: #{deeplab_head_forward.1} parent=11 // pred_check
          %p298 = pneg %p177
        $region30: #{deeplab_head_forward.1} parent=11 // pred_check_branch
          %300 = sbr.rel (%p298) target = $region32
        $region31: #{deeplab_head_forward.1} parent=11 // pred_region
          _
        $region32: #{deeplab_head_forward.1} parent=11 // pred_fallthru
          _
        // Predicated region
        $region33: #{deeplab_head_forward.1} parent=11 // pred_check
          %p301 = pneg %p198
        $region34: #{deeplab_head_forward.1} parent=11 // pred_check_branch
          %303 = sbr.rel (%p301) target = $region36
        $region35: #{deeplab_head_forward.1} parent=11 // pred_region
          _
        $region36: #{deeplab_head_forward.1} parent=11 // pred_fallthru
          _
        // Predicated region
        $region37: #{deeplab_head_forward.1} parent=11 // pred_check
          %p304 = pneg %p219
        $region38: #{deeplab_head_forward.1} parent=11 // pred_check_branch
          %306 = sbr.rel (%p304) target = $region40
        $region39: #{deeplab_head_forward.1} parent=11 // pred_region
          _
        $region40: #{deeplab_head_forward.1} parent=11 // pred_fallthru
          _
      $region12: #{deeplab_head_forward.1} parent=5 // pred_fallthru
        _
      %p307 = scmp.lt.s32.totalorder %s20, 2
      // Predicated region
      $region41: #{deeplab_head_forward.1} parent=5 // pred_check
        %p308 = pneg %p307
      $region42: #{deeplab_head_forward.1} parent=5 // pred_check_branch
        %310 = sbr.rel (%p308) target = $region44
      $region43: #{deeplab_head_forward.1} parent=5 // pred_region
        // Predicated region
        $region45: #{deeplab_head_forward.1} parent=43 // pred_check
          %p311 = pneg %p40
        $region46: #{deeplab_head_forward.1} parent=43 // pred_check_branch
          %313 = sbr.rel (%p311) target = $region48
        $region47: #{deeplab_head_forward.1} parent=43 // pred_region
          %p314 = scmp.lt.s32.totalorder %s20, 1
          %s315 = scalar_select %p314, %s20, 1
          %s316 = smul.addr %s315, 128
          %s317 = smul.addr %s316, 4
          %s318 = scalar_lea.vmem %s0, %s317
        $region48: #{deeplab_head_forward.1} parent=43 // pred_fallthru
          _
        // Predicated region
        $region49: #{deeplab_head_forward.1} parent=43 // pred_check
          %p319 = pneg %p66
        $region50: #{deeplab_head_forward.1} parent=43 // pred_check_branch
          %321 = sbr.rel (%p319) target = $region52
        $region51: #{deeplab_head_forward.1} parent=43 // pred_region
          %p322 = scmp.lt.s32.totalorder %s20, 1
          %s323 = scalar_select %p322, %s20, 1
          %s324 = smul.addr %s323, 4
          %s325 = scalar_lea.vmem %s1, %s324
        $region52: #{deeplab_head_forward.1} parent=43 // pred_fallthru
          _
      $region44: #{deeplab_head_forward.1} parent=5 // pred_fallthru
        _
      %p326 = scmp.le.s32.totalorder 1, %s20
      %p327 = scmp.lt.s32.totalorder %s20, 3
      %p328 = pnand %p326, %p327
      %p329 = pneg %p328
      // Predicated region
      $region53: #{deeplab_head_forward.1} parent=5 // pred_check
        _
      $region54: #{deeplab_head_forward.1} parent=5 // pred_check_branch
        %331 = sbr.rel (%p328) target = $region56
      $region55: #{deeplab_head_forward.1} parent=5 // pred_region
        %s332 = ssub.s32 %s20, 1
        %p333 = scmp.lt.s32.totalorder %s25, 1
        %s334 = scalar_select %p333, %s25, 1
        %s335 = smul.addr %s334, 128
        %s336 = smul.addr %s335, 4
        %s337 = scalar_lea.vmem %s0, %s336
        %p338 = pneg %p46
        %p339 = pneg %p43
        %p340 = scmp.lt.s32.totalorder %s25, 1
        %s341 = scalar_select %p340, %s25, 1
        %s342 = smul.addr %s341, 4
        %s343 = scalar_lea.vmem %s1, %s342
        %p344 = pneg %p72
        %p345 = pneg %p69
        %p346 = pneg %p93
        %p347 = pneg %p90
        %p348 = pneg %p114
        %p349 = pneg %p111
        %p350 = pneg %p135
        %p351 = pneg %p132
        %p352 = pneg %p156
        %p353 = pneg %p153
        %p354 = pneg %p177
        %p355 = pneg %p174
        %p356 = pneg %p198
        %p357 = pneg %p195
        %p358 = pneg %p219
        %p359 = pneg %p216
        %p360 = pneg %p245
        %p361 = pneg %p242
        %p362 = scmp.lt.s32.totalorder %s25, 1
        %s363 = scalar_select %p362, %s25, 1
        %s364 = smul.addr %s363, 32
        %s365 = smul.addr %s364, 8
        %s366 = scalar_lea.vmem %s9, %s365
        %p367 = pneg %p271
        %p368 = pneg %p268
        %s369 = sand.u32 %s258, 1
        %s370 = scalar_lea.sflag [#allocation5], %s369
        %s371 = sand.u32 %s258, 1
        %s372 = smul.addr %s371, 256
        %s373 = scalar_lea.vmem [#allocation4], %s372
        %p374 = scmp.lt.s32.totalorder %s25, 1
        %s375 = scalar_select %p374, %s25, 1
        %s376 = smul.addr %s375, 128
        %s377 = smul.addr %s376, 4
        %s378 = scalar_lea.vmem %s0, %s377
        %p379 = scmp.lt.s32.totalorder %s25, 1
        %s380 = scalar_select %p379, %s25, 1
        %s381 = smul.addr %s380, 4
        %s382 = scalar_lea.vmem %s1, %s381
        %p383 = scmp.lt.s32.totalorder %s25, 1
        %s384 = scalar_select %p383, %s25, 1
        %s385 = smul.addr %s384, 32
        %s386 = smul.addr %s385, 8
        %s387 = scalar_lea.vmem %s9, %s386
        %v389 = vld [vmem:[%s378] sm:$0xff]
        %v390 = vld [vmem:[%s378 + $0x8] sm:$0xff]
        %v391 = vld [vmem:[%s378 + $0x10] sm:$0xff]
        %v392 = vld [vmem:[%s378 + $0x18] sm:$0xff]
        %v393 = vld [vmem:[%s378 + $0x20] sm:$0xff]
        %v394 = vld [vmem:[%s378 + $0x28] sm:$0xff]
        %v395 = vld [vmem:[%s378 + $0x30] sm:$0xff]
        %v396 = vld [vmem:[%s378 + $0x38] sm:$0xff]
        %v397 = vld [vmem:[%s378 + $0x40] sm:$0xff]
        %v398 = vld [vmem:[%s378 + $0x48] sm:$0xff]
        %v399 = vld [vmem:[%s378 + $0x50] sm:$0xff]
        %v400 = vld [vmem:[%s378 + $0x58] sm:$0xff]
        %v401 = vld [vmem:[%s378 + $0x60] sm:$0xff]
        %v402 = vld [vmem:[%s378 + $0x68] sm:$0xff]
        %v403 = vld [vmem:[%s378 + $0x70] sm:$0xff]
        %v404 = vld [vmem:[%s378 + $0x78] sm:$0xff]
        %v405 = vld [vmem:[%s378 + $0x80] sm:$0xff]
        %v406 = vld [vmem:[%s378 + $0x88] sm:$0xff]
        %v407 = vld [vmem:[%s378 + $0x90] sm:$0xff]
        %v408 = vld [vmem:[%s378 + $0x98] sm:$0xff]
        %v409 = vld [vmem:[%s378 + $0xa0] sm:$0xff]
        %v410 = vld [vmem:[%s378 + $0xa8] sm:$0xff]
        %v411 = vld [vmem:[%s378 + $0xb0] sm:$0xff]
        %v412 = vld [vmem:[%s378 + $0xb8] sm:$0xff]
        %v413 = vld [vmem:[%s378 + $0xc0] sm:$0xff]
        %v414 = vld [vmem:[%s378 + $0xc8] sm:$0xff]
        %v415 = vld [vmem:[%s378 + $0xd0] sm:$0xff]
        %v416 = vld [vmem:[%s378 + $0xd8] sm:$0xff]
        %v417 = vld [vmem:[%s378 + $0xe0] sm:$0xff]
        %v418 = vld [vmem:[%s378 + $0xe8] sm:$0xff]
        %v419 = vld [vmem:[%s378 + $0xf0] sm:$0xff]
        %v420 = vld [vmem:[%s378 + $0xf8] sm:$0xff]
        %v421 = vld [vmem:[%s378 + $0x100] sm:$0xff]
        %v422 = vld [vmem:[%s378 + $0x108] sm:$0xff]
        %v423 = vld [vmem:[%s378 + $0x110] sm:$0xff]
        %v424 = vld [vmem:[%s378 + $0x118] sm:$0xff]
        %v425 = vld [vmem:[%s378 + $0x120] sm:$0xff]
        %v426 = vld [vmem:[%s378 + $0x128] sm:$0xff]
        %v427 = vld [vmem:[%s378 + $0x130] sm:$0xff]
        %v428 = vld [vmem:[%s378 + $0x138] sm:$0xff]
        %v429 = vld [vmem:[%s378 + $0x140] sm:$0xff]
        %v430 = vld [vmem:[%s378 + $0x148] sm:$0xff]
        %v431 = vld [vmem:[%s378 + $0x150] sm:$0xff]
        %v432 = vld [vmem:[%s378 + $0x158] sm:$0xff]
        %v433 = vld [vmem:[%s378 + $0x160] sm:$0xff]
        %v434 = vld [vmem:[%s378 + $0x168] sm:$0xff]
        %v435 = vld [vmem:[%s378 + $0x170] sm:$0xff]
        %v436 = vld [vmem:[%s378 + $0x178] sm:$0xff]
        %v437 = vld [vmem:[%s378 + $0x180] sm:$0xff]
        %v438 = vld [vmem:[%s378 + $0x188] sm:$0xff]
        %v439 = vld [vmem:[%s378 + $0x190] sm:$0xff]
        %v440 = vld [vmem:[%s378 + $0x198] sm:$0xff]
        %v441 = vld [vmem:[%s378 + $0x1a0] sm:$0xff]
        %v442 = vld [vmem:[%s378 + $0x1a8] sm:$0xff]
        %v443 = vld [vmem:[%s378 + $0x1b0] sm:$0xff]
        %v444 = vld [vmem:[%s378 + $0x1b8] sm:$0xff]
        %v445 = vld [vmem:[%s378 + $0x1c0] sm:$0xff]
        %v446 = vld [vmem:[%s378 + $0x1c8] sm:$0xff]
        %v447 = vld [vmem:[%s378 + $0x1d0] sm:$0xff]
        %v448 = vld [vmem:[%s378 + $0x1d8] sm:$0xff]
        %v449 = vld [vmem:[%s378 + $0x1e0] sm:$0xff]
        %v450 = vld [vmem:[%s378 + $0x1e8] sm:$0xff]
        %v451 = vld [vmem:[%s378 + $0x1f0] sm:$0xff]
        %v452 = vld [vmem:[%s378 + $0x1f8] sm:$0xff]
        %v453 = vld [vmem:[%s2] sm:$0xff]
        %v454 = vld [vmem:[%s2 + $0x8] sm:$0xff]
        %v455 = vld [vmem:[%s2 + $0x10] sm:$0xff]
        %v456 = vld [vmem:[%s2 + $0x18] sm:$0xff]
        %v457 = vld [vmem:[%s2 + $0x20] sm:$0xff]
        %v458 = vld [vmem:[%s2 + $0x28] sm:$0xff]
        %v459 = vld [vmem:[%s2 + $0x30] sm:$0xff]
        %v460 = vld [vmem:[%s2 + $0x38] sm:$0xff]
        %v461 = vld [vmem:[%s2 + $0x40] sm:$0xff]
        %v462 = vld [vmem:[%s2 + $0x48] sm:$0xff]
        %v463 = vld [vmem:[%s2 + $0x50] sm:$0xff]
        %v464 = vld [vmem:[%s2 + $0x58] sm:$0xff]
        %v465 = vld [vmem:[%s2 + $0x60] sm:$0xff]
        %v466 = vld [vmem:[%s2 + $0x68] sm:$0xff]
        %v467 = vld [vmem:[%s2 + $0x70] sm:$0xff]
        %v468 = vld [vmem:[%s2 + $0x78] sm:$0xff]
        %v469 = vld [vmem:[%s2 + $0x80] sm:$0xff]
        %v470 = vld [vmem:[%s2 + $0x88] sm:$0xff]
        %v471 = vld [vmem:[%s2 + $0x90] sm:$0xff]
        %v472 = vld [vmem:[%s2 + $0x98] sm:$0xff]
        %v473 = vld [vmem:[%s2 + $0xa0] sm:$0xff]
        %v474 = vld [vmem:[%s2 + $0xa8] sm:$0xff]
        %v475 = vld [vmem:[%s2 + $0xb0] sm:$0xff]
        %v476 = vld [vmem:[%s2 + $0xb8] sm:$0xff]
        %v477 = vld [vmem:[%s2 + $0xc0] sm:$0xff]
        %v478 = vld [vmem:[%s2 + $0xc8] sm:$0xff]
        %v479 = vld [vmem:[%s2 + $0xd0] sm:$0xff]
        %v480 = vld [vmem:[%s2 + $0xd8] sm:$0xff]
        %v481 = vld [vmem:[%s2 + $0xe0] sm:$0xff]
        %v482 = vld [vmem:[%s2 + $0xe8] sm:$0xff]
        %v483 = vld [vmem:[%s2 + $0xf0] sm:$0xff]
        %v484 = vld [vmem:[%s2 + $0xf8] sm:$0xff]
        %v485 = vld [vmem:[%s2 + $0x100] sm:$0xff]
        %v486 = vld [vmem:[%s2 + $0x108] sm:$0xff]
        %v487 = vld [vmem:[%s2 + $0x110] sm:$0xff]
        %v488 = vld [vmem:[%s2 + $0x118] sm:$0xff]
        %v489 = vld [vmem:[%s2 + $0x120] sm:$0xff]
        %v490 = vld [vmem:[%s2 + $0x128] sm:$0xff]
        %v491 = vld [vmem:[%s2 + $0x130] sm:$0xff]
        %v492 = vld [vmem:[%s2 + $0x138] sm:$0xff]
        %v493 = vld [vmem:[%s2 + $0x140] sm:$0xff]
        %v494 = vld [vmem:[%s2 + $0x148] sm:$0xff]
        %v495 = vld [vmem:[%s2 + $0x150] sm:$0xff]
        %v496 = vld [vmem:[%s2 + $0x158] sm:$0xff]
        %v497 = vld [vmem:[%s2 + $0x160] sm:$0xff]
        %v498 = vld [vmem:[%s2 + $0x168] sm:$0xff]
        %v499 = vld [vmem:[%s2 + $0x170] sm:$0xff]
        %v500 = vld [vmem:[%s2 + $0x178] sm:$0xff]
        %v501 = vld [vmem:[%s2 + $0x180] sm:$0xff]
        %v502 = vld [vmem:[%s2 + $0x188] sm:$0xff]
        %v503 = vld [vmem:[%s2 + $0x190] sm:$0xff]
        %v504 = vld [vmem:[%s2 + $0x198] sm:$0xff]
        %v505 = vld [vmem:[%s2 + $0x1a0] sm:$0xff]
        %v506 = vld [vmem:[%s2 + $0x1a8] sm:$0xff]
        %v507 = vld [vmem:[%s2 + $0x1b0] sm:$0xff]
        %v508 = vld [vmem:[%s2 + $0x1b8] sm:$0xff]
        %v509 = vld [vmem:[%s2 + $0x1c0] sm:$0xff]
        %v510 = vld [vmem:[%s2 + $0x1c8] sm:$0xff]
        %v511 = vld [vmem:[%s2 + $0x1d0] sm:$0xff]
        %v512 = vld [vmem:[%s2 + $0x1d8] sm:$0xff]
        %v513 = vld [vmem:[%s2 + $0x1e0] sm:$0xff]
        %v514 = vld [vmem:[%s2 + $0x1e8] sm:$0xff]
        %v515 = vld [vmem:[%s2 + $0x1f0] sm:$0xff]
        %v516 = vld [vmem:[%s2 + $0x1f8] sm:$0xff]
        %v517 = vld [vmem:[%s2 + $0x200] sm:$0xff]
        %v518 = vld [vmem:[%s2 + $0x208] sm:$0xff]
        %v519 = vld [vmem:[%s2 + $0x210] sm:$0xff]
        %v520 = vld [vmem:[%s2 + $0x218] sm:$0xff]
        %v521 = vld [vmem:[%s2 + $0x220] sm:$0xff]
        %v522 = vld [vmem:[%s2 + $0x228] sm:$0xff]
        %v523 = vld [vmem:[%s2 + $0x230] sm:$0xff]
        %v524 = vld [vmem:[%s2 + $0x238] sm:$0xff]
        %v525 = vld [vmem:[%s2 + $0x240] sm:$0xff]
        %v526 = vld [vmem:[%s2 + $0x248] sm:$0xff]
        %v527 = vld [vmem:[%s2 + $0x250] sm:$0xff]
        %v528 = vld [vmem:[%s2 + $0x258] sm:$0xff]
        %v529 = vld [vmem:[%s2 + $0x260] sm:$0xff]
        %v530 = vld [vmem:[%s2 + $0x268] sm:$0xff]
        %v531 = vld [vmem:[%s2 + $0x270] sm:$0xff]
        %v532 = vld [vmem:[%s2 + $0x278] sm:$0xff]
        %v533 = vld [vmem:[%s2 + $0x280] sm:$0xff]
        %v534 = vld [vmem:[%s2 + $0x288] sm:$0xff]
        %v535 = vld [vmem:[%s2 + $0x290] sm:$0xff]
        %v536 = vld [vmem:[%s2 + $0x298] sm:$0xff]
        %v537 = vld [vmem:[%s2 + $0x2a0] sm:$0xff]
        %v538 = vld [vmem:[%s2 + $0x2a8] sm:$0xff]
        %v539 = vld [vmem:[%s2 + $0x2b0] sm:$0xff]
        %v540 = vld [vmem:[%s2 + $0x2b8] sm:$0xff]
        %v541 = vld [vmem:[%s2 + $0x2c0] sm:$0xff]
        %v542 = vld [vmem:[%s2 + $0x2c8] sm:$0xff]
        %v543 = vld [vmem:[%s2 + $0x2d0] sm:$0xff]
        %v544 = vld [vmem:[%s2 + $0x2d8] sm:$0xff]
        %v545 = vld [vmem:[%s2 + $0x2e0] sm:$0xff]
        %v546 = vld [vmem:[%s2 + $0x2e8] sm:$0xff]
        %v547 = vld [vmem:[%s2 + $0x2f0] sm:$0xff]
        %v548 = vld [vmem:[%s2 + $0x2f8] sm:$0xff]
        %v549 = vld [vmem:[%s2 + $0x300] sm:$0xff]
        %v550 = vld [vmem:[%s2 + $0x308] sm:$0xff]
        %v551 = vld [vmem:[%s2 + $0x310] sm:$0xff]
        %v552 = vld [vmem:[%s2 + $0x318] sm:$0xff]
        %v553 = vld [vmem:[%s2 + $0x320] sm:$0xff]
        %v554 = vld [vmem:[%s2 + $0x328] sm:$0xff]
        %v555 = vld [vmem:[%s2 + $0x330] sm:$0xff]
        %v556 = vld [vmem:[%s2 + $0x338] sm:$0xff]
        %v557 = vld [vmem:[%s2 + $0x340] sm:$0xff]
        %v558 = vld [vmem:[%s2 + $0x348] sm:$0xff]
        %v559 = vld [vmem:[%s2 + $0x350] sm:$0xff]
        %v560 = vld [vmem:[%s2 + $0x358] sm:$0xff]
        %v561 = vld [vmem:[%s2 + $0x360] sm:$0xff]
        %v562 = vld [vmem:[%s2 + $0x368] sm:$0xff]
        %v563 = vld [vmem:[%s2 + $0x370] sm:$0xff]
        %v564 = vld [vmem:[%s2 + $0x378] sm:$0xff]
        %v565 = vld [vmem:[%s2 + $0x380] sm:$0xff]
        %v566 = vld [vmem:[%s2 + $0x388] sm:$0xff]
        %v567 = vld [vmem:[%s2 + $0x390] sm:$0xff]
        %v568 = vld [vmem:[%s2 + $0x398] sm:$0xff]
        %v569 = vld [vmem:[%s2 + $0x3a0] sm:$0xff]
        %v570 = vld [vmem:[%s2 + $0x3a8] sm:$0xff]
        %v571 = vld [vmem:[%s2 + $0x3b0] sm:$0xff]
        %v572 = vld [vmem:[%s2 + $0x3b8] sm:$0xff]
        %v573 = vld [vmem:[%s2 + $0x3c0] sm:$0xff]
        %v574 = vld [vmem:[%s2 + $0x3c8] sm:$0xff]
        %v575 = vld [vmem:[%s2 + $0x3d0] sm:$0xff]
        %v576 = vld [vmem:[%s2 + $0x3d8] sm:$0xff]
        %v577 = vld [vmem:[%s2 + $0x3e0] sm:$0xff]
        %v578 = vld [vmem:[%s2 + $0x3e8] sm:$0xff]
        %v579 = vld [vmem:[%s2 + $0x3f0] sm:$0xff]
        %v580 = vld [vmem:[%s2 + $0x3f8] sm:$0xff]
        %v581 = vld [vmem:[%s2 + $0x400] sm:$0xff]
        %v582 = vld [vmem:[%s2 + $0x408] sm:$0xff]
        %v583 = vld [vmem:[%s2 + $0x410] sm:$0xff]
        %v584 = vld [vmem:[%s2 + $0x418] sm:$0xff]
        %v585 = vld [vmem:[%s2 + $0x420] sm:$0xff]
        %v586 = vld [vmem:[%s2 + $0x428] sm:$0xff]
        %v587 = vld [vmem:[%s2 + $0x430] sm:$0xff]
        %v588 = vld [vmem:[%s2 + $0x438] sm:$0xff]
        %v589 = vld [vmem:[%s2 + $0x440] sm:$0xff]
        %v590 = vld [vmem:[%s2 + $0x448] sm:$0xff]
        %v591 = vld [vmem:[%s2 + $0x450] sm:$0xff]
        %v592 = vld [vmem:[%s2 + $0x458] sm:$0xff]
        %v593 = vld [vmem:[%s2 + $0x460] sm:$0xff]
        %v594 = vld [vmem:[%s2 + $0x468] sm:$0xff]
        %v595 = vld [vmem:[%s2 + $0x470] sm:$0xff]
        %v596 = vld [vmem:[%s2 + $0x478] sm:$0xff]
        %v597 = vld [vmem:[%s2 + $0x480] sm:$0xff]
        %v598 = vld [vmem:[%s2 + $0x488] sm:$0xff]
        %v599 = vld [vmem:[%s2 + $0x490] sm:$0xff]
        %v600 = vld [vmem:[%s2 + $0x498] sm:$0xff]
        %v601 = vld [vmem:[%s2 + $0x4a0] sm:$0xff]
        %v602 = vld [vmem:[%s2 + $0x4a8] sm:$0xff]
        %v603 = vld [vmem:[%s2 + $0x4b0] sm:$0xff]
        %v604 = vld [vmem:[%s2 + $0x4b8] sm:$0xff]
        %v605 = vld [vmem:[%s2 + $0x4c0] sm:$0xff]
        %v606 = vld [vmem:[%s2 + $0x4c8] sm:$0xff]
        %v607 = vld [vmem:[%s2 + $0x4d0] sm:$0xff]
        %v608 = vld [vmem:[%s2 + $0x4d8] sm:$0xff]
        %v609 = vld [vmem:[%s2 + $0x4e0] sm:$0xff]
        %v610 = vld [vmem:[%s2 + $0x4e8] sm:$0xff]
        %v611 = vld [vmem:[%s2 + $0x4f0] sm:$0xff]
        %v612 = vld [vmem:[%s2 + $0x4f8] sm:$0xff]
        %v613 = vld [vmem:[%s2 + $0x500] sm:$0xff]
        %v614 = vld [vmem:[%s2 + $0x508] sm:$0xff]
        %v615 = vld [vmem:[%s2 + $0x510] sm:$0xff]
        %v616 = vld [vmem:[%s2 + $0x518] sm:$0xff]
        %v617 = vld [vmem:[%s2 + $0x520] sm:$0xff]
        %v618 = vld [vmem:[%s2 + $0x528] sm:$0xff]
        %v619 = vld [vmem:[%s2 + $0x530] sm:$0xff]
        %v620 = vld [vmem:[%s2 + $0x538] sm:$0xff]
        %v621 = vld [vmem:[%s2 + $0x540] sm:$0xff]
        %v622 = vld [vmem:[%s2 + $0x548] sm:$0xff]
        %v623 = vld [vmem:[%s2 + $0x550] sm:$0xff]
        %v624 = vld [vmem:[%s2 + $0x558] sm:$0xff]
        %v625 = vld [vmem:[%s2 + $0x560] sm:$0xff]
        %v626 = vld [vmem:[%s2 + $0x568] sm:$0xff]
        %v627 = vld [vmem:[%s2 + $0x570] sm:$0xff]
        %v628 = vld [vmem:[%s2 + $0x578] sm:$0xff]
        %v629 = vld [vmem:[%s2 + $0x580] sm:$0xff]
        %v630 = vld [vmem:[%s2 + $0x588] sm:$0xff]
        %v631 = vld [vmem:[%s2 + $0x590] sm:$0xff]
        %v632 = vld [vmem:[%s2 + $0x598] sm:$0xff]
        %v633 = vld [vmem:[%s2 + $0x5a0] sm:$0xff]
        %v634 = vld [vmem:[%s2 + $0x5a8] sm:$0xff]
        %v635 = vld [vmem:[%s2 + $0x5b0] sm:$0xff]
        %v636 = vld [vmem:[%s2 + $0x5b8] sm:$0xff]
        %v637 = vld [vmem:[%s2 + $0x5c0] sm:$0xff]
        %v638 = vld [vmem:[%s2 + $0x5c8] sm:$0xff]
        %v639 = vld [vmem:[%s2 + $0x5d0] sm:$0xff]
        %v640 = vld [vmem:[%s2 + $0x5d8] sm:$0xff]
        %v641 = vld [vmem:[%s2 + $0x5e0] sm:$0xff]
        %v642 = vld [vmem:[%s2 + $0x5e8] sm:$0xff]
        %v643 = vld [vmem:[%s2 + $0x5f0] sm:$0xff]
        %v644 = vld [vmem:[%s2 + $0x5f8] sm:$0xff]
        %v645 = vld [vmem:[%s2 + $0x600] sm:$0xff]
        %v646 = vld [vmem:[%s2 + $0x608] sm:$0xff]
        %v647 = vld [vmem:[%s2 + $0x610] sm:$0xff]
        %v648 = vld [vmem:[%s2 + $0x618] sm:$0xff]
        %v649 = vld [vmem:[%s2 + $0x620] sm:$0xff]
        %v650 = vld [vmem:[%s2 + $0x628] sm:$0xff]
        %v651 = vld [vmem:[%s2 + $0x630] sm:$0xff]
        %v652 = vld [vmem:[%s2 + $0x638] sm:$0xff]
        %v653 = vld [vmem:[%s2 + $0x640] sm:$0xff]
        %v654 = vld [vmem:[%s2 + $0x648] sm:$0xff]
        %v655 = vld [vmem:[%s2 + $0x650] sm:$0xff]
        %v656 = vld [vmem:[%s2 + $0x658] sm:$0xff]
        %v657 = vld [vmem:[%s2 + $0x660] sm:$0xff]
        %v658 = vld [vmem:[%s2 + $0x668] sm:$0xff]
        %v659 = vld [vmem:[%s2 + $0x670] sm:$0xff]
        %v660 = vld [vmem:[%s2 + $0x678] sm:$0xff]
        %v661 = vld [vmem:[%s2 + $0x680] sm:$0xff]
        %v662 = vld [vmem:[%s2 + $0x688] sm:$0xff]
        %v663 = vld [vmem:[%s2 + $0x690] sm:$0xff]
        %v664 = vld [vmem:[%s2 + $0x698] sm:$0xff]
        %v665 = vld [vmem:[%s2 + $0x6a0] sm:$0xff]
        %v666 = vld [vmem:[%s2 + $0x6a8] sm:$0xff]
        %v667 = vld [vmem:[%s2 + $0x6b0] sm:$0xff]
        %v668 = vld [vmem:[%s2 + $0x6b8] sm:$0xff]
        %v669 = vld [vmem:[%s2 + $0x6c0] sm:$0xff]
        %v670 = vld [vmem:[%s2 + $0x6c8] sm:$0xff]
        %v671 = vld [vmem:[%s2 + $0x6d0] sm:$0xff]
        %v672 = vld [vmem:[%s2 + $0x6d8] sm:$0xff]
        %v673 = vld [vmem:[%s2 + $0x6e0] sm:$0xff]
        %v674 = vld [vmem:[%s2 + $0x6e8] sm:$0xff]
        %v675 = vld [vmem:[%s2 + $0x6f0] sm:$0xff]
        %v676 = vld [vmem:[%s2 + $0x6f8] sm:$0xff]
        %v677 = vld [vmem:[%s2 + $0x700] sm:$0xff]
        %v678 = vld [vmem:[%s2 + $0x708] sm:$0xff]
        %v679 = vld [vmem:[%s2 + $0x710] sm:$0xff]
        %v680 = vld [vmem:[%s2 + $0x718] sm:$0xff]
        %v681 = vld [vmem:[%s2 + $0x720] sm:$0xff]
        %v682 = vld [vmem:[%s2 + $0x728] sm:$0xff]
        %v683 = vld [vmem:[%s2 + $0x730] sm:$0xff]
        %v684 = vld [vmem:[%s2 + $0x738] sm:$0xff]
        %v685 = vld [vmem:[%s2 + $0x740] sm:$0xff]
        %v686 = vld [vmem:[%s2 + $0x748] sm:$0xff]
        %v687 = vld [vmem:[%s2 + $0x750] sm:$0xff]
        %v688 = vld [vmem:[%s2 + $0x758] sm:$0xff]
        %v689 = vld [vmem:[%s2 + $0x760] sm:$0xff]
        %v690 = vld [vmem:[%s2 + $0x768] sm:$0xff]
        %v691 = vld [vmem:[%s2 + $0x770] sm:$0xff]
        %v692 = vld [vmem:[%s2 + $0x778] sm:$0xff]
        %v693 = vld [vmem:[%s2 + $0x780] sm:$0xff]
        %v694 = vld [vmem:[%s2 + $0x788] sm:$0xff]
        %v695 = vld [vmem:[%s2 + $0x790] sm:$0xff]
        %v696 = vld [vmem:[%s2 + $0x798] sm:$0xff]
        %v697 = vld [vmem:[%s2 + $0x7a0] sm:$0xff]
        %v698 = vld [vmem:[%s2 + $0x7a8] sm:$0xff]
        %v699 = vld [vmem:[%s2 + $0x7b0] sm:$0xff]
        %v700 = vld [vmem:[%s2 + $0x7b8] sm:$0xff]
        %v701 = vld [vmem:[%s2 + $0x7c0] sm:$0xff]
        %v702 = vld [vmem:[%s2 + $0x7c8] sm:$0xff]
        %v703 = vld [vmem:[%s2 + $0x7d0] sm:$0xff]
        %v704 = vld [vmem:[%s2 + $0x7d8] sm:$0xff]
        %v705 = vld [vmem:[%s2 + $0x7e0] sm:$0xff]
        %v706 = vld [vmem:[%s2 + $0x7e8] sm:$0xff]
        %v707 = vld [vmem:[%s2 + $0x7f0] sm:$0xff]
        %v708 = vld [vmem:[%s2 + $0x7f8] sm:$0xff]
        %v709 = vld [vmem:[%s2 + $0x800] sm:$0xff]
        %v710 = vld [vmem:[%s2 + $0x808] sm:$0xff]
        %v711 = vld [vmem:[%s2 + $0x810] sm:$0xff]
        %v712 = vld [vmem:[%s2 + $0x818] sm:$0xff]
        %v713 = vld [vmem:[%s2 + $0x820] sm:$0xff]
        %v714 = vld [vmem:[%s2 + $0x828] sm:$0xff]
        %v715 = vld [vmem:[%s2 + $0x830] sm:$0xff]
        %v716 = vld [vmem:[%s2 + $0x838] sm:$0xff]
        %v717 = vld [vmem:[%s2 + $0x840] sm:$0xff]
        %v718 = vld [vmem:[%s2 + $0x848] sm:$0xff]
        %v719 = vld [vmem:[%s2 + $0x850] sm:$0xff]
        %v720 = vld [vmem:[%s2 + $0x858] sm:$0xff]
        %v721 = vld [vmem:[%s2 + $0x860] sm:$0xff]
        %v722 = vld [vmem:[%s2 + $0x868] sm:$0xff]
        %v723 = vld [vmem:[%s2 + $0x870] sm:$0xff]
        %v724 = vld [vmem:[%s2 + $0x878] sm:$0xff]
        %v725 = vld [vmem:[%s2 + $0x880] sm:$0xff]
        %v726 = vld [vmem:[%s2 + $0x888] sm:$0xff]
        %v727 = vld [vmem:[%s2 + $0x890] sm:$0xff]
        %v728 = vld [vmem:[%s2 + $0x898] sm:$0xff]
        %v729 = vld [vmem:[%s2 + $0x8a0] sm:$0xff]
        %v730 = vld [vmem:[%s2 + $0x8a8] sm:$0xff]
        %v731 = vld [vmem:[%s2 + $0x8b0] sm:$0xff]
        %v732 = vld [vmem:[%s2 + $0x8b8] sm:$0xff]
        %v733 = vld [vmem:[%s2 + $0x8c0] sm:$0xff]
        %v734 = vld [vmem:[%s2 + $0x8c8] sm:$0xff]
        %v735 = vld [vmem:[%s2 + $0x8d0] sm:$0xff]
        %v736 = vld [vmem:[%s2 + $0x8d8] sm:$0xff]
        %v737 = vld [vmem:[%s2 + $0x8e0] sm:$0xff]
        %v738 = vld [vmem:[%s2 + $0x8e8] sm:$0xff]
        %v739 = vld [vmem:[%s2 + $0x8f0] sm:$0xff]
        %v740 = vld [vmem:[%s2 + $0x8f8] sm:$0xff]
        %v741 = vld [vmem:[%s2 + $0x900] sm:$0xff]
        %v742 = vld [vmem:[%s2 + $0x908] sm:$0xff]
        %v743 = vld [vmem:[%s2 + $0x910] sm:$0xff]
        %v744 = vld [vmem:[%s2 + $0x918] sm:$0xff]
        %v745 = vld [vmem:[%s2 + $0x920] sm:$0xff]
        %v746 = vld [vmem:[%s2 + $0x928] sm:$0xff]
        %v747 = vld [vmem:[%s2 + $0x930] sm:$0xff]
        %v748 = vld [vmem:[%s2 + $0x938] sm:$0xff]
        %v749 = vld [vmem:[%s2 + $0x940] sm:$0xff]
        %v750 = vld [vmem:[%s2 + $0x948] sm:$0xff]
        %v751 = vld [vmem:[%s2 + $0x950] sm:$0xff]
        %v752 = vld [vmem:[%s2 + $0x958] sm:$0xff]
        %v753 = vld [vmem:[%s2 + $0x960] sm:$0xff]
        %v754 = vld [vmem:[%s2 + $0x968] sm:$0xff]
        %v755 = vld [vmem:[%s2 + $0x970] sm:$0xff]
        %v756 = vld [vmem:[%s2 + $0x978] sm:$0xff]
        %v757 = vld [vmem:[%s2 + $0x980] sm:$0xff]
        %v758 = vld [vmem:[%s2 + $0x988] sm:$0xff]
        %v759 = vld [vmem:[%s2 + $0x990] sm:$0xff]
        %v760 = vld [vmem:[%s2 + $0x998] sm:$0xff]
        %v761 = vld [vmem:[%s2 + $0x9a0] sm:$0xff]
        %v762 = vld [vmem:[%s2 + $0x9a8] sm:$0xff]
        %v763 = vld [vmem:[%s2 + $0x9b0] sm:$0xff]
        %v764 = vld [vmem:[%s2 + $0x9b8] sm:$0xff]
        %v765 = vld [vmem:[%s2 + $0x9c0] sm:$0xff]
        %v766 = vld [vmem:[%s2 + $0x9c8] sm:$0xff]
        %v767 = vld [vmem:[%s2 + $0x9d0] sm:$0xff]
        %v768 = vld [vmem:[%s2 + $0x9d8] sm:$0xff]
        %v769 = vld [vmem:[%s2 + $0x9e0] sm:$0xff]
        %v770 = vld [vmem:[%s2 + $0x9e8] sm:$0xff]
        %v771 = vld [vmem:[%s2 + $0x9f0] sm:$0xff]
        %v772 = vld [vmem:[%s2 + $0x9f8] sm:$0xff]
        %v773 = vld [vmem:[%s2 + $0xa00] sm:$0xff]
        %v774 = vld [vmem:[%s2 + $0xa08] sm:$0xff]
        %v775 = vld [vmem:[%s2 + $0xa10] sm:$0xff]
        %v776 = vld [vmem:[%s2 + $0xa18] sm:$0xff]
        %v777 = vld [vmem:[%s2 + $0xa20] sm:$0xff]
        %v778 = vld [vmem:[%s2 + $0xa28] sm:$0xff]
        %v779 = vld [vmem:[%s2 + $0xa30] sm:$0xff]
        %v780 = vld [vmem:[%s2 + $0xa38] sm:$0xff]
        %v781 = vld [vmem:[%s2 + $0xa40] sm:$0xff]
        %v782 = vld [vmem:[%s2 + $0xa48] sm:$0xff]
        %v783 = vld [vmem:[%s2 + $0xa50] sm:$0xff]
        %v784 = vld [vmem:[%s2 + $0xa58] sm:$0xff]
        %v785 = vld [vmem:[%s2 + $0xa60] sm:$0xff]
        %v786 = vld [vmem:[%s2 + $0xa68] sm:$0xff]
        %v787 = vld [vmem:[%s2 + $0xa70] sm:$0xff]
        %v788 = vld [vmem:[%s2 + $0xa78] sm:$0xff]
        %v789 = vld [vmem:[%s2 + $0xa80] sm:$0xff]
        %v790 = vld [vmem:[%s2 + $0xa88] sm:$0xff]
        %v791 = vld [vmem:[%s2 + $0xa90] sm:$0xff]
        %v792 = vld [vmem:[%s2 + $0xa98] sm:$0xff]
        %v793 = vld [vmem:[%s2 + $0xaa0] sm:$0xff]
        %v794 = vld [vmem:[%s2 + $0xaa8] sm:$0xff]
        %v795 = vld [vmem:[%s2 + $0xab0] sm:$0xff]
        %v796 = vld [vmem:[%s2 + $0xab8] sm:$0xff]
        %v797 = vld [vmem:[%s2 + $0xac0] sm:$0xff]
        %v798 = vld [vmem:[%s2 + $0xac8] sm:$0xff]
        %v799 = vld [vmem:[%s2 + $0xad0] sm:$0xff]
        %v800 = vld [vmem:[%s2 + $0xad8] sm:$0xff]
        %v801 = vld [vmem:[%s2 + $0xae0] sm:$0xff]
        %v802 = vld [vmem:[%s2 + $0xae8] sm:$0xff]
        %v803 = vld [vmem:[%s2 + $0xaf0] sm:$0xff]
        %v804 = vld [vmem:[%s2 + $0xaf8] sm:$0xff]
        %v805 = vld [vmem:[%s2 + $0xb00] sm:$0xff]
        %v806 = vld [vmem:[%s2 + $0xb08] sm:$0xff]
        %v807 = vld [vmem:[%s2 + $0xb10] sm:$0xff]
        %v808 = vld [vmem:[%s2 + $0xb18] sm:$0xff]
        %v809 = vld [vmem:[%s2 + $0xb20] sm:$0xff]
        %v810 = vld [vmem:[%s2 + $0xb28] sm:$0xff]
        %v811 = vld [vmem:[%s2 + $0xb30] sm:$0xff]
        %v812 = vld [vmem:[%s2 + $0xb38] sm:$0xff]
        %v813 = vld [vmem:[%s2 + $0xb40] sm:$0xff]
        %v814 = vld [vmem:[%s2 + $0xb48] sm:$0xff]
        %v815 = vld [vmem:[%s2 + $0xb50] sm:$0xff]
        %v816 = vld [vmem:[%s2 + $0xb58] sm:$0xff]
        %v817 = vld [vmem:[%s2 + $0xb60] sm:$0xff]
        %v818 = vld [vmem:[%s2 + $0xb68] sm:$0xff]
        %v819 = vld [vmem:[%s2 + $0xb70] sm:$0xff]
        %v820 = vld [vmem:[%s2 + $0xb78] sm:$0xff]
        %v821 = vld [vmem:[%s2 + $0xb80] sm:$0xff]
        %v822 = vld [vmem:[%s2 + $0xb88] sm:$0xff]
        %v823 = vld [vmem:[%s2 + $0xb90] sm:$0xff]
        %v824 = vld [vmem:[%s2 + $0xb98] sm:$0xff]
        %v825 = vld [vmem:[%s2 + $0xba0] sm:$0xff]
        %v826 = vld [vmem:[%s2 + $0xba8] sm:$0xff]
        %v827 = vld [vmem:[%s2 + $0xbb0] sm:$0xff]
        %v828 = vld [vmem:[%s2 + $0xbb8] sm:$0xff]
        %v829 = vld [vmem:[%s2 + $0xbc0] sm:$0xff]
        %v830 = vld [vmem:[%s2 + $0xbc8] sm:$0xff]
        %v831 = vld [vmem:[%s2 + $0xbd0] sm:$0xff]
        %v832 = vld [vmem:[%s2 + $0xbd8] sm:$0xff]
        %v833 = vld [vmem:[%s2 + $0xbe0] sm:$0xff]
        %v834 = vld [vmem:[%s2 + $0xbe8] sm:$0xff]
        %v835 = vld [vmem:[%s2 + $0xbf0] sm:$0xff]
        %v836 = vld [vmem:[%s2 + $0xbf8] sm:$0xff]
        %v901 = vunpack.c.l.b16 %v389
        %v902 = vunpack.c.h.b16 %v389
        %v903 = vunpack.c.l.b16 %v390
        %v904 = vunpack.c.h.b16 %v390
        %v905 = vunpack.c.l.b16 %v391
        %v906 = vunpack.c.h.b16 %v391
        %v907 = vunpack.c.l.b16 %v392
        %v908 = vunpack.c.h.b16 %v392
        %v909 = vunpack.c.l.b16 %v393
        %v910 = vunpack.c.h.b16 %v393
        %v911 = vunpack.c.l.b16 %v394
        %v912 = vunpack.c.h.b16 %v394
        %v913 = vunpack.c.l.b16 %v395
        %v914 = vunpack.c.h.b16 %v395
        %v915 = vunpack.c.l.b16 %v396
        %v916 = vunpack.c.h.b16 %v396
        %v917 = vunpack.c.l.b16 %v397
        %v918 = vunpack.c.h.b16 %v397
        %v919 = vunpack.c.l.b16 %v398
        %v920 = vunpack.c.h.b16 %v398
        %v921 = vunpack.c.l.b16 %v399
        %v922 = vunpack.c.h.b16 %v399
        %v923 = vunpack.c.l.b16 %v400
        %v924 = vunpack.c.h.b16 %v400
        %v925 = vunpack.c.l.b16 %v401
        %v926 = vunpack.c.h.b16 %v401
        %v927 = vunpack.c.l.b16 %v402
        %v928 = vunpack.c.h.b16 %v402
        %v929 = vunpack.c.l.b16 %v403
        %v930 = vunpack.c.h.b16 %v403
        %v931 = vunpack.c.l.b16 %v404
        %v932 = vunpack.c.h.b16 %v404
        %v933 = vunpack.c.l.b16 %v405
        %v934 = vunpack.c.h.b16 %v405
        %v935 = vunpack.c.l.b16 %v406
        %v936 = vunpack.c.h.b16 %v406
        %v937 = vunpack.c.l.b16 %v407
        %v938 = vunpack.c.h.b16 %v407
        %v939 = vunpack.c.l.b16 %v408
        %v940 = vunpack.c.h.b16 %v408
        %v941 = vunpack.c.l.b16 %v409
        %v942 = vunpack.c.h.b16 %v409
        %v943 = vunpack.c.l.b16 %v410
        %v944 = vunpack.c.h.b16 %v410
        %v945 = vunpack.c.l.b16 %v411
        %v946 = vunpack.c.h.b16 %v411
        %v947 = vunpack.c.l.b16 %v412
        %v948 = vunpack.c.h.b16 %v412
        %v949 = vunpack.c.l.b16 %v413
        %v950 = vunpack.c.h.b16 %v413
        %v951 = vunpack.c.l.b16 %v414
        %v952 = vunpack.c.h.b16 %v414
        %v953 = vunpack.c.l.b16 %v415
        %v954 = vunpack.c.h.b16 %v415
        %v955 = vunpack.c.l.b16 %v416
        %v956 = vunpack.c.h.b16 %v416
        %v957 = vunpack.c.l.b16 %v417
        %v958 = vunpack.c.h.b16 %v417
        %v959 = vunpack.c.l.b16 %v418
        %v960 = vunpack.c.h.b16 %v418
        %v961 = vunpack.c.l.b16 %v419
        %v962 = vunpack.c.h.b16 %v419
        %v963 = vunpack.c.l.b16 %v420
        %v964 = vunpack.c.h.b16 %v420
        %v965 = vunpack.c.l.b16 %v421
        %v966 = vunpack.c.h.b16 %v421
        %v967 = vunpack.c.l.b16 %v422
        %v968 = vunpack.c.h.b16 %v422
        %v969 = vunpack.c.l.b16 %v423
        %v970 = vunpack.c.h.b16 %v423
        %v971 = vunpack.c.l.b16 %v424
        %v972 = vunpack.c.h.b16 %v424
        %v973 = vunpack.c.l.b16 %v425
        %v974 = vunpack.c.h.b16 %v425
        %v975 = vunpack.c.l.b16 %v426
        %v976 = vunpack.c.h.b16 %v426
        %v977 = vunpack.c.l.b16 %v427
        %v978 = vunpack.c.h.b16 %v427
        %v979 = vunpack.c.l.b16 %v428
        %v980 = vunpack.c.h.b16 %v428
        %v981 = vunpack.c.l.b16 %v429
        %v982 = vunpack.c.h.b16 %v429
        %v983 = vunpack.c.l.b16 %v430
        %v984 = vunpack.c.h.b16 %v430
        %v985 = vunpack.c.l.b16 %v431
        %v986 = vunpack.c.h.b16 %v431
        %v987 = vunpack.c.l.b16 %v432
        %v988 = vunpack.c.h.b16 %v432
        %v989 = vunpack.c.l.b16 %v433
        %v990 = vunpack.c.h.b16 %v433
        %v991 = vunpack.c.l.b16 %v434
        %v992 = vunpack.c.h.b16 %v434
        %v993 = vunpack.c.l.b16 %v435
        %v994 = vunpack.c.h.b16 %v435
        %v995 = vunpack.c.l.b16 %v436
        %v996 = vunpack.c.h.b16 %v436
        %v997 = vunpack.c.l.b16 %v437
        %v998 = vunpack.c.h.b16 %v437
        %v999 = vunpack.c.l.b16 %v438
        %v1000 = vunpack.c.h.b16 %v438
        %v1001 = vunpack.c.l.b16 %v439
        %v1002 = vunpack.c.h.b16 %v439
        %v1003 = vunpack.c.l.b16 %v440
        %v1004 = vunpack.c.h.b16 %v440
        %v1005 = vunpack.c.l.b16 %v441
        %v1006 = vunpack.c.h.b16 %v441
        %v1007 = vunpack.c.l.b16 %v442
        %v1008 = vunpack.c.h.b16 %v442
        %v1009 = vunpack.c.l.b16 %v443
        %v1010 = vunpack.c.h.b16 %v443
        %v1011 = vunpack.c.l.b16 %v444
        %v1012 = vunpack.c.h.b16 %v444
        %v1013 = vunpack.c.l.b16 %v445
        %v1014 = vunpack.c.h.b16 %v445
        %v1015 = vunpack.c.l.b16 %v446
        %v1016 = vunpack.c.h.b16 %v446
        %v1017 = vunpack.c.l.b16 %v447
        %v1018 = vunpack.c.h.b16 %v447
        %v1019 = vunpack.c.l.b16 %v448
        %v1020 = vunpack.c.h.b16 %v448
        %v1021 = vunpack.c.l.b16 %v449
        %v1022 = vunpack.c.h.b16 %v449
        %v1023 = vunpack.c.l.b16 %v450
        %v1024 = vunpack.c.h.b16 %v450
        %v1025 = vunpack.c.l.b16 %v451
        %v1026 = vunpack.c.h.b16 %v451
        %v1027 = vunpack.c.l.b16 %v452
        %v1028 = vunpack.c.h.b16 %v452
        %v1029 = vpack.c.b16 %v905, %v901
        %v1030 = vpack.c.b16 %v906, %v902
        %v1031 = vpack.c.b16 %v907, %v903
        %v1032 = vpack.c.b16 %v908, %v904
        %v1033 = vpack.c.b16 %v913, %v909
        %v1034 = vpack.c.b16 %v914, %v910
        %v1035 = vpack.c.b16 %v915, %v911
        %v1036 = vpack.c.b16 %v916, %v912
        %v1037 = vpack.c.b16 %v921, %v917
        %v1038 = vpack.c.b16 %v922, %v918
        %v1039 = vpack.c.b16 %v923, %v919
        %v1040 = vpack.c.b16 %v924, %v920
        %v1041 = vpack.c.b16 %v929, %v925
        %v1042 = vpack.c.b16 %v930, %v926
        %v1043 = vpack.c.b16 %v931, %v927
        %v1044 = vpack.c.b16 %v932, %v928
        %v1045 = vpack.c.b16 %v937, %v933
        %v1046 = vpack.c.b16 %v938, %v934
        %v1047 = vpack.c.b16 %v939, %v935
        %v1048 = vpack.c.b16 %v940, %v936
        %v1049 = vpack.c.b16 %v945, %v941
        %v1050 = vpack.c.b16 %v946, %v942
        %v1051 = vpack.c.b16 %v947, %v943
        %v1052 = vpack.c.b16 %v948, %v944
        %v1053 = vpack.c.b16 %v953, %v949
        %v1054 = vpack.c.b16 %v954, %v950
        %v1055 = vpack.c.b16 %v955, %v951
        %v1056 = vpack.c.b16 %v956, %v952
        %v1057 = vpack.c.b16 %v961, %v957
        %v1058 = vpack.c.b16 %v962, %v958
        %v1059 = vpack.c.b16 %v963, %v959
        %v1060 = vpack.c.b16 %v964, %v960
        %v1061 = vpack.c.b16 %v969, %v965
        %v1062 = vpack.c.b16 %v970, %v966
        %v1063 = vpack.c.b16 %v971, %v967
        %v1064 = vpack.c.b16 %v972, %v968
        %v1065 = vpack.c.b16 %v977, %v973
        %v1066 = vpack.c.b16 %v978, %v974
        %v1067 = vpack.c.b16 %v979, %v975
        %v1068 = vpack.c.b16 %v980, %v976
        %v1069 = vpack.c.b16 %v985, %v981
        %v1070 = vpack.c.b16 %v986, %v982
        %v1071 = vpack.c.b16 %v987, %v983
        %v1072 = vpack.c.b16 %v988, %v984
        %v1073 = vpack.c.b16 %v993, %v989
        %v1074 = vpack.c.b16 %v994, %v990
        %v1075 = vpack.c.b16 %v995, %v991
        %v1076 = vpack.c.b16 %v996, %v992
        %v1077 = vpack.c.b16 %v1001, %v997
        %v1078 = vpack.c.b16 %v1002, %v998
        %v1079 = vpack.c.b16 %v1003, %v999
        %v1080 = vpack.c.b16 %v1004, %v1000
        %v1081 = vpack.c.b16 %v1009, %v1005
        %v1082 = vpack.c.b16 %v1010, %v1006
        %v1083 = vpack.c.b16 %v1011, %v1007
        %v1084 = vpack.c.b16 %v1012, %v1008
        %v1085 = vpack.c.b16 %v1017, %v1013
        %v1086 = vpack.c.b16 %v1018, %v1014
        %v1087 = vpack.c.b16 %v1019, %v1015
        %v1088 = vpack.c.b16 %v1020, %v1016
        %v1089 = vpack.c.b16 %v1025, %v1021
        %v1090 = vpack.c.b16 %v1026, %v1022
        %v1091 = vpack.c.b16 %v1027, %v1023
        %v1092 = vpack.c.b16 %v1028, %v1024
        %v1541 = vunpack.c.l.b16 %v453
        %v1542 = vunpack.c.h.b16 %v453
        %v1543 = vunpack.c.l.b16 %v454
        %v1544 = vunpack.c.h.b16 %v454
        %v1545 = vunpack.c.l.b16 %v455
        %v1546 = vunpack.c.h.b16 %v455
        %v1547 = vunpack.c.l.b16 %v456
        %v1548 = vunpack.c.h.b16 %v456
        %v1549 = vunpack.c.l.b16 %v457
        %v1550 = vunpack.c.h.b16 %v457
        %v1551 = vunpack.c.l.b16 %v458
        %v1552 = vunpack.c.h.b16 %v458
        %v1553 = vunpack.c.l.b16 %v459
        %v1554 = vunpack.c.h.b16 %v459
        %v1555 = vunpack.c.l.b16 %v460
        %v1556 = vunpack.c.h.b16 %v460
        %v1557 = vunpack.c.l.b16 %v461
        %v1558 = vunpack.c.h.b16 %v461
        %v1559 = vunpack.c.l.b16 %v462
        %v1560 = vunpack.c.h.b16 %v462
        %v1561 = vunpack.c.l.b16 %v463
        %v1562 = vunpack.c.h.b16 %v463
        %v1563 = vunpack.c.l.b16 %v464
        %v1564 = vunpack.c.h.b16 %v464
        %v1565 = vunpack.c.l.b16 %v465
        %v1566 = vunpack.c.h.b16 %v465
        %v1567 = vunpack.c.l.b16 %v466
        %v1568 = vunpack.c.h.b16 %v466
        %v1569 = vunpack.c.l.b16 %v467
        %v1570 = vunpack.c.h.b16 %v467
        %v1571 = vunpack.c.l.b16 %v468
        %v1572 = vunpack.c.h.b16 %v468
        %v1573 = vunpack.c.l.b16 %v469
        %v1574 = vunpack.c.h.b16 %v469
        %v1575 = vunpack.c.l.b16 %v470
        %v1576 = vunpack.c.h.b16 %v470
        %v1577 = vunpack.c.l.b16 %v471
        %v1578 = vunpack.c.h.b16 %v471
        %v1579 = vunpack.c.l.b16 %v472
        %v1580 = vunpack.c.h.b16 %v472
        %v1581 = vunpack.c.l.b16 %v473
        %v1582 = vunpack.c.h.b16 %v473
        %v1583 = vunpack.c.l.b16 %v474
        %v1584 = vunpack.c.h.b16 %v474
        %v1585 = vunpack.c.l.b16 %v475
        %v1586 = vunpack.c.h.b16 %v475
        %v1587 = vunpack.c.l.b16 %v476
        %v1588 = vunpack.c.h.b16 %v476
        %v1589 = vunpack.c.l.b16 %v477
        %v1590 = vunpack.c.h.b16 %v477
        %v1591 = vunpack.c.l.b16 %v478
        %v1592 = vunpack.c.h.b16 %v478
        %v1593 = vunpack.c.l.b16 %v479
        %v1594 = vunpack.c.h.b16 %v479
        %v1595 = vunpack.c.l.b16 %v480
        %v1596 = vunpack.c.h.b16 %v480
        %v1597 = vunpack.c.l.b16 %v481
        %v1598 = vunpack.c.h.b16 %v481
        %v1599 = vunpack.c.l.b16 %v482
        %v1600 = vunpack.c.h.b16 %v482
        %v1601 = vunpack.c.l.b16 %v483
        %v1602 = vunpack.c.h.b16 %v483
        %v1603 = vunpack.c.l.b16 %v484
        %v1604 = vunpack.c.h.b16 %v484
        %v1605 = vunpack.c.l.b16 %v485
        %v1606 = vunpack.c.h.b16 %v485
        %v1607 = vunpack.c.l.b16 %v486
        %v1608 = vunpack.c.h.b16 %v486
        %v1609 = vunpack.c.l.b16 %v487
        %v1610 = vunpack.c.h.b16 %v487
        %v1611 = vunpack.c.l.b16 %v488
        %v1612 = vunpack.c.h.b16 %v488
        %v1613 = vunpack.c.l.b16 %v489
        %v1614 = vunpack.c.h.b16 %v489
        %v1615 = vunpack.c.l.b16 %v490
        %v1616 = vunpack.c.h.b16 %v490
        %v1617 = vunpack.c.l.b16 %v491
        %v1618 = vunpack.c.h.b16 %v491
        %v1619 = vunpack.c.l.b16 %v492
        %v1620 = vunpack.c.h.b16 %v492
        %v1621 = vunpack.c.l.b16 %v493
        %v1622 = vunpack.c.h.b16 %v493
        %v1623 = vunpack.c.l.b16 %v494
        %v1624 = vunpack.c.h.b16 %v494
        %v1625 = vunpack.c.l.b16 %v495
        %v1626 = vunpack.c.h.b16 %v495
        %v1627 = vunpack.c.l.b16 %v496
        %v1628 = vunpack.c.h.b16 %v496
        %v1629 = vunpack.c.l.b16 %v497
        %v1630 = vunpack.c.h.b16 %v497
        %v1631 = vunpack.c.l.b16 %v498
        %v1632 = vunpack.c.h.b16 %v498
        %v1633 = vunpack.c.l.b16 %v499
        %v1634 = vunpack.c.h.b16 %v499
        %v1635 = vunpack.c.l.b16 %v500
        %v1636 = vunpack.c.h.b16 %v500
        %v1637 = vunpack.c.l.b16 %v501
        %v1638 = vunpack.c.h.b16 %v501
        %v1639 = vunpack.c.l.b16 %v502
        %v1640 = vunpack.c.h.b16 %v502
        %v1641 = vunpack.c.l.b16 %v503
        %v1642 = vunpack.c.h.b16 %v503
        %v1643 = vunpack.c.l.b16 %v504
        %v1644 = vunpack.c.h.b16 %v504
        %v1645 = vunpack.c.l.b16 %v505
        %v1646 = vunpack.c.h.b16 %v505
        %v1647 = vunpack.c.l.b16 %v506
        %v1648 = vunpack.c.h.b16 %v506
        %v1649 = vunpack.c.l.b16 %v507
        %v1650 = vunpack.c.h.b16 %v507
        %v1651 = vunpack.c.l.b16 %v508
        %v1652 = vunpack.c.h.b16 %v508
        %v1653 = vunpack.c.l.b16 %v509
        %v1654 = vunpack.c.h.b16 %v509
        %v1655 = vunpack.c.l.b16 %v510
        %v1656 = vunpack.c.h.b16 %v510
        %v1657 = vunpack.c.l.b16 %v511
        %v1658 = vunpack.c.h.b16 %v511
        %v1659 = vunpack.c.l.b16 %v512
        %v1660 = vunpack.c.h.b16 %v512
        %v1661 = vunpack.c.l.b16 %v513
        %v1662 = vunpack.c.h.b16 %v513
        %v1663 = vunpack.c.l.b16 %v514
        %v1664 = vunpack.c.h.b16 %v514
        %v1665 = vunpack.c.l.b16 %v515
        %v1666 = vunpack.c.h.b16 %v515
        %v1667 = vunpack.c.l.b16 %v516
        %v1668 = vunpack.c.h.b16 %v516
        %v1669 = vunpack.c.l.b16 %v517
        %v1670 = vunpack.c.h.b16 %v517
        %v1671 = vunpack.c.l.b16 %v518
        %v1672 = vunpack.c.h.b16 %v518
        %v1673 = vunpack.c.l.b16 %v519
        %v1674 = vunpack.c.h.b16 %v519
        %v1675 = vunpack.c.l.b16 %v520
        %v1676 = vunpack.c.h.b16 %v520
        %v1677 = vunpack.c.l.b16 %v521
        %v1678 = vunpack.c.h.b16 %v521
        %v1679 = vunpack.c.l.b16 %v522
        %v1680 = vunpack.c.h.b16 %v522
        %v1681 = vunpack.c.l.b16 %v523
        %v1682 = vunpack.c.h.b16 %v523
        %v1683 = vunpack.c.l.b16 %v524
        %v1684 = vunpack.c.h.b16 %v524
        %v1685 = vunpack.c.l.b16 %v525
        %v1686 = vunpack.c.h.b16 %v525
        %v1687 = vunpack.c.l.b16 %v526
        %v1688 = vunpack.c.h.b16 %v526
        %v1689 = vunpack.c.l.b16 %v527
        %v1690 = vunpack.c.h.b16 %v527
        %v1691 = vunpack.c.l.b16 %v528
        %v1692 = vunpack.c.h.b16 %v528
        %v1693 = vunpack.c.l.b16 %v529
        %v1694 = vunpack.c.h.b16 %v529
        %v1695 = vunpack.c.l.b16 %v530
        %v1696 = vunpack.c.h.b16 %v530
        %v1697 = vunpack.c.l.b16 %v531
        %v1698 = vunpack.c.h.b16 %v531
        %v1699 = vunpack.c.l.b16 %v532
        %v1700 = vunpack.c.h.b16 %v532
        %v1701 = vunpack.c.l.b16 %v533
        %v1702 = vunpack.c.h.b16 %v533
        %v1703 = vunpack.c.l.b16 %v534
        %v1704 = vunpack.c.h.b16 %v534
        %v1705 = vunpack.c.l.b16 %v535
        %v1706 = vunpack.c.h.b16 %v535
        %v1707 = vunpack.c.l.b16 %v536
        %v1708 = vunpack.c.h.b16 %v536
        %v1709 = vunpack.c.l.b16 %v537
        %v1710 = vunpack.c.h.b16 %v537
        %v1711 = vunpack.c.l.b16 %v538
        %v1712 = vunpack.c.h.b16 %v538
        %v1713 = vunpack.c.l.b16 %v539
        %v1714 = vunpack.c.h.b16 %v539
        %v1715 = vunpack.c.l.b16 %v540
        %v1716 = vunpack.c.h.b16 %v540
        %v1717 = vunpack.c.l.b16 %v541
        %v1718 = vunpack.c.h.b16 %v541
        %v1719 = vunpack.c.l.b16 %v542
        %v1720 = vunpack.c.h.b16 %v542
        %v1721 = vunpack.c.l.b16 %v543
        %v1722 = vunpack.c.h.b16 %v543
        %v1723 = vunpack.c.l.b16 %v544
        %v1724 = vunpack.c.h.b16 %v544
        %v1725 = vunpack.c.l.b16 %v545
        %v1726 = vunpack.c.h.b16 %v545
        %v1727 = vunpack.c.l.b16 %v546
        %v1728 = vunpack.c.h.b16 %v546
        %v1729 = vunpack.c.l.b16 %v547
        %v1730 = vunpack.c.h.b16 %v547
        %v1731 = vunpack.c.l.b16 %v548
        %v1732 = vunpack.c.h.b16 %v548
        %v1733 = vunpack.c.l.b16 %v549
        %v1734 = vunpack.c.h.b16 %v549
        %v1735 = vunpack.c.l.b16 %v550
        %v1736 = vunpack.c.h.b16 %v550
        %v1737 = vunpack.c.l.b16 %v551
        %v1738 = vunpack.c.h.b16 %v551
        %v1739 = vunpack.c.l.b16 %v552
        %v1740 = vunpack.c.h.b16 %v552
        %v1741 = vunpack.c.l.b16 %v553
        %v1742 = vunpack.c.h.b16 %v553
        %v1743 = vunpack.c.l.b16 %v554
        %v1744 = vunpack.c.h.b16 %v554
        %v1745 = vunpack.c.l.b16 %v555
        %v1746 = vunpack.c.h.b16 %v555
        %v1747 = vunpack.c.l.b16 %v556
        %v1748 = vunpack.c.h.b16 %v556
        %v1749 = vunpack.c.l.b16 %v557
        %v1750 = vunpack.c.h.b16 %v557
        %v1751 = vunpack.c.l.b16 %v558
        %v1752 = vunpack.c.h.b16 %v558
        %v1753 = vunpack.c.l.b16 %v559
        %v1754 = vunpack.c.h.b16 %v559
        %v1755 = vunpack.c.l.b16 %v560
        %v1756 = vunpack.c.h.b16 %v560
        %v1757 = vunpack.c.l.b16 %v561
        %v1758 = vunpack.c.h.b16 %v561
        %v1759 = vunpack.c.l.b16 %v562
        %v1760 = vunpack.c.h.b16 %v562
        %v1761 = vunpack.c.l.b16 %v563
        %v1762 = vunpack.c.h.b16 %v563
        %v1763 = vunpack.c.l.b16 %v564
        %v1764 = vunpack.c.h.b16 %v564
        %v1765 = vunpack.c.l.b16 %v565
        %v1766 = vunpack.c.h.b16 %v565
        %v1767 = vunpack.c.l.b16 %v566
        %v1768 = vunpack.c.h.b16 %v566
        %v1769 = vunpack.c.l.b16 %v567
        %v1770 = vunpack.c.h.b16 %v567
        %v1771 = vunpack.c.l.b16 %v568
        %v1772 = vunpack.c.h.b16 %v568
        %v1773 = vunpack.c.l.b16 %v569
        %v1774 = vunpack.c.h.b16 %v569
        %v1775 = vunpack.c.l.b16 %v570
        %v1776 = vunpack.c.h.b16 %v570
        %v1777 = vunpack.c.l.b16 %v571
        %v1778 = vunpack.c.h.b16 %v571
        %v1779 = vunpack.c.l.b16 %v572
        %v1780 = vunpack.c.h.b16 %v572
        %v1781 = vunpack.c.l.b16 %v573
        %v1782 = vunpack.c.h.b16 %v573
        %v1783 = vunpack.c.l.b16 %v574
        %v1784 = vunpack.c.h.b16 %v574
        %v1785 = vunpack.c.l.b16 %v575
        %v1786 = vunpack.c.h.b16 %v575
        %v1787 = vunpack.c.l.b16 %v576
        %v1788 = vunpack.c.h.b16 %v576
        %v1789 = vunpack.c.l.b16 %v577
        %v1790 = vunpack.c.h.b16 %v577
        %v1791 = vunpack.c.l.b16 %v578
        %v1792 = vunpack.c.h.b16 %v578
        %v1793 = vunpack.c.l.b16 %v579
        %v1794 = vunpack.c.h.b16 %v579
        %v1795 = vunpack.c.l.b16 %v580
        %v1796 = vunpack.c.h.b16 %v580
        %v1797 = vunpack.c.l.b16 %v581
        %v1798 = vunpack.c.h.b16 %v581
        %v1799 = vunpack.c.l.b16 %v582
        %v1800 = vunpack.c.h.b16 %v582
        %v1801 = vunpack.c.l.b16 %v583
        %v1802 = vunpack.c.h.b16 %v583
        %v1803 = vunpack.c.l.b16 %v584
        %v1804 = vunpack.c.h.b16 %v584
        %v1805 = vunpack.c.l.b16 %v585
        %v1806 = vunpack.c.h.b16 %v585
        %v1807 = vunpack.c.l.b16 %v586
        %v1808 = vunpack.c.h.b16 %v586
        %v1809 = vunpack.c.l.b16 %v587
        %v1810 = vunpack.c.h.b16 %v587
        %v1811 = vunpack.c.l.b16 %v588
        %v1812 = vunpack.c.h.b16 %v588
        %v1813 = vunpack.c.l.b16 %v589
        %v1814 = vunpack.c.h.b16 %v589
        %v1815 = vunpack.c.l.b16 %v590
        %v1816 = vunpack.c.h.b16 %v590
        %v1817 = vunpack.c.l.b16 %v591
        %v1818 = vunpack.c.h.b16 %v591
        %v1819 = vunpack.c.l.b16 %v592
        %v1820 = vunpack.c.h.b16 %v592
        %v1821 = vunpack.c.l.b16 %v593
        %v1822 = vunpack.c.h.b16 %v593
        %v1823 = vunpack.c.l.b16 %v594
        %v1824 = vunpack.c.h.b16 %v594
        %v1825 = vunpack.c.l.b16 %v595
        %v1826 = vunpack.c.h.b16 %v595
        %v1827 = vunpack.c.l.b16 %v596
        %v1828 = vunpack.c.h.b16 %v596
        %v1829 = vunpack.c.l.b16 %v597
        %v1830 = vunpack.c.h.b16 %v597
        %v1831 = vunpack.c.l.b16 %v598
        %v1832 = vunpack.c.h.b16 %v598
        %v1833 = vunpack.c.l.b16 %v599
        %v1834 = vunpack.c.h.b16 %v599
        %v1835 = vunpack.c.l.b16 %v600
        %v1836 = vunpack.c.h.b16 %v600
        %v1837 = vunpack.c.l.b16 %v601
        %v1838 = vunpack.c.h.b16 %v601
        %v1839 = vunpack.c.l.b16 %v602
        %v1840 = vunpack.c.h.b16 %v602
        %v1841 = vunpack.c.l.b16 %v603
        %v1842 = vunpack.c.h.b16 %v603
        %v1843 = vunpack.c.l.b16 %v604
        %v1844 = vunpack.c.h.b16 %v604
        %v1845 = vunpack.c.l.b16 %v605
        %v1846 = vunpack.c.h.b16 %v605
        %v1847 = vunpack.c.l.b16 %v606
        %v1848 = vunpack.c.h.b16 %v606
        %v1849 = vunpack.c.l.b16 %v607
        %v1850 = vunpack.c.h.b16 %v607
        %v1851 = vunpack.c.l.b16 %v608
        %v1852 = vunpack.c.h.b16 %v608
        %v1853 = vunpack.c.l.b16 %v609
        %v1854 = vunpack.c.h.b16 %v609
        %v1855 = vunpack.c.l.b16 %v610
        %v1856 = vunpack.c.h.b16 %v610
        %v1857 = vunpack.c.l.b16 %v611
        %v1858 = vunpack.c.h.b16 %v611
        %v1859 = vunpack.c.l.b16 %v612
        %v1860 = vunpack.c.h.b16 %v612
        %v1861 = vunpack.c.l.b16 %v613
        %v1862 = vunpack.c.h.b16 %v613
        %v1863 = vunpack.c.l.b16 %v614
        %v1864 = vunpack.c.h.b16 %v614
        %v1865 = vunpack.c.l.b16 %v615
        %v1866 = vunpack.c.h.b16 %v615
        %v1867 = vunpack.c.l.b16 %v616
        %v1868 = vunpack.c.h.b16 %v616
        %v1869 = vunpack.c.l.b16 %v617
        %v1870 = vunpack.c.h.b16 %v617
        %v1871 = vunpack.c.l.b16 %v618
        %v1872 = vunpack.c.h.b16 %v618
        %v1873 = vunpack.c.l.b16 %v619
        %v1874 = vunpack.c.h.b16 %v619
        %v1875 = vunpack.c.l.b16 %v620
        %v1876 = vunpack.c.h.b16 %v620
        %v1877 = vunpack.c.l.b16 %v621
        %v1878 = vunpack.c.h.b16 %v621
        %v1879 = vunpack.c.l.b16 %v622
        %v1880 = vunpack.c.h.b16 %v622
        %v1881 = vunpack.c.l.b16 %v623
        %v1882 = vunpack.c.h.b16 %v623
        %v1883 = vunpack.c.l.b16 %v624
        %v1884 = vunpack.c.h.b16 %v624
        %v1885 = vunpack.c.l.b16 %v625
        %v1886 = vunpack.c.h.b16 %v625
        %v1887 = vunpack.c.l.b16 %v626
        %v1888 = vunpack.c.h.b16 %v626
        %v1889 = vunpack.c.l.b16 %v627
        %v1890 = vunpack.c.h.b16 %v627
        %v1891 = vunpack.c.l.b16 %v628
        %v1892 = vunpack.c.h.b16 %v628
        %v1893 = vunpack.c.l.b16 %v629
        %v1894 = vunpack.c.h.b16 %v629
        %v1895 = vunpack.c.l.b16 %v630
        %v1896 = vunpack.c.h.b16 %v630
        %v1897 = vunpack.c.l.b16 %v631
        %v1898 = vunpack.c.h.b16 %v631
        %v1899 = vunpack.c.l.b16 %v632
        %v1900 = vunpack.c.h.b16 %v632
        %v1901 = vunpack.c.l.b16 %v633
        %v1902 = vunpack.c.h.b16 %v633
        %v1903 = vunpack.c.l.b16 %v634
        %v1904 = vunpack.c.h.b16 %v634
        %v1905 = vunpack.c.l.b16 %v635
        %v1906 = vunpack.c.h.b16 %v635
        %v1907 = vunpack.c.l.b16 %v636
        %v1908 = vunpack.c.h.b16 %v636
        %v1909 = vunpack.c.l.b16 %v637
        %v1910 = vunpack.c.h.b16 %v637
        %v1911 = vunpack.c.l.b16 %v638
        %v1912 = vunpack.c.h.b16 %v638
        %v1913 = vunpack.c.l.b16 %v639
        %v1914 = vunpack.c.h.b16 %v639
        %v1915 = vunpack.c.l.b16 %v640
        %v1916 = vunpack.c.h.b16 %v640
        %v1917 = vunpack.c.l.b16 %v641
        %v1918 = vunpack.c.h.b16 %v641
        %v1919 = vunpack.c.l.b16 %v642
        %v1920 = vunpack.c.h.b16 %v642
        %v1921 = vunpack.c.l.b16 %v643
        %v1922 = vunpack.c.h.b16 %v643
        %v1923 = vunpack.c.l.b16 %v644
        %v1924 = vunpack.c.h.b16 %v644
        %v1925 = vunpack.c.l.b16 %v645
        %v1926 = vunpack.c.h.b16 %v645
        %v1927 = vunpack.c.l.b16 %v646
        %v1928 = vunpack.c.h.b16 %v646
        %v1929 = vunpack.c.l.b16 %v647
        %v1930 = vunpack.c.h.b16 %v647
        %v1931 = vunpack.c.l.b16 %v648
        %v1932 = vunpack.c.h.b16 %v648
        %v1933 = vunpack.c.l.b16 %v649
        %v1934 = vunpack.c.h.b16 %v649
        %v1935 = vunpack.c.l.b16 %v650
        %v1936 = vunpack.c.h.b16 %v650
        %v1937 = vunpack.c.l.b16 %v651
        %v1938 = vunpack.c.h.b16 %v651
        %v1939 = vunpack.c.l.b16 %v652
        %v1940 = vunpack.c.h.b16 %v652
        %v1941 = vunpack.c.l.b16 %v653
        %v1942 = vunpack.c.h.b16 %v653
        %v1943 = vunpack.c.l.b16 %v654
        %v1944 = vunpack.c.h.b16 %v654
        %v1945 = vunpack.c.l.b16 %v655
        %v1946 = vunpack.c.h.b16 %v655
        %v1947 = vunpack.c.l.b16 %v656
        %v1948 = vunpack.c.h.b16 %v656
        %v1949 = vunpack.c.l.b16 %v657
        %v1950 = vunpack.c.h.b16 %v657
        %v1951 = vunpack.c.l.b16 %v658
        %v1952 = vunpack.c.h.b16 %v658
        %v1953 = vunpack.c.l.b16 %v659
        %v1954 = vunpack.c.h.b16 %v659
        %v1955 = vunpack.c.l.b16 %v660
        %v1956 = vunpack.c.h.b16 %v660
        %v1957 = vunpack.c.l.b16 %v661
        %v1958 = vunpack.c.h.b16 %v661
        %v1959 = vunpack.c.l.b16 %v662
        %v1960 = vunpack.c.h.b16 %v662
        %v1961 = vunpack.c.l.b16 %v663
        %v1962 = vunpack.c.h.b16 %v663
        %v1963 = vunpack.c.l.b16 %v664
        %v1964 = vunpack.c.h.b16 %v664
        %v1965 = vunpack.c.l.b16 %v665
        %v1966 = vunpack.c.h.b16 %v665
        %v1967 = vunpack.c.l.b16 %v666
        %v1968 = vunpack.c.h.b16 %v666
        %v1969 = vunpack.c.l.b16 %v667
        %v1970 = vunpack.c.h.b16 %v667
        %v1971 = vunpack.c.l.b16 %v668
        %v1972 = vunpack.c.h.b16 %v668
        %v1973 = vunpack.c.l.b16 %v669
        %v1974 = vunpack.c.h.b16 %v669
        %v1975 = vunpack.c.l.b16 %v670
        %v1976 = vunpack.c.h.b16 %v670
        %v1977 = vunpack.c.l.b16 %v671
        %v1978 = vunpack.c.h.b16 %v671
        %v1979 = vunpack.c.l.b16 %v672
        %v1980 = vunpack.c.h.b16 %v672
        %v1981 = vunpack.c.l.b16 %v673
        %v1982 = vunpack.c.h.b16 %v673
        %v1983 = vunpack.c.l.b16 %v674
        %v1984 = vunpack.c.h.b16 %v674
        %v1985 = vunpack.c.l.b16 %v675
        %v1986 = vunpack.c.h.b16 %v675
        %v1987 = vunpack.c.l.b16 %v676
        %v1988 = vunpack.c.h.b16 %v676
        %v1989 = vunpack.c.l.b16 %v677
        %v1990 = vunpack.c.h.b16 %v677
        %v1991 = vunpack.c.l.b16 %v678
        %v1992 = vunpack.c.h.b16 %v678
        %v1993 = vunpack.c.l.b16 %v679
        %v1994 = vunpack.c.h.b16 %v679
        %v1995 = vunpack.c.l.b16 %v680
        %v1996 = vunpack.c.h.b16 %v680
        %v1997 = vunpack.c.l.b16 %v681
        %v1998 = vunpack.c.h.b16 %v681
        %v1999 = vunpack.c.l.b16 %v682
        %v2000 = vunpack.c.h.b16 %v682
        %v2001 = vunpack.c.l.b16 %v683
        %v2002 = vunpack.c.h.b16 %v683
        %v2003 = vunpack.c.l.b16 %v684
        %v2004 = vunpack.c.h.b16 %v684
        %v2005 = vunpack.c.l.b16 %v685
        %v2006 = vunpack.c.h.b16 %v685
        %v2007 = vunpack.c.l.b16 %v686
        %v2008 = vunpack.c.h.b16 %v686
        %v2009 = vunpack.c.l.b16 %v687
        %v2010 = vunpack.c.h.b16 %v687
        %v2011 = vunpack.c.l.b16 %v688
        %v2012 = vunpack.c.h.b16 %v688
        %v2013 = vunpack.c.l.b16 %v689
        %v2014 = vunpack.c.h.b16 %v689
        %v2015 = vunpack.c.l.b16 %v690
        %v2016 = vunpack.c.h.b16 %v690
        %v2017 = vunpack.c.l.b16 %v691
        %v2018 = vunpack.c.h.b16 %v691
        %v2019 = vunpack.c.l.b16 %v692
        %v2020 = vunpack.c.h.b16 %v692
        %v2021 = vunpack.c.l.b16 %v693
        %v2022 = vunpack.c.h.b16 %v693
        %v2023 = vunpack.c.l.b16 %v694
        %v2024 = vunpack.c.h.b16 %v694
        %v2025 = vunpack.c.l.b16 %v695
        %v2026 = vunpack.c.h.b16 %v695
        %v2027 = vunpack.c.l.b16 %v696
        %v2028 = vunpack.c.h.b16 %v696
        %v2029 = vunpack.c.l.b16 %v697
        %v2030 = vunpack.c.h.b16 %v697
        %v2031 = vunpack.c.l.b16 %v698
        %v2032 = vunpack.c.h.b16 %v698
        %v2033 = vunpack.c.l.b16 %v699
        %v2034 = vunpack.c.h.b16 %v699
        %v2035 = vunpack.c.l.b16 %v700
        %v2036 = vunpack.c.h.b16 %v700
        %v2037 = vunpack.c.l.b16 %v701
        %v2038 = vunpack.c.h.b16 %v701
        %v2039 = vunpack.c.l.b16 %v702
        %v2040 = vunpack.c.h.b16 %v702
        %v2041 = vunpack.c.l.b16 %v703
        %v2042 = vunpack.c.h.b16 %v703
        %v2043 = vunpack.c.l.b16 %v704
        %v2044 = vunpack.c.h.b16 %v704
        %v2045 = vunpack.c.l.b16 %v705
        %v2046 = vunpack.c.h.b16 %v705
        %v2047 = vunpack.c.l.b16 %v706
        %v2048 = vunpack.c.h.b16 %v706
        %v2049 = vunpack.c.l.b16 %v707
        %v2050 = vunpack.c.h.b16 %v707
        %v2051 = vunpack.c.l.b16 %v708
        %v2052 = vunpack.c.h.b16 %v708
        %v2053 = vunpack.c.l.b16 %v709
        %v2054 = vunpack.c.h.b16 %v709
        %v2055 = vunpack.c.l.b16 %v710
        %v2056 = vunpack.c.h.b16 %v710
        %v2057 = vunpack.c.l.b16 %v711
        %v2058 = vunpack.c.h.b16 %v711
        %v2059 = vunpack.c.l.b16 %v712
        %v2060 = vunpack.c.h.b16 %v712
        %v2061 = vunpack.c.l.b16 %v713
        %v2062 = vunpack.c.h.b16 %v713
        %v2063 = vunpack.c.l.b16 %v714
        %v2064 = vunpack.c.h.b16 %v714
        %v2065 = vunpack.c.l.b16 %v715
        %v2066 = vunpack.c.h.b16 %v715
        %v2067 = vunpack.c.l.b16 %v716
        %v2068 = vunpack.c.h.b16 %v716
        %v2069 = vunpack.c.l.b16 %v717
        %v2070 = vunpack.c.h.b16 %v717
        %v2071 = vunpack.c.l.b16 %v718
        %v2072 = vunpack.c.h.b16 %v718
        %v2073 = vunpack.c.l.b16 %v719
        %v2074 = vunpack.c.h.b16 %v719
        %v2075 = vunpack.c.l.b16 %v720
        %v2076 = vunpack.c.h.b16 %v720
        %v2077 = vunpack.c.l.b16 %v721
        %v2078 = vunpack.c.h.b16 %v721
        %v2079 = vunpack.c.l.b16 %v722
        %v2080 = vunpack.c.h.b16 %v722
        %v2081 = vunpack.c.l.b16 %v723
        %v2082 = vunpack.c.h.b16 %v723
        %v2083 = vunpack.c.l.b16 %v724
        %v2084 = vunpack.c.h.b16 %v724
        %v2085 = vunpack.c.l.b16 %v725
        %v2086 = vunpack.c.h.b16 %v725
        %v2087 = vunpack.c.l.b16 %v726
        %v2088 = vunpack.c.h.b16 %v726
        %v2089 = vunpack.c.l.b16 %v727
        %v2090 = vunpack.c.h.b16 %v727
        %v2091 = vunpack.c.l.b16 %v728
        %v2092 = vunpack.c.h.b16 %v728
        %v2093 = vunpack.c.l.b16 %v729
        %v2094 = vunpack.c.h.b16 %v729
        %v2095 = vunpack.c.l.b16 %v730
        %v2096 = vunpack.c.h.b16 %v730
        %v2097 = vunpack.c.l.b16 %v731
        %v2098 = vunpack.c.h.b16 %v731
        %v2099 = vunpack.c.l.b16 %v732
        %v2100 = vunpack.c.h.b16 %v732
        %v2101 = vunpack.c.l.b16 %v733
        %v2102 = vunpack.c.h.b16 %v733
        %v2103 = vunpack.c.l.b16 %v734
        %v2104 = vunpack.c.h.b16 %v734
        %v2105 = vunpack.c.l.b16 %v735
        %v2106 = vunpack.c.h.b16 %v735
        %v2107 = vunpack.c.l.b16 %v736
        %v2108 = vunpack.c.h.b16 %v736
        %v2109 = vunpack.c.l.b16 %v737
        %v2110 = vunpack.c.h.b16 %v737
        %v2111 = vunpack.c.l.b16 %v738
        %v2112 = vunpack.c.h.b16 %v738
        %v2113 = vunpack.c.l.b16 %v739
        %v2114 = vunpack.c.h.b16 %v739
        %v2115 = vunpack.c.l.b16 %v740
        %v2116 = vunpack.c.h.b16 %v740
        %v2117 = vunpack.c.l.b16 %v741
        %v2118 = vunpack.c.h.b16 %v741
        %v2119 = vunpack.c.l.b16 %v742
        %v2120 = vunpack.c.h.b16 %v742
        %v2121 = vunpack.c.l.b16 %v743
        %v2122 = vunpack.c.h.b16 %v743
        %v2123 = vunpack.c.l.b16 %v744
        %v2124 = vunpack.c.h.b16 %v744
        %v2125 = vunpack.c.l.b16 %v745
        %v2126 = vunpack.c.h.b16 %v745
        %v2127 = vunpack.c.l.b16 %v746
        %v2128 = vunpack.c.h.b16 %v746
        %v2129 = vunpack.c.l.b16 %v747
        %v2130 = vunpack.c.h.b16 %v747
        %v2131 = vunpack.c.l.b16 %v748
        %v2132 = vunpack.c.h.b16 %v748
        %v2133 = vunpack.c.l.b16 %v749
        %v2134 = vunpack.c.h.b16 %v749
        %v2135 = vunpack.c.l.b16 %v750
        %v2136 = vunpack.c.h.b16 %v750
        %v2137 = vunpack.c.l.b16 %v751
        %v2138 = vunpack.c.h.b16 %v751
        %v2139 = vunpack.c.l.b16 %v752
        %v2140 = vunpack.c.h.b16 %v752
        %v2141 = vunpack.c.l.b16 %v753
        %v2142 = vunpack.c.h.b16 %v753
        %v2143 = vunpack.c.l.b16 %v754
        %v2144 = vunpack.c.h.b16 %v754
        %v2145 = vunpack.c.l.b16 %v755
        %v2146 = vunpack.c.h.b16 %v755
        %v2147 = vunpack.c.l.b16 %v756
        %v2148 = vunpack.c.h.b16 %v756
        %v2149 = vunpack.c.l.b16 %v757
        %v2150 = vunpack.c.h.b16 %v757
        %v2151 = vunpack.c.l.b16 %v758
        %v2152 = vunpack.c.h.b16 %v758
        %v2153 = vunpack.c.l.b16 %v759
        %v2154 = vunpack.c.h.b16 %v759
        %v2155 = vunpack.c.l.b16 %v760
        %v2156 = vunpack.c.h.b16 %v760
        %v2157 = vunpack.c.l.b16 %v761
        %v2158 = vunpack.c.h.b16 %v761
        %v2159 = vunpack.c.l.b16 %v762
        %v2160 = vunpack.c.h.b16 %v762
        %v2161 = vunpack.c.l.b16 %v763
        %v2162 = vunpack.c.h.b16 %v763
        %v2163 = vunpack.c.l.b16 %v764
        %v2164 = vunpack.c.h.b16 %v764
        %v2165 = vunpack.c.l.b16 %v765
        %v2166 = vunpack.c.h.b16 %v765
        %v2167 = vunpack.c.l.b16 %v766
        %v2168 = vunpack.c.h.b16 %v766
        %v2169 = vunpack.c.l.b16 %v767
        %v2170 = vunpack.c.h.b16 %v767
        %v2171 = vunpack.c.l.b16 %v768
        %v2172 = vunpack.c.h.b16 %v768
        %v2173 = vunpack.c.l.b16 %v769
        %v2174 = vunpack.c.h.b16 %v769
        %v2175 = vunpack.c.l.b16 %v770
        %v2176 = vunpack.c.h.b16 %v770
        %v2177 = vunpack.c.l.b16 %v771
        %v2178 = vunpack.c.h.b16 %v771
        %v2179 = vunpack.c.l.b16 %v772
        %v2180 = vunpack.c.h.b16 %v772
        %v2181 = vunpack.c.l.b16 %v773
        %v2182 = vunpack.c.h.b16 %v773
        %v2183 = vunpack.c.l.b16 %v774
        %v2184 = vunpack.c.h.b16 %v774
        %v2185 = vunpack.c.l.b16 %v775
        %v2186 = vunpack.c.h.b16 %v775
        %v2187 = vunpack.c.l.b16 %v776
        %v2188 = vunpack.c.h.b16 %v776
        %v2189 = vunpack.c.l.b16 %v777
        %v2190 = vunpack.c.h.b16 %v777
        %v2191 = vunpack.c.l.b16 %v778
        %v2192 = vunpack.c.h.b16 %v778
        %v2193 = vunpack.c.l.b16 %v779
        %v2194 = vunpack.c.h.b16 %v779
        %v2195 = vunpack.c.l.b16 %v780
        %v2196 = vunpack.c.h.b16 %v780
        %v2197 = vunpack.c.l.b16 %v781
        %v2198 = vunpack.c.h.b16 %v781
        %v2199 = vunpack.c.l.b16 %v782
        %v2200 = vunpack.c.h.b16 %v782
        %v2201 = vunpack.c.l.b16 %v783
        %v2202 = vunpack.c.h.b16 %v783
        %v2203 = vunpack.c.l.b16 %v784
        %v2204 = vunpack.c.h.b16 %v784
        %v2205 = vunpack.c.l.b16 %v785
        %v2206 = vunpack.c.h.b16 %v785
        %v2207 = vunpack.c.l.b16 %v786
        %v2208 = vunpack.c.h.b16 %v786
        %v2209 = vunpack.c.l.b16 %v787
        %v2210 = vunpack.c.h.b16 %v787
        %v2211 = vunpack.c.l.b16 %v788
        %v2212 = vunpack.c.h.b16 %v788
        %v2213 = vunpack.c.l.b16 %v789
        %v2214 = vunpack.c.h.b16 %v789
        %v2215 = vunpack.c.l.b16 %v790
        %v2216 = vunpack.c.h.b16 %v790
        %v2217 = vunpack.c.l.b16 %v791
        %v2218 = vunpack.c.h.b16 %v791
        %v2219 = vunpack.c.l.b16 %v792
        %v2220 = vunpack.c.h.b16 %v792
        %v2221 = vunpack.c.l.b16 %v793
        %v2222 = vunpack.c.h.b16 %v793
        %v2223 = vunpack.c.l.b16 %v794
        %v2224 = vunpack.c.h.b16 %v794
        %v2225 = vunpack.c.l.b16 %v795
        %v2226 = vunpack.c.h.b16 %v795
        %v2227 = vunpack.c.l.b16 %v796
        %v2228 = vunpack.c.h.b16 %v796
        %v2229 = vunpack.c.l.b16 %v797
        %v2230 = vunpack.c.h.b16 %v797
        %v2231 = vunpack.c.l.b16 %v798
        %v2232 = vunpack.c.h.b16 %v798
        %v2233 = vunpack.c.l.b16 %v799
        %v2234 = vunpack.c.h.b16 %v799
        %v2235 = vunpack.c.l.b16 %v800
        %v2236 = vunpack.c.h.b16 %v800
        %v2237 = vunpack.c.l.b16 %v801
        %v2238 = vunpack.c.h.b16 %v801
        %v2239 = vunpack.c.l.b16 %v802
        %v2240 = vunpack.c.h.b16 %v802
        %v2241 = vunpack.c.l.b16 %v803
        %v2242 = vunpack.c.h.b16 %v803
        %v2243 = vunpack.c.l.b16 %v804
        %v2244 = vunpack.c.h.b16 %v804
        %v2245 = vunpack.c.l.b16 %v805
        %v2246 = vunpack.c.h.b16 %v805
        %v2247 = vunpack.c.l.b16 %v806
        %v2248 = vunpack.c.h.b16 %v806
        %v2249 = vunpack.c.l.b16 %v807
        %v2250 = vunpack.c.h.b16 %v807
        %v2251 = vunpack.c.l.b16 %v808
        %v2252 = vunpack.c.h.b16 %v808
        %v2253 = vunpack.c.l.b16 %v809
        %v2254 = vunpack.c.h.b16 %v809
        %v2255 = vunpack.c.l.b16 %v810
        %v2256 = vunpack.c.h.b16 %v810
        %v2257 = vunpack.c.l.b16 %v811
        %v2258 = vunpack.c.h.b16 %v811
        %v2259 = vunpack.c.l.b16 %v812
        %v2260 = vunpack.c.h.b16 %v812
        %v2261 = vunpack.c.l.b16 %v813
        %v2262 = vunpack.c.h.b16 %v813
        %v2263 = vunpack.c.l.b16 %v814
        %v2264 = vunpack.c.h.b16 %v814
        %v2265 = vunpack.c.l.b16 %v815
        %v2266 = vunpack.c.h.b16 %v815
        %v2267 = vunpack.c.l.b16 %v816
        %v2268 = vunpack.c.h.b16 %v816
        %v2269 = vunpack.c.l.b16 %v817
        %v2270 = vunpack.c.h.b16 %v817
        %v2271 = vunpack.c.l.b16 %v818
        %v2272 = vunpack.c.h.b16 %v818
        %v2273 = vunpack.c.l.b16 %v819
        %v2274 = vunpack.c.h.b16 %v819
        %v2275 = vunpack.c.l.b16 %v820
        %v2276 = vunpack.c.h.b16 %v820
        %v2277 = vunpack.c.l.b16 %v821
        %v2278 = vunpack.c.h.b16 %v821
        %v2279 = vunpack.c.l.b16 %v822
        %v2280 = vunpack.c.h.b16 %v822
        %v2281 = vunpack.c.l.b16 %v823
        %v2282 = vunpack.c.h.b16 %v823
        %v2283 = vunpack.c.l.b16 %v824
        %v2284 = vunpack.c.h.b16 %v824
        %v2285 = vunpack.c.l.b16 %v825
        %v2286 = vunpack.c.h.b16 %v825
        %v2287 = vunpack.c.l.b16 %v826
        %v2288 = vunpack.c.h.b16 %v826
        %v2289 = vunpack.c.l.b16 %v827
        %v2290 = vunpack.c.h.b16 %v827
        %v2291 = vunpack.c.l.b16 %v828
        %v2292 = vunpack.c.h.b16 %v828
        %v2293 = vunpack.c.l.b16 %v829
        %v2294 = vunpack.c.h.b16 %v829
        %v2295 = vunpack.c.l.b16 %v830
        %v2296 = vunpack.c.h.b16 %v830
        %v2297 = vunpack.c.l.b16 %v831
        %v2298 = vunpack.c.h.b16 %v831
        %v2299 = vunpack.c.l.b16 %v832
        %v2300 = vunpack.c.h.b16 %v832
        %v2301 = vunpack.c.l.b16 %v833
        %v2302 = vunpack.c.h.b16 %v833
        %v2303 = vunpack.c.l.b16 %v834
        %v2304 = vunpack.c.h.b16 %v834
        %v2305 = vunpack.c.l.b16 %v835
        %v2306 = vunpack.c.h.b16 %v835
        %v2307 = vunpack.c.l.b16 %v836
        %v2308 = vunpack.c.h.b16 %v836
        %v2309 = vpack.c.b16 %v1553, %v1541
        %v2310 = vpack.c.b16 %v1554, %v1542
        %v2311 = vpack.c.b16 %v1555, %v1543
        %v2312 = vpack.c.b16 %v1556, %v1544
        %v2313 = vpack.c.b16 %v1557, %v1545
        %v2314 = vpack.c.b16 %v1558, %v1546
        %v2315 = vpack.c.b16 %v1559, %v1547
        %v2316 = vpack.c.b16 %v1560, %v1548
        %v2317 = vpack.c.b16 %v1561, %v1549
        %v2318 = vpack.c.b16 %v1562, %v1550
        %v2319 = vpack.c.b16 %v1563, %v1551
        %v2320 = vpack.c.b16 %v1564, %v1552
        %v2321 = vpack.c.b16 %v1577, %v1565
        %v2322 = vpack.c.b16 %v1578, %v1566
        %v2323 = vpack.c.b16 %v1579, %v1567
        %v2324 = vpack.c.b16 %v1580, %v1568
        %v2325 = vpack.c.b16 %v1581, %v1569
        %v2326 = vpack.c.b16 %v1582, %v1570
        %v2327 = vpack.c.b16 %v1583, %v1571
        %v2328 = vpack.c.b16 %v1584, %v1572
        %v2329 = vpack.c.b16 %v1585, %v1573
        %v2330 = vpack.c.b16 %v1586, %v1574
        %v2331 = vpack.c.b16 %v1587, %v1575
        %v2332 = vpack.c.b16 %v1588, %v1576
        %v2333 = vpack.c.b16 %v1601, %v1589
        %v2334 = vpack.c.b16 %v1602, %v1590
        %v2335 = vpack.c.b16 %v1603, %v1591
        %v2336 = vpack.c.b16 %v1604, %v1592
        %v2337 = vpack.c.b16 %v1605, %v1593
        %v2338 = vpack.c.b16 %v1606, %v1594
        %v2339 = vpack.c.b16 %v1607, %v1595
        %v2340 = vpack.c.b16 %v1608, %v1596
        %v2341 = vpack.c.b16 %v1609, %v1597
        %v2342 = vpack.c.b16 %v1610, %v1598
        %v2343 = vpack.c.b16 %v1611, %v1599
        %v2344 = vpack.c.b16 %v1612, %v1600
        %v2345 = vpack.c.b16 %v1625, %v1613
        %v2346 = vpack.c.b16 %v1626, %v1614
        %v2347 = vpack.c.b16 %v1627, %v1615
        %v2348 = vpack.c.b16 %v1628, %v1616
        %v2349 = vpack.c.b16 %v1629, %v1617
        %v2350 = vpack.c.b16 %v1630, %v1618
        %v2351 = vpack.c.b16 %v1631, %v1619
        %v2352 = vpack.c.b16 %v1632, %v1620
        %v2353 = vpack.c.b16 %v1633, %v1621
        %v2354 = vpack.c.b16 %v1634, %v1622
        %v2355 = vpack.c.b16 %v1635, %v1623
        %v2356 = vpack.c.b16 %v1636, %v1624
        %v2357 = vpack.c.b16 %v1649, %v1637
        %v2358 = vpack.c.b16 %v1650, %v1638
        %v2359 = vpack.c.b16 %v1651, %v1639
        %v2360 = vpack.c.b16 %v1652, %v1640
        %v2361 = vpack.c.b16 %v1653, %v1641
        %v2362 = vpack.c.b16 %v1654, %v1642
        %v2363 = vpack.c.b16 %v1655, %v1643
        %v2364 = vpack.c.b16 %v1656, %v1644
        %v2365 = vpack.c.b16 %v1657, %v1645
        %v2366 = vpack.c.b16 %v1658, %v1646
        %v2367 = vpack.c.b16 %v1659, %v1647
        %v2368 = vpack.c.b16 %v1660, %v1648
        %v2369 = vpack.c.b16 %v1673, %v1661
        %v2370 = vpack.c.b16 %v1674, %v1662
        %v2371 = vpack.c.b16 %v1675, %v1663
        %v2372 = vpack.c.b16 %v1676, %v1664
        %v2373 = vpack.c.b16 %v1677, %v1665
        %v2374 = vpack.c.b16 %v1678, %v1666
        %v2375 = vpack.c.b16 %v1679, %v1667
        %v2376 = vpack.c.b16 %v1680, %v1668
        %v2377 = vpack.c.b16 %v1681, %v1669
        %v2378 = vpack.c.b16 %v1682, %v1670
        %v2379 = vpack.c.b16 %v1683, %v1671
        %v2380 = vpack.c.b16 %v1684, %v1672
        %v2381 = vpack.c.b16 %v1697, %v1685
        %v2382 = vpack.c.b16 %v1698, %v1686
        %v2383 = vpack.c.b16 %v1699, %v1687
        %v2384 = vpack.c.b16 %v1700, %v1688
        %v2385 = vpack.c.b16 %v1701, %v1689
        %v2386 = vpack.c.b16 %v1702, %v1690
        %v2387 = vpack.c.b16 %v1703, %v1691
        %v2388 = vpack.c.b16 %v1704, %v1692
        %v2389 = vpack.c.b16 %v1705, %v1693
        %v2390 = vpack.c.b16 %v1706, %v1694
        %v2391 = vpack.c.b16 %v1707, %v1695
        %v2392 = vpack.c.b16 %v1708, %v1696
        %v2393 = vpack.c.b16 %v1721, %v1709
        %v2394 = vpack.c.b16 %v1722, %v1710
        %v2395 = vpack.c.b16 %v1723, %v1711
        %v2396 = vpack.c.b16 %v1724, %v1712
        %v2397 = vpack.c.b16 %v1725, %v1713
        %v2398 = vpack.c.b16 %v1726, %v1714
        %v2399 = vpack.c.b16 %v1727, %v1715
        %v2400 = vpack.c.b16 %v1728, %v1716
        %v2401 = vpack.c.b16 %v1729, %v1717
        %v2402 = vpack.c.b16 %v1730, %v1718
        %v2403 = vpack.c.b16 %v1731, %v1719
        %v2404 = vpack.c.b16 %v1732, %v1720
        %v2405 = vpack.c.b16 %v1745, %v1733
        %v2406 = vpack.c.b16 %v1746, %v1734
        %v2407 = vpack.c.b16 %v1747, %v1735
        %v2408 = vpack.c.b16 %v1748, %v1736
        %v2409 = vpack.c.b16 %v1749, %v1737
        %v2410 = vpack.c.b16 %v1750, %v1738
        %v2411 = vpack.c.b16 %v1751, %v1739
        %v2412 = vpack.c.b16 %v1752, %v1740
        %v2413 = vpack.c.b16 %v1753, %v1741
        %v2414 = vpack.c.b16 %v1754, %v1742
        %v2415 = vpack.c.b16 %v1755, %v1743
        %v2416 = vpack.c.b16 %v1756, %v1744
        %v2417 = vpack.c.b16 %v1769, %v1757
        %v2418 = vpack.c.b16 %v1770, %v1758
        %v2419 = vpack.c.b16 %v1771, %v1759
        %v2420 = vpack.c.b16 %v1772, %v1760
        %v2421 = vpack.c.b16 %v1773, %v1761
        %v2422 = vpack.c.b16 %v1774, %v1762
        %v2423 = vpack.c.b16 %v1775, %v1763
        %v2424 = vpack.c.b16 %v1776, %v1764
        %v2425 = vpack.c.b16 %v1777, %v1765
        %v2426 = vpack.c.b16 %v1778, %v1766
        %v2427 = vpack.c.b16 %v1779, %v1767
        %v2428 = vpack.c.b16 %v1780, %v1768
        %v2429 = vpack.c.b16 %v1793, %v1781
        %v2430 = vpack.c.b16 %v1794, %v1782
        %v2431 = vpack.c.b16 %v1795, %v1783
        %v2432 = vpack.c.b16 %v1796, %v1784
        %v2433 = vpack.c.b16 %v1797, %v1785
        %v2434 = vpack.c.b16 %v1798, %v1786
        %v2435 = vpack.c.b16 %v1799, %v1787
        %v2436 = vpack.c.b16 %v1800, %v1788
        %v2437 = vpack.c.b16 %v1801, %v1789
        %v2438 = vpack.c.b16 %v1802, %v1790
        %v2439 = vpack.c.b16 %v1803, %v1791
        %v2440 = vpack.c.b16 %v1804, %v1792
        %v2441 = vpack.c.b16 %v1817, %v1805
        %v2442 = vpack.c.b16 %v1818, %v1806
        %v2443 = vpack.c.b16 %v1819, %v1807
        %v2444 = vpack.c.b16 %v1820, %v1808
        %v2445 = vpack.c.b16 %v1821, %v1809
        %v2446 = vpack.c.b16 %v1822, %v1810
        %v2447 = vpack.c.b16 %v1823, %v1811
        %v2448 = vpack.c.b16 %v1824, %v1812
        %v2449 = vpack.c.b16 %v1825, %v1813
        %v2450 = vpack.c.b16 %v1826, %v1814
        %v2451 = vpack.c.b16 %v1827, %v1815
        %v2452 = vpack.c.b16 %v1828, %v1816
        %v2453 = vpack.c.b16 %v1841, %v1829
        %v2454 = vpack.c.b16 %v1842, %v1830
        %v2455 = vpack.c.b16 %v1843, %v1831
        %v2456 = vpack.c.b16 %v1844, %v1832
        %v2457 = vpack.c.b16 %v1845, %v1833
        %v2458 = vpack.c.b16 %v1846, %v1834
        %v2459 = vpack.c.b16 %v1847, %v1835
        %v2460 = vpack.c.b16 %v1848, %v1836
        %v2461 = vpack.c.b16 %v1849, %v1837
        %v2462 = vpack.c.b16 %v1850, %v1838
        %v2463 = vpack.c.b16 %v1851, %v1839
        %v2464 = vpack.c.b16 %v1852, %v1840
        %v2465 = vpack.c.b16 %v1865, %v1853
        %v2466 = vpack.c.b16 %v1866, %v1854
        %v2467 = vpack.c.b16 %v1867, %v1855
        %v2468 = vpack.c.b16 %v1868, %v1856
        %v2469 = vpack.c.b16 %v1869, %v1857
        %v2470 = vpack.c.b16 %v1870, %v1858
        %v2471 = vpack.c.b16 %v1871, %v1859
        %v2472 = vpack.c.b16 %v1872, %v1860
        %v2473 = vpack.c.b16 %v1873, %v1861
        %v2474 = vpack.c.b16 %v1874, %v1862
        %v2475 = vpack.c.b16 %v1875, %v1863
        %v2476 = vpack.c.b16 %v1876, %v1864
        %v2477 = vpack.c.b16 %v1889, %v1877
        %v2478 = vpack.c.b16 %v1890, %v1878
        %v2479 = vpack.c.b16 %v1891, %v1879
        %v2480 = vpack.c.b16 %v1892, %v1880
        %v2481 = vpack.c.b16 %v1893, %v1881
        %v2482 = vpack.c.b16 %v1894, %v1882
        %v2483 = vpack.c.b16 %v1895, %v1883
        %v2484 = vpack.c.b16 %v1896, %v1884
        %v2485 = vpack.c.b16 %v1897, %v1885
        %v2486 = vpack.c.b16 %v1898, %v1886
        %v2487 = vpack.c.b16 %v1899, %v1887
        %v2488 = vpack.c.b16 %v1900, %v1888
        %v2489 = vpack.c.b16 %v1913, %v1901
        %v2490 = vpack.c.b16 %v1914, %v1902
        %v2491 = vpack.c.b16 %v1915, %v1903
        %v2492 = vpack.c.b16 %v1916, %v1904
        %v2493 = vpack.c.b16 %v1917, %v1905
        %v2494 = vpack.c.b16 %v1918, %v1906
        %v2495 = vpack.c.b16 %v1919, %v1907
        %v2496 = vpack.c.b16 %v1920, %v1908
        %v2497 = vpack.c.b16 %v1921, %v1909
        %v2498 = vpack.c.b16 %v1922, %v1910
        %v2499 = vpack.c.b16 %v1923, %v1911
        %v2500 = vpack.c.b16 %v1924, %v1912
        %v2501 = vpack.c.b16 %v1937, %v1925
        %v2502 = vpack.c.b16 %v1938, %v1926
        %v2503 = vpack.c.b16 %v1939, %v1927
        %v2504 = vpack.c.b16 %v1940, %v1928
        %v2505 = vpack.c.b16 %v1941, %v1929
        %v2506 = vpack.c.b16 %v1942, %v1930
        %v2507 = vpack.c.b16 %v1943, %v1931
        %v2508 = vpack.c.b16 %v1944, %v1932
        %v2509 = vpack.c.b16 %v1945, %v1933
        %v2510 = vpack.c.b16 %v1946, %v1934
        %v2511 = vpack.c.b16 %v1947, %v1935
        %v2512 = vpack.c.b16 %v1948, %v1936
        %v2513 = vpack.c.b16 %v1961, %v1949
        %v2514 = vpack.c.b16 %v1962, %v1950
        %v2515 = vpack.c.b16 %v1963, %v1951
        %v2516 = vpack.c.b16 %v1964, %v1952
        %v2517 = vpack.c.b16 %v1965, %v1953
        %v2518 = vpack.c.b16 %v1966, %v1954
        %v2519 = vpack.c.b16 %v1967, %v1955
        %v2520 = vpack.c.b16 %v1968, %v1956
        %v2521 = vpack.c.b16 %v1969, %v1957
        %v2522 = vpack.c.b16 %v1970, %v1958
        %v2523 = vpack.c.b16 %v1971, %v1959
        %v2524 = vpack.c.b16 %v1972, %v1960
        %v2525 = vpack.c.b16 %v1985, %v1973
        %v2526 = vpack.c.b16 %v1986, %v1974
        %v2527 = vpack.c.b16 %v1987, %v1975
        %v2528 = vpack.c.b16 %v1988, %v1976
        %v2529 = vpack.c.b16 %v1989, %v1977
        %v2530 = vpack.c.b16 %v1990, %v1978
        %v2531 = vpack.c.b16 %v1991, %v1979
        %v2532 = vpack.c.b16 %v1992, %v1980
        %v2533 = vpack.c.b16 %v1993, %v1981
        %v2534 = vpack.c.b16 %v1994, %v1982
        %v2535 = vpack.c.b16 %v1995, %v1983
        %v2536 = vpack.c.b16 %v1996, %v1984
        %v2537 = vpack.c.b16 %v2009, %v1997
        %v2538 = vpack.c.b16 %v2010, %v1998
        %v2539 = vpack.c.b16 %v2011, %v1999
        %v2540 = vpack.c.b16 %v2012, %v2000
        %v2541 = vpack.c.b16 %v2013, %v2001
        %v2542 = vpack.c.b16 %v2014, %v2002
        %v2543 = vpack.c.b16 %v2015, %v2003
        %v2544 = vpack.c.b16 %v2016, %v2004
        %v2545 = vpack.c.b16 %v2017, %v2005
        %v2546 = vpack.c.b16 %v2018, %v2006
        %v2547 = vpack.c.b16 %v2019, %v2007
        %v2548 = vpack.c.b16 %v2020, %v2008
        %v2549 = vpack.c.b16 %v2033, %v2021
        %v2550 = vpack.c.b16 %v2034, %v2022
        %v2551 = vpack.c.b16 %v2035, %v2023
        %v2552 = vpack.c.b16 %v2036, %v2024
        %v2553 = vpack.c.b16 %v2037, %v2025
        %v2554 = vpack.c.b16 %v2038, %v2026
        %v2555 = vpack.c.b16 %v2039, %v2027
        %v2556 = vpack.c.b16 %v2040, %v2028
        %v2557 = vpack.c.b16 %v2041, %v2029
        %v2558 = vpack.c.b16 %v2042, %v2030
        %v2559 = vpack.c.b16 %v2043, %v2031
        %v2560 = vpack.c.b16 %v2044, %v2032
        %v2561 = vpack.c.b16 %v2057, %v2045
        %v2562 = vpack.c.b16 %v2058, %v2046
        %v2563 = vpack.c.b16 %v2059, %v2047
        %v2564 = vpack.c.b16 %v2060, %v2048
        %v2565 = vpack.c.b16 %v2061, %v2049
        %v2566 = vpack.c.b16 %v2062, %v2050
        %v2567 = vpack.c.b16 %v2063, %v2051
        %v2568 = vpack.c.b16 %v2064, %v2052
        %v2569 = vpack.c.b16 %v2065, %v2053
        %v2570 = vpack.c.b16 %v2066, %v2054
        %v2571 = vpack.c.b16 %v2067, %v2055
        %v2572 = vpack.c.b16 %v2068, %v2056
        %v2573 = vpack.c.b16 %v2081, %v2069
        %v2574 = vpack.c.b16 %v2082, %v2070
        %v2575 = vpack.c.b16 %v2083, %v2071
        %v2576 = vpack.c.b16 %v2084, %v2072
        %v2577 = vpack.c.b16 %v2085, %v2073
        %v2578 = vpack.c.b16 %v2086, %v2074
        %v2579 = vpack.c.b16 %v2087, %v2075
        %v2580 = vpack.c.b16 %v2088, %v2076
        %v2581 = vpack.c.b16 %v2089, %v2077
        %v2582 = vpack.c.b16 %v2090, %v2078
        %v2583 = vpack.c.b16 %v2091, %v2079
        %v2584 = vpack.c.b16 %v2092, %v2080
        %v2585 = vpack.c.b16 %v2105, %v2093
        %v2586 = vpack.c.b16 %v2106, %v2094
        %v2587 = vpack.c.b16 %v2107, %v2095
        %v2588 = vpack.c.b16 %v2108, %v2096
        %v2589 = vpack.c.b16 %v2109, %v2097
        %v2590 = vpack.c.b16 %v2110, %v2098
        %v2591 = vpack.c.b16 %v2111, %v2099
        %v2592 = vpack.c.b16 %v2112, %v2100
        %v2593 = vpack.c.b16 %v2113, %v2101
        %v2594 = vpack.c.b16 %v2114, %v2102
        %v2595 = vpack.c.b16 %v2115, %v2103
        %v2596 = vpack.c.b16 %v2116, %v2104
        %v2597 = vpack.c.b16 %v2129, %v2117
        %v2598 = vpack.c.b16 %v2130, %v2118
        %v2599 = vpack.c.b16 %v2131, %v2119
        %v2600 = vpack.c.b16 %v2132, %v2120
        %v2601 = vpack.c.b16 %v2133, %v2121
        %v2602 = vpack.c.b16 %v2134, %v2122
        %v2603 = vpack.c.b16 %v2135, %v2123
        %v2604 = vpack.c.b16 %v2136, %v2124
        %v2605 = vpack.c.b16 %v2137, %v2125
        %v2606 = vpack.c.b16 %v2138, %v2126
        %v2607 = vpack.c.b16 %v2139, %v2127
        %v2608 = vpack.c.b16 %v2140, %v2128
        %v2609 = vpack.c.b16 %v2153, %v2141
        %v2610 = vpack.c.b16 %v2154, %v2142
        %v2611 = vpack.c.b16 %v2155, %v2143
        %v2612 = vpack.c.b16 %v2156, %v2144
        %v2613 = vpack.c.b16 %v2157, %v2145
        %v2614 = vpack.c.b16 %v2158, %v2146
        %v2615 = vpack.c.b16 %v2159, %v2147
        %v2616 = vpack.c.b16 %v2160, %v2148
        %v2617 = vpack.c.b16 %v2161, %v2149
        %v2618 = vpack.c.b16 %v2162, %v2150
        %v2619 = vpack.c.b16 %v2163, %v2151
        %v2620 = vpack.c.b16 %v2164, %v2152
        %v2621 = vpack.c.b16 %v2177, %v2165
        %v2622 = vpack.c.b16 %v2178, %v2166
        %v2623 = vpack.c.b16 %v2179, %v2167
        %v2624 = vpack.c.b16 %v2180, %v2168
        %v2625 = vpack.c.b16 %v2181, %v2169
        %v2626 = vpack.c.b16 %v2182, %v2170
        %v2627 = vpack.c.b16 %v2183, %v2171
        %v2628 = vpack.c.b16 %v2184, %v2172
        %v2629 = vpack.c.b16 %v2185, %v2173
        %v2630 = vpack.c.b16 %v2186, %v2174
        %v2631 = vpack.c.b16 %v2187, %v2175
        %v2632 = vpack.c.b16 %v2188, %v2176
        %v2633 = vpack.c.b16 %v2201, %v2189
        %v2634 = vpack.c.b16 %v2202, %v2190
        %v2635 = vpack.c.b16 %v2203, %v2191
        %v2636 = vpack.c.b16 %v2204, %v2192
        %v2637 = vpack.c.b16 %v2205, %v2193
        %v2638 = vpack.c.b16 %v2206, %v2194
        %v2639 = vpack.c.b16 %v2207, %v2195
        %v2640 = vpack.c.b16 %v2208, %v2196
        %v2641 = vpack.c.b16 %v2209, %v2197
        %v2642 = vpack.c.b16 %v2210, %v2198
        %v2643 = vpack.c.b16 %v2211, %v2199
        %v2644 = vpack.c.b16 %v2212, %v2200
        %v2645 = vpack.c.b16 %v2225, %v2213
        %v2646 = vpack.c.b16 %v2226, %v2214
        %v2647 = vpack.c.b16 %v2227, %v2215
        %v2648 = vpack.c.b16 %v2228, %v2216
        %v2649 = vpack.c.b16 %v2229, %v2217
        %v2650 = vpack.c.b16 %v2230, %v2218
        %v2651 = vpack.c.b16 %v2231, %v2219
        %v2652 = vpack.c.b16 %v2232, %v2220
        %v2653 = vpack.c.b16 %v2233, %v2221
        %v2654 = vpack.c.b16 %v2234, %v2222
        %v2655 = vpack.c.b16 %v2235, %v2223
        %v2656 = vpack.c.b16 %v2236, %v2224
        %v2657 = vpack.c.b16 %v2249, %v2237
        %v2658 = vpack.c.b16 %v2250, %v2238
        %v2659 = vpack.c.b16 %v2251, %v2239
        %v2660 = vpack.c.b16 %v2252, %v2240
        %v2661 = vpack.c.b16 %v2253, %v2241
        %v2662 = vpack.c.b16 %v2254, %v2242
        %v2663 = vpack.c.b16 %v2255, %v2243
        %v2664 = vpack.c.b16 %v2256, %v2244
        %v2665 = vpack.c.b16 %v2257, %v2245
        %v2666 = vpack.c.b16 %v2258, %v2246
        %v2667 = vpack.c.b16 %v2259, %v2247
        %v2668 = vpack.c.b16 %v2260, %v2248
        %v2669 = vpack.c.b16 %v2273, %v2261
        %v2670 = vpack.c.b16 %v2274, %v2262
        %v2671 = vpack.c.b16 %v2275, %v2263
        %v2672 = vpack.c.b16 %v2276, %v2264
        %v2673 = vpack.c.b16 %v2277, %v2265
        %v2674 = vpack.c.b16 %v2278, %v2266
        %v2675 = vpack.c.b16 %v2279, %v2267
        %v2676 = vpack.c.b16 %v2280, %v2268
        %v2677 = vpack.c.b16 %v2281, %v2269
        %v2678 = vpack.c.b16 %v2282, %v2270
        %v2679 = vpack.c.b16 %v2283, %v2271
        %v2680 = vpack.c.b16 %v2284, %v2272
        %v2681 = vpack.c.b16 %v2297, %v2285
        %v2682 = vpack.c.b16 %v2298, %v2286
        %v2683 = vpack.c.b16 %v2299, %v2287
        %v2684 = vpack.c.b16 %v2300, %v2288
        %v2685 = vpack.c.b16 %v2301, %v2289
        %v2686 = vpack.c.b16 %v2302, %v2290
        %v2687 = vpack.c.b16 %v2303, %v2291
        %v2688 = vpack.c.b16 %v2304, %v2292
        %v2689 = vpack.c.b16 %v2305, %v2293
        %v2690 = vpack.c.b16 %v2306, %v2294
        %v2691 = vpack.c.b16 %v2307, %v2295
        %v2692 = vpack.c.b16 %v2308, %v2296
        %3077 = vmatprep.subr.bf16.mxu0 %v2310
        %3078 = vmatpush1.bf16.msra.mxu0 %v2309
        %3079 = vmatprep.subr.bf16.mxu0 %v2322
        %3080 = vmatpush1.bf16.msra.mxu0 %v2321
        %3081 = vmatprep.subr.bf16.mxu0 %v2334
        %3082 = vmatpush1.bf16.msra.mxu0 %v2333
        %3083 = vmatprep.subr.bf16.mxu0 %v2346
        %3084 = vmatpush1.bf16.msra.mxu0 %v2345
        %3085 = vmatprep.subr.bf16.mxu0 %v2358
        %3086 = vmatpush1.bf16.msra.mxu0 %v2357
        %3087 = vmatprep.subr.bf16.mxu0 %v2370
        %3088 = vmatpush1.bf16.msra.mxu0 %v2369
        %3089 = vmatprep.subr.bf16.mxu0 %v2382
        %3090 = vmatpush1.bf16.msra.mxu0 %v2381
        %3091 = vmatprep.subr.bf16.mxu0 %v2394
        %3092 = vmatpush1.bf16.msra.mxu0 %v2393
        %3093 = vmatprep.subr.bf16.mxu0 %v2406
        %3094 = vmatpush1.bf16.msra.mxu0 %v2405
        %3095 = vmatprep.subr.bf16.mxu0 %v2418
        %3096 = vmatpush1.bf16.msra.mxu0 %v2417
        %3097 = vmatprep.subr.bf16.mxu0 %v2430
        %3098 = vmatpush1.bf16.msra.mxu0 %v2429
        %3099 = vmatprep.subr.bf16.mxu0 %v2442
        %3100 = vmatpush1.bf16.msra.mxu0 %v2441
        %3101 = vmatprep.subr.bf16.mxu0 %v2454
        %3102 = vmatpush1.bf16.msra.mxu0 %v2453
        %3103 = vmatprep.subr.bf16.mxu0 %v2466
        %3104 = vmatpush1.bf16.msra.mxu0 %v2465
        %3105 = vmatprep.subr.bf16.mxu0 %v2478
        %3106 = vmatpush1.bf16.msra.mxu0 %v2477
        %3107 = vmatprep.subr.bf16.mxu0 %v2490
        %3108 = vmatpush1.bf16.msra.mxu0 %v2489
        %3109 = vmatprep.mubr.bf16.mxu0 %v1030
        %3110 = vmatmul.mubr.bf16.gmra.mrb[0].mxu0 %v1029
        %v3111 = vpop.f32.mrb[0].mxu0
        %v3112 = vadd.f32 0.0, %v3111
        %v3113 = vpop.f32.mrb[0].mxu0
        %v3114 = vadd.f32 0.0, %v3113
        %v3115 = vpop.f32.mrb[0].mxu0
        %v3116 = vadd.f32 0.0, %v3115
        %v3117 = vpop.f32.mrb[0].mxu0
        %v3118 = vadd.f32 0.0, %v3117
        %3119 = vmatprep.mubr.bf16.mxu0 %v1034
        %3120 = vmatmul.mubr.bf16.gmra.mrb[0].mxu0 %v1033
        %v3121 = vpop.f32.mrb[0].mxu0
        %v3122 = vadd.f32 0.0, %v3121
        %v3123 = vpop.f32.mrb[0].mxu0
        %v3124 = vadd.f32 0.0, %v3123
        %v3125 = vpop.f32.mrb[0].mxu0
        %v3126 = vadd.f32 0.0, %v3125
        %v3127 = vpop.f32.mrb[0].mxu0
        %v3128 = vadd.f32 0.0, %v3127
        %3129 = vmatprep.mubr.bf16.mxu0 %v1038
        %3130 = vmatmul.mubr.bf16.gmra.mrb[0].mxu0 %v1037
        %v3131 = vpop.f32.mrb[0].mxu0
        %v3132 = vadd.f32 0.0, %v3131
        %v3133 = vpop.f32.mrb[0].mxu0
        %v3134 = vadd.f32 0.0, %v3133
        %v3135 = vpop.f32.mrb[0].mxu0
        %v3136 = vadd.f32 0.0, %v3135
        %v3137 = vpop.f32.mrb[0].mxu0
        %v3138 = vadd.f32 0.0, %v3137
        %3139 = vmatprep.mubr.bf16.mxu0 %v1042
        %3140 = vmatmul.mubr.bf16.gmra.mrb[0].mxu0 %v1041
        %v3141 = vpop.f32.mrb[0].mxu0
        %v3142 = vadd.f32 0.0, %v3141
        %v3143 = vpop.f32.mrb[0].mxu0
        %v3144 = vadd.f32 0.0, %v3143
        %v3145 = vpop.f32.mrb[0].mxu0
        %v3146 = vadd.f32 0.0, %v3145
        %v3147 = vpop.f32.mrb[0].mxu0
        %v3148 = vadd.f32 0.0, %v3147
        %3149 = vmatprep.mubr.bf16.mxu0 %v1046
        %3150 = vmatmul.mubr.bf16.gmra.mrb[0].mxu0 %v1045
        %v3151 = vpop.f32.mrb[0].mxu0
        %v3152 = vadd.f32 0.0, %v3151
        %v3153 = vpop.f32.mrb[0].mxu0
        %v3154 = vadd.f32 0.0, %v3153
        %v3155 = vpop.f32.mrb[0].mxu0
        %v3156 = vadd.f32 0.0, %v3155
        %v3157 = vpop.f32.mrb[0].mxu0
        %v3158 = vadd.f32 0.0, %v3157
        %3159 = vmatprep.mubr.bf16.mxu0 %v1050
        %3160 = vmatmul.mubr.bf16.gmra.mrb[0].mxu0 %v1049
        %v3161 = vpop.f32.mrb[0].mxu0
        %v3162 = vadd.f32 0.0, %v3161
        %v3163 = vpop.f32.mrb[0].mxu0
        %v3164 = vadd.f32 0.0, %v3163
        %v3165 = vpop.f32.mrb[0].mxu0
        %v3166 = vadd.f32 0.0, %v3165
        %v3167 = vpop.f32.mrb[0].mxu0
        %v3168 = vadd.f32 0.0, %v3167
        %3169 = vmatprep.mubr.bf16.mxu0 %v1054
        %3170 = vmatmul.mubr.bf16.gmra.mrb[0].mxu0 %v1053
        %v3171 = vpop.f32.mrb[0].mxu0
        %v3172 = vadd.f32 0.0, %v3171
        %v3173 = vpop.f32.mrb[0].mxu0
        %v3174 = vadd.f32 0.0, %v3173
        %v3175 = vpop.f32.mrb[0].mxu0
        %v3176 = vadd.f32 0.0, %v3175
        %v3177 = vpop.f32.mrb[0].mxu0
        %v3178 = vadd.f32 0.0, %v3177
        %3179 = vmatprep.mubr.bf16.mxu0 %v1058
        %3180 = vmatmul.mubr.bf16.gmra.mrb[0].mxu0 %v1057
        %v3181 = vpop.f32.mrb[0].mxu0
        %v3182 = vadd.f32 0.0, %v3181
        %v3183 = vpop.f32.mrb[0].mxu0
        %v3184 = vadd.f32 0.0, %v3183
        %v3185 = vpop.f32.mrb[0].mxu0
        %v3186 = vadd.f32 0.0, %v3185
        %v3187 = vpop.f32.mrb[0].mxu0
        %v3188 = vadd.f32 0.0, %v3187
        %3189 = vmatprep.mubr.bf16.mxu0 %v1062
        %3190 = vmatmul.mubr.bf16.gmra.mrb[0].mxu0 %v1061
        %v3191 = vpop.f32.mrb[0].mxu0
        %v3192 = vadd.f32 0.0, %v3191
        %v3193 = vpop.f32.mrb[0].mxu0
        %v3194 = vadd.f32 0.0, %v3193
        %v3195 = vpop.f32.mrb[0].mxu0
        %v3196 = vadd.f32 0.0, %v3195
        %v3197 = vpop.f32.mrb[0].mxu0
        %v3198 = vadd.f32 0.0, %v3197
        %3199 = vmatprep.mubr.bf16.mxu0 %v1066
        %3200 = vmatmul.mubr.bf16.gmra.mrb[0].mxu0 %v1065
        %v3201 = vpop.f32.mrb[0].mxu0
        %v3202 = vadd.f32 0.0, %v3201
        %v3203 = vpop.f32.mrb[0].mxu0
        %v3204 = vadd.f32 0.0, %v3203
        %v3205 = vpop.f32.mrb[0].mxu0
        %v3206 = vadd.f32 0.0, %v3205
        %v3207 = vpop.f32.mrb[0].mxu0
        %v3208 = vadd.f32 0.0, %v3207
        %3209 = vmatprep.mubr.bf16.mxu0 %v1070
        %3210 = vmatmul.mubr.bf16.gmra.mrb[0].mxu0 %v1069
        %v3211 = vpop.f32.mrb[0].mxu0
        %v3212 = vadd.f32 0.0, %v3211
        %v3213 = vpop.f32.mrb[0].mxu0
        %v3214 = vadd.f32 0.0, %v3213
        %v3215 = vpop.f32.mrb[0].mxu0
        %v3216 = vadd.f32 0.0, %v3215
        %v3217 = vpop.f32.mrb[0].mxu0
        %v3218 = vadd.f32 0.0, %v3217
        %3219 = vmatprep.mubr.bf16.mxu0 %v1074
        %3220 = vmatmul.mubr.bf16.gmra.mrb[0].mxu0 %v1073
        %v3221 = vpop.f32.mrb[0].mxu0
        %v3222 = vadd.f32 0.0, %v3221
        %v3223 = vpop.f32.mrb[0].mxu0
        %v3224 = vadd.f32 0.0, %v3223
        %v3225 = vpop.f32.mrb[0].mxu0
        %v3226 = vadd.f32 0.0, %v3225
        %v3227 = vpop.f32.mrb[0].mxu0
        %v3228 = vadd.f32 0.0, %v3227
        %3229 = vmatprep.mubr.bf16.mxu0 %v1078
        %3230 = vmatmul.mubr.bf16.gmra.mrb[0].mxu0 %v1077
        %v3231 = vpop.f32.mrb[0].mxu0
        %v3232 = vadd.f32 0.0, %v3231
        %v3233 = vpop.f32.mrb[0].mxu0
        %v3234 = vadd.f32 0.0, %v3233
        %v3235 = vpop.f32.mrb[0].mxu0
        %v3236 = vadd.f32 0.0, %v3235
        %v3237 = vpop.f32.mrb[0].mxu0
        %v3238 = vadd.f32 0.0, %v3237
        %3239 = vmatprep.mubr.bf16.mxu0 %v1082
        %3240 = vmatmul.mubr.bf16.gmra.mrb[0].mxu0 %v1081
        %v3241 = vpop.f32.mrb[0].mxu0
        %v3242 = vadd.f32 0.0, %v3241
        %v3243 = vpop.f32.mrb[0].mxu0
        %v3244 = vadd.f32 0.0, %v3243
        %v3245 = vpop.f32.mrb[0].mxu0
        %v3246 = vadd.f32 0.0, %v3245
        %v3247 = vpop.f32.mrb[0].mxu0
        %v3248 = vadd.f32 0.0, %v3247
        %3249 = vmatprep.mubr.bf16.mxu0 %v1086
        %3250 = vmatmul.mubr.bf16.gmra.mrb[0].mxu0 %v1085
        %v3251 = vpop.f32.mrb[0].mxu0
        %v3252 = vadd.f32 0.0, %v3251
        %v3253 = vpop.f32.mrb[0].mxu0
        %v3254 = vadd.f32 0.0, %v3253
        %v3255 = vpop.f32.mrb[0].mxu0
        %v3256 = vadd.f32 0.0, %v3255
        %v3257 = vpop.f32.mrb[0].mxu0
        %v3258 = vadd.f32 0.0, %v3257
        %3259 = vmatprep.mubr.bf16.mxu0 %v1090
        %3260 = vmatmul.mubr.bf16.gmra.mrb[0].mxu0 %v1089
        %v3261 = vpop.f32.mrb[0].mxu0
        %v3262 = vadd.f32 0.0, %v3261
        %v3263 = vpop.f32.mrb[0].mxu0
        %v3264 = vadd.f32 0.0, %v3263
        %v3265 = vpop.f32.mrb[0].mxu0
        %v3266 = vadd.f32 0.0, %v3265
        %v3267 = vpop.f32.mrb[0].mxu0
        %v3268 = vadd.f32 0.0, %v3267
        %3269 = vdwg.mxu0
        %3270 = vmatprep.subr.bf16.mxu0 %v2502
        %3271 = vmatpush1.bf16.msra.mxu0 %v2501
        %3272 = vmatprep.subr.bf16.mxu0 %v2514
        %3273 = vmatpush1.bf16.msra.mxu0 %v2513
        %3274 = vmatprep.subr.bf16.mxu0 %v2526
        %3275 = vmatpush1.bf16.msra.mxu0 %v2525
        %3276 = vmatprep.subr.bf16.mxu0 %v2538
        %3277 = vmatpush1.bf16.msra.mxu0 %v2537
        %3278 = vmatprep.subr.bf16.mxu0 %v2550
        %3279 = vmatpush1.bf16.msra.mxu0 %v2549
        %3280 = vmatprep.subr.bf16.mxu0 %v2562
        %3281 = vmatpush1.bf16.msra.mxu0 %v2561
        %3282 = vmatprep.subr.bf16.mxu0 %v2574
        %3283 = vmatpush1.bf16.msra.mxu0 %v2573
        %3284 = vmatprep.subr.bf16.mxu0 %v2586
        %3285 = vmatpush1.bf16.msra.mxu0 %v2585
        %3286 = vmatprep.subr.bf16.mxu0 %v2598
        %3287 = vmatpush1.bf16.msra.mxu0 %v2597
        %3288 = vmatprep.subr.bf16.mxu0 %v2610
        %3289 = vmatpush1.bf16.msra.mxu0 %v2609
        %3290 = vmatprep.subr.bf16.mxu0 %v2622
        %3291 = vmatpush1.bf16.msra.mxu0 %v2621
        %3292 = vmatprep.subr.bf16.mxu0 %v2634
        %3293 = vmatpush1.bf16.msra.mxu0 %v2633
        %3294 = vmatprep.subr.bf16.mxu0 %v2646
        %3295 = vmatpush1.bf16.msra.mxu0 %v2645
        %3296 = vmatprep.subr.bf16.mxu0 %v2658
        %3297 = vmatpush1.bf16.msra.mxu0 %v2657
        %3298 = vmatprep.subr.bf16.mxu0 %v2670
        %3299 = vmatpush1.bf16.msra.mxu0 %v2669
        %3300 = vmatprep.subr.bf16.mxu0 %v2682
        %3301 = vmatpush1.bf16.msra.mxu0 %v2681
        %3302 = vmatprep.mubr.bf16.mxu0 %v1032
        %3303 = vmatmul.mubr.bf16.gmra.mrb[0].mxu0 %v1031
        %v3304 = vpop.f32.mrb[0].mxu0
        %v3305 = vadd.f32 %v3112, %v3304
        %v3306 = vpop.f32.mrb[0].mxu0
        %v3307 = vadd.f32 %v3114, %v3306
        %v3308 = vpop.f32.mrb[0].mxu0
        %v3309 = vadd.f32 %v3116, %v3308
        %v3310 = vpop.f32.mrb[0].mxu0
        %v3311 = vadd.f32 %v3118, %v3310
        %3312 = vmatprep.mubr.bf16.mxu0 %v1036
        %3313 = vmatmul.mubr.bf16.gmra.mrb[0].mxu0 %v1035
        %v3314 = vpop.f32.mrb[0].mxu0
        %v3315 = vadd.f32 %v3122, %v3314
        %v3316 = vpop.f32.mrb[0].mxu0
        %v3317 = vadd.f32 %v3124, %v3316
        %v3318 = vpop.f32.mrb[0].mxu0
        %v3319 = vadd.f32 %v3126, %v3318
        %v3320 = vpop.f32.mrb[0].mxu0
        %v3321 = vadd.f32 %v3128, %v3320
        %3322 = vmatprep.mubr.bf16.mxu0 %v1040
        %3323 = vmatmul.mubr.bf16.gmra.mrb[0].mxu0 %v1039
        %v3324 = vpop.f32.mrb[0].mxu0
        %v3325 = vadd.f32 %v3132, %v3324
        %v3326 = vpop.f32.mrb[0].mxu0
        %v3327 = vadd.f32 %v3134, %v3326
        %v3328 = vpop.f32.mrb[0].mxu0
        %v3329 = vadd.f32 %v3136, %v3328
        %v3330 = vpop.f32.mrb[0].mxu0
        %v3331 = vadd.f32 %v3138, %v3330
        %3332 = vmatprep.mubr.bf16.mxu0 %v1044
        %3333 = vmatmul.mubr.bf16.gmra.mrb[0].mxu0 %v1043
        %v3334 = vpop.f32.mrb[0].mxu0
        %v3335 = vadd.f32 %v3142, %v3334
        %v3336 = vpop.f32.mrb[0].mxu0
        %v3337 = vadd.f32 %v3144, %v3336
        %v3338 = vpop.f32.mrb[0].mxu0
        %v3339 = vadd.f32 %v3146, %v3338
        %v3340 = vpop.f32.mrb[0].mxu0
        %v3341 = vadd.f32 %v3148, %v3340
        %3342 = vmatprep.mubr.bf16.mxu0 %v1048
        %3343 = vmatmul.mubr.bf16.gmra.mrb[0].mxu0 %v1047
        %v3344 = vpop.f32.mrb[0].mxu0
        %v3345 = vadd.f32 %v3152, %v3344
        %v3346 = vpop.f32.mrb[0].mxu0
        %v3347 = vadd.f32 %v3154, %v3346
        %v3348 = vpop.f32.mrb[0].mxu0
        %v3349 = vadd.f32 %v3156, %v3348
        %v3350 = vpop.f32.mrb[0].mxu0
        %v3351 = vadd.f32 %v3158, %v3350
        %3352 = vmatprep.mubr.bf16.mxu0 %v1052
        %3353 = vmatmul.mubr.bf16.gmra.mrb[0].mxu0 %v1051
        %v3354 = vpop.f32.mrb[0].mxu0
        %v3355 = vadd.f32 %v3162, %v3354
        %v3356 = vpop.f32.mrb[0].mxu0
        %v3357 = vadd.f32 %v3164, %v3356
        %v3358 = vpop.f32.mrb[0].mxu0
        %v3359 = vadd.f32 %v3166, %v3358
        %v3360 = vpop.f32.mrb[0].mxu0
        %v3361 = vadd.f32 %v3168, %v3360
        %3362 = vmatprep.mubr.bf16.mxu0 %v1056
        %3363 = vmatmul.mubr.bf16.gmra.mrb[0].mxu0 %v1055
        %v3364 = vpop.f32.mrb[0].mxu0
        %v3365 = vadd.f32 %v3172, %v3364
        %v3366 = vpop.f32.mrb[0].mxu0
        %v3367 = vadd.f32 %v3174, %v3366
        %v3368 = vpop.f32.mrb[0].mxu0
        %v3369 = vadd.f32 %v3176, %v3368
        %v3370 = vpop.f32.mrb[0].mxu0
        %v3371 = vadd.f32 %v3178, %v3370
        %3372 = vmatprep.mubr.bf16.mxu0 %v1060
        %3373 = vmatmul.mubr.bf16.gmra.mrb[0].mxu0 %v1059
        %v3374 = vpop.f32.mrb[0].mxu0
        %v3375 = vadd.f32 %v3182, %v3374
        %v3376 = vpop.f32.mrb[0].mxu0
        %v3377 = vadd.f32 %v3184, %v3376
        %v3378 = vpop.f32.mrb[0].mxu0
        %v3379 = vadd.f32 %v3186, %v3378
        %v3380 = vpop.f32.mrb[0].mxu0
        %v3381 = vadd.f32 %v3188, %v3380
        %3382 = vmatprep.mubr.bf16.mxu0 %v1064
        %3383 = vmatmul.mubr.bf16.gmra.mrb[0].mxu0 %v1063
        %v3384 = vpop.f32.mrb[0].mxu0
        %v3385 = vadd.f32 %v3192, %v3384
        %v3386 = vpop.f32.mrb[0].mxu0
        %v3387 = vadd.f32 %v3194, %v3386
        %v3388 = vpop.f32.mrb[0].mxu0
        %v3389 = vadd.f32 %v3196, %v3388
        %v3390 = vpop.f32.mrb[0].mxu0
        %v3391 = vadd.f32 %v3198, %v3390
        %3392 = vmatprep.mubr.bf16.mxu0 %v1068
        %3393 = vmatmul.mubr.bf16.gmra.mrb[0].mxu0 %v1067
        %v3394 = vpop.f32.mrb[0].mxu0
        %v3395 = vadd.f32 %v3202, %v3394
        %v3396 = vpop.f32.mrb[0].mxu0
        %v3397 = vadd.f32 %v3204, %v3396
        %v3398 = vpop.f32.mrb[0].mxu0
        %v3399 = vadd.f32 %v3206, %v3398
        %v3400 = vpop.f32.mrb[0].mxu0
        %v3401 = vadd.f32 %v3208, %v3400
        %3402 = vmatprep.mubr.bf16.mxu0 %v1072
        %3403 = vmatmul.mubr.bf16.gmra.mrb[0].mxu0 %v1071
        %v3404 = vpop.f32.mrb[0].mxu0
        %v3405 = vadd.f32 %v3212, %v3404
        %v3406 = vpop.f32.mrb[0].mxu0
        %v3407 = vadd.f32 %v3214, %v3406
        %v3408 = vpop.f32.mrb[0].mxu0
        %v3409 = vadd.f32 %v3216, %v3408
        %v3410 = vpop.f32.mrb[0].mxu0
        %v3411 = vadd.f32 %v3218, %v3410
        %3412 = vmatprep.mubr.bf16.mxu0 %v1076
        %3413 = vmatmul.mubr.bf16.gmra.mrb[0].mxu0 %v1075
        %v3414 = vpop.f32.mrb[0].mxu0
        %v3415 = vadd.f32 %v3222, %v3414
        %v3416 = vpop.f32.mrb[0].mxu0
        %v3417 = vadd.f32 %v3224, %v3416
        %v3418 = vpop.f32.mrb[0].mxu0
        %v3419 = vadd.f32 %v3226, %v3418
        %v3420 = vpop.f32.mrb[0].mxu0
        %v3421 = vadd.f32 %v3228, %v3420
        %3422 = vmatprep.mubr.bf16.mxu0 %v1080
        %3423 = vmatmul.mubr.bf16.gmra.mrb[0].mxu0 %v1079
        %v3424 = vpop.f32.mrb[0].mxu0
        %v3425 = vadd.f32 %v3232, %v3424
        %v3426 = vpop.f32.mrb[0].mxu0
        %v3427 = vadd.f32 %v3234, %v3426
        %v3428 = vpop.f32.mrb[0].mxu0
        %v3429 = vadd.f32 %v3236, %v3428
        %v3430 = vpop.f32.mrb[0].mxu0
        %v3431 = vadd.f32 %v3238, %v3430
        %3432 = vmatprep.mubr.bf16.mxu0 %v1084
        %3433 = vmatmul.mubr.bf16.gmra.mrb[0].mxu0 %v1083
        %v3434 = vpop.f32.mrb[0].mxu0
        %v3435 = vadd.f32 %v3242, %v3434
        %v3436 = vpop.f32.mrb[0].mxu0
        %v3437 = vadd.f32 %v3244, %v3436
        %v3438 = vpop.f32.mrb[0].mxu0
        %v3439 = vadd.f32 %v3246, %v3438
        %v3440 = vpop.f32.mrb[0].mxu0
        %v3441 = vadd.f32 %v3248, %v3440
        %3442 = vmatprep.mubr.bf16.mxu0 %v1088
        %3443 = vmatmul.mubr.bf16.gmra.mrb[0].mxu0 %v1087
        %v3444 = vpop.f32.mrb[0].mxu0
        %v3445 = vadd.f32 %v3252, %v3444
        %v3446 = vpop.f32.mrb[0].mxu0
        %v3447 = vadd.f32 %v3254, %v3446
        %v3448 = vpop.f32.mrb[0].mxu0
        %v3449 = vadd.f32 %v3256, %v3448
        %v3450 = vpop.f32.mrb[0].mxu0
        %v3451 = vadd.f32 %v3258, %v3450
        %3452 = vmatprep.mubr.bf16.mxu0 %v1092
        %3453 = vmatmul.mubr.bf16.gmra.mrb[0].mxu0 %v1091
        %v3454 = vpop.f32.mrb[0].mxu0
        %v3455 = vadd.f32 %v3262, %v3454
        %v3456 = vpop.f32.mrb[0].mxu0
        %v3457 = vadd.f32 %v3264, %v3456
        %v3458 = vpop.f32.mrb[0].mxu0
        %v3459 = vadd.f32 %v3266, %v3458
        %v3460 = vpop.f32.mrb[0].mxu0
        %v3461 = vadd.f32 %v3268, %v3460
        %3462 = vdwg.mxu0
        %3463 = vmatprep.subr.bf16.mxu0 %v2312
        %3464 = vmatpush1.bf16.msra.mxu0 %v2311
        %3465 = vmatprep.subr.bf16.mxu0 %v2324
        %3466 = vmatpush1.bf16.msra.mxu0 %v2323
        %3467 = vmatprep.subr.bf16.mxu0 %v2336
        %3468 = vmatpush1.bf16.msra.mxu0 %v2335
        %3469 = vmatprep.subr.bf16.mxu0 %v2348
        %3470 = vmatpush1.bf16.msra.mxu0 %v2347
        %3471 = vmatprep.subr.bf16.mxu0 %v2360
        %3472 = vmatpush1.bf16.msra.mxu0 %v2359
        %3473 = vmatprep.subr.bf16.mxu0 %v2372
        %3474 = vmatpush1.bf16.msra.mxu0 %v2371
        %3475 = vmatprep.subr.bf16.mxu0 %v2384
        %3476 = vmatpush1.bf16.msra.mxu0 %v2383
        %3477 = vmatprep.subr.bf16.mxu0 %v2396
        %3478 = vmatpush1.bf16.msra.mxu0 %v2395
        %3479 = vmatprep.subr.bf16.mxu0 %v2408
        %3480 = vmatpush1.bf16.msra.mxu0 %v2407
        %3481 = vmatprep.subr.bf16.mxu0 %v2420
        %3482 = vmatpush1.bf16.msra.mxu0 %v2419
        %3483 = vmatprep.subr.bf16.mxu0 %v2432
        %3484 = vmatpush1.bf16.msra.mxu0 %v2431
        %3485 = vmatprep.subr.bf16.mxu0 %v2444
        %3486 = vmatpush1.bf16.msra.mxu0 %v2443
        %3487 = vmatprep.subr.bf16.mxu0 %v2456
        %3488 = vmatpush1.bf16.msra.mxu0 %v2455
        %3489 = vmatprep.subr.bf16.mxu0 %v2468
        %3490 = vmatpush1.bf16.msra.mxu0 %v2467
        %3491 = vmatprep.subr.bf16.mxu0 %v2480
        %3492 = vmatpush1.bf16.msra.mxu0 %v2479
        %3493 = vmatprep.subr.bf16.mxu0 %v2492
        %3494 = vmatpush1.bf16.msra.mxu0 %v2491
        %3495 = vmatprep.mubr.bf16.mxu0 %v1030
        %3496 = vmatmul.mubr.bf16.gmra.mrb[0].mxu0 %v1029
        %v3497 = vpop.f32.mrb[0].mxu0
        %v3498 = vadd.f32 0.0, %v3497
        %v3499 = vpop.f32.mrb[0].mxu0
        %v3500 = vadd.f32 0.0, %v3499
        %v3501 = vpop.f32.mrb[0].mxu0
        %v3502 = vadd.f32 0.0, %v3501
        %v3503 = vpop.f32.mrb[0].mxu0
        %v3504 = vadd.f32 0.0, %v3503
        %3505 = vmatprep.mubr.bf16.mxu0 %v1034
        %3506 = vmatmul.mubr.bf16.gmra.mrb[0].mxu0 %v1033
        %v3507 = vpop.f32.mrb[0].mxu0
        %v3508 = vadd.f32 0.0, %v3507
        %v3509 = vpop.f32.mrb[0].mxu0
        %v3510 = vadd.f32 0.0, %v3509
        %v3511 = vpop.f32.mrb[0].mxu0
        %v3512 = vadd.f32 0.0, %v3511
        %v3513 = vpop.f32.mrb[0].mxu0
        %v3514 = vadd.f32 0.0, %v3513
        %3515 = vmatprep.mubr.bf16.mxu0 %v1038
        %3516 = vmatmul.mubr.bf16.gmra.mrb[0].mxu0 %v1037
        %v3517 = vpop.f32.mrb[0].mxu0
        %v3518 = vadd.f32 0.0, %v3517
        %v3519 = vpop.f32.mrb[0].mxu0
        %v3520 = vadd.f32 0.0, %v3519
        %v3521 = vpop.f32.mrb[0].mxu0
        %v3522 = vadd.f32 0.0, %v3521
        %v3523 = vpop.f32.mrb[0].mxu0
        %v3524 = vadd.f32 0.0, %v3523
        %3525 = vmatprep.mubr.bf16.mxu0 %v1042
        %3526 = vmatmul.mubr.bf16.gmra.mrb[0].mxu0 %v1041
        %v3527 = vpop.f32.mrb[0].mxu0
        %v3528 = vadd.f32 0.0, %v3527
        %v3529 = vpop.f32.mrb[0].mxu0
        %v3530 = vadd.f32 0.0, %v3529
        %v3531 = vpop.f32.mrb[0].mxu0
        %v3532 = vadd.f32 0.0, %v3531
        %v3533 = vpop.f32.mrb[0].mxu0
        %v3534 = vadd.f32 0.0, %v3533
        %3535 = vmatprep.mubr.bf16.mxu0 %v1046
        %3536 = vmatmul.mubr.bf16.gmra.mrb[0].mxu0 %v1045
        %v3537 = vpop.f32.mrb[0].mxu0
        %v3538 = vadd.f32 0.0, %v3537
        %v3539 = vpop.f32.mrb[0].mxu0
        %v3540 = vadd.f32 0.0, %v3539
        %v3541 = vpop.f32.mrb[0].mxu0
        %v3542 = vadd.f32 0.0, %v3541
        %v3543 = vpop.f32.mrb[0].mxu0
        %v3544 = vadd.f32 0.0, %v3543
        %3545 = vmatprep.mubr.bf16.mxu0 %v1050
        %3546 = vmatmul.mubr.bf16.gmra.mrb[0].mxu0 %v1049
        %v3547 = vpop.f32.mrb[0].mxu0
        %v3548 = vadd.f32 0.0, %v3547
        %v3549 = vpop.f32.mrb[0].mxu0
        %v3550 = vadd.f32 0.0, %v3549
        %v3551 = vpop.f32.mrb[0].mxu0
        %v3552 = vadd.f32 0.0, %v3551
        %v3553 = vpop.f32.mrb[0].mxu0
        %v3554 = vadd.f32 0.0, %v3553
        %3555 = vmatprep.mubr.bf16.mxu0 %v1054
        %3556 = vmatmul.mubr.bf16.gmra.mrb[0].mxu0 %v1053
        %v3557 = vpop.f32.mrb[0].mxu0
        %v3558 = vadd.f32 0.0, %v3557
        %v3559 = vpop.f32.mrb[0].mxu0
        %v3560 = vadd.f32 0.0, %v3559
        %v3561 = vpop.f32.mrb[0].mxu0
        %v3562 = vadd.f32 0.0, %v3561
        %v3563 = vpop.f32.mrb[0].mxu0
        %v3564 = vadd.f32 0.0, %v3563
        %3565 = vmatprep.mubr.bf16.mxu0 %v1058
        %3566 = vmatmul.mubr.bf16.gmra.mrb[0].mxu0 %v1057
        %v3567 = vpop.f32.mrb[0].mxu0
        %v3568 = vadd.f32 0.0, %v3567
        %v3569 = vpop.f32.mrb[0].mxu0
        %v3570 = vadd.f32 0.0, %v3569
        %v3571 = vpop.f32.mrb[0].mxu0
        %v3572 = vadd.f32 0.0, %v3571
        %v3573 = vpop.f32.mrb[0].mxu0
        %v3574 = vadd.f32 0.0, %v3573
        %3575 = vmatprep.mubr.bf16.mxu0 %v1062
        %3576 = vmatmul.mubr.bf16.gmra.mrb[0].mxu0 %v1061
        %v3577 = vpop.f32.mrb[0].mxu0
        %v3578 = vadd.f32 0.0, %v3577
        %v3579 = vpop.f32.mrb[0].mxu0
        %v3580 = vadd.f32 0.0, %v3579
        %v3581 = vpop.f32.mrb[0].mxu0
        %v3582 = vadd.f32 0.0, %v3581
        %v3583 = vpop.f32.mrb[0].mxu0
        %v3584 = vadd.f32 0.0, %v3583
        %3585 = vmatprep.mubr.bf16.mxu0 %v1066
        %3586 = vmatmul.mubr.bf16.gmra.mrb[0].mxu0 %v1065
        %v3587 = vpop.f32.mrb[0].mxu0
        %v3588 = vadd.f32 0.0, %v3587
        %v3589 = vpop.f32.mrb[0].mxu0
        %v3590 = vadd.f32 0.0, %v3589
        %v3591 = vpop.f32.mrb[0].mxu0
        %v3592 = vadd.f32 0.0, %v3591
        %v3593 = vpop.f32.mrb[0].mxu0
        %v3594 = vadd.f32 0.0, %v3593
        %3595 = vmatprep.mubr.bf16.mxu0 %v1070
        %3596 = vmatmul.mubr.bf16.gmra.mrb[0].mxu0 %v1069
        %v3597 = vpop.f32.mrb[0].mxu0
        %v3598 = vadd.f32 0.0, %v3597
        %v3599 = vpop.f32.mrb[0].mxu0
        %v3600 = vadd.f32 0.0, %v3599
        %v3601 = vpop.f32.mrb[0].mxu0
        %v3602 = vadd.f32 0.0, %v3601
        %v3603 = vpop.f32.mrb[0].mxu0
        %v3604 = vadd.f32 0.0, %v3603
        %3605 = vmatprep.mubr.bf16.mxu0 %v1074
        %3606 = vmatmul.mubr.bf16.gmra.mrb[0].mxu0 %v1073
        %v3607 = vpop.f32.mrb[0].mxu0
        %v3608 = vadd.f32 0.0, %v3607
        %v3609 = vpop.f32.mrb[0].mxu0
        %v3610 = vadd.f32 0.0, %v3609
        %v3611 = vpop.f32.mrb[0].mxu0
        %v3612 = vadd.f32 0.0, %v3611
        %v3613 = vpop.f32.mrb[0].mxu0
        %v3614 = vadd.f32 0.0, %v3613
        %3615 = vmatprep.mubr.bf16.mxu0 %v1078
        %3616 = vmatmul.mubr.bf16.gmra.mrb[0].mxu0 %v1077
        %v3617 = vpop.f32.mrb[0].mxu0
        %v3618 = vadd.f32 0.0, %v3617
        %v3619 = vpop.f32.mrb[0].mxu0
        %v3620 = vadd.f32 0.0, %v3619
        %v3621 = vpop.f32.mrb[0].mxu0
        %v3622 = vadd.f32 0.0, %v3621
        %v3623 = vpop.f32.mrb[0].mxu0
        %v3624 = vadd.f32 0.0, %v3623
        %3625 = vmatprep.mubr.bf16.mxu0 %v1082
        %3626 = vmatmul.mubr.bf16.gmra.mrb[0].mxu0 %v1081
        %v3627 = vpop.f32.mrb[0].mxu0
        %v3628 = vadd.f32 0.0, %v3627
        %v3629 = vpop.f32.mrb[0].mxu0
        %v3630 = vadd.f32 0.0, %v3629
        %v3631 = vpop.f32.mrb[0].mxu0
        %v3632 = vadd.f32 0.0, %v3631
        %v3633 = vpop.f32.mrb[0].mxu0
        %v3634 = vadd.f32 0.0, %v3633
        %3635 = vmatprep.mubr.bf16.mxu0 %v1086
        %3636 = vmatmul.mubr.bf16.gmra.mrb[0].mxu0 %v1085
        %v3637 = vpop.f32.mrb[0].mxu0
        %v3638 = vadd.f32 0.0, %v3637
        %v3639 = vpop.f32.mrb[0].mxu0
        %v3640 = vadd.f32 0.0, %v3639
        %v3641 = vpop.f32.mrb[0].mxu0
        %v3642 = vadd.f32 0.0, %v3641
        %v3643 = vpop.f32.mrb[0].mxu0
        %v3644 = vadd.f32 0.0, %v3643
        %3645 = vmatprep.mubr.bf16.mxu0 %v1090
        %3646 = vmatmul.mubr.bf16.gmra.mrb[0].mxu0 %v1089
        %v3647 = vpop.f32.mrb[0].mxu0
        %v3648 = vadd.f32 0.0, %v3647
        %v3649 = vpop.f32.mrb[0].mxu0
        %v3650 = vadd.f32 0.0, %v3649
        %v3651 = vpop.f32.mrb[0].mxu0
        %v3652 = vadd.f32 0.0, %v3651
        %v3653 = vpop.f32.mrb[0].mxu0
        %v3654 = vadd.f32 0.0, %v3653
        %3655 = vdwg.mxu0
        %3656 = vmatprep.subr.bf16.mxu0 %v2504
        %3657 = vmatpush1.bf16.msra.mxu0 %v2503
        %3658 = vmatprep.subr.bf16.mxu0 %v2516
        %3659 = vmatpush1.bf16.msra.mxu0 %v2515
        %3660 = vmatprep.subr.bf16.mxu0 %v2528
        %3661 = vmatpush1.bf16.msra.mxu0 %v2527
        %3662 = vmatprep.subr.bf16.mxu0 %v2540
        %3663 = vmatpush1.bf16.msra.mxu0 %v2539
        %3664 = vmatprep.subr.bf16.mxu0 %v2552
        %3665 = vmatpush1.bf16.msra.mxu0 %v2551
        %3666 = vmatprep.subr.bf16.mxu0 %v2564
        %3667 = vmatpush1.bf16.msra.mxu0 %v2563
        %3668 = vmatprep.subr.bf16.mxu0 %v2576
        %3669 = vmatpush1.bf16.msra.mxu0 %v2575
        %3670 = vmatprep.subr.bf16.mxu0 %v2588
        %3671 = vmatpush1.bf16.msra.mxu0 %v2587
        %3672 = vmatprep.subr.bf16.mxu0 %v2600
        %3673 = vmatpush1.bf16.msra.mxu0 %v2599
        %3674 = vmatprep.subr.bf16.mxu0 %v2612
        %3675 = vmatpush1.bf16.msra.mxu0 %v2611
        %3676 = vmatprep.subr.bf16.mxu0 %v2624
        %3677 = vmatpush1.bf16.msra.mxu0 %v2623
        %3678 = vmatprep.subr.bf16.mxu0 %v2636
        %3679 = vmatpush1.bf16.msra.mxu0 %v2635
        %3680 = vmatprep.subr.bf16.mxu0 %v2648
        %3681 = vmatpush1.bf16.msra.mxu0 %v2647
        %3682 = vmatprep.subr.bf16.mxu0 %v2660
        %3683 = vmatpush1.bf16.msra.mxu0 %v2659
        %3684 = vmatprep.subr.bf16.mxu0 %v2672
        %3685 = vmatpush1.bf16.msra.mxu0 %v2671
        %3686 = vmatprep.subr.bf16.mxu0 %v2684
        %3687 = vmatpush1.bf16.msra.mxu0 %v2683
        %3688 = vmatprep.mubr.bf16.mxu0 %v1032
        %3689 = vmatmul.mubr.bf16.gmra.mrb[0].mxu0 %v1031
        %v3690 = vpop.f32.mrb[0].mxu0
        %v3691 = vadd.f32 %v3498, %v3690
        %v3692 = vpop.f32.mrb[0].mxu0
        %v3693 = vadd.f32 %v3500, %v3692
        %v3694 = vpop.f32.mrb[0].mxu0
        %v3695 = vadd.f32 %v3502, %v3694
        %v3696 = vpop.f32.mrb[0].mxu0
        %v3697 = vadd.f32 %v3504, %v3696
        %3698 = vmatprep.mubr.bf16.mxu0 %v1036
        %3699 = vmatmul.mubr.bf16.gmra.mrb[0].mxu0 %v1035
        %v3700 = vpop.f32.mrb[0].mxu0
        %v3701 = vadd.f32 %v3508, %v3700
        %v3702 = vpop.f32.mrb[0].mxu0
        %v3703 = vadd.f32 %v3510, %v3702
        %v3704 = vpop.f32.mrb[0].mxu0
        %v3705 = vadd.f32 %v3512, %v3704
        %v3706 = vpop.f32.mrb[0].mxu0
        %v3707 = vadd.f32 %v3514, %v3706
        %3708 = vmatprep.mubr.bf16.mxu0 %v1040
        %3709 = vmatmul.mubr.bf16.gmra.mrb[0].mxu0 %v1039
        %v3710 = vpop.f32.mrb[0].mxu0
        %v3711 = vadd.f32 %v3518, %v3710
        %v3712 = vpop.f32.mrb[0].mxu0
        %v3713 = vadd.f32 %v3520, %v3712
        %v3714 = vpop.f32.mrb[0].mxu0
        %v3715 = vadd.f32 %v3522, %v3714
        %v3716 = vpop.f32.mrb[0].mxu0
        %v3717 = vadd.f32 %v3524, %v3716
        %3718 = vmatprep.mubr.bf16.mxu0 %v1044
        %3719 = vmatmul.mubr.bf16.gmra.mrb[0].mxu0 %v1043
        %v3720 = vpop.f32.mrb[0].mxu0
        %v3721 = vadd.f32 %v3528, %v3720
        %v3722 = vpop.f32.mrb[0].mxu0
        %v3723 = vadd.f32 %v3530, %v3722
        %v3724 = vpop.f32.mrb[0].mxu0
        %v3725 = vadd.f32 %v3532, %v3724
        %v3726 = vpop.f32.mrb[0].mxu0
        %v3727 = vadd.f32 %v3534, %v3726
        %3728 = vmatprep.mubr.bf16.mxu0 %v1048
        %3729 = vmatmul.mubr.bf16.gmra.mrb[0].mxu0 %v1047
        %v3730 = vpop.f32.mrb[0].mxu0
        %v3731 = vadd.f32 %v3538, %v3730
        %v3732 = vpop.f32.mrb[0].mxu0
        %v3733 = vadd.f32 %v3540, %v3732
        %v3734 = vpop.f32.mrb[0].mxu0
        %v3735 = vadd.f32 %v3542, %v3734
        %v3736 = vpop.f32.mrb[0].mxu0
        %v3737 = vadd.f32 %v3544, %v3736
        %3738 = vmatprep.mubr.bf16.mxu0 %v1052
        %3739 = vmatmul.mubr.bf16.gmra.mrb[0].mxu0 %v1051
        %v3740 = vpop.f32.mrb[0].mxu0
        %v3741 = vadd.f32 %v3548, %v3740
        %v3742 = vpop.f32.mrb[0].mxu0
        %v3743 = vadd.f32 %v3550, %v3742
        %v3744 = vpop.f32.mrb[0].mxu0
        %v3745 = vadd.f32 %v3552, %v3744
        %v3746 = vpop.f32.mrb[0].mxu0
        %v3747 = vadd.f32 %v3554, %v3746
        %3748 = vmatprep.mubr.bf16.mxu0 %v1056
        %3749 = vmatmul.mubr.bf16.gmra.mrb[0].mxu0 %v1055
        %v3750 = vpop.f32.mrb[0].mxu0
        %v3751 = vadd.f32 %v3558, %v3750
        %v3752 = vpop.f32.mrb[0].mxu0
        %v3753 = vadd.f32 %v3560, %v3752
        %v3754 = vpop.f32.mrb[0].mxu0
        %v3755 = vadd.f32 %v3562, %v3754
        %v3756 = vpop.f32.mrb[0].mxu0
        %v3757 = vadd.f32 %v3564, %v3756
        %3758 = vmatprep.mubr.bf16.mxu0 %v1060
        %3759 = vmatmul.mubr.bf16.gmra.mrb[0].mxu0 %v1059
        %v3760 = vpop.f32.mrb[0].mxu0
        %v3761 = vadd.f32 %v3568, %v3760
        %v3762 = vpop.f32.mrb[0].mxu0
        %v3763 = vadd.f32 %v3570, %v3762
        %v3764 = vpop.f32.mrb[0].mxu0
        %v3765 = vadd.f32 %v3572, %v3764
        %v3766 = vpop.f32.mrb[0].mxu0
        %v3767 = vadd.f32 %v3574, %v3766
        %3768 = vmatprep.mubr.bf16.mxu0 %v1064
        %3769 = vmatmul.mubr.bf16.gmra.mrb[0].mxu0 %v1063
        %v3770 = vpop.f32.mrb[0].mxu0
        %v3771 = vadd.f32 %v3578, %v3770
        %v3772 = vpop.f32.mrb[0].mxu0
        %v3773 = vadd.f32 %v3580, %v3772
        %v3774 = vpop.f32.mrb[0].mxu0
        %v3775 = vadd.f32 %v3582, %v3774
        %v3776 = vpop.f32.mrb[0].mxu0
        %v3777 = vadd.f32 %v3584, %v3776
        %3778 = vmatprep.mubr.bf16.mxu0 %v1068
        %3779 = vmatmul.mubr.bf16.gmra.mrb[0].mxu0 %v1067
        %v3780 = vpop.f32.mrb[0].mxu0
        %v3781 = vadd.f32 %v3588, %v3780
        %v3782 = vpop.f32.mrb[0].mxu0
        %v3783 = vadd.f32 %v3590, %v3782
        %v3784 = vpop.f32.mrb[0].mxu0
        %v3785 = vadd.f32 %v3592, %v3784
        %v3786 = vpop.f32.mrb[0].mxu0
        %v3787 = vadd.f32 %v3594, %v3786
        %3788 = vmatprep.mubr.bf16.mxu0 %v1072
        %3789 = vmatmul.mubr.bf16.gmra.mrb[0].mxu0 %v1071
        %v3790 = vpop.f32.mrb[0].mxu0
        %v3791 = vadd.f32 %v3598, %v3790
        %v3792 = vpop.f32.mrb[0].mxu0
        %v3793 = vadd.f32 %v3600, %v3792
        %v3794 = vpop.f32.mrb[0].mxu0
        %v3795 = vadd.f32 %v3602, %v3794
        %v3796 = vpop.f32.mrb[0].mxu0
        %v3797 = vadd.f32 %v3604, %v3796
        %3798 = vmatprep.mubr.bf16.mxu0 %v1076
        %3799 = vmatmul.mubr.bf16.gmra.mrb[0].mxu0 %v1075
        %v3800 = vpop.f32.mrb[0].mxu0
        %v3801 = vadd.f32 %v3608, %v3800
        %v3802 = vpop.f32.mrb[0].mxu0
        %v3803 = vadd.f32 %v3610, %v3802
        %v3804 = vpop.f32.mrb[0].mxu0
        %v3805 = vadd.f32 %v3612, %v3804
        %v3806 = vpop.f32.mrb[0].mxu0
        %v3807 = vadd.f32 %v3614, %v3806
        %3808 = vmatprep.mubr.bf16.mxu0 %v1080
        %3809 = vmatmul.mubr.bf16.gmra.mrb[0].mxu0 %v1079
        %v3810 = vpop.f32.mrb[0].mxu0
        %v3811 = vadd.f32 %v3618, %v3810
        %v3812 = vpop.f32.mrb[0].mxu0
        %v3813 = vadd.f32 %v3620, %v3812
        %v3814 = vpop.f32.mrb[0].mxu0
        %v3815 = vadd.f32 %v3622, %v3814
        %v3816 = vpop.f32.mrb[0].mxu0
        %v3817 = vadd.f32 %v3624, %v3816
        %3818 = vmatprep.mubr.bf16.mxu0 %v1084
        %3819 = vmatmul.mubr.bf16.gmra.mrb[0].mxu0 %v1083
        %v3820 = vpop.f32.mrb[0].mxu0
        %v3821 = vadd.f32 %v3628, %v3820
        %v3822 = vpop.f32.mrb[0].mxu0
        %v3823 = vadd.f32 %v3630, %v3822
        %v3824 = vpop.f32.mrb[0].mxu0
        %v3825 = vadd.f32 %v3632, %v3824
        %v3826 = vpop.f32.mrb[0].mxu0
        %v3827 = vadd.f32 %v3634, %v3826
        %3828 = vmatprep.mubr.bf16.mxu0 %v1088
        %3829 = vmatmul.mubr.bf16.gmra.mrb[0].mxu0 %v1087
        %v3830 = vpop.f32.mrb[0].mxu0
        %v3831 = vadd.f32 %v3638, %v3830
        %v3832 = vpop.f32.mrb[0].mxu0
        %v3833 = vadd.f32 %v3640, %v3832
        %v3834 = vpop.f32.mrb[0].mxu0
        %v3835 = vadd.f32 %v3642, %v3834
        %v3836 = vpop.f32.mrb[0].mxu0
        %v3837 = vadd.f32 %v3644, %v3836
        %3838 = vmatprep.mubr.bf16.mxu0 %v1092
        %3839 = vmatmul.mubr.bf16.gmra.mrb[0].mxu0 %v1091
        %v3840 = vpop.f32.mrb[0].mxu0
        %v3841 = vadd.f32 %v3648, %v3840
        %v3842 = vpop.f32.mrb[0].mxu0
        %v3843 = vadd.f32 %v3650, %v3842
        %v3844 = vpop.f32.mrb[0].mxu0
        %v3845 = vadd.f32 %v3652, %v3844
        %v3846 = vpop.f32.mrb[0].mxu0
        %v3847 = vadd.f32 %v3654, %v3846
        %3848 = vdwg.mxu0
        %3849 = vmatprep.subr.bf16.mxu0 %v2314
        %3850 = vmatpush1.bf16.msra.mxu0 %v2313
        %3851 = vmatprep.subr.bf16.mxu0 %v2326
        %3852 = vmatpush1.bf16.msra.mxu0 %v2325
        %3853 = vmatprep.subr.bf16.mxu0 %v2338
        %3854 = vmatpush1.bf16.msra.mxu0 %v2337
        %3855 = vmatprep.subr.bf16.mxu0 %v2350
        %3856 = vmatpush1.bf16.msra.mxu0 %v2349
        %3857 = vmatprep.subr.bf16.mxu0 %v2362
        %3858 = vmatpush1.bf16.msra.mxu0 %v2361
        %3859 = vmatprep.subr.bf16.mxu0 %v2374
        %3860 = vmatpush1.bf16.msra.mxu0 %v2373
        %3861 = vmatprep.subr.bf16.mxu0 %v2386
        %3862 = vmatpush1.bf16.msra.mxu0 %v2385
        %3863 = vmatprep.subr.bf16.mxu0 %v2398
        %3864 = vmatpush1.bf16.msra.mxu0 %v2397
        %3865 = vmatprep.subr.bf16.mxu0 %v2410
        %3866 = vmatpush1.bf16.msra.mxu0 %v2409
        %3867 = vmatprep.subr.bf16.mxu0 %v2422
        %3868 = vmatpush1.bf16.msra.mxu0 %v2421
        %3869 = vmatprep.subr.bf16.mxu0 %v2434
        %3870 = vmatpush1.bf16.msra.mxu0 %v2433
        %3871 = vmatprep.subr.bf16.mxu0 %v2446
        %3872 = vmatpush1.bf16.msra.mxu0 %v2445
        %3873 = vmatprep.subr.bf16.mxu0 %v2458
        %3874 = vmatpush1.bf16.msra.mxu0 %v2457
        %3875 = vmatprep.subr.bf16.mxu0 %v2470
        %3876 = vmatpush1.bf16.msra.mxu0 %v2469
        %3877 = vmatprep.subr.bf16.mxu0 %v2482
        %3878 = vmatpush1.bf16.msra.mxu0 %v2481
        %3879 = vmatprep.subr.bf16.mxu0 %v2494
        %3880 = vmatpush1.bf16.msra.mxu0 %v2493
        %3881 = vmatprep.mubr.bf16.mxu0 %v1030
        %3882 = vmatmul.mubr.bf16.gmra.mrb[0].mxu0 %v1029
        %v3883 = vpop.f32.mrb[0].mxu0
        %v3884 = vadd.f32 0.0, %v3883
        %v3885 = vpop.f32.mrb[0].mxu0
        %v3886 = vadd.f32 0.0, %v3885
        %v3887 = vpop.f32.mrb[0].mxu0
        %v3888 = vpop.f32.mrb[0].mxu0
        %v3889 = vadd.f32 0.0, %v3888
        %3890 = vmatprep.mubr.bf16.mxu0 %v1034
        %3891 = vmatmul.mubr.bf16.gmra.mrb[0].mxu0 %v1033
        %v3892 = vpop.f32.mrb[0].mxu0
        %v3893 = vadd.f32 0.0, %v3892
        %v3894 = vpop.f32.mrb[0].mxu0
        %v3895 = vadd.f32 0.0, %v3894
        %v3896 = vpop.f32.mrb[0].mxu0
        %v3897 = vpop.f32.mrb[0].mxu0
        %v3898 = vadd.f32 0.0, %v3897
        %3899 = vmatprep.mubr.bf16.mxu0 %v1038
        %3900 = vmatmul.mubr.bf16.gmra.mrb[0].mxu0 %v1037
        %v3901 = vpop.f32.mrb[0].mxu0
        %v3902 = vadd.f32 0.0, %v3901
        %v3903 = vpop.f32.mrb[0].mxu0
        %v3904 = vadd.f32 0.0, %v3903
        %v3905 = vpop.f32.mrb[0].mxu0
        %v3906 = vpop.f32.mrb[0].mxu0
        %v3907 = vadd.f32 0.0, %v3906
        %3908 = vmatprep.mubr.bf16.mxu0 %v1042
        %3909 = vmatmul.mubr.bf16.gmra.mrb[0].mxu0 %v1041
        %v3910 = vpop.f32.mrb[0].mxu0
        %v3911 = vadd.f32 0.0, %v3910
        %v3912 = vpop.f32.mrb[0].mxu0
        %v3913 = vadd.f32 0.0, %v3912
        %v3914 = vpop.f32.mrb[0].mxu0
        %v3915 = vpop.f32.mrb[0].mxu0
        %v3916 = vadd.f32 0.0, %v3915
        %3917 = vmatprep.mubr.bf16.mxu0 %v1046
        %3918 = vmatmul.mubr.bf16.gmra.mrb[0].mxu0 %v1045
        %v3919 = vpop.f32.mrb[0].mxu0
        %v3920 = vpop.f32.mrb[0].mxu0
        %v3921 = vpop.f32.mrb[0].mxu0
        %v3922 = vpop.f32.mrb[0].mxu0
        %3923 = vmatprep.mubr.bf16.mxu0 %v1050
        %3924 = vmatmul.mubr.bf16.gmra.mrb[0].mxu0 %v1049
        %v3925 = vpop.f32.mrb[0].mxu0
        %v3926 = vpop.f32.mrb[0].mxu0
        %v3927 = vpop.f32.mrb[0].mxu0
        %v3928 = vpop.f32.mrb[0].mxu0
        %3929 = vmatprep.mubr.bf16.mxu0 %v1054
        %3930 = vmatmul.mubr.bf16.gmra.mrb[0].mxu0 %v1053
        %v3931 = vpop.f32.mrb[0].mxu0
        %v3932 = vpop.f32.mrb[0].mxu0
        %v3933 = vpop.f32.mrb[0].mxu0
        %v3934 = vpop.f32.mrb[0].mxu0
        %3935 = vmatprep.mubr.bf16.mxu0 %v1058
        %3936 = vmatmul.mubr.bf16.gmra.mrb[0].mxu0 %v1057
        %v3937 = vpop.f32.mrb[0].mxu0
        %v3938 = vpop.f32.mrb[0].mxu0
        %v3939 = vpop.f32.mrb[0].mxu0
        %v3940 = vpop.f32.mrb[0].mxu0
        %3941 = vmatprep.mubr.bf16.mxu0 %v1062
        %3942 = vmatmul.mubr.bf16.gmra.mrb[0].mxu0 %v1061
        %v3943 = vpop.f32.mrb[0].mxu0
        %v3944 = vpop.f32.mrb[0].mxu0
        %v3945 = vpop.f32.mrb[0].mxu0
        %v3946 = vpop.f32.mrb[0].mxu0
        %3947 = vmatprep.mubr.bf16.mxu0 %v1066
        %3948 = vmatmul.mubr.bf16.gmra.mrb[0].mxu0 %v1065
        %v3949 = vpop.f32.mrb[0].mxu0
        %v3950 = vpop.f32.mrb[0].mxu0
        %v3951 = vpop.f32.mrb[0].mxu0
        %v3952 = vpop.f32.mrb[0].mxu0
        %3953 = vmatprep.mubr.bf16.mxu0 %v1070
        %3954 = vmatmul.mubr.bf16.gmra.mrb[0].mxu0 %v1069
        %v3955 = vpop.f32.mrb[0].mxu0
        %v3956 = vpop.f32.mrb[0].mxu0
        %v3957 = vpop.f32.mrb[0].mxu0
        %v3958 = vpop.f32.mrb[0].mxu0
        %3959 = vmatprep.mubr.bf16.mxu0 %v1074
        %3960 = vmatmul.mubr.bf16.gmra.mrb[0].mxu0 %v1073
        %v3961 = vpop.f32.mrb[0].mxu0
        %v3962 = vpop.f32.mrb[0].mxu0
        %v3963 = vpop.f32.mrb[0].mxu0
        %v3964 = vpop.f32.mrb[0].mxu0
        %3965 = vmatprep.mubr.bf16.mxu0 %v1078
        %3966 = vmatmul.mubr.bf16.gmra.mrb[0].mxu0 %v1077
        %v3967 = vpop.f32.mrb[0].mxu0
        %v3968 = vpop.f32.mrb[0].mxu0
        %v3969 = vpop.f32.mrb[0].mxu0
        %v3970 = vpop.f32.mrb[0].mxu0
        %3971 = vmatprep.mubr.bf16.mxu0 %v1082
        %3972 = vmatmul.mubr.bf16.gmra.mrb[0].mxu0 %v1081
        %v3973 = vpop.f32.mrb[0].mxu0
        %v3974 = vpop.f32.mrb[0].mxu0
        %v3975 = vpop.f32.mrb[0].mxu0
        %v3976 = vpop.f32.mrb[0].mxu0
        %3977 = vmatprep.mubr.bf16.mxu0 %v1086
        %3978 = vmatmul.mubr.bf16.gmra.mrb[0].mxu0 %v1085
        %v3979 = vpop.f32.mrb[0].mxu0
        %v3980 = vpop.f32.mrb[0].mxu0
        %v3981 = vpop.f32.mrb[0].mxu0
        %v3982 = vpop.f32.mrb[0].mxu0
        %3983 = vmatprep.mubr.bf16.mxu0 %v1090
        %3984 = vmatmul.mubr.bf16.gmra.mrb[0].mxu0 %v1089
        %v3985 = vpop.f32.mrb[0].mxu0
        %v3986 = vpop.f32.mrb[0].mxu0
        %v3987 = vpop.f32.mrb[0].mxu0
        %v3988 = vpop.f32.mrb[0].mxu0
        %3989 = vdwg.mxu0
        %3990 = vmatprep.subr.bf16.mxu0 %v2506
        %3991 = vmatpush1.bf16.msra.mxu0 %v2505
        %3992 = vmatprep.subr.bf16.mxu0 %v2518
        %3993 = vmatpush1.bf16.msra.mxu0 %v2517
        %3994 = vmatprep.subr.bf16.mxu0 %v2530
        %3995 = vmatpush1.bf16.msra.mxu0 %v2529
        %3996 = vmatprep.subr.bf16.mxu0 %v2542
        %3997 = vmatpush1.bf16.msra.mxu0 %v2541
        %3998 = vmatprep.subr.bf16.mxu0 %v2554
        %3999 = vmatpush1.bf16.msra.mxu0 %v2553
        %4000 = vmatprep.subr.bf16.mxu0 %v2566
        %4001 = vmatpush1.bf16.msra.mxu0 %v2565
        %4002 = vmatprep.subr.bf16.mxu0 %v2578
        %4003 = vmatpush1.bf16.msra.mxu0 %v2577
        %4004 = vmatprep.subr.bf16.mxu0 %v2590
        %4005 = vmatpush1.bf16.msra.mxu0 %v2589
        %4006 = vmatprep.subr.bf16.mxu0 %v2602
        %4007 = vmatpush1.bf16.msra.mxu0 %v2601
        %4008 = vmatprep.subr.bf16.mxu0 %v2614
        %4009 = vmatpush1.bf16.msra.mxu0 %v2613
        %4010 = vmatprep.subr.bf16.mxu0 %v2626
        %4011 = vmatpush1.bf16.msra.mxu0 %v2625
        %4012 = vmatprep.subr.bf16.mxu0 %v2638
        %4013 = vmatpush1.bf16.msra.mxu0 %v2637
        %4014 = vmatprep.subr.bf16.mxu0 %v2650
        %4015 = vmatpush1.bf16.msra.mxu0 %v2649
        %4016 = vmatprep.subr.bf16.mxu0 %v2662
        %4017 = vmatpush1.bf16.msra.mxu0 %v2661
        %4018 = vmatprep.subr.bf16.mxu0 %v2674
        %4019 = vmatpush1.bf16.msra.mxu0 %v2673
        %4020 = vmatprep.subr.bf16.mxu0 %v2686
        %4021 = vmatpush1.bf16.msra.mxu0 %v2685
        %4022 = vmatprep.mubr.bf16.mxu0 %v1032
        %4023 = vmatmul.mubr.bf16.gmra.mrb[0].mxu0 %v1031
        %v4024 = vpop.f32.mrb[0].mxu0
        %v4025 = vadd.f32 %v3884, %v4024
        %v4026 = vpop.f32.mrb[0].mxu0
        %v4027 = vadd.f32 %v3886, %v4026
        %v4028 = vpop.f32.mrb[0].mxu0
        %v4029 = vpop.f32.mrb[0].mxu0
        %v4030 = vadd.f32 %v3889, %v4029
        %4031 = vmatprep.mubr.bf16.mxu0 %v1036
        %4032 = vmatmul.mubr.bf16.gmra.mrb[0].mxu0 %v1035
        %v4033 = vpop.f32.mrb[0].mxu0
        %v4034 = vadd.f32 %v3893, %v4033
        %v4035 = vpop.f32.mrb[0].mxu0
        %v4036 = vadd.f32 %v3895, %v4035
        %v4037 = vpop.f32.mrb[0].mxu0
        %v4038 = vpop.f32.mrb[0].mxu0
        %v4039 = vadd.f32 %v3898, %v4038
        %4040 = vmatprep.mubr.bf16.mxu0 %v1040
        %4041 = vmatmul.mubr.bf16.gmra.mrb[0].mxu0 %v1039
        %v4042 = vpop.f32.mrb[0].mxu0
        %v4043 = vadd.f32 %v3902, %v4042
        %v4044 = vpop.f32.mrb[0].mxu0
        %v4045 = vadd.f32 %v3904, %v4044
        %v4046 = vpop.f32.mrb[0].mxu0
        %v4047 = vpop.f32.mrb[0].mxu0
        %v4048 = vadd.f32 %v3907, %v4047
        %4049 = vmatprep.mubr.bf16.mxu0 %v1044
        %4050 = vmatmul.mubr.bf16.gmra.mrb[0].mxu0 %v1043
        %v4051 = vpop.f32.mrb[0].mxu0
        %v4052 = vadd.f32 %v3911, %v4051
        %v4053 = vpop.f32.mrb[0].mxu0
        %v4054 = vadd.f32 %v3913, %v4053
        %v4055 = vpop.f32.mrb[0].mxu0
        %v4056 = vpop.f32.mrb[0].mxu0
        %v4057 = vadd.f32 %v3916, %v4056
        %4058 = vmatprep.mubr.bf16.mxu0 %v1048
        %4059 = vmatmul.mubr.bf16.gmra.mrb[0].mxu0 %v1047
        %v4060 = vpop.f32.mrb[0].mxu0
        %v4061 = vpop.f32.mrb[0].mxu0
        %v4062 = vpop.f32.mrb[0].mxu0
        %v4063 = vpop.f32.mrb[0].mxu0
        %4064 = vmatprep.mubr.bf16.mxu0 %v1052
        %4065 = vmatmul.mubr.bf16.gmra.mrb[0].mxu0 %v1051
        %v4066 = vpop.f32.mrb[0].mxu0
        %v4067 = vpop.f32.mrb[0].mxu0
        %v4068 = vpop.f32.mrb[0].mxu0
        %v4069 = vpop.f32.mrb[0].mxu0
        %4070 = vmatprep.mubr.bf16.mxu0 %v1056
        %4071 = vmatmul.mubr.bf16.gmra.mrb[0].mxu0 %v1055
        %v4072 = vpop.f32.mrb[0].mxu0
        %v4073 = vpop.f32.mrb[0].mxu0
        %v4074 = vpop.f32.mrb[0].mxu0
        %v4075 = vpop.f32.mrb[0].mxu0
        %4076 = vmatprep.mubr.bf16.mxu0 %v1060
        %4077 = vmatmul.mubr.bf16.gmra.mrb[0].mxu0 %v1059
        %v4078 = vpop.f32.mrb[0].mxu0
        %v4079 = vpop.f32.mrb[0].mxu0
        %v4080 = vpop.f32.mrb[0].mxu0
        %v4081 = vpop.f32.mrb[0].mxu0
        %4082 = vmatprep.mubr.bf16.mxu0 %v1064
        %4083 = vmatmul.mubr.bf16.gmra.mrb[0].mxu0 %v1063
        %v4084 = vpop.f32.mrb[0].mxu0
        %v4085 = vpop.f32.mrb[0].mxu0
        %v4086 = vpop.f32.mrb[0].mxu0
        %v4087 = vpop.f32.mrb[0].mxu0
        %4088 = vmatprep.mubr.bf16.mxu0 %v1068
        %4089 = vmatmul.mubr.bf16.gmra.mrb[0].mxu0 %v1067
        %v4090 = vpop.f32.mrb[0].mxu0
        %v4091 = vpop.f32.mrb[0].mxu0
        %v4092 = vpop.f32.mrb[0].mxu0
        %v4093 = vpop.f32.mrb[0].mxu0
        %4094 = vmatprep.mubr.bf16.mxu0 %v1072
        %4095 = vmatmul.mubr.bf16.gmra.mrb[0].mxu0 %v1071
        %v4096 = vpop.f32.mrb[0].mxu0
        %v4097 = vpop.f32.mrb[0].mxu0
        %v4098 = vpop.f32.mrb[0].mxu0
        %v4099 = vpop.f32.mrb[0].mxu0
        %4100 = vmatprep.mubr.bf16.mxu0 %v1076
        %4101 = vmatmul.mubr.bf16.gmra.mrb[0].mxu0 %v1075
        %v4102 = vpop.f32.mrb[0].mxu0
        %v4103 = vpop.f32.mrb[0].mxu0
        %v4104 = vpop.f32.mrb[0].mxu0
        %v4105 = vpop.f32.mrb[0].mxu0
        %4106 = vmatprep.mubr.bf16.mxu0 %v1080
        %4107 = vmatmul.mubr.bf16.gmra.mrb[0].mxu0 %v1079
        %v4108 = vpop.f32.mrb[0].mxu0
        %v4109 = vpop.f32.mrb[0].mxu0
        %v4110 = vpop.f32.mrb[0].mxu0
        %v4111 = vpop.f32.mrb[0].mxu0
        %4112 = vmatprep.mubr.bf16.mxu0 %v1084
        %4113 = vmatmul.mubr.bf16.gmra.mrb[0].mxu0 %v1083
        %v4114 = vpop.f32.mrb[0].mxu0
        %v4115 = vpop.f32.mrb[0].mxu0
        %v4116 = vpop.f32.mrb[0].mxu0
        %v4117 = vpop.f32.mrb[0].mxu0
        %4118 = vmatprep.mubr.bf16.mxu0 %v1088
        %4119 = vmatmul.mubr.bf16.gmra.mrb[0].mxu0 %v1087
        %v4120 = vpop.f32.mrb[0].mxu0
        %v4121 = vpop.f32.mrb[0].mxu0
        %v4122 = vpop.f32.mrb[0].mxu0
        %v4123 = vpop.f32.mrb[0].mxu0
        %4124 = vmatprep.mubr.bf16.mxu0 %v1092
        %4125 = vmatmul.mubr.bf16.gmra.mrb[0].mxu0 %v1091
        %v4126 = vpop.f32.mrb[0].mxu0
        %v4127 = vpop.f32.mrb[0].mxu0
        %v4128 = vpop.f32.mrb[0].mxu0
        %v4129 = vpop.f32.mrb[0].mxu0
        %4130 = vdwg.mxu0
        %4131 = vmatprep.subr.bf16.mxu0 %v2316
        %4132 = vmatpush1.bf16.msra.mxu0 %v2315
        %4133 = vmatprep.subr.bf16.mxu0 %v2328
        %4134 = vmatpush1.bf16.msra.mxu0 %v2327
        %4135 = vmatprep.subr.bf16.mxu0 %v2340
        %4136 = vmatpush1.bf16.msra.mxu0 %v2339
        %4137 = vmatprep.subr.bf16.mxu0 %v2352
        %4138 = vmatpush1.bf16.msra.mxu0 %v2351
        %4139 = vmatprep.subr.bf16.mxu0 %v2364
        %4140 = vmatpush1.bf16.msra.mxu0 %v2363
        %4141 = vmatprep.subr.bf16.mxu0 %v2376
        %4142 = vmatpush1.bf16.msra.mxu0 %v2375
        %4143 = vmatprep.subr.bf16.mxu0 %v2388
        %4144 = vmatpush1.bf16.msra.mxu0 %v2387
        %4145 = vmatprep.subr.bf16.mxu0 %v2400
        %4146 = vmatpush1.bf16.msra.mxu0 %v2399
        %4147 = vmatprep.subr.bf16.mxu0 %v2412
        %4148 = vmatpush1.bf16.msra.mxu0 %v2411
        %4149 = vmatprep.subr.bf16.mxu0 %v2424
        %4150 = vmatpush1.bf16.msra.mxu0 %v2423
        %4151 = vmatprep.subr.bf16.mxu0 %v2436
        %4152 = vmatpush1.bf16.msra.mxu0 %v2435
        %4153 = vmatprep.subr.bf16.mxu0 %v2448
        %4154 = vmatpush1.bf16.msra.mxu0 %v2447
        %4155 = vmatprep.subr.bf16.mxu0 %v2460
        %4156 = vmatpush1.bf16.msra.mxu0 %v2459
        %4157 = vmatprep.subr.bf16.mxu0 %v2472
        %4158 = vmatpush1.bf16.msra.mxu0 %v2471
        %4159 = vmatprep.subr.bf16.mxu0 %v2484
        %4160 = vmatpush1.bf16.msra.mxu0 %v2483
        %4161 = vmatprep.subr.bf16.mxu0 %v2496
        %4162 = vmatpush1.bf16.msra.mxu0 %v2495
        %4163 = vmatprep.mubr.bf16.mxu0 %v1030
        %4164 = vmatmul.mubr.bf16.gmra.mrb[0].mxu0 %v1029
        %v4165 = vpop.f32.mrb[0].mxu0
        %v4166 = vpop.f32.mrb[0].mxu0
        %v4167 = vadd.f32 0.0, %v4166
        %v4168 = vpop.f32.mrb[0].mxu0
        %v4169 = vadd.f32 0.0, %v4168
        %v4170 = vpop.f32.mrb[0].mxu0
        %4171 = vmatprep.mubr.bf16.mxu0 %v1034
        %4172 = vmatmul.mubr.bf16.gmra.mrb[0].mxu0 %v1033
        %v4173 = vpop.f32.mrb[0].mxu0
        %v4174 = vpop.f32.mrb[0].mxu0
        %v4175 = vadd.f32 0.0, %v4174
        %v4176 = vpop.f32.mrb[0].mxu0
        %v4177 = vadd.f32 0.0, %v4176
        %v4178 = vpop.f32.mrb[0].mxu0
        %4179 = vmatprep.mubr.bf16.mxu0 %v1038
        %4180 = vmatmul.mubr.bf16.gmra.mrb[0].mxu0 %v1037
        %v4181 = vpop.f32.mrb[0].mxu0
        %v4182 = vpop.f32.mrb[0].mxu0
        %v4183 = vadd.f32 0.0, %v4182
        %v4184 = vpop.f32.mrb[0].mxu0
        %v4185 = vadd.f32 0.0, %v4184
        %v4186 = vpop.f32.mrb[0].mxu0
        %4187 = vmatprep.mubr.bf16.mxu0 %v1042
        %4188 = vmatmul.mubr.bf16.gmra.mrb[0].mxu0 %v1041
        %v4189 = vpop.f32.mrb[0].mxu0
        %v4190 = vpop.f32.mrb[0].mxu0
        %v4191 = vadd.f32 0.0, %v4190
        %v4192 = vpop.f32.mrb[0].mxu0
        %v4193 = vadd.f32 0.0, %v4192
        %v4194 = vpop.f32.mrb[0].mxu0
        %4195 = vmatprep.mubr.bf16.mxu0 %v1046
        %4196 = vmatmul.mubr.bf16.gmra.mrb[0].mxu0 %v1045
        %v4197 = vpop.f32.mrb[0].mxu0
        %v4198 = vpop.f32.mrb[0].mxu0
        %v4199 = vadd.f32 0.0, %v4198
        %v4200 = vpop.f32.mrb[0].mxu0
        %v4201 = vpop.f32.mrb[0].mxu0
        %4202 = vmatprep.mubr.bf16.mxu0 %v1050
        %4203 = vmatmul.mubr.bf16.gmra.mrb[0].mxu0 %v1049
        %v4204 = vpop.f32.mrb[0].mxu0
        %v4205 = vpop.f32.mrb[0].mxu0
        %v4206 = vadd.f32 0.0, %v4205
        %v4207 = vpop.f32.mrb[0].mxu0
        %v4208 = vpop.f32.mrb[0].mxu0
        %4209 = vmatprep.mubr.bf16.mxu0 %v1054
        %4210 = vmatmul.mubr.bf16.gmra.mrb[0].mxu0 %v1053
        %v4211 = vpop.f32.mrb[0].mxu0
        %v4212 = vpop.f32.mrb[0].mxu0
        %v4213 = vadd.f32 0.0, %v4212
        %v4214 = vpop.f32.mrb[0].mxu0
        %v4215 = vpop.f32.mrb[0].mxu0
        %4216 = vmatprep.mubr.bf16.mxu0 %v1058
        %4217 = vmatmul.mubr.bf16.gmra.mrb[0].mxu0 %v1057
        %v4218 = vpop.f32.mrb[0].mxu0
        %v4219 = vpop.f32.mrb[0].mxu0
        %v4220 = vadd.f32 0.0, %v4219
        %v4221 = vpop.f32.mrb[0].mxu0
        %v4222 = vpop.f32.mrb[0].mxu0
        %4223 = vmatprep.mubr.bf16.mxu0 %v1062
        %4224 = vmatmul.mubr.bf16.gmra.mrb[0].mxu0 %v1061
        %v4225 = vpop.f32.mrb[0].mxu0
        %v4226 = vpop.f32.mrb[0].mxu0
        %v4227 = vadd.f32 0.0, %v4226
        %v4228 = vpop.f32.mrb[0].mxu0
        %v4229 = vpop.f32.mrb[0].mxu0
        %4230 = vmatprep.mubr.bf16.mxu0 %v1066
        %4231 = vmatmul.mubr.bf16.gmra.mrb[0].mxu0 %v1065
        %v4232 = vpop.f32.mrb[0].mxu0
        %v4233 = vpop.f32.mrb[0].mxu0
        %v4234 = vadd.f32 0.0, %v4233
        %v4235 = vpop.f32.mrb[0].mxu0
        %v4236 = vpop.f32.mrb[0].mxu0
        %4237 = vmatprep.mubr.bf16.mxu0 %v1070
        %4238 = vmatmul.mubr.bf16.gmra.mrb[0].mxu0 %v1069
        %v4239 = vpop.f32.mrb[0].mxu0
        %v4240 = vpop.f32.mrb[0].mxu0
        %v4241 = vadd.f32 0.0, %v4240
        %v4242 = vpop.f32.mrb[0].mxu0
        %v4243 = vpop.f32.mrb[0].mxu0
        %4244 = vmatprep.mubr.bf16.mxu0 %v1074
        %4245 = vmatmul.mubr.bf16.gmra.mrb[0].mxu0 %v1073
        %v4246 = vpop.f32.mrb[0].mxu0
        %v4247 = vpop.f32.mrb[0].mxu0
        %v4248 = vadd.f32 0.0, %v4247
        %v4249 = vpop.f32.mrb[0].mxu0
        %v4250 = vpop.f32.mrb[0].mxu0
        %4251 = vmatprep.mubr.bf16.mxu0 %v1078
        %4252 = vmatmul.mubr.bf16.gmra.mrb[0].mxu0 %v1077
        %v4253 = vpop.f32.mrb[0].mxu0
        %v4254 = vpop.f32.mrb[0].mxu0
        %v4255 = vadd.f32 0.0, %v4254
        %v4256 = vpop.f32.mrb[0].mxu0
        %v4257 = vpop.f32.mrb[0].mxu0
        %4258 = vmatprep.mubr.bf16.mxu0 %v1082
        %4259 = vmatmul.mubr.bf16.gmra.mrb[0].mxu0 %v1081
        %v4260 = vpop.f32.mrb[0].mxu0
        %v4261 = vpop.f32.mrb[0].mxu0
        %v4262 = vadd.f32 0.0, %v4261
        %v4263 = vpop.f32.mrb[0].mxu0
        %v4264 = vpop.f32.mrb[0].mxu0
        %4265 = vmatprep.mubr.bf16.mxu0 %v1086
        %4266 = vmatmul.mubr.bf16.gmra.mrb[0].mxu0 %v1085
        %v4267 = vpop.f32.mrb[0].mxu0
        %v4268 = vpop.f32.mrb[0].mxu0
        %v4269 = vadd.f32 0.0, %v4268
        %v4270 = vpop.f32.mrb[0].mxu0
        %v4271 = vpop.f32.mrb[0].mxu0
        %4272 = vmatprep.mubr.bf16.mxu0 %v1090
        %4273 = vmatmul.mubr.bf16.gmra.mrb[0].mxu0 %v1089
        %v4274 = vpop.f32.mrb[0].mxu0
        %v4275 = vpop.f32.mrb[0].mxu0
        %v4276 = vadd.f32 0.0, %v4275
        %v4277 = vpop.f32.mrb[0].mxu0
        %v4278 = vpop.f32.mrb[0].mxu0
        %4279 = vdwg.mxu0
        %4280 = vmatprep.subr.bf16.mxu0 %v2508
        %4281 = vmatpush1.bf16.msra.mxu0 %v2507
        %4282 = vmatprep.subr.bf16.mxu0 %v2520
        %4283 = vmatpush1.bf16.msra.mxu0 %v2519
        %4284 = vmatprep.subr.bf16.mxu0 %v2532
        %4285 = vmatpush1.bf16.msra.mxu0 %v2531
        %4286 = vmatprep.subr.bf16.mxu0 %v2544
        %4287 = vmatpush1.bf16.msra.mxu0 %v2543
        %4288 = vmatprep.subr.bf16.mxu0 %v2556
        %4289 = vmatpush1.bf16.msra.mxu0 %v2555
        %4290 = vmatprep.subr.bf16.mxu0 %v2568
        %4291 = vmatpush1.bf16.msra.mxu0 %v2567
        %4292 = vmatprep.subr.bf16.mxu0 %v2580
        %4293 = vmatpush1.bf16.msra.mxu0 %v2579
        %4294 = vmatprep.subr.bf16.mxu0 %v2592
        %4295 = vmatpush1.bf16.msra.mxu0 %v2591
        %4296 = vmatprep.subr.bf16.mxu0 %v2604
        %4297 = vmatpush1.bf16.msra.mxu0 %v2603
        %4298 = vmatprep.subr.bf16.mxu0 %v2616
        %4299 = vmatpush1.bf16.msra.mxu0 %v2615
        %4300 = vmatprep.subr.bf16.mxu0 %v2628
        %4301 = vmatpush1.bf16.msra.mxu0 %v2627
        %4302 = vmatprep.subr.bf16.mxu0 %v2640
        %4303 = vmatpush1.bf16.msra.mxu0 %v2639
        %4304 = vmatprep.subr.bf16.mxu0 %v2652
        %4305 = vmatpush1.bf16.msra.mxu0 %v2651
        %4306 = vmatprep.subr.bf16.mxu0 %v2664
        %4307 = vmatpush1.bf16.msra.mxu0 %v2663
        %4308 = vmatprep.subr.bf16.mxu0 %v2676
        %4309 = vmatpush1.bf16.msra.mxu0 %v2675
        %4310 = vmatprep.subr.bf16.mxu0 %v2688
        %4311 = vmatpush1.bf16.msra.mxu0 %v2687
        %4312 = vmatprep.mubr.bf16.mxu0 %v1032
        %4313 = vmatmul.mubr.bf16.gmra.mrb[0].mxu0 %v1031
        %v4314 = vpop.f32.mrb[0].mxu0
        %v4315 = vpop.f32.mrb[0].mxu0
        %v4316 = vadd.f32 %v4167, %v4315
        %v4317 = vpop.f32.mrb[0].mxu0
        %v4318 = vadd.f32 %v4169, %v4317
        %v4319 = vpop.f32.mrb[0].mxu0
        %4320 = vmatprep.mubr.bf16.mxu0 %v1036
        %4321 = vmatmul.mubr.bf16.gmra.mrb[0].mxu0 %v1035
        %v4322 = vpop.f32.mrb[0].mxu0
        %v4323 = vpop.f32.mrb[0].mxu0
        %v4324 = vadd.f32 %v4175, %v4323
        %v4325 = vpop.f32.mrb[0].mxu0
        %v4326 = vadd.f32 %v4177, %v4325
        %v4327 = vpop.f32.mrb[0].mxu0
        %4328 = vmatprep.mubr.bf16.mxu0 %v1040
        %4329 = vmatmul.mubr.bf16.gmra.mrb[0].mxu0 %v1039
        %v4330 = vpop.f32.mrb[0].mxu0
        %v4331 = vpop.f32.mrb[0].mxu0
        %v4332 = vadd.f32 %v4183, %v4331
        %v4333 = vpop.f32.mrb[0].mxu0
        %v4334 = vadd.f32 %v4185, %v4333
        %v4335 = vpop.f32.mrb[0].mxu0
        %4336 = vmatprep.mubr.bf16.mxu0 %v1044
        %4337 = vmatmul.mubr.bf16.gmra.mrb[0].mxu0 %v1043
        %v4338 = vpop.f32.mrb[0].mxu0
        %v4339 = vpop.f32.mrb[0].mxu0
        %v4340 = vadd.f32 %v4191, %v4339
        %v4341 = vpop.f32.mrb[0].mxu0
        %v4342 = vadd.f32 %v4193, %v4341
        %v4343 = vpop.f32.mrb[0].mxu0
        %4344 = vmatprep.mubr.bf16.mxu0 %v1048
        %4345 = vmatmul.mubr.bf16.gmra.mrb[0].mxu0 %v1047
        %v4346 = vpop.f32.mrb[0].mxu0
        %v4347 = vpop.f32.mrb[0].mxu0
        %v4348 = vadd.f32 %v4199, %v4347
        %v4349 = vpop.f32.mrb[0].mxu0
        %v4350 = vpop.f32.mrb[0].mxu0
        %4351 = vmatprep.mubr.bf16.mxu0 %v1052
        %4352 = vmatmul.mubr.bf16.gmra.mrb[0].mxu0 %v1051
        %v4353 = vpop.f32.mrb[0].mxu0
        %v4354 = vpop.f32.mrb[0].mxu0
        %v4355 = vadd.f32 %v4206, %v4354
        %v4356 = vpop.f32.mrb[0].mxu0
        %v4357 = vpop.f32.mrb[0].mxu0
        %4358 = vmatprep.mubr.bf16.mxu0 %v1056
        %4359 = vmatmul.mubr.bf16.gmra.mrb[0].mxu0 %v1055
        %v4360 = vpop.f32.mrb[0].mxu0
        %v4361 = vpop.f32.mrb[0].mxu0
        %v4362 = vadd.f32 %v4213, %v4361
        %v4363 = vpop.f32.mrb[0].mxu0
        %v4364 = vpop.f32.mrb[0].mxu0
        %4365 = vmatprep.mubr.bf16.mxu0 %v1060
        %4366 = vmatmul.mubr.bf16.gmra.mrb[0].mxu0 %v1059
        %v4367 = vpop.f32.mrb[0].mxu0
        %v4368 = vpop.f32.mrb[0].mxu0
        %v4369 = vadd.f32 %v4220, %v4368
        %v4370 = vpop.f32.mrb[0].mxu0
        %v4371 = vpop.f32.mrb[0].mxu0
        %4372 = vmatprep.mubr.bf16.mxu0 %v1064
        %4373 = vmatmul.mubr.bf16.gmra.mrb[0].mxu0 %v1063
        %v4374 = vpop.f32.mrb[0].mxu0
        %v4375 = vpop.f32.mrb[0].mxu0
        %v4376 = vadd.f32 %v4227, %v4375
        %v4377 = vpop.f32.mrb[0].mxu0
        %v4378 = vpop.f32.mrb[0].mxu0
        %4379 = vmatprep.mubr.bf16.mxu0 %v1068
        %4380 = vmatmul.mubr.bf16.gmra.mrb[0].mxu0 %v1067
        %v4381 = vpop.f32.mrb[0].mxu0
        %v4382 = vpop.f32.mrb[0].mxu0
        %v4383 = vadd.f32 %v4234, %v4382
        %v4384 = vpop.f32.mrb[0].mxu0
        %v4385 = vpop.f32.mrb[0].mxu0
        %4386 = vmatprep.mubr.bf16.mxu0 %v1072
        %4387 = vmatmul.mubr.bf16.gmra.mrb[0].mxu0 %v1071
        %v4388 = vpop.f32.mrb[0].mxu0
        %v4389 = vpop.f32.mrb[0].mxu0
        %v4390 = vadd.f32 %v4241, %v4389
        %v4391 = vpop.f32.mrb[0].mxu0
        %v4392 = vpop.f32.mrb[0].mxu0
        %4393 = vmatprep.mubr.bf16.mxu0 %v1076
        %4394 = vmatmul.mubr.bf16.gmra.mrb[0].mxu0 %v1075
        %v4395 = vpop.f32.mrb[0].mxu0
        %v4396 = vpop.f32.mrb[0].mxu0
        %v4397 = vadd.f32 %v4248, %v4396
        %v4398 = vpop.f32.mrb[0].mxu0
        %v4399 = vpop.f32.mrb[0].mxu0
        %4400 = vmatprep.mubr.bf16.mxu0 %v1080
        %4401 = vmatmul.mubr.bf16.gmra.mrb[0].mxu0 %v1079
        %v4402 = vpop.f32.mrb[0].mxu0
        %v4403 = vpop.f32.mrb[0].mxu0
        %v4404 = vadd.f32 %v4255, %v4403
        %v4405 = vpop.f32.mrb[0].mxu0
        %v4406 = vpop.f32.mrb[0].mxu0
        %4407 = vmatprep.mubr.bf16.mxu0 %v1084
        %4408 = vmatmul.mubr.bf16.gmra.mrb[0].mxu0 %v1083
        %v4409 = vpop.f32.mrb[0].mxu0
        %v4410 = vpop.f32.mrb[0].mxu0
        %v4411 = vadd.f32 %v4262, %v4410
        %v4412 = vpop.f32.mrb[0].mxu0
        %v4413 = vpop.f32.mrb[0].mxu0
        %4414 = vmatprep.mubr.bf16.mxu0 %v1088
        %4415 = vmatmul.mubr.bf16.gmra.mrb[0].mxu0 %v1087
        %v4416 = vpop.f32.mrb[0].mxu0
        %v4417 = vpop.f32.mrb[0].mxu0
        %v4418 = vadd.f32 %v4269, %v4417
        %v4419 = vpop.f32.mrb[0].mxu0
        %v4420 = vpop.f32.mrb[0].mxu0
        %4421 = vmatprep.mubr.bf16.mxu0 %v1092
        %4422 = vmatmul.mubr.bf16.gmra.mrb[0].mxu0 %v1091
        %v4423 = vpop.f32.mrb[0].mxu0
        %v4424 = vpop.f32.mrb[0].mxu0
        %v4425 = vadd.f32 %v4276, %v4424
        %v4426 = vpop.f32.mrb[0].mxu0
        %v4427 = vpop.f32.mrb[0].mxu0
        %4428 = vdwg.mxu0
        %4429 = vmatprep.subr.bf16.mxu0 %v2318
        %4430 = vmatpush1.bf16.msra.mxu0 %v2317
        %4431 = vmatprep.subr.bf16.mxu0 %v2330
        %4432 = vmatpush1.bf16.msra.mxu0 %v2329
        %4433 = vmatprep.subr.bf16.mxu0 %v2342
        %4434 = vmatpush1.bf16.msra.mxu0 %v2341
        %4435 = vmatprep.subr.bf16.mxu0 %v2354
        %4436 = vmatpush1.bf16.msra.mxu0 %v2353
        %4437 = vmatprep.subr.bf16.mxu0 %v2366
        %4438 = vmatpush1.bf16.msra.mxu0 %v2365
        %4439 = vmatprep.subr.bf16.mxu0 %v2378
        %4440 = vmatpush1.bf16.msra.mxu0 %v2377
        %4441 = vmatprep.subr.bf16.mxu0 %v2390
        %4442 = vmatpush1.bf16.msra.mxu0 %v2389
        %4443 = vmatprep.subr.bf16.mxu0 %v2402
        %4444 = vmatpush1.bf16.msra.mxu0 %v2401
        %4445 = vmatprep.subr.bf16.mxu0 %v2414
        %4446 = vmatpush1.bf16.msra.mxu0 %v2413
        %4447 = vmatprep.subr.bf16.mxu0 %v2426
        %4448 = vmatpush1.bf16.msra.mxu0 %v2425
        %4449 = vmatprep.subr.bf16.mxu0 %v2438
        %4450 = vmatpush1.bf16.msra.mxu0 %v2437
        %4451 = vmatprep.subr.bf16.mxu0 %v2450
        %4452 = vmatpush1.bf16.msra.mxu0 %v2449
        %4453 = vmatprep.subr.bf16.mxu0 %v2462
        %4454 = vmatpush1.bf16.msra.mxu0 %v2461
        %4455 = vmatprep.subr.bf16.mxu0 %v2474
        %4456 = vmatpush1.bf16.msra.mxu0 %v2473
        %4457 = vmatprep.subr.bf16.mxu0 %v2486
        %4458 = vmatpush1.bf16.msra.mxu0 %v2485
        %4459 = vmatprep.subr.bf16.mxu0 %v2498
        %4460 = vmatpush1.bf16.msra.mxu0 %v2497
        %4461 = vmatprep.mubr.bf16.mxu0 %v1030
        %4462 = vmatmul.mubr.bf16.gmra.mrb[0].mxu0 %v1029
        %v4463 = vpop.f32.mrb[0].mxu0
        %v4464 = vpop.f32.mrb[0].mxu0
        %v4465 = vpop.f32.mrb[0].mxu0
        %v4466 = vadd.f32 0.0, %v4465
        %v4467 = vpop.f32.mrb[0].mxu0
        %4468 = vmatprep.mubr.bf16.mxu0 %v1034
        %4469 = vmatmul.mubr.bf16.gmra.mrb[0].mxu0 %v1033
        %v4470 = vpop.f32.mrb[0].mxu0
        %v4471 = vpop.f32.mrb[0].mxu0
        %v4472 = vpop.f32.mrb[0].mxu0
        %v4473 = vadd.f32 0.0, %v4472
        %v4474 = vpop.f32.mrb[0].mxu0
        %4475 = vmatprep.mubr.bf16.mxu0 %v1038
        %4476 = vmatmul.mubr.bf16.gmra.mrb[0].mxu0 %v1037
        %v4477 = vpop.f32.mrb[0].mxu0
        %v4478 = vpop.f32.mrb[0].mxu0
        %v4479 = vpop.f32.mrb[0].mxu0
        %v4480 = vadd.f32 0.0, %v4479
        %v4481 = vpop.f32.mrb[0].mxu0
        %4482 = vmatprep.mubr.bf16.mxu0 %v1042
        %4483 = vmatmul.mubr.bf16.gmra.mrb[0].mxu0 %v1041
        %v4484 = vpop.f32.mrb[0].mxu0
        %v4485 = vpop.f32.mrb[0].mxu0
        %v4486 = vpop.f32.mrb[0].mxu0
        %v4487 = vadd.f32 0.0, %v4486
        %v4488 = vpop.f32.mrb[0].mxu0
        %4489 = vmatprep.mubr.bf16.mxu0 %v1046
        %4490 = vmatmul.mubr.bf16.gmra.mrb[0].mxu0 %v1045
        %v4491 = vpop.f32.mrb[0].mxu0
        %v4492 = vpop.f32.mrb[0].mxu0
        %v4493 = vpop.f32.mrb[0].mxu0
        %v4494 = vadd.f32 0.0, %v4493
        %v4495 = vpop.f32.mrb[0].mxu0
        %4496 = vmatprep.mubr.bf16.mxu0 %v1050
        %4497 = vmatmul.mubr.bf16.gmra.mrb[0].mxu0 %v1049
        %v4498 = vpop.f32.mrb[0].mxu0
        %v4499 = vpop.f32.mrb[0].mxu0
        %v4500 = vpop.f32.mrb[0].mxu0
        %v4501 = vadd.f32 0.0, %v4500
        %v4502 = vpop.f32.mrb[0].mxu0
        %4503 = vmatprep.mubr.bf16.mxu0 %v1054
        %4504 = vmatmul.mubr.bf16.gmra.mrb[0].mxu0 %v1053
        %v4505 = vpop.f32.mrb[0].mxu0
        %v4506 = vpop.f32.mrb[0].mxu0
        %v4507 = vpop.f32.mrb[0].mxu0
        %v4508 = vadd.f32 0.0, %v4507
        %v4509 = vpop.f32.mrb[0].mxu0
        %4510 = vmatprep.mubr.bf16.mxu0 %v1058
        %4511 = vmatmul.mubr.bf16.gmra.mrb[0].mxu0 %v1057
        %v4512 = vpop.f32.mrb[0].mxu0
        %v4513 = vpop.f32.mrb[0].mxu0
        %v4514 = vpop.f32.mrb[0].mxu0
        %v4515 = vadd.f32 0.0, %v4514
        %v4516 = vpop.f32.mrb[0].mxu0
        %4517 = vmatprep.mubr.bf16.mxu0 %v1062
        %4518 = vmatmul.mubr.bf16.gmra.mrb[0].mxu0 %v1061
        %v4519 = vpop.f32.mrb[0].mxu0
        %v4520 = vpop.f32.mrb[0].mxu0
        %v4521 = vpop.f32.mrb[0].mxu0
        %v4522 = vadd.f32 0.0, %v4521
        %v4523 = vpop.f32.mrb[0].mxu0
        %4524 = vmatprep.mubr.bf16.mxu0 %v1066
        %4525 = vmatmul.mubr.bf16.gmra.mrb[0].mxu0 %v1065
        %v4526 = vpop.f32.mrb[0].mxu0
        %v4527 = vpop.f32.mrb[0].mxu0
        %v4528 = vpop.f32.mrb[0].mxu0
        %v4529 = vadd.f32 0.0, %v4528
        %v4530 = vpop.f32.mrb[0].mxu0
        %4531 = vmatprep.mubr.bf16.mxu0 %v1070
        %4532 = vmatmul.mubr.bf16.gmra.mrb[0].mxu0 %v1069
        %v4533 = vpop.f32.mrb[0].mxu0
        %v4534 = vpop.f32.mrb[0].mxu0
        %v4535 = vpop.f32.mrb[0].mxu0
        %v4536 = vadd.f32 0.0, %v4535
        %v4537 = vpop.f32.mrb[0].mxu0
        %4538 = vmatprep.mubr.bf16.mxu0 %v1074
        %4539 = vmatmul.mubr.bf16.gmra.mrb[0].mxu0 %v1073
        %v4540 = vpop.f32.mrb[0].mxu0
        %v4541 = vpop.f32.mrb[0].mxu0
        %v4542 = vpop.f32.mrb[0].mxu0
        %v4543 = vadd.f32 0.0, %v4542
        %v4544 = vpop.f32.mrb[0].mxu0
        %4545 = vmatprep.mubr.bf16.mxu0 %v1078
        %4546 = vmatmul.mubr.bf16.gmra.mrb[0].mxu0 %v1077
        %v4547 = vpop.f32.mrb[0].mxu0
        %v4548 = vpop.f32.mrb[0].mxu0
        %v4549 = vadd.f32 0.0, %v4548
        %v4550 = vpop.f32.mrb[0].mxu0
        %v4551 = vadd.f32 0.0, %v4550
        %v4552 = vpop.f32.mrb[0].mxu0
        %4553 = vmatprep.mubr.bf16.mxu0 %v1082
        %4554 = vmatmul.mubr.bf16.gmra.mrb[0].mxu0 %v1081
        %v4555 = vpop.f32.mrb[0].mxu0
        %v4556 = vpop.f32.mrb[0].mxu0
        %v4557 = vadd.f32 0.0, %v4556
        %v4558 = vpop.f32.mrb[0].mxu0
        %v4559 = vadd.f32 0.0, %v4558
        %v4560 = vpop.f32.mrb[0].mxu0
        %4561 = vmatprep.mubr.bf16.mxu0 %v1086
        %4562 = vmatmul.mubr.bf16.gmra.mrb[0].mxu0 %v1085
        %v4563 = vpop.f32.mrb[0].mxu0
        %v4564 = vpop.f32.mrb[0].mxu0
        %v4565 = vadd.f32 0.0, %v4564
        %v4566 = vpop.f32.mrb[0].mxu0
        %v4567 = vadd.f32 0.0, %v4566
        %v4568 = vpop.f32.mrb[0].mxu0
        %4569 = vmatprep.mubr.bf16.mxu0 %v1090
        %4570 = vmatmul.mubr.bf16.gmra.mrb[0].mxu0 %v1089
        %v4571 = vpop.f32.mrb[0].mxu0
        %v4572 = vpop.f32.mrb[0].mxu0
        %v4573 = vadd.f32 0.0, %v4572
        %v4574 = vpop.f32.mrb[0].mxu0
        %v4575 = vadd.f32 0.0, %v4574
        %v4576 = vpop.f32.mrb[0].mxu0
        %4577 = vdwg.mxu0
        %4578 = vmatprep.subr.bf16.mxu0 %v2510
        %4579 = vmatpush1.bf16.msra.mxu0 %v2509
        %4580 = vmatprep.subr.bf16.mxu0 %v2522
        %4581 = vmatpush1.bf16.msra.mxu0 %v2521
        %4582 = vmatprep.subr.bf16.mxu0 %v2534
        %4583 = vmatpush1.bf16.msra.mxu0 %v2533
        %4584 = vmatprep.subr.bf16.mxu0 %v2546
        %4585 = vmatpush1.bf16.msra.mxu0 %v2545
        %4586 = vmatprep.subr.bf16.mxu0 %v2558
        %4587 = vmatpush1.bf16.msra.mxu0 %v2557
        %4588 = vmatprep.subr.bf16.mxu0 %v2570
        %4589 = vmatpush1.bf16.msra.mxu0 %v2569
        %4590 = vmatprep.subr.bf16.mxu0 %v2582
        %4591 = vmatpush1.bf16.msra.mxu0 %v2581
        %4592 = vmatprep.subr.bf16.mxu0 %v2594
        %4593 = vmatpush1.bf16.msra.mxu0 %v2593
        %4594 = vmatprep.subr.bf16.mxu0 %v2606
        %4595 = vmatpush1.bf16.msra.mxu0 %v2605
        %4596 = vmatprep.subr.bf16.mxu0 %v2618
        %4597 = vmatpush1.bf16.msra.mxu0 %v2617
        %4598 = vmatprep.subr.bf16.mxu0 %v2630
        %4599 = vmatpush1.bf16.msra.mxu0 %v2629
        %4600 = vmatprep.subr.bf16.mxu0 %v2642
        %4601 = vmatpush1.bf16.msra.mxu0 %v2641
        %4602 = vmatprep.subr.bf16.mxu0 %v2654
        %4603 = vmatpush1.bf16.msra.mxu0 %v2653
        %4604 = vmatprep.subr.bf16.mxu0 %v2666
        %4605 = vmatpush1.bf16.msra.mxu0 %v2665
        %4606 = vmatprep.subr.bf16.mxu0 %v2678
        %4607 = vmatpush1.bf16.msra.mxu0 %v2677
        %4608 = vmatprep.subr.bf16.mxu0 %v2690
        %4609 = vmatpush1.bf16.msra.mxu0 %v2689
        %4610 = vmatprep.mubr.bf16.mxu0 %v1032
        %4611 = vmatmul.mubr.bf16.gmra.mrb[0].mxu0 %v1031
        %v4612 = vpop.f32.mrb[0].mxu0
        %v4613 = vpop.f32.mrb[0].mxu0
        %v4614 = vpop.f32.mrb[0].mxu0
        %v4615 = vadd.f32 %v4466, %v4614
        %v4616 = vpop.f32.mrb[0].mxu0
        %4617 = vmatprep.mubr.bf16.mxu0 %v1036
        %4618 = vmatmul.mubr.bf16.gmra.mrb[0].mxu0 %v1035
        %v4619 = vpop.f32.mrb[0].mxu0
        %v4620 = vpop.f32.mrb[0].mxu0
        %v4621 = vpop.f32.mrb[0].mxu0
        %v4622 = vadd.f32 %v4473, %v4621
        %v4623 = vpop.f32.mrb[0].mxu0
        %4624 = vmatprep.mubr.bf16.mxu0 %v1040
        %4625 = vmatmul.mubr.bf16.gmra.mrb[0].mxu0 %v1039
        %v4626 = vpop.f32.mrb[0].mxu0
        %v4627 = vpop.f32.mrb[0].mxu0
        %v4628 = vpop.f32.mrb[0].mxu0
        %v4629 = vadd.f32 %v4480, %v4628
        %v4630 = vpop.f32.mrb[0].mxu0
        %4631 = vmatprep.mubr.bf16.mxu0 %v1044
        %4632 = vmatmul.mubr.bf16.gmra.mrb[0].mxu0 %v1043
        %v4633 = vpop.f32.mrb[0].mxu0
        %v4634 = vpop.f32.mrb[0].mxu0
        %v4635 = vpop.f32.mrb[0].mxu0
        %v4636 = vadd.f32 %v4487, %v4635
        %v4637 = vpop.f32.mrb[0].mxu0
        %4638 = vmatprep.mubr.bf16.mxu0 %v1048
        %4639 = vmatmul.mubr.bf16.gmra.mrb[0].mxu0 %v1047
        %v4640 = vpop.f32.mrb[0].mxu0
        %v4641 = vpop.f32.mrb[0].mxu0
        %v4642 = vpop.f32.mrb[0].mxu0
        %v4643 = vadd.f32 %v4494, %v4642
        %v4644 = vpop.f32.mrb[0].mxu0
        %4645 = vmatprep.mubr.bf16.mxu0 %v1052
        %4646 = vmatmul.mubr.bf16.gmra.mrb[0].mxu0 %v1051
        %v4647 = vpop.f32.mrb[0].mxu0
        %v4648 = vpop.f32.mrb[0].mxu0
        %v4649 = vpop.f32.mrb[0].mxu0
        %v4650 = vadd.f32 %v4501, %v4649
        %v4651 = vpop.f32.mrb[0].mxu0
        %4652 = vmatprep.mubr.bf16.mxu0 %v1056
        %4653 = vmatmul.mubr.bf16.gmra.mrb[0].mxu0 %v1055
        %v4654 = vpop.f32.mrb[0].mxu0
        %v4655 = vpop.f32.mrb[0].mxu0
        %v4656 = vpop.f32.mrb[0].mxu0
        %v4657 = vadd.f32 %v4508, %v4656
        %v4658 = vpop.f32.mrb[0].mxu0
        %4659 = vmatprep.mubr.bf16.mxu0 %v1060
        %4660 = vmatmul.mubr.bf16.gmra.mrb[0].mxu0 %v1059
        %v4661 = vpop.f32.mrb[0].mxu0
        %v4662 = vpop.f32.mrb[0].mxu0
        %v4663 = vpop.f32.mrb[0].mxu0
        %v4664 = vadd.f32 %v4515, %v4663
        %v4665 = vpop.f32.mrb[0].mxu0
        %4666 = vmatprep.mubr.bf16.mxu0 %v1064
        %4667 = vmatmul.mubr.bf16.gmra.mrb[0].mxu0 %v1063
        %v4668 = vpop.f32.mrb[0].mxu0
        %v4669 = vpop.f32.mrb[0].mxu0
        %v4670 = vpop.f32.mrb[0].mxu0
        %v4671 = vadd.f32 %v4522, %v4670
        %v4672 = vpop.f32.mrb[0].mxu0
        %4673 = vmatprep.mubr.bf16.mxu0 %v1068
        %4674 = vmatmul.mubr.bf16.gmra.mrb[0].mxu0 %v1067
        %v4675 = vpop.f32.mrb[0].mxu0
        %v4676 = vpop.f32.mrb[0].mxu0
        %v4677 = vpop.f32.mrb[0].mxu0
        %v4678 = vadd.f32 %v4529, %v4677
        %v4679 = vpop.f32.mrb[0].mxu0
        %4680 = vmatprep.mubr.bf16.mxu0 %v1072
        %4681 = vmatmul.mubr.bf16.gmra.mrb[0].mxu0 %v1071
        %v4682 = vpop.f32.mrb[0].mxu0
        %v4683 = vpop.f32.mrb[0].mxu0
        %v4684 = vpop.f32.mrb[0].mxu0
        %v4685 = vadd.f32 %v4536, %v4684
        %v4686 = vpop.f32.mrb[0].mxu0
        %4687 = vmatprep.mubr.bf16.mxu0 %v1076
        %4688 = vmatmul.mubr.bf16.gmra.mrb[0].mxu0 %v1075
        %v4689 = vpop.f32.mrb[0].mxu0
        %v4690 = vpop.f32.mrb[0].mxu0
        %v4691 = vpop.f32.mrb[0].mxu0
        %v4692 = vadd.f32 %v4543, %v4691
        %v4693 = vpop.f32.mrb[0].mxu0
        %4694 = vmatprep.mubr.bf16.mxu0 %v1080
        %4695 = vmatmul.mubr.bf16.gmra.mrb[0].mxu0 %v1079
        %v4696 = vpop.f32.mrb[0].mxu0
        %v4697 = vpop.f32.mrb[0].mxu0
        %v4698 = vadd.f32 %v4549, %v4697
        %v4699 = vpop.f32.mrb[0].mxu0
        %v4700 = vadd.f32 %v4551, %v4699
        %v4701 = vpop.f32.mrb[0].mxu0
        %4702 = vmatprep.mubr.bf16.mxu0 %v1084
        %4703 = vmatmul.mubr.bf16.gmra.mrb[0].mxu0 %v1083
        %v4704 = vpop.f32.mrb[0].mxu0
        %v4705 = vpop.f32.mrb[0].mxu0
        %v4706 = vadd.f32 %v4557, %v4705
        %v4707 = vpop.f32.mrb[0].mxu0
        %v4708 = vadd.f32 %v4559, %v4707
        %v4709 = vpop.f32.mrb[0].mxu0
        %4710 = vmatprep.mubr.bf16.mxu0 %v1088
        %4711 = vmatmul.mubr.bf16.gmra.mrb[0].mxu0 %v1087
        %v4712 = vpop.f32.mrb[0].mxu0
        %v4713 = vpop.f32.mrb[0].mxu0
        %v4714 = vadd.f32 %v4565, %v4713
        %v4715 = vpop.f32.mrb[0].mxu0
        %v4716 = vadd.f32 %v4567, %v4715
        %v4717 = vpop.f32.mrb[0].mxu0
        %4718 = vmatprep.mubr.bf16.mxu0 %v1092
        %4719 = vmatmul.mubr.bf16.gmra.mrb[0].mxu0 %v1091
        %v4720 = vpop.f32.mrb[0].mxu0
        %v4721 = vpop.f32.mrb[0].mxu0
        %v4722 = vadd.f32 %v4573, %v4721
        %v4723 = vpop.f32.mrb[0].mxu0
        %v4724 = vadd.f32 %v4575, %v4723
        %v4725 = vpop.f32.mrb[0].mxu0
        %4726 = vdwg.mxu0
        %4727 = vmatprep.subr.bf16.mxu0 %v2320
        %4728 = vmatpush1.bf16.msra.mxu0 %v2319
        %4729 = vmatprep.subr.bf16.mxu0 %v2332
        %4730 = vmatpush1.bf16.msra.mxu0 %v2331
        %4731 = vmatprep.subr.bf16.mxu0 %v2344
        %4732 = vmatpush1.bf16.msra.mxu0 %v2343
        %4733 = vmatprep.subr.bf16.mxu0 %v2356
        %4734 = vmatpush1.bf16.msra.mxu0 %v2355
        %4735 = vmatprep.subr.bf16.mxu0 %v2368
        %4736 = vmatpush1.bf16.msra.mxu0 %v2367
        %4737 = vmatprep.subr.bf16.mxu0 %v2380
        %4738 = vmatpush1.bf16.msra.mxu0 %v2379
        %4739 = vmatprep.subr.bf16.mxu0 %v2392
        %4740 = vmatpush1.bf16.msra.mxu0 %v2391
        %4741 = vmatprep.subr.bf16.mxu0 %v2404
        %4742 = vmatpush1.bf16.msra.mxu0 %v2403
        %4743 = vmatprep.subr.bf16.mxu0 %v2416
        %4744 = vmatpush1.bf16.msra.mxu0 %v2415
        %4745 = vmatprep.subr.bf16.mxu0 %v2428
        %4746 = vmatpush1.bf16.msra.mxu0 %v2427
        %4747 = vmatprep.subr.bf16.mxu0 %v2440
        %4748 = vmatpush1.bf16.msra.mxu0 %v2439
        %4749 = vmatprep.subr.bf16.mxu0 %v2452
        %4750 = vmatpush1.bf16.msra.mxu0 %v2451
        %4751 = vmatprep.subr.bf16.mxu0 %v2464
        %4752 = vmatpush1.bf16.msra.mxu0 %v2463
        %4753 = vmatprep.subr.bf16.mxu0 %v2476
        %4754 = vmatpush1.bf16.msra.mxu0 %v2475
        %4755 = vmatprep.subr.bf16.mxu0 %v2488
        %4756 = vmatpush1.bf16.msra.mxu0 %v2487
        %4757 = vmatprep.subr.bf16.mxu0 %v2500
        %4758 = vmatpush1.bf16.msra.mxu0 %v2499
        %4759 = vmatprep.mubr.bf16.mxu0 %v1030
        %4760 = vmatmul.mubr.bf16.gmra.mrb[0].mxu0 %v1029
        %v4761 = vpop.f32.mrb[0].mxu0
        %v4762 = vpop.f32.mrb[0].mxu0
        %v4763 = vpop.f32.mrb[0].mxu0
        %v4764 = vpop.f32.mrb[0].mxu0
        %4765 = vmatprep.mubr.bf16.mxu0 %v1034
        %4766 = vmatmul.mubr.bf16.gmra.mrb[0].mxu0 %v1033
        %v4767 = vpop.f32.mrb[0].mxu0
        %v4768 = vpop.f32.mrb[0].mxu0
        %v4769 = vpop.f32.mrb[0].mxu0
        %v4770 = vpop.f32.mrb[0].mxu0
        %4771 = vmatprep.mubr.bf16.mxu0 %v1038
        %4772 = vmatmul.mubr.bf16.gmra.mrb[0].mxu0 %v1037
        %v4773 = vpop.f32.mrb[0].mxu0
        %v4774 = vpop.f32.mrb[0].mxu0
        %v4775 = vpop.f32.mrb[0].mxu0
        %v4776 = vpop.f32.mrb[0].mxu0
        %4777 = vmatprep.mubr.bf16.mxu0 %v1042
        %4778 = vmatmul.mubr.bf16.gmra.mrb[0].mxu0 %v1041
        %v4779 = vpop.f32.mrb[0].mxu0
        %v4780 = vpop.f32.mrb[0].mxu0
        %v4781 = vpop.f32.mrb[0].mxu0
        %v4782 = vpop.f32.mrb[0].mxu0
        %4783 = vmatprep.mubr.bf16.mxu0 %v1046
        %4784 = vmatmul.mubr.bf16.gmra.mrb[0].mxu0 %v1045
        %v4785 = vpop.f32.mrb[0].mxu0
        %v4786 = vpop.f32.mrb[0].mxu0
        %v4787 = vpop.f32.mrb[0].mxu0
        %v4788 = vpop.f32.mrb[0].mxu0
        %4789 = vmatprep.mubr.bf16.mxu0 %v1050
        %4790 = vmatmul.mubr.bf16.gmra.mrb[0].mxu0 %v1049
        %v4791 = vpop.f32.mrb[0].mxu0
        %v4792 = vpop.f32.mrb[0].mxu0
        %v4793 = vpop.f32.mrb[0].mxu0
        %v4794 = vpop.f32.mrb[0].mxu0
        %4795 = vmatprep.mubr.bf16.mxu0 %v1054
        %4796 = vmatmul.mubr.bf16.gmra.mrb[0].mxu0 %v1053
        %v4797 = vpop.f32.mrb[0].mxu0
        %v4798 = vpop.f32.mrb[0].mxu0
        %v4799 = vpop.f32.mrb[0].mxu0
        %v4800 = vpop.f32.mrb[0].mxu0
        %4801 = vmatprep.mubr.bf16.mxu0 %v1058
        %4802 = vmatmul.mubr.bf16.gmra.mrb[0].mxu0 %v1057
        %v4803 = vpop.f32.mrb[0].mxu0
        %v4804 = vpop.f32.mrb[0].mxu0
        %v4805 = vpop.f32.mrb[0].mxu0
        %v4806 = vpop.f32.mrb[0].mxu0
        %4807 = vmatprep.mubr.bf16.mxu0 %v1062
        %4808 = vmatmul.mubr.bf16.gmra.mrb[0].mxu0 %v1061
        %v4809 = vpop.f32.mrb[0].mxu0
        %v4810 = vpop.f32.mrb[0].mxu0
        %v4811 = vpop.f32.mrb[0].mxu0
        %v4812 = vpop.f32.mrb[0].mxu0
        %4813 = vmatprep.mubr.bf16.mxu0 %v1066
        %4814 = vmatmul.mubr.bf16.gmra.mrb[0].mxu0 %v1065
        %v4815 = vpop.f32.mrb[0].mxu0
        %v4816 = vpop.f32.mrb[0].mxu0
        %v4817 = vpop.f32.mrb[0].mxu0
        %v4818 = vpop.f32.mrb[0].mxu0
        %4819 = vmatprep.mubr.bf16.mxu0 %v1070
        %4820 = vmatmul.mubr.bf16.gmra.mrb[0].mxu0 %v1069
        %v4821 = vpop.f32.mrb[0].mxu0
        %v4822 = vpop.f32.mrb[0].mxu0
        %v4823 = vpop.f32.mrb[0].mxu0
        %v4824 = vpop.f32.mrb[0].mxu0
        %4825 = vmatprep.mubr.bf16.mxu0 %v1074
        %4826 = vmatmul.mubr.bf16.gmra.mrb[0].mxu0 %v1073
        %v4827 = vpop.f32.mrb[0].mxu0
        %v4828 = vpop.f32.mrb[0].mxu0
        %v4829 = vpop.f32.mrb[0].mxu0
        %v4830 = vpop.f32.mrb[0].mxu0
        %4831 = vmatprep.mubr.bf16.mxu0 %v1078
        %4832 = vmatmul.mubr.bf16.gmra.mrb[0].mxu0 %v1077
        %v4833 = vpop.f32.mrb[0].mxu0
        %v4834 = vadd.f32 0.0, %v4833
        %v4835 = vpop.f32.mrb[0].mxu0
        %v4836 = vpop.f32.mrb[0].mxu0
        %v4837 = vadd.f32 0.0, %v4836
        %v4838 = vpop.f32.mrb[0].mxu0
        %v4839 = vadd.f32 0.0, %v4838
        %4840 = vmatprep.mubr.bf16.mxu0 %v1082
        %4841 = vmatmul.mubr.bf16.gmra.mrb[0].mxu0 %v1081
        %v4842 = vpop.f32.mrb[0].mxu0
        %v4843 = vadd.f32 0.0, %v4842
        %v4844 = vpop.f32.mrb[0].mxu0
        %v4845 = vpop.f32.mrb[0].mxu0
        %v4846 = vadd.f32 0.0, %v4845
        %v4847 = vpop.f32.mrb[0].mxu0
        %v4848 = vadd.f32 0.0, %v4847
        %4849 = vmatprep.mubr.bf16.mxu0 %v1086
        %4850 = vmatmul.mubr.bf16.gmra.mrb[0].mxu0 %v1085
        %v4851 = vpop.f32.mrb[0].mxu0
        %v4852 = vadd.f32 0.0, %v4851
        %v4853 = vpop.f32.mrb[0].mxu0
        %v4854 = vpop.f32.mrb[0].mxu0
        %v4855 = vadd.f32 0.0, %v4854
        %v4856 = vpop.f32.mrb[0].mxu0
        %v4857 = vadd.f32 0.0, %v4856
        %4858 = vmatprep.mubr.bf16.mxu0 %v1090
        %4859 = vmatmul.mubr.bf16.gmra.mrb[0].mxu0 %v1089
        %v4860 = vpop.f32.mrb[0].mxu0
        %v4861 = vadd.f32 0.0, %v4860
        %v4862 = vpop.f32.mrb[0].mxu0
        %v4863 = vpop.f32.mrb[0].mxu0
        %v4864 = vadd.f32 0.0, %v4863
        %v4865 = vpop.f32.mrb[0].mxu0
        %v4866 = vadd.f32 0.0, %v4865
        %4867 = vdwg.mxu0
        %4868 = vmatprep.subr.bf16.mxu0 %v2512
        %4869 = vmatpush1.bf16.msra.mxu0 %v2511
        %4870 = vmatprep.subr.bf16.mxu0 %v2524
        %4871 = vmatpush1.bf16.msra.mxu0 %v2523
        %4872 = vmatprep.subr.bf16.mxu0 %v2536
        %4873 = vmatpush1.bf16.msra.mxu0 %v2535
        %4874 = vmatprep.subr.bf16.mxu0 %v2548
        %4875 = vmatpush1.bf16.msra.mxu0 %v2547
        %4876 = vmatprep.subr.bf16.mxu0 %v2560
        %4877 = vmatpush1.bf16.msra.mxu0 %v2559
        %4878 = vmatprep.subr.bf16.mxu0 %v2572
        %4879 = vmatpush1.bf16.msra.mxu0 %v2571
        %4880 = vmatprep.subr.bf16.mxu0 %v2584
        %4881 = vmatpush1.bf16.msra.mxu0 %v2583
        %4882 = vmatprep.subr.bf16.mxu0 %v2596
        %4883 = vmatpush1.bf16.msra.mxu0 %v2595
        %4884 = vmatprep.subr.bf16.mxu0 %v2608
        %4885 = vmatpush1.bf16.msra.mxu0 %v2607
        %4886 = vmatprep.subr.bf16.mxu0 %v2620
        %4887 = vmatpush1.bf16.msra.mxu0 %v2619
        %4888 = vmatprep.subr.bf16.mxu0 %v2632
        %4889 = vmatpush1.bf16.msra.mxu0 %v2631
        %4890 = vmatprep.subr.bf16.mxu0 %v2644
        %4891 = vmatpush1.bf16.msra.mxu0 %v2643
        %4892 = vmatprep.subr.bf16.mxu0 %v2656
        %4893 = vmatpush1.bf16.msra.mxu0 %v2655
        %4894 = vmatprep.subr.bf16.mxu0 %v2668
        %4895 = vmatpush1.bf16.msra.mxu0 %v2667
        %4896 = vmatprep.subr.bf16.mxu0 %v2680
        %4897 = vmatpush1.bf16.msra.mxu0 %v2679
        %4898 = vmatprep.subr.bf16.mxu0 %v2692
        %4899 = vmatpush1.bf16.msra.mxu0 %v2691
        %4900 = vmatprep.mubr.bf16.mxu0 %v1032
        %4901 = vmatmul.mubr.bf16.gmra.mrb[0].mxu0 %v1031
        %v4902 = vpop.f32.mrb[0].mxu0
        %v4903 = vpop.f32.mrb[0].mxu0
        %v4904 = vpop.f32.mrb[0].mxu0
        %v4905 = vpop.f32.mrb[0].mxu0
        %4906 = vmatprep.mubr.bf16.mxu0 %v1036
        %4907 = vmatmul.mubr.bf16.gmra.mrb[0].mxu0 %v1035
        %v4908 = vpop.f32.mrb[0].mxu0
        %v4909 = vpop.f32.mrb[0].mxu0
        %v4910 = vpop.f32.mrb[0].mxu0
        %v4911 = vpop.f32.mrb[0].mxu0
        %4912 = vmatprep.mubr.bf16.mxu0 %v1040
        %4913 = vmatmul.mubr.bf16.gmra.mrb[0].mxu0 %v1039
        %v4914 = vpop.f32.mrb[0].mxu0
        %v4915 = vpop.f32.mrb[0].mxu0
        %v4916 = vpop.f32.mrb[0].mxu0
        %v4917 = vpop.f32.mrb[0].mxu0
        %4918 = vmatprep.mubr.bf16.mxu0 %v1044
        %4919 = vmatmul.mubr.bf16.gmra.mrb[0].mxu0 %v1043
        %v4920 = vpop.f32.mrb[0].mxu0
        %v4921 = vpop.f32.mrb[0].mxu0
        %v4922 = vpop.f32.mrb[0].mxu0
        %v4923 = vpop.f32.mrb[0].mxu0
        %4924 = vmatprep.mubr.bf16.mxu0 %v1048
        %4925 = vmatmul.mubr.bf16.gmra.mrb[0].mxu0 %v1047
        %v4926 = vpop.f32.mrb[0].mxu0
        %v4927 = vpop.f32.mrb[0].mxu0
        %v4928 = vpop.f32.mrb[0].mxu0
        %v4929 = vpop.f32.mrb[0].mxu0
        %4930 = vmatprep.mubr.bf16.mxu0 %v1052
        %4931 = vmatmul.mubr.bf16.gmra.mrb[0].mxu0 %v1051
        %v4932 = vpop.f32.mrb[0].mxu0
        %v4933 = vpop.f32.mrb[0].mxu0
        %v4934 = vpop.f32.mrb[0].mxu0
        %v4935 = vpop.f32.mrb[0].mxu0
        %4936 = vmatprep.mubr.bf16.mxu0 %v1056
        %4937 = vmatmul.mubr.bf16.gmra.mrb[0].mxu0 %v1055
        %v4938 = vpop.f32.mrb[0].mxu0
        %v4939 = vpop.f32.mrb[0].mxu0
        %v4940 = vpop.f32.mrb[0].mxu0
        %v4941 = vpop.f32.mrb[0].mxu0
        %4942 = vmatprep.mubr.bf16.mxu0 %v1060
        %4943 = vmatmul.mubr.bf16.gmra.mrb[0].mxu0 %v1059
        %v4944 = vpop.f32.mrb[0].mxu0
        %v4945 = vpop.f32.mrb[0].mxu0
        %v4946 = vpop.f32.mrb[0].mxu0
        %v4947 = vpop.f32.mrb[0].mxu0
        %4948 = vmatprep.mubr.bf16.mxu0 %v1064
        %4949 = vmatmul.mubr.bf16.gmra.mrb[0].mxu0 %v1063
        %v4950 = vpop.f32.mrb[0].mxu0
        %v4951 = vpop.f32.mrb[0].mxu0
        %v4952 = vpop.f32.mrb[0].mxu0
        %v4953 = vpop.f32.mrb[0].mxu0
        %4954 = vmatprep.mubr.bf16.mxu0 %v1068
        %4955 = vmatmul.mubr.bf16.gmra.mrb[0].mxu0 %v1067
        %v4956 = vpop.f32.mrb[0].mxu0
        %v4957 = vpop.f32.mrb[0].mxu0
        %v4958 = vpop.f32.mrb[0].mxu0
        %v4959 = vpop.f32.mrb[0].mxu0
        %4960 = vmatprep.mubr.bf16.mxu0 %v1072
        %4961 = vmatmul.mubr.bf16.gmra.mrb[0].mxu0 %v1071
        %v4962 = vpop.f32.mrb[0].mxu0
        %v4963 = vpop.f32.mrb[0].mxu0
        %v4964 = vpop.f32.mrb[0].mxu0
        %v4965 = vpop.f32.mrb[0].mxu0
        %4966 = vmatprep.mubr.bf16.mxu0 %v1076
        %4967 = vmatmul.mubr.bf16.gmra.mrb[0].mxu0 %v1075
        %v4968 = vpop.f32.mrb[0].mxu0
        %v4969 = vpop.f32.mrb[0].mxu0
        %v4970 = vpop.f32.mrb[0].mxu0
        %v4971 = vpop.f32.mrb[0].mxu0
        %4972 = vmatprep.mubr.bf16.mxu0 %v1080
        %4973 = vmatmul.mubr.bf16.gmra.mrb[0].mxu0 %v1079
        %v4974 = vpop.f32.mrb[0].mxu0
        %v4975 = vadd.f32 %v4834, %v4974
        %v4976 = vpop.f32.mrb[0].mxu0
        %v4977 = vpop.f32.mrb[0].mxu0
        %v4978 = vadd.f32 %v4837, %v4977
        %v4979 = vpop.f32.mrb[0].mxu0
        %v4980 = vadd.f32 %v4839, %v4979
        %4981 = vmatprep.mubr.bf16.mxu0 %v1084
        %4982 = vmatmul.mubr.bf16.gmra.mrb[0].mxu0 %v1083
        %v4983 = vpop.f32.mrb[0].mxu0
        %v4984 = vadd.f32 %v4843, %v4983
        %v4985 = vpop.f32.mrb[0].mxu0
        %v4986 = vpop.f32.mrb[0].mxu0
        %v4987 = vadd.f32 %v4846, %v4986
        %v4988 = vpop.f32.mrb[0].mxu0
        %v4989 = vadd.f32 %v4848, %v4988
        %4990 = vmatprep.mubr.bf16.mxu0 %v1088
        %4991 = vmatmul.mubr.bf16.gmra.mrb[0].mxu0 %v1087
        %v4992 = vpop.f32.mrb[0].mxu0
        %v4993 = vadd.f32 %v4852, %v4992
        %v4994 = vpop.f32.mrb[0].mxu0
        %v4995 = vpop.f32.mrb[0].mxu0
        %v4996 = vadd.f32 %v4855, %v4995
        %v4997 = vpop.f32.mrb[0].mxu0
        %v4998 = vadd.f32 %v4857, %v4997
        %4999 = vmatprep.mubr.bf16.mxu0 %v1092
        %5000 = vmatmul.mubr.bf16.gmra.mrb[0].mxu0 %v1091
        %v5001 = vpop.f32.mrb[0].mxu0
        %v5002 = vadd.f32 %v4861, %v5001
        %v5003 = vpop.f32.mrb[0].mxu0
        %v5004 = vpop.f32.mrb[0].mxu0
        %v5005 = vadd.f32 %v4864, %v5004
        %v5006 = vpop.f32.mrb[0].mxu0
        %v5007 = vadd.f32 %v4866, %v5006
        %5008 = vdwg.mxu0
        %v5009 = vld [vmem:[%s8] sm:$0x1]
        %v5010 = vlaneseq
        %v5011 = vshrl.u32 %v5010, 7
        %v5012 = vsub.s32 0, %v5011
        %v5013 = vrot.slane %v5009, %v5012
        %v5014 = vadd.f32 %v3305, %v5013
        %v5015 = vadd.f32 %v3309, %v5013
        %v5016 = vadd.f32 %v3315, %v5013
        %v5017 = vadd.f32 %v3319, %v5013
        %v5018 = vadd.f32 %v3325, %v5013
        %v5019 = vadd.f32 %v3329, %v5013
        %v5020 = vadd.f32 %v3335, %v5013
        %v5021 = vadd.f32 %v3339, %v5013
        %v5022 = vadd.f32 %v3345, %v5013
        %v5023 = vadd.f32 %v3349, %v5013
        %v5024 = vadd.f32 %v3355, %v5013
        %v5025 = vadd.f32 %v3359, %v5013
        %v5026 = vadd.f32 %v3365, %v5013
        %v5027 = vadd.f32 %v3369, %v5013
        %v5028 = vadd.f32 %v3375, %v5013
        %v5029 = vadd.f32 %v3379, %v5013
        %v5030 = vadd.f32 %v3385, %v5013
        %v5031 = vadd.f32 %v3389, %v5013
        %v5032 = vadd.f32 %v3395, %v5013
        %v5033 = vadd.f32 %v3399, %v5013
        %v5034 = vadd.f32 %v3405, %v5013
        %v5035 = vadd.f32 %v3409, %v5013
        %v5036 = vadd.f32 %v3415, %v5013
        %v5037 = vadd.f32 %v3419, %v5013
        %v5038 = vadd.f32 %v3425, %v5013
        %v5039 = vadd.f32 %v3429, %v5013
        %v5040 = vadd.f32 %v3435, %v5013
        %v5041 = vadd.f32 %v3439, %v5013
        %v5042 = vadd.f32 %v3445, %v5013
        %v5043 = vadd.f32 %v3449, %v5013
        %v5044 = vadd.f32 %v3455, %v5013
        %v5045 = vadd.f32 %v3459, %v5013
        %v5046 = vmax.f32 %v5014, 0.0
        %v5047 = vmax.f32 %v5015, 0.0
        %v5048 = vmax.f32 %v5016, 0.0
        %v5049 = vmax.f32 %v5017, 0.0
        %v5050 = vmax.f32 %v5018, 0.0
        %v5051 = vmax.f32 %v5019, 0.0
        %v5052 = vmax.f32 %v5020, 0.0
        %v5053 = vmax.f32 %v5021, 0.0
        %v5054 = vmax.f32 %v5022, 0.0
        %v5055 = vmax.f32 %v5023, 0.0
        %v5056 = vmax.f32 %v5024, 0.0
        %v5057 = vmax.f32 %v5025, 0.0
        %v5058 = vmax.f32 %v5026, 0.0
        %v5059 = vmax.f32 %v5027, 0.0
        %v5060 = vmax.f32 %v5028, 0.0
        %v5061 = vmax.f32 %v5029, 0.0
        %v5062 = vmax.f32 %v5030, 0.0
        %v5063 = vmax.f32 %v5031, 0.0
        %v5064 = vmax.f32 %v5032, 0.0
        %v5065 = vmax.f32 %v5033, 0.0
        %v5066 = vmax.f32 %v5034, 0.0
        %v5067 = vmax.f32 %v5035, 0.0
        %v5068 = vmax.f32 %v5036, 0.0
        %v5069 = vmax.f32 %v5037, 0.0
        %v5070 = vmax.f32 %v5038, 0.0
        %v5071 = vmax.f32 %v5039, 0.0
        %v5072 = vmax.f32 %v5040, 0.0
        %v5073 = vmax.f32 %v5041, 0.0
        %v5074 = vmax.f32 %v5042, 0.0
        %v5075 = vmax.f32 %v5043, 0.0
        %v5076 = vmax.f32 %v5044, 0.0
        %v5077 = vmax.f32 %v5045, 0.0
        %v5078 = vpack.c.bf16 %v5047, %v5046
        %v5079 = vpack.c.bf16 %v5049, %v5048
        %v5080 = vpack.c.bf16 %v5051, %v5050
        %v5081 = vpack.c.bf16 %v5053, %v5052
        %v5082 = vpack.c.bf16 %v5055, %v5054
        %v5083 = vpack.c.bf16 %v5057, %v5056
        %v5084 = vpack.c.bf16 %v5059, %v5058
        %v5085 = vpack.c.bf16 %v5061, %v5060
        %v5086 = vpack.c.bf16 %v5063, %v5062
        %v5087 = vpack.c.bf16 %v5065, %v5064
        %v5088 = vpack.c.bf16 %v5067, %v5066
        %v5089 = vpack.c.bf16 %v5069, %v5068
        %v5090 = vpack.c.bf16 %v5071, %v5070
        %v5091 = vpack.c.bf16 %v5073, %v5072
        %v5092 = vpack.c.bf16 %v5075, %v5074
        %v5093 = vpack.c.bf16 %v5077, %v5076
        %5094 = vst [vmem:[#allocation2] sm:$0xff] %v3307
        %5095 = vst [vmem:[#allocation2 + $0x8] sm:$0xff] %v3311
        %5096 = vst [vmem:[#allocation2 + $0x10] sm:$0xff] %v3317
        %5097 = vst [vmem:[#allocation2 + $0x18] sm:$0xff] %v3321
        %5098 = vst [vmem:[#allocation2 + $0x20] sm:$0xff] %v3327
        %5099 = vst [vmem:[#allocation2 + $0x28] sm:$0xff] %v3331
        %5100 = vst [vmem:[#allocation2 + $0x30] sm:$0xff] %v3337
        %5101 = vst [vmem:[#allocation2 + $0x38] sm:$0xff] %v3341
        %5102 = vst [vmem:[#allocation2 + $0x40] sm:$0xff] %v3347
        %5103 = vst [vmem:[#allocation2 + $0x48] sm:$0xff] %v3351
        %5104 = vst [vmem:[#allocation2 + $0x50] sm:$0xff] %v3357
        %5105 = vst [vmem:[#allocation2 + $0x58] sm:$0xff] %v3361
        %5106 = vst [vmem:[#allocation2 + $0x60] sm:$0xff] %v3367
        %5107 = vst [vmem:[#allocation2 + $0x68] sm:$0xff] %v3371
        %5108 = vst [vmem:[#allocation2 + $0x70] sm:$0xff] %v3377
        %5109 = vst [vmem:[#allocation2 + $0x78] sm:$0xff] %v3381
        %5110 = vst [vmem:[#allocation2 + $0x80] sm:$0xff] %v3387
        %5111 = vst [vmem:[#allocation2 + $0x88] sm:$0xff] %v3391
        %5112 = vst [vmem:[#allocation2 + $0x90] sm:$0xff] %v3397
        %5113 = vst [vmem:[#allocation2 + $0x98] sm:$0xff] %v3401
        %5114 = vst [vmem:[#allocation2 + $0xa0] sm:$0xff] %v3407
        %5115 = vst [vmem:[#allocation2 + $0xa8] sm:$0xff] %v3411
        %5116 = vst [vmem:[#allocation2 + $0xb0] sm:$0xff] %v3417
        %5117 = vst [vmem:[#allocation2 + $0xb8] sm:$0xff] %v3421
        %5118 = vst [vmem:[#allocation2 + $0xc0] sm:$0xff] %v3427
        %5119 = vst [vmem:[#allocation2 + $0xc8] sm:$0xff] %v3431
        %5120 = vst [vmem:[#allocation2 + $0xd0] sm:$0xff] %v3437
        %5121 = vst [vmem:[#allocation2 + $0xd8] sm:$0xff] %v3441
        %5122 = vst [vmem:[#allocation2 + $0xe0] sm:$0xff] %v3447
        %5123 = vst [vmem:[#allocation2 + $0xe8] sm:$0xff] %v3451
        %5124 = vst [vmem:[#allocation2 + $0xf0] sm:$0xff] %v3457
        %5125 = vst [vmem:[#allocation2 + $0xf8] sm:$0xff] %v3461
        %s5126 = scalar_lea.vmem [#allocation2], 192
        %v5127 = vld [vmem:[%s5126 + $0xc] sm:$0xf]
        %v5128 = vld [vmem:[%s5126 + $0x1c] sm:$0xf]
        %v5129 = vld [vmem:[%s5126 + $0x2c] sm:$0xf]
        %v5130 = vld [vmem:[%s5126 + $0x3c] sm:$0xf]
        %v5131 = vadd.f32 %v5127, %v4025
        %v5132 = vadd.f32 %v5128, %v4034
        %v5133 = vadd.f32 %v5129, %v4043
        %v5134 = vadd.f32 %v5130, %v4052
        %5135 = vst [vmem:[%s5126 + $0xc] sm:$0xf] %v5131
        %5136 = vst [vmem:[%s5126 + $0x1c] sm:$0xf] %v5132
        %5137 = vst [vmem:[%s5126 + $0x2c] sm:$0xf] %v5133
        %5138 = vst [vmem:[%s5126 + $0x3c] sm:$0xf] %v5134
        %v5139 = vld [vmem:[%s5126] sm:$0xff]
        %v5140 = vld [vmem:[%s5126 + $0x8] sm:$0xff]
        %v5141 = vld [vmem:[%s5126 + $0x10] sm:$0xff]
        %v5142 = vld [vmem:[%s5126 + $0x18] sm:$0xff]
        %v5143 = vld [vmem:[%s5126 + $0x20] sm:$0xff]
        %v5144 = vld [vmem:[%s5126 + $0x28] sm:$0xff]
        %v5145 = vld [vmem:[%s5126 + $0x30] sm:$0xff]
        %v5146 = vld [vmem:[%s5126 + $0x38] sm:$0xff]
        %v5147 = vadd.f32 %v5139, %v4027
        %v5148 = vadd.f32 %v5140, %v4030
        %v5149 = vadd.f32 %v5141, %v4036
        %v5150 = vadd.f32 %v5142, %v4039
        %v5151 = vadd.f32 %v5143, %v4045
        %v5152 = vadd.f32 %v5144, %v4048
        %v5153 = vadd.f32 %v5145, %v4054
        %v5154 = vadd.f32 %v5146, %v4057
        %5155 = vst [vmem:[%s5126] sm:$0xff] %v5147
        %5156 = vst [vmem:[%s5126 + $0x8] sm:$0xff] %v5148
        %5157 = vst [vmem:[%s5126 + $0x10] sm:$0xff] %v5149
        %5158 = vst [vmem:[%s5126 + $0x18] sm:$0xff] %v5150
        %5159 = vst [vmem:[%s5126 + $0x20] sm:$0xff] %v5151
        %5160 = vst [vmem:[%s5126 + $0x28] sm:$0xff] %v5152
        %5161 = vst [vmem:[%s5126 + $0x30] sm:$0xff] %v5153
        %5162 = vst [vmem:[%s5126 + $0x38] sm:$0xff] %v5154
        %v5163 = vld [vmem:[%s5126] sm:$0xf]
        %v5164 = vld [vmem:[%s5126 + $0x10] sm:$0xf]
        %v5165 = vld [vmem:[%s5126 + $0x20] sm:$0xf]
        %v5166 = vld [vmem:[%s5126 + $0x30] sm:$0xf]
        %v5171 = vrot.slane %v4318, 4
        %v5172 = vrot.slane %v4326, 4
        %v5173 = vrot.slane %v4334, 4
        %v5174 = vrot.slane %v4342, 4
        %v5179 = vadd.f32 %v5163, %v5171
        %v5180 = vadd.f32 %v5164, %v5172
        %v5181 = vadd.f32 %v5165, %v5173
        %v5182 = vadd.f32 %v5166, %v5174
        %5183 = vst [vmem:[%s5126] sm:$0xf] %v5179
        %5184 = vst [vmem:[%s5126 + $0x10] sm:$0xf] %v5180
        %5185 = vst [vmem:[%s5126 + $0x20] sm:$0xf] %v5181
        %5186 = vst [vmem:[%s5126 + $0x30] sm:$0xf] %v5182
        %v5187 = vld [vmem:[#allocation2 + $0xc] sm:$0xf]
        %v5188 = vld [vmem:[#allocation2 + $0x1c] sm:$0xf]
        %v5189 = vld [vmem:[#allocation2 + $0x2c] sm:$0xf]
        %v5190 = vld [vmem:[#allocation2 + $0x3c] sm:$0xf]
        %v5191 = vld [vmem:[#allocation2 + $0x4c] sm:$0xf]
        %v5192 = vld [vmem:[#allocation2 + $0x5c] sm:$0xf]
        %v5193 = vld [vmem:[#allocation2 + $0x6c] sm:$0xf]
        %v5194 = vld [vmem:[#allocation2 + $0x7c] sm:$0xf]
        %v5195 = vld [vmem:[#allocation2 + $0x8c] sm:$0xf]
        %v5196 = vld [vmem:[#allocation2 + $0x9c] sm:$0xf]
        %v5197 = vld [vmem:[#allocation2 + $0xac] sm:$0xf]
        %v5198 = vld [vmem:[#allocation2 + $0xbc] sm:$0xf]
        %v5199 = vld [vmem:[#allocation2 + $0xcc] sm:$0xf]
        %v5200 = vld [vmem:[#allocation2 + $0xdc] sm:$0xf]
        %v5201 = vld [vmem:[#allocation2 + $0xec] sm:$0xf]
        %v5202 = vld [vmem:[#allocation2 + $0xfc] sm:$0xf]
        %v5203 = vadd.f32 %v5187, %v4316
        %v5204 = vadd.f32 %v5188, %v4324
        %v5205 = vadd.f32 %v5189, %v4332
        %v5206 = vadd.f32 %v5190, %v4340
        %v5207 = vadd.f32 %v5191, %v4348
        %v5208 = vadd.f32 %v5192, %v4355
        %v5209 = vadd.f32 %v5193, %v4362
        %v5210 = vadd.f32 %v5194, %v4369
        %v5211 = vadd.f32 %v5195, %v4376
        %v5212 = vadd.f32 %v5196, %v4383
        %v5213 = vadd.f32 %v5197, %v4390
        %v5214 = vadd.f32 %v5198, %v4397
        %v5215 = vadd.f32 %v5199, %v4404
        %v5216 = vadd.f32 %v5200, %v4411
        %v5217 = vadd.f32 %v5201, %v4418
        %v5218 = vadd.f32 %v5202, %v4425
        %5219 = vst [vmem:[#allocation2 + $0xc] sm:$0xf] %v5203
        %5220 = vst [vmem:[#allocation2 + $0x1c] sm:$0xf] %v5204
        %5221 = vst [vmem:[#allocation2 + $0x2c] sm:$0xf] %v5205
        %5222 = vst [vmem:[#allocation2 + $0x3c] sm:$0xf] %v5206
        %5223 = vst [vmem:[#allocation2 + $0x4c] sm:$0xf] %v5207
        %5224 = vst [vmem:[#allocation2 + $0x5c] sm:$0xf] %v5208
        %5225 = vst [vmem:[#allocation2 + $0x6c] sm:$0xf] %v5209
        %5226 = vst [vmem:[#allocation2 + $0x7c] sm:$0xf] %v5210
        %5227 = vst [vmem:[#allocation2 + $0x8c] sm:$0xf] %v5211
        %5228 = vst [vmem:[#allocation2 + $0x9c] sm:$0xf] %v5212
        %5229 = vst [vmem:[#allocation2 + $0xac] sm:$0xf] %v5213
        %5230 = vst [vmem:[#allocation2 + $0xbc] sm:$0xf] %v5214
        %5231 = vst [vmem:[#allocation2 + $0xcc] sm:$0xf] %v5215
        %5232 = vst [vmem:[#allocation2 + $0xdc] sm:$0xf] %v5216
        %5233 = vst [vmem:[#allocation2 + $0xec] sm:$0xf] %v5217
        %5234 = vst [vmem:[#allocation2 + $0xfc] sm:$0xf] %v5218
        %v5235 = vld [vmem:[#allocation2] sm:$0xf]
        %v5236 = vld [vmem:[#allocation2 + $0x10] sm:$0xf]
        %v5237 = vld [vmem:[#allocation2 + $0x20] sm:$0xf]
        %v5238 = vld [vmem:[#allocation2 + $0x30] sm:$0xf]
        %v5239 = vld [vmem:[#allocation2 + $0x40] sm:$0xf]
        %v5240 = vld [vmem:[#allocation2 + $0x50] sm:$0xf]
        %v5241 = vld [vmem:[#allocation2 + $0x60] sm:$0xf]
        %v5242 = vld [vmem:[#allocation2 + $0x70] sm:$0xf]
        %v5243 = vld [vmem:[#allocation2 + $0x80] sm:$0xf]
        %v5244 = vld [vmem:[#allocation2 + $0x90] sm:$0xf]
        %v5245 = vld [vmem:[#allocation2 + $0xa0] sm:$0xf]
        %v5246 = vld [vmem:[#allocation2 + $0xb0] sm:$0xf]
        %v5247 = vld [vmem:[#allocation2 + $0xc0] sm:$0xf]
        %v5248 = vld [vmem:[#allocation2 + $0xd0] sm:$0xf]
        %v5249 = vld [vmem:[#allocation2 + $0xe0] sm:$0xf]
        %v5250 = vld [vmem:[#allocation2 + $0xf0] sm:$0xf]
        %v5267 = vrot.slane %v4615, 4
        %v5268 = vrot.slane %v4622, 4
        %v5269 = vrot.slane %v4629, 4
        %v5270 = vrot.slane %v4636, 4
        %v5271 = vrot.slane %v4643, 4
        %v5272 = vrot.slane %v4650, 4
        %v5273 = vrot.slane %v4657, 4
        %v5274 = vrot.slane %v4664, 4
        %v5275 = vrot.slane %v4671, 4
        %v5276 = vrot.slane %v4678, 4
        %v5277 = vrot.slane %v4685, 4
        %v5278 = vrot.slane %v4692, 4
        %v5279 = vrot.slane %v4700, 4
        %v5280 = vrot.slane %v4708, 4
        %v5281 = vrot.slane %v4716, 4
        %v5282 = vrot.slane %v4724, 4
        %v5299 = vadd.f32 %v5235, %v5267
        %v5300 = vadd.f32 %v5236, %v5268
        %v5301 = vadd.f32 %v5237, %v5269
        %v5302 = vadd.f32 %v5238, %v5270
        %v5303 = vadd.f32 %v5239, %v5271
        %v5304 = vadd.f32 %v5240, %v5272
        %v5305 = vadd.f32 %v5241, %v5273
        %v5306 = vadd.f32 %v5242, %v5274
        %v5307 = vadd.f32 %v5243, %v5275
        %v5308 = vadd.f32 %v5244, %v5276
        %v5309 = vadd.f32 %v5245, %v5277
        %v5310 = vadd.f32 %v5246, %v5278
        %v5311 = vadd.f32 %v5247, %v5279
        %v5312 = vadd.f32 %v5248, %v5280
        %v5313 = vadd.f32 %v5249, %v5281
        %v5314 = vadd.f32 %v5250, %v5282
        %5315 = vst [vmem:[#allocation2] sm:$0xf] %v5299
        %5316 = vst [vmem:[#allocation2 + $0x10] sm:$0xf] %v5300
        %5317 = vst [vmem:[#allocation2 + $0x20] sm:$0xf] %v5301
        %5318 = vst [vmem:[#allocation2 + $0x30] sm:$0xf] %v5302
        %5319 = vst [vmem:[#allocation2 + $0x40] sm:$0xf] %v5303
        %5320 = vst [vmem:[#allocation2 + $0x50] sm:$0xf] %v5304
        %5321 = vst [vmem:[#allocation2 + $0x60] sm:$0xf] %v5305
        %5322 = vst [vmem:[#allocation2 + $0x70] sm:$0xf] %v5306
        %5323 = vst [vmem:[#allocation2 + $0x80] sm:$0xf] %v5307
        %5324 = vst [vmem:[#allocation2 + $0x90] sm:$0xf] %v5308
        %5325 = vst [vmem:[#allocation2 + $0xa0] sm:$0xf] %v5309
        %5326 = vst [vmem:[#allocation2 + $0xb0] sm:$0xf] %v5310
        %5327 = vst [vmem:[#allocation2 + $0xc0] sm:$0xf] %v5311
        %5328 = vst [vmem:[#allocation2 + $0xd0] sm:$0xf] %v5312
        %5329 = vst [vmem:[#allocation2 + $0xe0] sm:$0xf] %v5313
        %5330 = vst [vmem:[#allocation2 + $0xf0] sm:$0xf] %v5314
        %v5331 = vld [vmem:[#allocation2 + $0xc] sm:$0xf]
        %v5332 = vld [vmem:[#allocation2 + $0x1c] sm:$0xf]
        %v5333 = vld [vmem:[#allocation2 + $0x2c] sm:$0xf]
        %v5334 = vld [vmem:[#allocation2 + $0x3c] sm:$0xf]
        %v5335 = vadd.f32 %v5331, %v4698
        %v5336 = vadd.f32 %v5332, %v4706
        %v5337 = vadd.f32 %v5333, %v4714
        %v5338 = vadd.f32 %v5334, %v4722
        %5339 = vst [vmem:[#allocation2 + $0xc] sm:$0xf] %v5335
        %5340 = vst [vmem:[#allocation2 + $0x1c] sm:$0xf] %v5336
        %5341 = vst [vmem:[#allocation2 + $0x2c] sm:$0xf] %v5337
        %5342 = vst [vmem:[#allocation2 + $0x3c] sm:$0xf] %v5338
        %v5343 = vld [vmem:[#allocation2] sm:$0xff]
        %v5344 = vld [vmem:[#allocation2 + $0x8] sm:$0xff]
        %v5345 = vld [vmem:[#allocation2 + $0x10] sm:$0xff]
        %v5346 = vld [vmem:[#allocation2 + $0x18] sm:$0xff]
        %v5347 = vld [vmem:[#allocation2 + $0x20] sm:$0xff]
        %v5348 = vld [vmem:[#allocation2 + $0x28] sm:$0xff]
        %v5349 = vld [vmem:[#allocation2 + $0x30] sm:$0xff]
        %v5350 = vld [vmem:[#allocation2 + $0x38] sm:$0xff]
        %v5351 = vadd.f32 %v5343, %v4975
        %v5352 = vadd.f32 %v5344, %v4978
        %v5353 = vadd.f32 %v5345, %v4984
        %v5354 = vadd.f32 %v5346, %v4987
        %v5355 = vadd.f32 %v5347, %v4993
        %v5356 = vadd.f32 %v5348, %v4996
        %v5357 = vadd.f32 %v5349, %v5002
        %v5358 = vadd.f32 %v5350, %v5005
        %5359 = vst [vmem:[#allocation2] sm:$0xff] %v5351
        %5360 = vst [vmem:[#allocation2 + $0x8] sm:$0xff] %v5352
        %5361 = vst [vmem:[#allocation2 + $0x10] sm:$0xff] %v5353
        %5362 = vst [vmem:[#allocation2 + $0x18] sm:$0xff] %v5354
        %5363 = vst [vmem:[#allocation2 + $0x20] sm:$0xff] %v5355
        %5364 = vst [vmem:[#allocation2 + $0x28] sm:$0xff] %v5356
        %5365 = vst [vmem:[#allocation2 + $0x30] sm:$0xff] %v5357
        %5366 = vst [vmem:[#allocation2 + $0x38] sm:$0xff] %v5358
        %v5367 = vld [vmem:[#allocation2] sm:$0xf]
        %v5368 = vld [vmem:[#allocation2 + $0x10] sm:$0xf]
        %v5369 = vld [vmem:[#allocation2 + $0x20] sm:$0xf]
        %v5370 = vld [vmem:[#allocation2 + $0x30] sm:$0xf]
        %v5375 = vrot.slane %v4980, 4
        %v5376 = vrot.slane %v4989, 4
        %v5377 = vrot.slane %v4998, 4
        %v5378 = vrot.slane %v5007, 4
        %v5383 = vadd.f32 %v5367, %v5375
        %v5384 = vadd.f32 %v5368, %v5376
        %v5385 = vadd.f32 %v5369, %v5377
        %v5386 = vadd.f32 %v5370, %v5378
        %5387 = vst [vmem:[#allocation2] sm:$0xf] %v5383
        %5388 = vst [vmem:[#allocation2 + $0x10] sm:$0xf] %v5384
        %5389 = vst [vmem:[#allocation2 + $0x20] sm:$0xf] %v5385
        %5390 = vst [vmem:[#allocation2 + $0x30] sm:$0xf] %v5386
        %v5391 = vld [vmem:[#allocation2] sm:$0xff]
        %v5392 = vld [vmem:[#allocation2 + $0x8] sm:$0xff]
        %v5393 = vld [vmem:[#allocation2 + $0x10] sm:$0xff]
        %v5394 = vld [vmem:[#allocation2 + $0x18] sm:$0xff]
        %v5395 = vld [vmem:[#allocation2 + $0x20] sm:$0xff]
        %v5396 = vld [vmem:[#allocation2 + $0x28] sm:$0xff]
        %v5397 = vld [vmem:[#allocation2 + $0x30] sm:$0xff]
        %v5398 = vld [vmem:[#allocation2 + $0x38] sm:$0xff]
        %v5399 = vld [vmem:[#allocation2 + $0x40] sm:$0xff]
        %v5400 = vld [vmem:[#allocation2 + $0x48] sm:$0xff]
        %v5401 = vld [vmem:[#allocation2 + $0x50] sm:$0xff]
        %v5402 = vld [vmem:[#allocation2 + $0x58] sm:$0xff]
        %v5403 = vld [vmem:[#allocation2 + $0x60] sm:$0xff]
        %v5404 = vld [vmem:[#allocation2 + $0x68] sm:$0xff]
        %v5405 = vld [vmem:[#allocation2 + $0x70] sm:$0xff]
        %v5406 = vld [vmem:[#allocation2 + $0x78] sm:$0xff]
        %v5407 = vld [vmem:[#allocation2 + $0x80] sm:$0xff]
        %v5408 = vld [vmem:[#allocation2 + $0x88] sm:$0xff]
        %v5409 = vld [vmem:[#allocation2 + $0x90] sm:$0xff]
        %v5410 = vld [vmem:[#allocation2 + $0x98] sm:$0xff]
        %v5411 = vld [vmem:[#allocation2 + $0xa0] sm:$0xff]
        %v5412 = vld [vmem:[#allocation2 + $0xa8] sm:$0xff]
        %v5413 = vld [vmem:[#allocation2 + $0xb0] sm:$0xff]
        %v5414 = vld [vmem:[#allocation2 + $0xb8] sm:$0xff]
        %v5415 = vld [vmem:[#allocation2 + $0xc0] sm:$0xff]
        %v5416 = vld [vmem:[#allocation2 + $0xc8] sm:$0xff]
        %v5417 = vld [vmem:[#allocation2 + $0xd0] sm:$0xff]
        %v5418 = vld [vmem:[#allocation2 + $0xd8] sm:$0xff]
        %v5419 = vld [vmem:[#allocation2 + $0xe0] sm:$0xff]
        %v5420 = vld [vmem:[#allocation2 + $0xe8] sm:$0xff]
        %v5421 = vld [vmem:[#allocation2 + $0xf0] sm:$0xff]
        %v5422 = vld [vmem:[#allocation2 + $0xf8] sm:$0xff]
        %v5423 = vld [vmem:[%s8 + $0x1] sm:$0x1]
        %v5424 = vlaneseq
        %v5425 = vshrl.u32 %v5424, 7
        %v5426 = vsub.s32 0, %v5425
        %v5427 = vrot.slane %v5423, %v5426
        %v5428 = vadd.f32 %v5391, %v5427
        %v5429 = vadd.f32 %v5392, %v5427
        %v5430 = vadd.f32 %v5393, %v5427
        %v5431 = vadd.f32 %v5394, %v5427
        %v5432 = vadd.f32 %v5395, %v5427
        %v5433 = vadd.f32 %v5396, %v5427
        %v5434 = vadd.f32 %v5397, %v5427
        %v5435 = vadd.f32 %v5398, %v5427
        %v5436 = vadd.f32 %v5399, %v5427
        %v5437 = vadd.f32 %v5400, %v5427
        %v5438 = vadd.f32 %v5401, %v5427
        %v5439 = vadd.f32 %v5402, %v5427
        %v5440 = vadd.f32 %v5403, %v5427
        %v5441 = vadd.f32 %v5404, %v5427
        %v5442 = vadd.f32 %v5405, %v5427
        %v5443 = vadd.f32 %v5406, %v5427
        %v5444 = vadd.f32 %v5407, %v5427
        %v5445 = vadd.f32 %v5408, %v5427
        %v5446 = vadd.f32 %v5409, %v5427
        %v5447 = vadd.f32 %v5410, %v5427
        %v5448 = vadd.f32 %v5411, %v5427
        %v5449 = vadd.f32 %v5412, %v5427
        %v5450 = vadd.f32 %v5413, %v5427
        %v5451 = vadd.f32 %v5414, %v5427
        %v5452 = vadd.f32 %v5415, %v5427
        %v5453 = vadd.f32 %v5416, %v5427
        %v5454 = vadd.f32 %v5417, %v5427
        %v5455 = vadd.f32 %v5418, %v5427
        %v5456 = vadd.f32 %v5419, %v5427
        %v5457 = vadd.f32 %v5420, %v5427
        %v5458 = vadd.f32 %v5421, %v5427
        %v5459 = vadd.f32 %v5422, %v5427
        %v5460 = vmax.f32 %v5428, 0.0
        %v5461 = vmax.f32 %v5429, 0.0
        %v5462 = vmax.f32 %v5430, 0.0
        %v5463 = vmax.f32 %v5431, 0.0
        %v5464 = vmax.f32 %v5432, 0.0
        %v5465 = vmax.f32 %v5433, 0.0
        %v5466 = vmax.f32 %v5434, 0.0
        %v5467 = vmax.f32 %v5435, 0.0
        %v5468 = vmax.f32 %v5436, 0.0
        %v5469 = vmax.f32 %v5437, 0.0
        %v5470 = vmax.f32 %v5438, 0.0
        %v5471 = vmax.f32 %v5439, 0.0
        %v5472 = vmax.f32 %v5440, 0.0
        %v5473 = vmax.f32 %v5441, 0.0
        %v5474 = vmax.f32 %v5442, 0.0
        %v5475 = vmax.f32 %v5443, 0.0
        %v5476 = vmax.f32 %v5444, 0.0
        %v5477 = vmax.f32 %v5445, 0.0
        %v5478 = vmax.f32 %v5446, 0.0
        %v5479 = vmax.f32 %v5447, 0.0
        %v5480 = vmax.f32 %v5448, 0.0
        %v5481 = vmax.f32 %v5449, 0.0
        %v5482 = vmax.f32 %v5450, 0.0
        %v5483 = vmax.f32 %v5451, 0.0
        %v5484 = vmax.f32 %v5452, 0.0
        %v5485 = vmax.f32 %v5453, 0.0
        %v5486 = vmax.f32 %v5454, 0.0
        %v5487 = vmax.f32 %v5455, 0.0
        %v5488 = vmax.f32 %v5456, 0.0
        %v5489 = vmax.f32 %v5457, 0.0
        %v5490 = vmax.f32 %v5458, 0.0
        %v5491 = vmax.f32 %v5459, 0.0
        %v5492 = vpack.c.bf16 %v5461, %v5460
        %v5493 = vpack.c.bf16 %v5463, %v5462
        %v5494 = vpack.c.bf16 %v5465, %v5464
        %v5495 = vpack.c.bf16 %v5467, %v5466
        %v5496 = vpack.c.bf16 %v5469, %v5468
        %v5497 = vpack.c.bf16 %v5471, %v5470
        %v5498 = vpack.c.bf16 %v5473, %v5472
        %v5499 = vpack.c.bf16 %v5475, %v5474
        %v5500 = vpack.c.bf16 %v5477, %v5476
        %v5501 = vpack.c.bf16 %v5479, %v5478
        %v5502 = vpack.c.bf16 %v5481, %v5480
        %v5503 = vpack.c.bf16 %v5483, %v5482
        %v5504 = vpack.c.bf16 %v5485, %v5484
        %v5505 = vpack.c.bf16 %v5487, %v5486
        %v5506 = vpack.c.bf16 %v5489, %v5488
        %v5507 = vpack.c.bf16 %v5491, %v5490
        %v5508 = vld [vmem:[%s8 + $0x2] sm:$0x1]
        %v5509 = vlaneseq
        %v5510 = vshrl.u32 %v5509, 7
        %v5511 = vsub.s32 0, %v5510
        %v5512 = vrot.slane %v5508, %v5511
        %v5513 = vadd.f32 %v3691, %v5512
        %v5514 = vadd.f32 %v3695, %v5512
        %v5515 = vadd.f32 %v3701, %v5512
        %v5516 = vadd.f32 %v3705, %v5512
        %v5517 = vadd.f32 %v3711, %v5512
        %v5518 = vadd.f32 %v3715, %v5512
        %v5519 = vadd.f32 %v3721, %v5512
        %v5520 = vadd.f32 %v3725, %v5512
        %v5521 = vadd.f32 %v3731, %v5512
        %v5522 = vadd.f32 %v3735, %v5512
        %v5523 = vadd.f32 %v3741, %v5512
        %v5524 = vadd.f32 %v3745, %v5512
        %v5525 = vadd.f32 %v3751, %v5512
        %v5526 = vadd.f32 %v3755, %v5512
        %v5527 = vadd.f32 %v3761, %v5512
        %v5528 = vadd.f32 %v3765, %v5512
        %v5529 = vadd.f32 %v3771, %v5512
        %v5530 = vadd.f32 %v3775, %v5512
        %v5531 = vadd.f32 %v3781, %v5512
        %v5532 = vadd.f32 %v3785, %v5512
        %v5533 = vadd.f32 %v3791, %v5512
        %v5534 = vadd.f32 %v3795, %v5512
        %v5535 = vadd.f32 %v3801, %v5512
        %v5536 = vadd.f32 %v3805, %v5512
        %v5537 = vadd.f32 %v3811, %v5512
        %v5538 = vadd.f32 %v3815, %v5512
        %v5539 = vadd.f32 %v3821, %v5512
        %v5540 = vadd.f32 %v3825, %v5512
        %v5541 = vadd.f32 %v3831, %v5512
        %v5542 = vadd.f32 %v3835, %v5512
        %v5543 = vadd.f32 %v3841, %v5512
        %v5544 = vadd.f32 %v3845, %v5512
        %v5545 = vmax.f32 %v5513, 0.0
        %v5546 = vmax.f32 %v5514, 0.0
        %v5547 = vmax.f32 %v5515, 0.0
        %v5548 = vmax.f32 %v5516, 0.0
        %v5549 = vmax.f32 %v5517, 0.0
        %v5550 = vmax.f32 %v5518, 0.0
        %v5551 = vmax.f32 %v5519, 0.0
        %v5552 = vmax.f32 %v5520, 0.0
        %v5553 = vmax.f32 %v5521, 0.0
        %v5554 = vmax.f32 %v5522, 0.0
        %v5555 = vmax.f32 %v5523, 0.0
        %v5556 = vmax.f32 %v5524, 0.0
        %v5557 = vmax.f32 %v5525, 0.0
        %v5558 = vmax.f32 %v5526, 0.0
        %v5559 = vmax.f32 %v5527, 0.0
        %v5560 = vmax.f32 %v5528, 0.0
        %v5561 = vmax.f32 %v5529, 0.0
        %v5562 = vmax.f32 %v5530, 0.0
        %v5563 = vmax.f32 %v5531, 0.0
        %v5564 = vmax.f32 %v5532, 0.0
        %v5565 = vmax.f32 %v5533, 0.0
        %v5566 = vmax.f32 %v5534, 0.0
        %v5567 = vmax.f32 %v5535, 0.0
        %v5568 = vmax.f32 %v5536, 0.0
        %v5569 = vmax.f32 %v5537, 0.0
        %v5570 = vmax.f32 %v5538, 0.0
        %v5571 = vmax.f32 %v5539, 0.0
        %v5572 = vmax.f32 %v5540, 0.0
        %v5573 = vmax.f32 %v5541, 0.0
        %v5574 = vmax.f32 %v5542, 0.0
        %v5575 = vmax.f32 %v5543, 0.0
        %v5576 = vmax.f32 %v5544, 0.0
        %v5577 = vpack.c.bf16 %v5546, %v5545
        %v5578 = vpack.c.bf16 %v5548, %v5547
        %v5579 = vpack.c.bf16 %v5550, %v5549
        %v5580 = vpack.c.bf16 %v5552, %v5551
        %v5581 = vpack.c.bf16 %v5554, %v5553
        %v5582 = vpack.c.bf16 %v5556, %v5555
        %v5583 = vpack.c.bf16 %v5558, %v5557
        %v5584 = vpack.c.bf16 %v5560, %v5559
        %v5585 = vpack.c.bf16 %v5562, %v5561
        %v5586 = vpack.c.bf16 %v5564, %v5563
        %v5587 = vpack.c.bf16 %v5566, %v5565
        %v5588 = vpack.c.bf16 %v5568, %v5567
        %v5589 = vpack.c.bf16 %v5570, %v5569
        %v5590 = vpack.c.bf16 %v5572, %v5571
        %v5591 = vpack.c.bf16 %v5574, %v5573
        %v5592 = vpack.c.bf16 %v5576, %v5575
        %v5593 = vld [vmem:[%s8 + $0x3] sm:$0x1]
        %v5594 = vlaneseq
        %v5595 = vshrl.u32 %v5594, 7
        %v5596 = vsub.s32 0, %v5595
        %v5597 = vrot.slane %v5593, %v5596
        %v5598 = vadd.f32 %v3693, %v5597
        %v5599 = vadd.f32 %v3697, %v5597
        %v5600 = vadd.f32 %v3703, %v5597
        %v5601 = vadd.f32 %v3707, %v5597
        %v5602 = vadd.f32 %v3713, %v5597
        %v5603 = vadd.f32 %v3717, %v5597
        %v5604 = vadd.f32 %v3723, %v5597
        %v5605 = vadd.f32 %v3727, %v5597
        %v5606 = vadd.f32 %v3733, %v5597
        %v5607 = vadd.f32 %v3737, %v5597
        %v5608 = vadd.f32 %v3743, %v5597
        %v5609 = vadd.f32 %v3747, %v5597
        %v5610 = vadd.f32 %v3753, %v5597
        %v5611 = vadd.f32 %v3757, %v5597
        %v5612 = vadd.f32 %v3763, %v5597
        %v5613 = vadd.f32 %v3767, %v5597
        %v5614 = vadd.f32 %v3773, %v5597
        %v5615 = vadd.f32 %v3777, %v5597
        %v5616 = vadd.f32 %v3783, %v5597
        %v5617 = vadd.f32 %v3787, %v5597
        %v5618 = vadd.f32 %v3793, %v5597
        %v5619 = vadd.f32 %v3797, %v5597
        %v5620 = vadd.f32 %v3803, %v5597
        %v5621 = vadd.f32 %v3807, %v5597
        %v5622 = vadd.f32 %v3813, %v5597
        %v5623 = vadd.f32 %v3817, %v5597
        %v5624 = vadd.f32 %v3823, %v5597
        %v5625 = vadd.f32 %v3827, %v5597
        %v5626 = vadd.f32 %v3833, %v5597
        %v5627 = vadd.f32 %v3837, %v5597
        %v5628 = vadd.f32 %v3843, %v5597
        %v5629 = vadd.f32 %v3847, %v5597
        %v5630 = vmax.f32 %v5598, 0.0
        %v5631 = vmax.f32 %v5599, 0.0
        %v5632 = vmax.f32 %v5600, 0.0
        %v5633 = vmax.f32 %v5601, 0.0
        %v5634 = vmax.f32 %v5602, 0.0
        %v5635 = vmax.f32 %v5603, 0.0
        %v5636 = vmax.f32 %v5604, 0.0
        %v5637 = vmax.f32 %v5605, 0.0
        %v5638 = vmax.f32 %v5606, 0.0
        %v5639 = vmax.f32 %v5607, 0.0
        %v5640 = vmax.f32 %v5608, 0.0
        %v5641 = vmax.f32 %v5609, 0.0
        %v5642 = vmax.f32 %v5610, 0.0
        %v5643 = vmax.f32 %v5611, 0.0
        %v5644 = vmax.f32 %v5612, 0.0
        %v5645 = vmax.f32 %v5613, 0.0
        %v5646 = vmax.f32 %v5614, 0.0
        %v5647 = vmax.f32 %v5615, 0.0
        %v5648 = vmax.f32 %v5616, 0.0
        %v5649 = vmax.f32 %v5617, 0.0
        %v5650 = vmax.f32 %v5618, 0.0
        %v5651 = vmax.f32 %v5619, 0.0
        %v5652 = vmax.f32 %v5620, 0.0
        %v5653 = vmax.f32 %v5621, 0.0
        %v5654 = vmax.f32 %v5622, 0.0
        %v5655 = vmax.f32 %v5623, 0.0
        %v5656 = vmax.f32 %v5624, 0.0
        %v5657 = vmax.f32 %v5625, 0.0
        %v5658 = vmax.f32 %v5626, 0.0
        %v5659 = vmax.f32 %v5627, 0.0
        %v5660 = vmax.f32 %v5628, 0.0
        %v5661 = vmax.f32 %v5629, 0.0
        %v5662 = vpack.c.bf16 %v5631, %v5630
        %v5663 = vpack.c.bf16 %v5633, %v5632
        %v5664 = vpack.c.bf16 %v5635, %v5634
        %v5665 = vpack.c.bf16 %v5637, %v5636
        %v5666 = vpack.c.bf16 %v5639, %v5638
        %v5667 = vpack.c.bf16 %v5641, %v5640
        %v5668 = vpack.c.bf16 %v5643, %v5642
        %v5669 = vpack.c.bf16 %v5645, %v5644
        %v5670 = vpack.c.bf16 %v5647, %v5646
        %v5671 = vpack.c.bf16 %v5649, %v5648
        %v5672 = vpack.c.bf16 %v5651, %v5650
        %v5673 = vpack.c.bf16 %v5653, %v5652
        %v5674 = vpack.c.bf16 %v5655, %v5654
        %v5675 = vpack.c.bf16 %v5657, %v5656
        %v5676 = vpack.c.bf16 %v5659, %v5658
        %v5677 = vpack.c.bf16 %v5661, %v5660
        %v5678 = vld [vmem:[%s382] sm:$0xf]
        %v5680 = vlaneseq
        %v5681 = vshrl.u32 %v5680, 7
        %v5682 = vsub.s32 0, %v5681
        %v5683 = vrot.slane %v5678, %v5682
        %v5684 = vlaneseq
        %v5685 = vshrl.u32 %v5684, 7
        %v5686 = vsub.s32 1, %v5685
        %v5687 = vrot.slane %v5678, %v5686
        %v5688 = vlaneseq
        %v5689 = vshrl.u32 %v5688, 7
        %v5690 = vsub.s32 2, %v5689
        %v5691 = vrot.slane %v5678, %v5690
        %v5692 = vlaneseq
        %v5693 = vshrl.u32 %v5692, 7
        %v5694 = vsub.s32 3, %v5693
        %v5695 = vrot.slane %v5678, %v5694
        %v5700 = vpack.c.bf16 %v5683, %v5683
        %v5701 = vpack.c.bf16 %v5687, %v5687
        %v5702 = vpack.c.bf16 %v5691, %v5691
        %v5703 = vpack.c.bf16 %v5695, %v5695
        %v5704 = vld [vmem:[%s3] sm:$0xf]
        %v5705 = vld [vmem:[%s3 + $0x4] sm:$0xf]
        %v5706 = vld [vmem:[%s3 + $0x8] sm:$0xf]
        %v5707 = vld [vmem:[%s3 + $0xc] sm:$0xf]
        %v5708 = vld [vmem:[%s3 + $0x10] sm:$0xf]
        %v5709 = vld [vmem:[%s3 + $0x14] sm:$0xf]
        %v5710 = vld [vmem:[%s3 + $0x18] sm:$0xf]
        %v5711 = vld [vmem:[%s3 + $0x1c] sm:$0xf]
        %v5712 = vld [vmem:[%s3 + $0x20] sm:$0xf]
        %v5713 = vld [vmem:[%s3 + $0x24] sm:$0xf]
        %v5714 = vld [vmem:[%s3 + $0x28] sm:$0xf]
        %v5715 = vld [vmem:[%s3 + $0x2c] sm:$0xf]
        %v5716 = vld [vmem:[%s3 + $0x30] sm:$0xf]
        %v5717 = vld [vmem:[%s3 + $0x34] sm:$0xf]
        %v5718 = vld [vmem:[%s3 + $0x38] sm:$0xf]
        %v5719 = vld [vmem:[%s3 + $0x3c] sm:$0xf]
        %v5720 = vld [vmem:[%s3 + $0x40] sm:$0xf]
        %v5721 = vld [vmem:[%s3 + $0x44] sm:$0xf]
        %v5722 = vld [vmem:[%s3 + $0x48] sm:$0xf]
        %v5723 = vld [vmem:[%s3 + $0x4c] sm:$0xf]
        %v5724 = vld [vmem:[%s3 + $0x50] sm:$0xf]
        %v5725 = vld [vmem:[%s3 + $0x54] sm:$0xf]
        %v5726 = vld [vmem:[%s3 + $0x58] sm:$0xf]
        %v5727 = vld [vmem:[%s3 + $0x5c] sm:$0xf]
        %v5728 = vld [vmem:[%s3 + $0x60] sm:$0xf]
        %v5729 = vld [vmem:[%s3 + $0x64] sm:$0xf]
        %v5730 = vld [vmem:[%s3 + $0x68] sm:$0xf]
        %v5731 = vld [vmem:[%s3 + $0x6c] sm:$0xf]
        %v5732 = vld [vmem:[%s3 + $0x70] sm:$0xf]
        %v5733 = vld [vmem:[%s3 + $0x74] sm:$0xf]
        %v5734 = vld [vmem:[%s3 + $0x78] sm:$0xf]
        %v5735 = vld [vmem:[%s3 + $0x7c] sm:$0xf]
        %v5736 = vld [vmem:[%s3 + $0x80] sm:$0xf]
        %v5737 = vld [vmem:[%s3 + $0x84] sm:$0xf]
        %v5738 = vld [vmem:[%s3 + $0x88] sm:$0xf]
        %v5739 = vld [vmem:[%s3 + $0x8c] sm:$0xf]
        %v5740 = vld [vmem:[%s3 + $0x90] sm:$0xf]
        %v5741 = vld [vmem:[%s3 + $0x94] sm:$0xf]
        %v5742 = vld [vmem:[%s3 + $0x98] sm:$0xf]
        %v5743 = vld [vmem:[%s3 + $0x9c] sm:$0xf]
        %v5744 = vld [vmem:[%s3 + $0xa0] sm:$0xf]
        %v5745 = vld [vmem:[%s3 + $0xa4] sm:$0xf]
        %v5746 = vld [vmem:[%s3 + $0xa8] sm:$0xf]
        %v5747 = vld [vmem:[%s3 + $0xac] sm:$0xf]
        %v5748 = vld [vmem:[%s3 + $0xb0] sm:$0xf]
        %v5749 = vld [vmem:[%s3 + $0xb4] sm:$0xf]
        %v5750 = vld [vmem:[%s3 + $0xb8] sm:$0xf]
        %v5751 = vld [vmem:[%s3 + $0xbc] sm:$0xf]
        %v5752 = vld [vmem:[%s3 + $0xc0] sm:$0xf]
        %v5753 = vld [vmem:[%s3 + $0xc4] sm:$0xf]
        %v5754 = vld [vmem:[%s3 + $0xc8] sm:$0xf]
        %v5755 = vld [vmem:[%s3 + $0xcc] sm:$0xf]
        %v5756 = vld [vmem:[%s3 + $0xd0] sm:$0xf]
        %v5757 = vld [vmem:[%s3 + $0xd4] sm:$0xf]
        %v5758 = vld [vmem:[%s3 + $0xd8] sm:$0xf]
        %v5759 = vld [vmem:[%s3 + $0xdc] sm:$0xf]
        %v5760 = vld [vmem:[%s3 + $0xe0] sm:$0xf]
        %v5761 = vld [vmem:[%s3 + $0xe4] sm:$0xf]
        %v5762 = vld [vmem:[%s3 + $0xe8] sm:$0xf]
        %v5763 = vld [vmem:[%s3 + $0xec] sm:$0xf]
        %v5764 = vld [vmem:[%s3 + $0xf0] sm:$0xf]
        %v5765 = vld [vmem:[%s3 + $0xf4] sm:$0xf]
        %v5766 = vld [vmem:[%s3 + $0xf8] sm:$0xf]
        %v5767 = vld [vmem:[%s3 + $0xfc] sm:$0xf]
        %v5768 = vld [vmem:[%s8 + $0x4] sm:$0x1]
        %v5833 = vunpack.c.l.b16 %v5704
        %v5834 = vunpack.c.l.b16 %v5705
        %v5835 = vunpack.c.l.b16 %v5706
        %v5836 = vunpack.c.l.b16 %v5707
        %v5837 = vunpack.c.l.b16 %v5708
        %v5838 = vunpack.c.l.b16 %v5709
        %v5839 = vunpack.c.l.b16 %v5710
        %v5840 = vunpack.c.l.b16 %v5711
        %v5841 = vunpack.c.l.b16 %v5712
        %v5842 = vunpack.c.l.b16 %v5713
        %v5843 = vunpack.c.l.b16 %v5714
        %v5844 = vunpack.c.l.b16 %v5715
        %v5845 = vunpack.c.l.b16 %v5716
        %v5846 = vunpack.c.l.b16 %v5717
        %v5847 = vunpack.c.l.b16 %v5718
        %v5848 = vunpack.c.l.b16 %v5719
        %v5849 = vunpack.c.l.b16 %v5720
        %v5850 = vunpack.c.l.b16 %v5721
        %v5851 = vunpack.c.l.b16 %v5722
        %v5852 = vunpack.c.l.b16 %v5723
        %v5853 = vunpack.c.l.b16 %v5724
        %v5854 = vunpack.c.l.b16 %v5725
        %v5855 = vunpack.c.l.b16 %v5726
        %v5856 = vunpack.c.l.b16 %v5727
        %v5857 = vunpack.c.l.b16 %v5728
        %v5858 = vunpack.c.l.b16 %v5729
        %v5859 = vunpack.c.l.b16 %v5730
        %v5860 = vunpack.c.l.b16 %v5731
        %v5861 = vunpack.c.l.b16 %v5732
        %v5862 = vunpack.c.l.b16 %v5733
        %v5863 = vunpack.c.l.b16 %v5734
        %v5864 = vunpack.c.l.b16 %v5735
        %v5865 = vunpack.c.l.b16 %v5736
        %v5866 = vunpack.c.l.b16 %v5737
        %v5867 = vunpack.c.l.b16 %v5738
        %v5868 = vunpack.c.l.b16 %v5739
        %v5869 = vunpack.c.l.b16 %v5740
        %v5870 = vunpack.c.l.b16 %v5741
        %v5871 = vunpack.c.l.b16 %v5742
        %v5872 = vunpack.c.l.b16 %v5743
        %v5873 = vunpack.c.l.b16 %v5744
        %v5874 = vunpack.c.l.b16 %v5745
        %v5875 = vunpack.c.l.b16 %v5746
        %v5876 = vunpack.c.l.b16 %v5747
        %v5877 = vunpack.c.l.b16 %v5748
        %v5878 = vunpack.c.l.b16 %v5749
        %v5879 = vunpack.c.l.b16 %v5750
        %v5880 = vunpack.c.l.b16 %v5751
        %v5881 = vunpack.c.l.b16 %v5752
        %v5882 = vunpack.c.l.b16 %v5753
        %v5883 = vunpack.c.l.b16 %v5754
        %v5884 = vunpack.c.l.b16 %v5755
        %v5885 = vunpack.c.l.b16 %v5756
        %v5886 = vunpack.c.l.b16 %v5757
        %v5887 = vunpack.c.l.b16 %v5758
        %v5888 = vunpack.c.l.b16 %v5759
        %v5889 = vunpack.c.l.b16 %v5760
        %v5890 = vunpack.c.l.b16 %v5761
        %v5891 = vunpack.c.l.b16 %v5762
        %v5892 = vunpack.c.l.b16 %v5763
        %v5893 = vunpack.c.l.b16 %v5764
        %v5894 = vunpack.c.l.b16 %v5765
        %v5895 = vunpack.c.l.b16 %v5766
        %v5896 = vunpack.c.l.b16 %v5767
        %v5897 = vpack.c.b16 %v5834, %v5833
        %v5898 = vpack.c.b16 %v5836, %v5835
        %v5899 = vpack.c.b16 %v5838, %v5837
        %v5900 = vpack.c.b16 %v5840, %v5839
        %v5901 = vpack.c.b16 %v5842, %v5841
        %v5902 = vpack.c.b16 %v5844, %v5843
        %v5903 = vpack.c.b16 %v5846, %v5845
        %v5904 = vpack.c.b16 %v5848, %v5847
        %v5905 = vpack.c.b16 %v5850, %v5849
        %v5906 = vpack.c.b16 %v5852, %v5851
        %v5907 = vpack.c.b16 %v5854, %v5853
        %v5908 = vpack.c.b16 %v5856, %v5855
        %v5909 = vpack.c.b16 %v5858, %v5857
        %v5910 = vpack.c.b16 %v5860, %v5859
        %v5911 = vpack.c.b16 %v5862, %v5861
        %v5912 = vpack.c.b16 %v5864, %v5863
        %v5913 = vpack.c.b16 %v5866, %v5865
        %v5914 = vpack.c.b16 %v5868, %v5867
        %v5915 = vpack.c.b16 %v5870, %v5869
        %v5916 = vpack.c.b16 %v5872, %v5871
        %v5917 = vpack.c.b16 %v5874, %v5873
        %v5918 = vpack.c.b16 %v5876, %v5875
        %v5919 = vpack.c.b16 %v5878, %v5877
        %v5920 = vpack.c.b16 %v5880, %v5879
        %v5921 = vpack.c.b16 %v5882, %v5881
        %v5922 = vpack.c.b16 %v5884, %v5883
        %v5923 = vpack.c.b16 %v5886, %v5885
        %v5924 = vpack.c.b16 %v5888, %v5887
        %v5925 = vpack.c.b16 %v5890, %v5889
        %v5926 = vpack.c.b16 %v5892, %v5891
        %v5927 = vpack.c.b16 %v5894, %v5893
        %v5928 = vpack.c.b16 %v5896, %v5895
        %5961 = vmatprep.subr.bf16.mxu0 0
        %5962 = vmatpush1.bf16.msra.mxu0 %v5897
        %5963 = vmatprep.subr.bf16.mxu0 0
        %5964 = vmatpush1.bf16.msra.mxu0 %v5898
        %5965 = vmatprep.subr.bf16.mxu0 0
        %5966 = vmatpush1.bf16.msra.mxu0 %v5899
        %5967 = vmatprep.subr.bf16.mxu0 0
        %5968 = vmatpush1.bf16.msra.mxu0 %v5900
        %5969 = vmatprep.subr.bf16.mxu0 0
        %5970 = vmatpush1.bf16.msra.mxu0 %v5901
        %5971 = vmatprep.subr.bf16.mxu0 0
        %5972 = vmatpush1.bf16.msra.mxu0 %v5902
        %5973 = vmatprep.subr.bf16.mxu0 0
        %5974 = vmatpush1.bf16.msra.mxu0 %v5903
        %5975 = vmatprep.subr.bf16.mxu0 0
        %5976 = vmatpush1.bf16.msra.mxu0 %v5904
        %5977 = vmatprep.subr.bf16.mxu0 0
        %5978 = vmatpush1.bf16.msra.mxu0 %v5905
        %5979 = vmatprep.subr.bf16.mxu0 0
        %5980 = vmatpush1.bf16.msra.mxu0 %v5906
        %5981 = vmatprep.subr.bf16.mxu0 0
        %5982 = vmatpush1.bf16.msra.mxu0 %v5907
        %5983 = vmatprep.subr.bf16.mxu0 0
        %5984 = vmatpush1.bf16.msra.mxu0 %v5908
        %5985 = vmatprep.subr.bf16.mxu0 0
        %5986 = vmatpush1.bf16.msra.mxu0 %v5909
        %5987 = vmatprep.subr.bf16.mxu0 0
        %5988 = vmatpush1.bf16.msra.mxu0 %v5910
        %5989 = vmatprep.subr.bf16.mxu0 0
        %5990 = vmatpush1.bf16.msra.mxu0 %v5911
        %5991 = vmatprep.subr.bf16.mxu0 0
        %5992 = vmatpush1.bf16.msra.mxu0 %v5912
        %5993 = vmatprep.mubr.bf16.mxu0 %v5701
        %5994 = vmatmul.mubr.bf16.gmra.mrb[0].mxu0 %v5700
        %v5995 = vpop.f32.mrb[0].mxu0
        %v5996 = vadd.f32 %v5768, %v5995
        %v5997 = vpop.f32.mrb[0].mxu0
        %v5998 = vpop.f32.mrb[0].mxu0
        %v5999 = vpop.f32.mrb[0].mxu0
        %6000 = vdwg.mxu0
        %6001 = vmatprep.subr.bf16.mxu0 0
        %6002 = vmatpush1.bf16.msra.mxu0 %v5913
        %6003 = vmatprep.subr.bf16.mxu0 0
        %6004 = vmatpush1.bf16.msra.mxu0 %v5914
        %6005 = vmatprep.subr.bf16.mxu0 0
        %6006 = vmatpush1.bf16.msra.mxu0 %v5915
        %6007 = vmatprep.subr.bf16.mxu0 0
        %6008 = vmatpush1.bf16.msra.mxu0 %v5916
        %6009 = vmatprep.subr.bf16.mxu0 0
        %6010 = vmatpush1.bf16.msra.mxu0 %v5917
        %6011 = vmatprep.subr.bf16.mxu0 0
        %6012 = vmatpush1.bf16.msra.mxu0 %v5918
        %6013 = vmatprep.subr.bf16.mxu0 0
        %6014 = vmatpush1.bf16.msra.mxu0 %v5919
        %6015 = vmatprep.subr.bf16.mxu0 0
        %6016 = vmatpush1.bf16.msra.mxu0 %v5920
        %6017 = vmatprep.subr.bf16.mxu0 0
        %6018 = vmatpush1.bf16.msra.mxu0 %v5921
        %6019 = vmatprep.subr.bf16.mxu0 0
        %6020 = vmatpush1.bf16.msra.mxu0 %v5922
        %6021 = vmatprep.subr.bf16.mxu0 0
        %6022 = vmatpush1.bf16.msra.mxu0 %v5923
        %6023 = vmatprep.subr.bf16.mxu0 0
        %6024 = vmatpush1.bf16.msra.mxu0 %v5924
        %6025 = vmatprep.subr.bf16.mxu0 0
        %6026 = vmatpush1.bf16.msra.mxu0 %v5925
        %6027 = vmatprep.subr.bf16.mxu0 0
        %6028 = vmatpush1.bf16.msra.mxu0 %v5926
        %6029 = vmatprep.subr.bf16.mxu0 0
        %6030 = vmatpush1.bf16.msra.mxu0 %v5927
        %6031 = vmatprep.subr.bf16.mxu0 0
        %6032 = vmatpush1.bf16.msra.mxu0 %v5928
        %6033 = vmatprep.mubr.bf16.mxu0 %v5703
        %6034 = vmatmul.mubr.bf16.gmra.mrb[0].mxu0 %v5702
        %v6035 = vpop.f32.mrb[0].mxu0
        %v6036 = vadd.f32 %v5996, %v6035
        %v6037 = vpop.f32.mrb[0].mxu0
        %v6038 = vpop.f32.mrb[0].mxu0
        %v6039 = vpop.f32.mrb[0].mxu0
        %6040 = vdwg.mxu0
        %v6041 = vmax.f32 %v6036, 0.0
        %v6042 = vpack.c.bf16 %v6041, %v6041
        %v6043 = vld [vmem:[%s4] sm:$0xf]
        %v6044 = vld [vmem:[%s4 + $0x4] sm:$0xf]
        %v6045 = vld [vmem:[%s4 + $0x8] sm:$0xf]
        %v6046 = vld [vmem:[%s4 + $0xc] sm:$0xf]
        %v6047 = vld [vmem:[%s4 + $0x10] sm:$0xf]
        %v6048 = vld [vmem:[%s4 + $0x14] sm:$0xf]
        %v6049 = vld [vmem:[%s4 + $0x18] sm:$0xf]
        %v6050 = vld [vmem:[%s4 + $0x1c] sm:$0xf]
        %v6051 = vld [vmem:[%s4 + $0x20] sm:$0xf]
        %v6052 = vld [vmem:[%s4 + $0x24] sm:$0xf]
        %v6053 = vld [vmem:[%s4 + $0x28] sm:$0xf]
        %v6054 = vld [vmem:[%s4 + $0x2c] sm:$0xf]
        %v6055 = vld [vmem:[%s4 + $0x30] sm:$0xf]
        %v6056 = vld [vmem:[%s4 + $0x34] sm:$0xf]
        %v6057 = vld [vmem:[%s4 + $0x38] sm:$0xf]
        %v6058 = vld [vmem:[%s4 + $0x3c] sm:$0xf]
        %v6075 = vunpack.c.l.b16 %v6043
        %v6076 = vunpack.c.l.b16 %v6044
        %v6077 = vunpack.c.l.b16 %v6045
        %v6078 = vunpack.c.l.b16 %v6046
        %v6079 = vunpack.c.l.b16 %v6047
        %v6080 = vunpack.c.l.b16 %v6048
        %v6081 = vunpack.c.l.b16 %v6049
        %v6082 = vunpack.c.l.b16 %v6050
        %v6083 = vunpack.c.l.b16 %v6051
        %v6084 = vunpack.c.l.b16 %v6052
        %v6085 = vunpack.c.l.b16 %v6053
        %v6086 = vunpack.c.l.b16 %v6054
        %v6087 = vunpack.c.l.b16 %v6055
        %v6088 = vunpack.c.l.b16 %v6056
        %v6089 = vunpack.c.l.b16 %v6057
        %v6090 = vunpack.c.l.b16 %v6058
        %v6091 = vpack.c.b16 %v6076, %v6075
        %v6092 = vpack.c.b16 %v6078, %v6077
        %v6093 = vpack.c.b16 %v6080, %v6079
        %v6094 = vpack.c.b16 %v6082, %v6081
        %v6095 = vpack.c.b16 %v6084, %v6083
        %v6096 = vpack.c.b16 %v6086, %v6085
        %v6097 = vpack.c.b16 %v6088, %v6087
        %v6098 = vpack.c.b16 %v6090, %v6089
        %6107 = vmatprep.subr.bf16.mxu0 0
        %6108 = vmatpush1.bf16.msra.mxu0 %v6091
        %6109 = vmatprep.subr.bf16.mxu0 0
        %6110 = vmatpush1.bf16.msra.mxu0 %v6092
        %6111 = vmatprep.subr.bf16.mxu0 0
        %6112 = vmatpush1.bf16.msra.mxu0 %v6093
        %6113 = vmatprep.subr.bf16.mxu0 0
        %6114 = vmatpush1.bf16.msra.mxu0 %v6094
        %6115 = vmatprep.subr.bf16.mxu0 0
        %6116 = vmatpush1.bf16.msra.mxu0 %v6095
        %6117 = vmatprep.subr.bf16.mxu0 0
        %6118 = vmatpush1.bf16.msra.mxu0 %v6096
        %6119 = vmatprep.subr.bf16.mxu0 0
        %6120 = vmatpush1.bf16.msra.mxu0 %v6097
        %6121 = vmatprep.subr.bf16.mxu0 0
        %6122 = vmatpush1.bf16.msra.mxu0 %v6098
        %6123 = vmatprep.subr.bf16.mxu0 0
        %6124 = vmatpush1.bf16.msra.mxu0 0
        %6125 = vmatprep.subr.bf16.mxu0 0
        %6126 = vmatpush1.bf16.msra.mxu0 0
        %6127 = vmatprep.subr.bf16.mxu0 0
        %6128 = vmatpush1.bf16.msra.mxu0 0
        %6129 = vmatprep.subr.bf16.mxu0 0
        %6130 = vmatpush1.bf16.msra.mxu0 0
        %6131 = vmatprep.subr.bf16.mxu0 0
        %6132 = vmatpush1.bf16.msra.mxu0 0
        %6133 = vmatprep.subr.bf16.mxu0 0
        %6134 = vmatpush1.bf16.msra.mxu0 0
        %6135 = vmatprep.subr.bf16.mxu0 0
        %6136 = vmatpush1.bf16.msra.mxu0 0
        %6137 = vmatprep.subr.bf16.mxu0 0
        %6138 = vmatpush1.bf16.msra.mxu0 0
        %6139 = vmatprep.mubr.bf16.mxu0 0
        %6140 = vmatmul.mubr.bf16.gmra.mrb[0].mxu0 %v6042
        %v6141 = vpop.f32.mrb[0].mxu0
        %v6142 = vadd.f32 0.0, %v6141
        %v6143 = vpop.f32.mrb[0].mxu0
        %v6144 = vpop.f32.mrb[0].mxu0
        %v6145 = vpop.f32.mrb[0].mxu0
        %6146 = vdwg.mxu0
        %v6147 = vld [vmem:[%s5] sm:$0xf]
        %v6148 = vld [vmem:[%s5 + $0x4] sm:$0xf]
        %v6149 = vld [vmem:[%s5 + $0x8] sm:$0xf]
        %v6150 = vld [vmem:[%s5 + $0xc] sm:$0xf]
        %v6151 = vld [vmem:[%s5 + $0x10] sm:$0xf]
        %v6152 = vld [vmem:[%s5 + $0x14] sm:$0xf]
        %v6153 = vld [vmem:[%s5 + $0x18] sm:$0xf]
        %v6154 = vld [vmem:[%s5 + $0x1c] sm:$0xf]
        %v6155 = vld [vmem:[%s5 + $0x20] sm:$0xf]
        %v6156 = vld [vmem:[%s5 + $0x24] sm:$0xf]
        %v6157 = vld [vmem:[%s5 + $0x28] sm:$0xf]
        %v6158 = vld [vmem:[%s5 + $0x2c] sm:$0xf]
        %v6159 = vld [vmem:[%s5 + $0x30] sm:$0xf]
        %v6160 = vld [vmem:[%s5 + $0x34] sm:$0xf]
        %v6161 = vld [vmem:[%s5 + $0x38] sm:$0xf]
        %v6162 = vld [vmem:[%s5 + $0x3c] sm:$0xf]
        %v6163 = vld [vmem:[%s5 + $0x40] sm:$0xf]
        %v6164 = vld [vmem:[%s5 + $0x44] sm:$0xf]
        %v6165 = vld [vmem:[%s5 + $0x48] sm:$0xf]
        %v6166 = vld [vmem:[%s5 + $0x4c] sm:$0xf]
        %v6167 = vld [vmem:[%s5 + $0x50] sm:$0xf]
        %v6168 = vld [vmem:[%s5 + $0x54] sm:$0xf]
        %v6169 = vld [vmem:[%s5 + $0x58] sm:$0xf]
        %v6170 = vld [vmem:[%s5 + $0x5c] sm:$0xf]
        %v6171 = vld [vmem:[%s5 + $0x60] sm:$0xf]
        %v6172 = vld [vmem:[%s5 + $0x64] sm:$0xf]
        %v6173 = vld [vmem:[%s5 + $0x68] sm:$0xf]
        %v6174 = vld [vmem:[%s5 + $0x6c] sm:$0xf]
        %v6175 = vld [vmem:[%s5 + $0x70] sm:$0xf]
        %v6176 = vld [vmem:[%s5 + $0x74] sm:$0xf]
        %v6177 = vld [vmem:[%s5 + $0x78] sm:$0xf]
        %v6178 = vld [vmem:[%s5 + $0x7c] sm:$0xf]
        %v6179 = vld [vmem:[%s5 + $0x80] sm:$0xf]
        %v6180 = vld [vmem:[%s5 + $0x84] sm:$0xf]
        %v6181 = vld [vmem:[%s5 + $0x88] sm:$0xf]
        %v6182 = vld [vmem:[%s5 + $0x8c] sm:$0xf]
        %v6183 = vld [vmem:[%s5 + $0x90] sm:$0xf]
        %v6184 = vld [vmem:[%s5 + $0x94] sm:$0xf]
        %v6185 = vld [vmem:[%s5 + $0x98] sm:$0xf]
        %v6186 = vld [vmem:[%s5 + $0x9c] sm:$0xf]
        %v6187 = vld [vmem:[%s5 + $0xa0] sm:$0xf]
        %v6188 = vld [vmem:[%s5 + $0xa4] sm:$0xf]
        %v6189 = vld [vmem:[%s5 + $0xa8] sm:$0xf]
        %v6190 = vld [vmem:[%s5 + $0xac] sm:$0xf]
        %v6191 = vld [vmem:[%s5 + $0xb0] sm:$0xf]
        %v6192 = vld [vmem:[%s5 + $0xb4] sm:$0xf]
        %v6193 = vld [vmem:[%s5 + $0xb8] sm:$0xf]
        %v6194 = vld [vmem:[%s5 + $0xbc] sm:$0xf]
        %v6195 = vld [vmem:[%s5 + $0xc0] sm:$0xf]
        %v6196 = vld [vmem:[%s5 + $0xc4] sm:$0xf]
        %v6197 = vld [vmem:[%s5 + $0xc8] sm:$0xf]
        %v6198 = vld [vmem:[%s5 + $0xcc] sm:$0xf]
        %v6199 = vld [vmem:[%s5 + $0xd0] sm:$0xf]
        %v6200 = vld [vmem:[%s5 + $0xd4] sm:$0xf]
        %v6201 = vld [vmem:[%s5 + $0xd8] sm:$0xf]
        %v6202 = vld [vmem:[%s5 + $0xdc] sm:$0xf]
        %v6203 = vld [vmem:[%s5 + $0xe0] sm:$0xf]
        %v6204 = vld [vmem:[%s5 + $0xe4] sm:$0xf]
        %v6205 = vld [vmem:[%s5 + $0xe8] sm:$0xf]
        %v6206 = vld [vmem:[%s5 + $0xec] sm:$0xf]
        %v6207 = vld [vmem:[%s5 + $0xf0] sm:$0xf]
        %v6208 = vld [vmem:[%s5 + $0xf4] sm:$0xf]
        %v6209 = vld [vmem:[%s5 + $0xf8] sm:$0xf]
        %v6210 = vld [vmem:[%s5 + $0xfc] sm:$0xf]
        %v6211 = vlaneseq
        %v6212 = vshrl.u32 %v6211, 7
        %v6213 = vsub.s32 0, %v6212
        %v6214 = vrot.slane %v6142, %v6213
        %v6279 = vunpack.c.l.b16 %v6147
        %v6280 = vunpack.c.l.b16 %v6148
        %v6281 = vunpack.c.l.b16 %v6149
        %v6282 = vunpack.c.l.b16 %v6150
        %v6283 = vunpack.c.l.b16 %v6151
        %v6284 = vunpack.c.l.b16 %v6152
        %v6285 = vunpack.c.l.b16 %v6153
        %v6286 = vunpack.c.l.b16 %v6154
        %v6287 = vunpack.c.l.b16 %v6155
        %v6288 = vunpack.c.l.b16 %v6156
        %v6289 = vunpack.c.l.b16 %v6157
        %v6290 = vunpack.c.l.b16 %v6158
        %v6291 = vunpack.c.l.b16 %v6159
        %v6292 = vunpack.c.l.b16 %v6160
        %v6293 = vunpack.c.l.b16 %v6161
        %v6294 = vunpack.c.l.b16 %v6162
        %v6295 = vunpack.c.l.b16 %v6163
        %v6296 = vunpack.c.l.b16 %v6164
        %v6297 = vunpack.c.l.b16 %v6165
        %v6298 = vunpack.c.l.b16 %v6166
        %v6299 = vunpack.c.l.b16 %v6167
        %v6300 = vunpack.c.l.b16 %v6168
        %v6301 = vunpack.c.l.b16 %v6169
        %v6302 = vunpack.c.l.b16 %v6170
        %v6303 = vunpack.c.l.b16 %v6171
        %v6304 = vunpack.c.l.b16 %v6172
        %v6305 = vunpack.c.l.b16 %v6173
        %v6306 = vunpack.c.l.b16 %v6174
        %v6307 = vunpack.c.l.b16 %v6175
        %v6308 = vunpack.c.l.b16 %v6176
        %v6309 = vunpack.c.l.b16 %v6177
        %v6310 = vunpack.c.l.b16 %v6178
        %v6311 = vunpack.c.l.b16 %v6179
        %v6312 = vunpack.c.l.b16 %v6180
        %v6313 = vunpack.c.l.b16 %v6181
        %v6314 = vunpack.c.l.b16 %v6182
        %v6315 = vunpack.c.l.b16 %v6183
        %v6316 = vunpack.c.l.b16 %v6184
        %v6317 = vunpack.c.l.b16 %v6185
        %v6318 = vunpack.c.l.b16 %v6186
        %v6319 = vunpack.c.l.b16 %v6187
        %v6320 = vunpack.c.l.b16 %v6188
        %v6321 = vunpack.c.l.b16 %v6189
        %v6322 = vunpack.c.l.b16 %v6190
        %v6323 = vunpack.c.l.b16 %v6191
        %v6324 = vunpack.c.l.b16 %v6192
        %v6325 = vunpack.c.l.b16 %v6193
        %v6326 = vunpack.c.l.b16 %v6194
        %v6327 = vunpack.c.l.b16 %v6195
        %v6328 = vunpack.c.l.b16 %v6196
        %v6329 = vunpack.c.l.b16 %v6197
        %v6330 = vunpack.c.l.b16 %v6198
        %v6331 = vunpack.c.l.b16 %v6199
        %v6332 = vunpack.c.l.b16 %v6200
        %v6333 = vunpack.c.l.b16 %v6201
        %v6334 = vunpack.c.l.b16 %v6202
        %v6335 = vunpack.c.l.b16 %v6203
        %v6336 = vunpack.c.l.b16 %v6204
        %v6337 = vunpack.c.l.b16 %v6205
        %v6338 = vunpack.c.l.b16 %v6206
        %v6339 = vunpack.c.l.b16 %v6207
        %v6340 = vunpack.c.l.b16 %v6208
        %v6341 = vunpack.c.l.b16 %v6209
        %v6342 = vunpack.c.l.b16 %v6210
        %v6343 = vpack.c.b16 %v6280, %v6279
        %v6344 = vpack.c.b16 %v6282, %v6281
        %v6345 = vpack.c.b16 %v6284, %v6283
        %v6346 = vpack.c.b16 %v6286, %v6285
        %v6347 = vpack.c.b16 %v6288, %v6287
        %v6348 = vpack.c.b16 %v6290, %v6289
        %v6349 = vpack.c.b16 %v6292, %v6291
        %v6350 = vpack.c.b16 %v6294, %v6293
        %v6351 = vpack.c.b16 %v6296, %v6295
        %v6352 = vpack.c.b16 %v6298, %v6297
        %v6353 = vpack.c.b16 %v6300, %v6299
        %v6354 = vpack.c.b16 %v6302, %v6301
        %v6355 = vpack.c.b16 %v6304, %v6303
        %v6356 = vpack.c.b16 %v6306, %v6305
        %v6357 = vpack.c.b16 %v6308, %v6307
        %v6358 = vpack.c.b16 %v6310, %v6309
        %v6359 = vpack.c.b16 %v6312, %v6311
        %v6360 = vpack.c.b16 %v6314, %v6313
        %v6361 = vpack.c.b16 %v6316, %v6315
        %v6362 = vpack.c.b16 %v6318, %v6317
        %v6363 = vpack.c.b16 %v6320, %v6319
        %v6364 = vpack.c.b16 %v6322, %v6321
        %v6365 = vpack.c.b16 %v6324, %v6323
        %v6366 = vpack.c.b16 %v6326, %v6325
        %v6367 = vpack.c.b16 %v6328, %v6327
        %v6368 = vpack.c.b16 %v6330, %v6329
        %v6369 = vpack.c.b16 %v6332, %v6331
        %v6370 = vpack.c.b16 %v6334, %v6333
        %v6371 = vpack.c.b16 %v6336, %v6335
        %v6372 = vpack.c.b16 %v6338, %v6337
        %v6373 = vpack.c.b16 %v6340, %v6339
        %v6374 = vpack.c.b16 %v6342, %v6341
        %6407 = vmatprep.subr.bf16.mxu0 0
        %6408 = vmatpush1.bf16.msra.mxu0 %v6343
        %6409 = vmatprep.subr.bf16.mxu0 0
        %6410 = vmatpush1.bf16.msra.mxu0 %v6344
        %6411 = vmatprep.subr.bf16.mxu0 0
        %6412 = vmatpush1.bf16.msra.mxu0 %v6345
        %6413 = vmatprep.subr.bf16.mxu0 0
        %6414 = vmatpush1.bf16.msra.mxu0 %v6346
        %6415 = vmatprep.subr.bf16.mxu0 0
        %6416 = vmatpush1.bf16.msra.mxu0 %v6347
        %6417 = vmatprep.subr.bf16.mxu0 0
        %6418 = vmatpush1.bf16.msra.mxu0 %v6348
        %6419 = vmatprep.subr.bf16.mxu0 0
        %6420 = vmatpush1.bf16.msra.mxu0 %v6349
        %6421 = vmatprep.subr.bf16.mxu0 0
        %6422 = vmatpush1.bf16.msra.mxu0 %v6350
        %6423 = vmatprep.subr.bf16.mxu0 0
        %6424 = vmatpush1.bf16.msra.mxu0 %v6351
        %6425 = vmatprep.subr.bf16.mxu0 0
        %6426 = vmatpush1.bf16.msra.mxu0 %v6352
        %6427 = vmatprep.subr.bf16.mxu0 0
        %6428 = vmatpush1.bf16.msra.mxu0 %v6353
        %6429 = vmatprep.subr.bf16.mxu0 0
        %6430 = vmatpush1.bf16.msra.mxu0 %v6354
        %6431 = vmatprep.subr.bf16.mxu0 0
        %6432 = vmatpush1.bf16.msra.mxu0 %v6355
        %6433 = vmatprep.subr.bf16.mxu0 0
        %6434 = vmatpush1.bf16.msra.mxu0 %v6356
        %6435 = vmatprep.subr.bf16.mxu0 0
        %6436 = vmatpush1.bf16.msra.mxu0 %v6357
        %6437 = vmatprep.subr.bf16.mxu0 0
        %6438 = vmatpush1.bf16.msra.mxu0 %v6358
        %6439 = vmatprep.mubr.bf16.mxu0 %v5492
        %6440 = vmatmul.mubr.bf16.gmra.mrb[0].mxu0 %v5078
        %v6441 = vpop.f32.mrb[0].mxu0
        %v6442 = vadd.f32 %v6214, %v6441
        %v6443 = vpop.f32.mrb[0].mxu0
        %v6444 = vpop.f32.mrb[0].mxu0
        %v6445 = vadd.f32 %v6214, %v6444
        %v6446 = vpop.f32.mrb[0].mxu0
        %6447 = vmatprep.mubr.bf16.mxu0 %v5493
        %6448 = vmatmul.mubr.bf16.gmra.mrb[0].mxu0 %v5079
        %v6449 = vpop.f32.mrb[0].mxu0
        %v6450 = vadd.f32 %v6214, %v6449
        %v6451 = vpop.f32.mrb[0].mxu0
        %v6452 = vpop.f32.mrb[0].mxu0
        %v6453 = vadd.f32 %v6214, %v6452
        %v6454 = vpop.f32.mrb[0].mxu0
        %6455 = vmatprep.mubr.bf16.mxu0 %v5494
        %6456 = vmatmul.mubr.bf16.gmra.mrb[0].mxu0 %v5080
        %v6457 = vpop.f32.mrb[0].mxu0
        %v6458 = vadd.f32 %v6214, %v6457
        %v6459 = vpop.f32.mrb[0].mxu0
        %v6460 = vpop.f32.mrb[0].mxu0
        %v6461 = vadd.f32 %v6214, %v6460
        %v6462 = vpop.f32.mrb[0].mxu0
        %6463 = vmatprep.mubr.bf16.mxu0 %v5495
        %6464 = vmatmul.mubr.bf16.gmra.mrb[0].mxu0 %v5081
        %v6465 = vpop.f32.mrb[0].mxu0
        %v6466 = vadd.f32 %v6214, %v6465
        %v6467 = vpop.f32.mrb[0].mxu0
        %v6468 = vpop.f32.mrb[0].mxu0
        %v6469 = vadd.f32 %v6214, %v6468
        %v6470 = vpop.f32.mrb[0].mxu0
        %6471 = vmatprep.mubr.bf16.mxu0 %v5496
        %6472 = vmatmul.mubr.bf16.gmra.mrb[0].mxu0 %v5082
        %v6473 = vpop.f32.mrb[0].mxu0
        %v6474 = vadd.f32 %v6214, %v6473
        %v6475 = vpop.f32.mrb[0].mxu0
        %v6476 = vpop.f32.mrb[0].mxu0
        %v6477 = vadd.f32 %v6214, %v6476
        %v6478 = vpop.f32.mrb[0].mxu0
        %6479 = vmatprep.mubr.bf16.mxu0 %v5497
        %6480 = vmatmul.mubr.bf16.gmra.mrb[0].mxu0 %v5083
        %v6481 = vpop.f32.mrb[0].mxu0
        %v6482 = vadd.f32 %v6214, %v6481
        %v6483 = vpop.f32.mrb[0].mxu0
        %v6484 = vpop.f32.mrb[0].mxu0
        %v6485 = vadd.f32 %v6214, %v6484
        %v6486 = vpop.f32.mrb[0].mxu0
        %6487 = vmatprep.mubr.bf16.mxu0 %v5498
        %6488 = vmatmul.mubr.bf16.gmra.mrb[0].mxu0 %v5084
        %v6489 = vpop.f32.mrb[0].mxu0
        %v6490 = vadd.f32 %v6214, %v6489
        %v6491 = vpop.f32.mrb[0].mxu0
        %v6492 = vpop.f32.mrb[0].mxu0
        %v6493 = vadd.f32 %v6214, %v6492
        %v6494 = vpop.f32.mrb[0].mxu0
        %6495 = vmatprep.mubr.bf16.mxu0 %v5499
        %6496 = vmatmul.mubr.bf16.gmra.mrb[0].mxu0 %v5085
        %v6497 = vpop.f32.mrb[0].mxu0
        %v6498 = vadd.f32 %v6214, %v6497
        %v6499 = vpop.f32.mrb[0].mxu0
        %v6500 = vpop.f32.mrb[0].mxu0
        %v6501 = vadd.f32 %v6214, %v6500
        %v6502 = vpop.f32.mrb[0].mxu0
        %6503 = vmatprep.mubr.bf16.mxu0 %v5500
        %6504 = vmatmul.mubr.bf16.gmra.mrb[0].mxu0 %v5086
        %v6505 = vpop.f32.mrb[0].mxu0
        %v6506 = vadd.f32 %v6214, %v6505
        %v6507 = vpop.f32.mrb[0].mxu0
        %v6508 = vpop.f32.mrb[0].mxu0
        %v6509 = vadd.f32 %v6214, %v6508
        %v6510 = vpop.f32.mrb[0].mxu0
        %6511 = vmatprep.mubr.bf16.mxu0 %v5501
        %6512 = vmatmul.mubr.bf16.gmra.mrb[0].mxu0 %v5087
        %v6513 = vpop.f32.mrb[0].mxu0
        %v6514 = vadd.f32 %v6214, %v6513
        %v6515 = vpop.f32.mrb[0].mxu0
        %v6516 = vpop.f32.mrb[0].mxu0
        %v6517 = vadd.f32 %v6214, %v6516
        %v6518 = vpop.f32.mrb[0].mxu0
        %6519 = vmatprep.mubr.bf16.mxu0 %v5502
        %6520 = vmatmul.mubr.bf16.gmra.mrb[0].mxu0 %v5088
        %v6521 = vpop.f32.mrb[0].mxu0
        %v6522 = vadd.f32 %v6214, %v6521
        %v6523 = vpop.f32.mrb[0].mxu0
        %v6524 = vpop.f32.mrb[0].mxu0
        %v6525 = vadd.f32 %v6214, %v6524
        %v6526 = vpop.f32.mrb[0].mxu0
        %6527 = vmatprep.mubr.bf16.mxu0 %v5503
        %6528 = vmatmul.mubr.bf16.gmra.mrb[0].mxu0 %v5089
        %v6529 = vpop.f32.mrb[0].mxu0
        %v6530 = vadd.f32 %v6214, %v6529
        %v6531 = vpop.f32.mrb[0].mxu0
        %v6532 = vpop.f32.mrb[0].mxu0
        %v6533 = vadd.f32 %v6214, %v6532
        %v6534 = vpop.f32.mrb[0].mxu0
        %6535 = vmatprep.mubr.bf16.mxu0 %v5504
        %6536 = vmatmul.mubr.bf16.gmra.mrb[0].mxu0 %v5090
        %v6537 = vpop.f32.mrb[0].mxu0
        %v6538 = vadd.f32 %v6214, %v6537
        %v6539 = vpop.f32.mrb[0].mxu0
        %v6540 = vpop.f32.mrb[0].mxu0
        %v6541 = vadd.f32 %v6214, %v6540
        %v6542 = vpop.f32.mrb[0].mxu0
        %6543 = vmatprep.mubr.bf16.mxu0 %v5505
        %6544 = vmatmul.mubr.bf16.gmra.mrb[0].mxu0 %v5091
        %v6545 = vpop.f32.mrb[0].mxu0
        %v6546 = vadd.f32 %v6214, %v6545
        %v6547 = vpop.f32.mrb[0].mxu0
        %v6548 = vpop.f32.mrb[0].mxu0
        %v6549 = vadd.f32 %v6214, %v6548
        %v6550 = vpop.f32.mrb[0].mxu0
        %6551 = vmatprep.mubr.bf16.mxu0 %v5506
        %6552 = vmatmul.mubr.bf16.gmra.mrb[0].mxu0 %v5092
        %v6553 = vpop.f32.mrb[0].mxu0
        %v6554 = vadd.f32 %v6214, %v6553
        %v6555 = vpop.f32.mrb[0].mxu0
        %v6556 = vpop.f32.mrb[0].mxu0
        %v6557 = vadd.f32 %v6214, %v6556
        %v6558 = vpop.f32.mrb[0].mxu0
        %6559 = vmatprep.mubr.bf16.mxu0 %v5507
        %6560 = vmatmul.mubr.bf16.gmra.mrb[0].mxu0 %v5093
        %v6561 = vpop.f32.mrb[0].mxu0
        %v6562 = vadd.f32 %v6214, %v6561
        %v6563 = vpop.f32.mrb[0].mxu0
        %v6564 = vpop.f32.mrb[0].mxu0
        %v6565 = vadd.f32 %v6214, %v6564
        %v6566 = vpop.f32.mrb[0].mxu0
        %6567 = vdwg.mxu0
        %6568 = vmatprep.subr.bf16.mxu0 0
        %6569 = vmatpush1.bf16.msra.mxu0 %v6359
        %6570 = vmatprep.subr.bf16.mxu0 0
        %6571 = vmatpush1.bf16.msra.mxu0 %v6360
        %6572 = vmatprep.subr.bf16.mxu0 0
        %6573 = vmatpush1.bf16.msra.mxu0 %v6361
        %6574 = vmatprep.subr.bf16.mxu0 0
        %6575 = vmatpush1.bf16.msra.mxu0 %v6362
        %6576 = vmatprep.subr.bf16.mxu0 0
        %6577 = vmatpush1.bf16.msra.mxu0 %v6363
        %6578 = vmatprep.subr.bf16.mxu0 0
        %6579 = vmatpush1.bf16.msra.mxu0 %v6364
        %6580 = vmatprep.subr.bf16.mxu0 0
        %6581 = vmatpush1.bf16.msra.mxu0 %v6365
        %6582 = vmatprep.subr.bf16.mxu0 0
        %6583 = vmatpush1.bf16.msra.mxu0 %v6366
        %6584 = vmatprep.subr.bf16.mxu0 0
        %6585 = vmatpush1.bf16.msra.mxu0 %v6367
        %6586 = vmatprep.subr.bf16.mxu0 0
        %6587 = vmatpush1.bf16.msra.mxu0 %v6368
        %6588 = vmatprep.subr.bf16.mxu0 0
        %6589 = vmatpush1.bf16.msra.mxu0 %v6369
        %6590 = vmatprep.subr.bf16.mxu0 0
        %6591 = vmatpush1.bf16.msra.mxu0 %v6370
        %6592 = vmatprep.subr.bf16.mxu0 0
        %6593 = vmatpush1.bf16.msra.mxu0 %v6371
        %6594 = vmatprep.subr.bf16.mxu0 0
        %6595 = vmatpush1.bf16.msra.mxu0 %v6372
        %6596 = vmatprep.subr.bf16.mxu0 0
        %6597 = vmatpush1.bf16.msra.mxu0 %v6373
        %6598 = vmatprep.subr.bf16.mxu0 0
        %6599 = vmatpush1.bf16.msra.mxu0 %v6374
        %6600 = vmatprep.mubr.bf16.mxu0 %v5662
        %6601 = vmatmul.mubr.bf16.gmra.mrb[0].mxu0 %v5577
        %v6602 = vpop.f32.mrb[0].mxu0
        %v6603 = vadd.f32 %v6442, %v6602
        %v6604 = vpop.f32.mrb[0].mxu0
        %v6605 = vpop.f32.mrb[0].mxu0
        %v6606 = vadd.f32 %v6445, %v6605
        %v6607 = vpop.f32.mrb[0].mxu0
        %6608 = vmatprep.mubr.bf16.mxu0 %v5663
        %6609 = vmatmul.mubr.bf16.gmra.mrb[0].mxu0 %v5578
        %v6610 = vpop.f32.mrb[0].mxu0
        %v6611 = vadd.f32 %v6450, %v6610
        %v6612 = vpop.f32.mrb[0].mxu0
        %v6613 = vpop.f32.mrb[0].mxu0
        %v6614 = vadd.f32 %v6453, %v6613
        %v6615 = vpop.f32.mrb[0].mxu0
        %6616 = vmatprep.mubr.bf16.mxu0 %v5664
        %6617 = vmatmul.mubr.bf16.gmra.mrb[0].mxu0 %v5579
        %v6618 = vpop.f32.mrb[0].mxu0
        %v6619 = vadd.f32 %v6458, %v6618
        %v6620 = vpop.f32.mrb[0].mxu0
        %v6621 = vpop.f32.mrb[0].mxu0
        %v6622 = vadd.f32 %v6461, %v6621
        %v6623 = vpop.f32.mrb[0].mxu0
        %6624 = vmatprep.mubr.bf16.mxu0 %v5665
        %6625 = vmatmul.mubr.bf16.gmra.mrb[0].mxu0 %v5580
        %v6626 = vpop.f32.mrb[0].mxu0
        %v6627 = vadd.f32 %v6466, %v6626
        %v6628 = vpop.f32.mrb[0].mxu0
        %v6629 = vpop.f32.mrb[0].mxu0
        %v6630 = vadd.f32 %v6469, %v6629
        %v6631 = vpop.f32.mrb[0].mxu0
        %6632 = vmatprep.mubr.bf16.mxu0 %v5666
        %6633 = vmatmul.mubr.bf16.gmra.mrb[0].mxu0 %v5581
        %v6634 = vpop.f32.mrb[0].mxu0
        %v6635 = vadd.f32 %v6474, %v6634
        %v6636 = vpop.f32.mrb[0].mxu0
        %v6637 = vpop.f32.mrb[0].mxu0
        %v6638 = vadd.f32 %v6477, %v6637
        %v6639 = vpop.f32.mrb[0].mxu0
        %6640 = vmatprep.mubr.bf16.mxu0 %v5667
        %6641 = vmatmul.mubr.bf16.gmra.mrb[0].mxu0 %v5582
        %v6642 = vpop.f32.mrb[0].mxu0
        %v6643 = vadd.f32 %v6482, %v6642
        %v6644 = vpop.f32.mrb[0].mxu0
        %v6645 = vpop.f32.mrb[0].mxu0
        %v6646 = vadd.f32 %v6485, %v6645
        %v6647 = vpop.f32.mrb[0].mxu0
        %6648 = vmatprep.mubr.bf16.mxu0 %v5668
        %6649 = vmatmul.mubr.bf16.gmra.mrb[0].mxu0 %v5583
        %v6650 = vpop.f32.mrb[0].mxu0
        %v6651 = vadd.f32 %v6490, %v6650
        %v6652 = vpop.f32.mrb[0].mxu0
        %v6653 = vpop.f32.mrb[0].mxu0
        %v6654 = vadd.f32 %v6493, %v6653
        %v6655 = vpop.f32.mrb[0].mxu0
        %6656 = vmatprep.mubr.bf16.mxu0 %v5669
        %6657 = vmatmul.mubr.bf16.gmra.mrb[0].mxu0 %v5584
        %v6658 = vpop.f32.mrb[0].mxu0
        %v6659 = vadd.f32 %v6498, %v6658
        %v6660 = vpop.f32.mrb[0].mxu0
        %v6661 = vpop.f32.mrb[0].mxu0
        %v6662 = vadd.f32 %v6501, %v6661
        %v6663 = vpop.f32.mrb[0].mxu0
        %6664 = vmatprep.mubr.bf16.mxu0 %v5670
        %6665 = vmatmul.mubr.bf16.gmra.mrb[0].mxu0 %v5585
        %v6666 = vpop.f32.mrb[0].mxu0
        %v6667 = vadd.f32 %v6506, %v6666
        %v6668 = vpop.f32.mrb[0].mxu0
        %v6669 = vpop.f32.mrb[0].mxu0
        %v6670 = vadd.f32 %v6509, %v6669
        %v6671 = vpop.f32.mrb[0].mxu0
        %6672 = vmatprep.mubr.bf16.mxu0 %v5671
        %6673 = vmatmul.mubr.bf16.gmra.mrb[0].mxu0 %v5586
        %v6674 = vpop.f32.mrb[0].mxu0
        %v6675 = vadd.f32 %v6514, %v6674
        %v6676 = vpop.f32.mrb[0].mxu0
        %v6677 = vpop.f32.mrb[0].mxu0
        %v6678 = vadd.f32 %v6517, %v6677
        %v6679 = vpop.f32.mrb[0].mxu0
        %6680 = vmatprep.mubr.bf16.mxu0 %v5672
        %6681 = vmatmul.mubr.bf16.gmra.mrb[0].mxu0 %v5587
        %v6682 = vpop.f32.mrb[0].mxu0
        %v6683 = vadd.f32 %v6522, %v6682
        %v6684 = vpop.f32.mrb[0].mxu0
        %v6685 = vpop.f32.mrb[0].mxu0
        %v6686 = vadd.f32 %v6525, %v6685
        %v6687 = vpop.f32.mrb[0].mxu0
        %6688 = vmatprep.mubr.bf16.mxu0 %v5673
        %6689 = vmatmul.mubr.bf16.gmra.mrb[0].mxu0 %v5588
        %v6690 = vpop.f32.mrb[0].mxu0
        %v6691 = vadd.f32 %v6530, %v6690
        %v6692 = vpop.f32.mrb[0].mxu0
        %v6693 = vpop.f32.mrb[0].mxu0
        %v6694 = vadd.f32 %v6533, %v6693
        %v6695 = vpop.f32.mrb[0].mxu0
        %6696 = vmatprep.mubr.bf16.mxu0 %v5674
        %6697 = vmatmul.mubr.bf16.gmra.mrb[0].mxu0 %v5589
        %v6698 = vpop.f32.mrb[0].mxu0
        %v6699 = vadd.f32 %v6538, %v6698
        %v6700 = vpop.f32.mrb[0].mxu0
        %v6701 = vpop.f32.mrb[0].mxu0
        %v6702 = vadd.f32 %v6541, %v6701
        %v6703 = vpop.f32.mrb[0].mxu0
        %6704 = vmatprep.mubr.bf16.mxu0 %v5675
        %6705 = vmatmul.mubr.bf16.gmra.mrb[0].mxu0 %v5590
        %v6706 = vpop.f32.mrb[0].mxu0
        %v6707 = vadd.f32 %v6546, %v6706
        %v6708 = vpop.f32.mrb[0].mxu0
        %v6709 = vpop.f32.mrb[0].mxu0
        %v6710 = vadd.f32 %v6549, %v6709
        %v6711 = vpop.f32.mrb[0].mxu0
        %6712 = vmatprep.mubr.bf16.mxu0 %v5676
        %6713 = vmatmul.mubr.bf16.gmra.mrb[0].mxu0 %v5591
        %v6714 = vpop.f32.mrb[0].mxu0
        %v6715 = vadd.f32 %v6554, %v6714
        %v6716 = vpop.f32.mrb[0].mxu0
        %v6717 = vpop.f32.mrb[0].mxu0
        %v6718 = vadd.f32 %v6557, %v6717
        %v6719 = vpop.f32.mrb[0].mxu0
        %6720 = vmatprep.mubr.bf16.mxu0 %v5677
        %6721 = vmatmul.mubr.bf16.gmra.mrb[0].mxu0 %v5592
        %v6722 = vpop.f32.mrb[0].mxu0
        %v6723 = vadd.f32 %v6562, %v6722
        %v6724 = vpop.f32.mrb[0].mxu0
        %v6725 = vpop.f32.mrb[0].mxu0
        %v6726 = vadd.f32 %v6565, %v6725
        %v6727 = vpop.f32.mrb[0].mxu0
        %6728 = vdwg.mxu0
        %v6729 = vld [vmem:[%s8 + $0x5] sm:$0x1]
        %v6730 = vlaneseq
        %v6731 = vshrl.u32 %v6730, 7
        %v6732 = vsub.s32 0, %v6731
        %v6733 = vrot.slane %v6729, %v6732
        %v6734 = vadd.f32 %v6603, %v6733
        %v6735 = vadd.f32 %v6606, %v6733
        %v6736 = vadd.f32 %v6611, %v6733
        %v6737 = vadd.f32 %v6614, %v6733
        %v6738 = vadd.f32 %v6619, %v6733
        %v6739 = vadd.f32 %v6622, %v6733
        %v6740 = vadd.f32 %v6627, %v6733
        %v6741 = vadd.f32 %v6630, %v6733
        %v6742 = vadd.f32 %v6635, %v6733
        %v6743 = vadd.f32 %v6638, %v6733
        %v6744 = vadd.f32 %v6643, %v6733
        %v6745 = vadd.f32 %v6646, %v6733
        %v6746 = vadd.f32 %v6651, %v6733
        %v6747 = vadd.f32 %v6654, %v6733
        %v6748 = vadd.f32 %v6659, %v6733
        %v6749 = vadd.f32 %v6662, %v6733
        %v6750 = vadd.f32 %v6667, %v6733
        %v6751 = vadd.f32 %v6670, %v6733
        %v6752 = vadd.f32 %v6675, %v6733
        %v6753 = vadd.f32 %v6678, %v6733
        %v6754 = vadd.f32 %v6683, %v6733
        %v6755 = vadd.f32 %v6686, %v6733
        %v6756 = vadd.f32 %v6691, %v6733
        %v6757 = vadd.f32 %v6694, %v6733
        %v6758 = vadd.f32 %v6699, %v6733
        %v6759 = vadd.f32 %v6702, %v6733
        %v6760 = vadd.f32 %v6707, %v6733
        %v6761 = vadd.f32 %v6710, %v6733
        %v6762 = vadd.f32 %v6715, %v6733
        %v6763 = vadd.f32 %v6718, %v6733
        %v6764 = vadd.f32 %v6723, %v6733
        %v6765 = vadd.f32 %v6726, %v6733
        %v6766 = vmax.f32 %v6734, 0.0
        %v6767 = vmax.f32 %v6735, 0.0
        %v6768 = vmax.f32 %v6736, 0.0
        %v6769 = vmax.f32 %v6737, 0.0
        %v6770 = vmax.f32 %v6738, 0.0
        %v6771 = vmax.f32 %v6739, 0.0
        %v6772 = vmax.f32 %v6740, 0.0
        %v6773 = vmax.f32 %v6741, 0.0
        %v6774 = vmax.f32 %v6742, 0.0
        %v6775 = vmax.f32 %v6743, 0.0
        %v6776 = vmax.f32 %v6744, 0.0
        %v6777 = vmax.f32 %v6745, 0.0
        %v6778 = vmax.f32 %v6746, 0.0
        %v6779 = vmax.f32 %v6747, 0.0
        %v6780 = vmax.f32 %v6748, 0.0
        %v6781 = vmax.f32 %v6749, 0.0
        %v6782 = vmax.f32 %v6750, 0.0
        %v6783 = vmax.f32 %v6751, 0.0
        %v6784 = vmax.f32 %v6752, 0.0
        %v6785 = vmax.f32 %v6753, 0.0
        %v6786 = vmax.f32 %v6754, 0.0
        %v6787 = vmax.f32 %v6755, 0.0
        %v6788 = vmax.f32 %v6756, 0.0
        %v6789 = vmax.f32 %v6757, 0.0
        %v6790 = vmax.f32 %v6758, 0.0
        %v6791 = vmax.f32 %v6759, 0.0
        %v6792 = vmax.f32 %v6760, 0.0
        %v6793 = vmax.f32 %v6761, 0.0
        %v6794 = vmax.f32 %v6762, 0.0
        %v6795 = vmax.f32 %v6763, 0.0
        %v6796 = vmax.f32 %v6764, 0.0
        %v6797 = vmax.f32 %v6765, 0.0
        %v6798 = vpack.c.bf16 %v6767, %v6766
        %v6799 = vpack.c.bf16 %v6769, %v6768
        %v6800 = vpack.c.bf16 %v6771, %v6770
        %v6801 = vpack.c.bf16 %v6773, %v6772
        %v6802 = vpack.c.bf16 %v6775, %v6774
        %v6803 = vpack.c.bf16 %v6777, %v6776
        %v6804 = vpack.c.bf16 %v6779, %v6778
        %v6805 = vpack.c.bf16 %v6781, %v6780
        %v6806 = vpack.c.bf16 %v6783, %v6782
        %v6807 = vpack.c.bf16 %v6785, %v6784
        %v6808 = vpack.c.bf16 %v6787, %v6786
        %v6809 = vpack.c.bf16 %v6789, %v6788
        %v6810 = vpack.c.bf16 %v6791, %v6790
        %v6811 = vpack.c.bf16 %v6793, %v6792
        %v6812 = vpack.c.bf16 %v6795, %v6794
        %v6813 = vpack.c.bf16 %v6797, %v6796
        %6814 = vst [vmem:[#allocation3] sm:$0xff] 0
        %vm6815 = vcmask 1040384
        %vm6816 = vsmask.f32 256
        %vm6817 = vmand %vm6815, %vm6816
        %v6818 = vld [vmem:[#allocation3] sm:$0x1]
        %v6819 = vsel %vm6817, 0, %v6818
        %6820 = vst [vmem:[#allocation3] sm:$0x1] %v6819
        %v6821 = vld [vmem:[#allocation3 + $0x48] sm:$0x1]
        %v6822 = vsel %vm6817, 0, %v6821
        %6823 = vst [vmem:[#allocation3 + $0x48] sm:$0x1] %v6822
        %v6824 = vld [vmem:[#allocation3 + $0x90] sm:$0x1]
        %v6825 = vsel %vm6817, 0, %v6824
        %6826 = vst [vmem:[#allocation3 + $0x90] sm:$0x1] %v6825
        %v6827 = vld [vmem:[#allocation3 + $0xd8] sm:$0x1]
        %v6828 = vsel %vm6817, 0, %v6827
        %6829 = vst [vmem:[#allocation3 + $0xd8] sm:$0x1] %v6828
        %v6830 = vld [vmem:[#allocation3 + $0x120] sm:$0x1]
        %v6831 = vsel %vm6817, 0, %v6830
        %6832 = vst [vmem:[#allocation3 + $0x120] sm:$0x1] %v6831
        %v6833 = vld [vmem:[#allocation3 + $0x168] sm:$0x1]
        %v6834 = vsel %vm6817, 0, %v6833
        %6835 = vst [vmem:[#allocation3 + $0x168] sm:$0x1] %v6834
        %v6836 = vld [vmem:[#allocation3 + $0x1b0] sm:$0x1]
        %v6837 = vsel %vm6817, 0, %v6836
        %6838 = vst [vmem:[#allocation3 + $0x1b0] sm:$0x1] %v6837
        %v6839 = vld [vmem:[#allocation3 + $0x1f8] sm:$0x1]
        %v6840 = vsel %vm6817, 0, %v6839
        %6841 = vst [vmem:[#allocation3 + $0x1f8] sm:$0x1] %v6840
        %v6842 = vld [vmem:[#allocation3 + $0x240] sm:$0x1]
        %v6843 = vsel %vm6817, 0, %v6842
        %6844 = vst [vmem:[#allocation3 + $0x240] sm:$0x1] %v6843
        %v6845 = vld [vmem:[#allocation3 + $0x288] sm:$0x1]
        %v6846 = vsel %vm6817, 0, %v6845
        %6847 = vst [vmem:[#allocation3 + $0x288] sm:$0x1] %v6846
        %v6848 = vld [vmem:[#allocation3 + $0x2d0] sm:$0x1]
        %v6849 = vsel %vm6817, 0, %v6848
        %6850 = vst [vmem:[#allocation3 + $0x2d0] sm:$0x1] %v6849
        %v6851 = vld [vmem:[#allocation3 + $0x318] sm:$0x1]
        %v6852 = vsel %vm6817, 0, %v6851
        %6853 = vst [vmem:[#allocation3 + $0x318] sm:$0x1] %v6852
        %v6854 = vld [vmem:[#allocation3 + $0x360] sm:$0x1]
        %v6855 = vsel %vm6817, 0, %v6854
        %6856 = vst [vmem:[#allocation3 + $0x360] sm:$0x1] %v6855
        %v6857 = vld [vmem:[#allocation3 + $0x3a8] sm:$0x1]
        %v6858 = vsel %vm6817, 0, %v6857
        %6859 = vst [vmem:[#allocation3 + $0x3a8] sm:$0x1] %v6858
        %v6860 = vld [vmem:[#allocation3 + $0x3f0] sm:$0x1]
        %v6861 = vsel %vm6817, 0, %v6860
        %6862 = vst [vmem:[#allocation3 + $0x3f0] sm:$0x1] %v6861
        %v6863 = vld [vmem:[#allocation3 + $0x438] sm:$0x1]
        %v6864 = vsel %vm6817, 0, %v6863
        %6865 = vst [vmem:[#allocation3 + $0x438] sm:$0x1] %v6864
        %v6867 = vshrl.u32 %v6798, 16
        %v6869 = vrot.slane %v6867, 7
        %v6870 = vshll.u32 %v6798, 16
        %v6872 = vor.u32 %v6869, %v6870
        %v6874 = vshrl.u32 %v6799, 16
        %v6876 = vrot.slane %v6874, 7
        %v6877 = vshll.u32 %v6799, 16
        %v6879 = vor.u32 %v6876, %v6877
        %v6881 = vshrl.u32 %v6800, 16
        %v6883 = vrot.slane %v6881, 7
        %v6884 = vshll.u32 %v6800, 16
        %v6886 = vor.u32 %v6883, %v6884
        %v6888 = vshrl.u32 %v6801, 16
        %v6890 = vrot.slane %v6888, 7
        %v6891 = vshll.u32 %v6801, 16
        %v6893 = vor.u32 %v6890, %v6891
        %v6895 = vshrl.u32 %v6802, 16
        %v6897 = vrot.slane %v6895, 7
        %v6898 = vshll.u32 %v6802, 16
        %v6900 = vor.u32 %v6897, %v6898
        %v6902 = vshrl.u32 %v6803, 16
        %v6904 = vrot.slane %v6902, 7
        %v6905 = vshll.u32 %v6803, 16
        %v6907 = vor.u32 %v6904, %v6905
        %v6909 = vshrl.u32 %v6804, 16
        %v6911 = vrot.slane %v6909, 7
        %v6912 = vshll.u32 %v6804, 16
        %v6914 = vor.u32 %v6911, %v6912
        %v6916 = vshrl.u32 %v6805, 16
        %v6918 = vrot.slane %v6916, 7
        %v6919 = vshll.u32 %v6805, 16
        %v6921 = vor.u32 %v6918, %v6919
        %v6923 = vshrl.u32 %v6806, 16
        %v6925 = vrot.slane %v6923, 7
        %v6926 = vshll.u32 %v6806, 16
        %v6928 = vor.u32 %v6925, %v6926
        %v6930 = vshrl.u32 %v6807, 16
        %v6932 = vrot.slane %v6930, 7
        %v6933 = vshll.u32 %v6807, 16
        %v6935 = vor.u32 %v6932, %v6933
        %v6937 = vshrl.u32 %v6808, 16
        %v6939 = vrot.slane %v6937, 7
        %v6940 = vshll.u32 %v6808, 16
        %v6942 = vor.u32 %v6939, %v6940
        %v6944 = vshrl.u32 %v6809, 16
        %v6946 = vrot.slane %v6944, 7
        %v6947 = vshll.u32 %v6809, 16
        %v6949 = vor.u32 %v6946, %v6947
        %v6951 = vshrl.u32 %v6810, 16
        %v6953 = vrot.slane %v6951, 7
        %v6954 = vshll.u32 %v6810, 16
        %v6956 = vor.u32 %v6953, %v6954
        %v6958 = vshrl.u32 %v6811, 16
        %v6960 = vrot.slane %v6958, 7
        %v6961 = vshll.u32 %v6811, 16
        %v6963 = vor.u32 %v6960, %v6961
        %v6965 = vshrl.u32 %v6812, 16
        %v6967 = vrot.slane %v6965, 7
        %v6968 = vshll.u32 %v6812, 16
        %v6970 = vor.u32 %v6967, %v6968
        %s6986 = scalar_lea.vmem [#allocation3], 72
        %vm6987 = vcmask 1047552
        %vm6988 = vsmask.f32 7938
        %vm6989 = vmand %vm6987, %vm6988
        %v6990 = vld [vmem:[%s6986] sm:$0xff]
        %v6991 = vsel %vm6989, %v6872, %v6990
        %6992 = vst [vmem:[%s6986] sm:$0xff] %v6991
        %v6993 = vld [vmem:[%s6986 + $0x48] sm:$0xff]
        %v6994 = vsel %vm6989, %v6879, %v6993
        %6995 = vst [vmem:[%s6986 + $0x48] sm:$0xff] %v6994
        %v6996 = vld [vmem:[%s6986 + $0x90] sm:$0xff]
        %v6997 = vsel %vm6989, %v6886, %v6996
        %6998 = vst [vmem:[%s6986 + $0x90] sm:$0xff] %v6997
        %v6999 = vld [vmem:[%s6986 + $0xd8] sm:$0xff]
        %v7000 = vsel %vm6989, %v6893, %v6999
        %7001 = vst [vmem:[%s6986 + $0xd8] sm:$0xff] %v7000
        %v7002 = vld [vmem:[%s6986 + $0x120] sm:$0xff]
        %v7003 = vsel %vm6989, %v6900, %v7002
        %7004 = vst [vmem:[%s6986 + $0x120] sm:$0xff] %v7003
        %v7005 = vld [vmem:[%s6986 + $0x168] sm:$0xff]
        %v7006 = vsel %vm6989, %v6907, %v7005
        %7007 = vst [vmem:[%s6986 + $0x168] sm:$0xff] %v7006
        %v7008 = vld [vmem:[%s6986 + $0x1b0] sm:$0xff]
        %v7009 = vsel %vm6989, %v6914, %v7008
        %7010 = vst [vmem:[%s6986 + $0x1b0] sm:$0xff] %v7009
        %v7011 = vld [vmem:[%s6986 + $0x1f8] sm:$0xff]
        %v7012 = vsel %vm6989, %v6921, %v7011
        %7013 = vst [vmem:[%s6986 + $0x1f8] sm:$0xff] %v7012
        %v7014 = vld [vmem:[%s6986 + $0x240] sm:$0xff]
        %v7015 = vsel %vm6989, %v6928, %v7014
        %7016 = vst [vmem:[%s6986 + $0x240] sm:$0xff] %v7015
        %v7017 = vld [vmem:[%s6986 + $0x288] sm:$0xff]
        %v7018 = vsel %vm6989, %v6935, %v7017
        %7019 = vst [vmem:[%s6986 + $0x288] sm:$0xff] %v7018
        %v7020 = vld [vmem:[%s6986 + $0x2d0] sm:$0xff]
        %v7021 = vsel %vm6989, %v6942, %v7020
        %7022 = vst [vmem:[%s6986 + $0x2d0] sm:$0xff] %v7021
        %v7023 = vld [vmem:[%s6986 + $0x318] sm:$0xff]
        %v7024 = vsel %vm6989, %v6949, %v7023
        %7025 = vst [vmem:[%s6986 + $0x318] sm:$0xff] %v7024
        %v7026 = vld [vmem:[%s6986 + $0x360] sm:$0xff]
        %v7027 = vsel %vm6989, %v6956, %v7026
        %7028 = vst [vmem:[%s6986 + $0x360] sm:$0xff] %v7027
        %v7029 = vld [vmem:[%s6986 + $0x3a8] sm:$0xff]
        %v7030 = vsel %vm6989, %v6963, %v7029
        %7031 = vst [vmem:[%s6986 + $0x3a8] sm:$0xff] %v7030
        %v7032 = vld [vmem:[%s6986 + $0x3f0] sm:$0xff]
        %v7033 = vsel %vm6989, %v6970, %v7032
        %7034 = vst [vmem:[%s6986 + $0x3f0] sm:$0xff] %v7033
        %7035 = vst [vmem:[#allocation3 + $0x8] sm:$0xff] 0
        %7036 = vst [vmem:[%s6986 + $0x8] sm:$0xff] %v6798
        %7037 = vst [vmem:[%s6986 + $0x50] sm:$0xff] %v6799
        %7038 = vst [vmem:[%s6986 + $0x98] sm:$0xff] %v6800
        %7039 = vst [vmem:[%s6986 + $0xe0] sm:$0xff] %v6801
        %7040 = vst [vmem:[%s6986 + $0x128] sm:$0xff] %v6802
        %7041 = vst [vmem:[%s6986 + $0x170] sm:$0xff] %v6803
        %7042 = vst [vmem:[%s6986 + $0x1b8] sm:$0xff] %v6804
        %7043 = vst [vmem:[%s6986 + $0x200] sm:$0xff] %v6805
        %7044 = vst [vmem:[%s6986 + $0x248] sm:$0xff] %v6806
        %7045 = vst [vmem:[%s6986 + $0x290] sm:$0xff] %v6807
        %7046 = vst [vmem:[%s6986 + $0x2d8] sm:$0xff] %v6808
        %7047 = vst [vmem:[%s6986 + $0x320] sm:$0xff] %v6809
        %7048 = vst [vmem:[%s6986 + $0x368] sm:$0xff] %v6810
        %7049 = vst [vmem:[%s6986 + $0x3b0] sm:$0xff] %v6811
        %7050 = vst [vmem:[%s6986 + $0x3f8] sm:$0xff] %v6812
        %7051 = vst [vmem:[#allocation3 + $0x10] sm:$0xff] 0
        %vm7052 = vcmask 1047559
        %vm7053 = vsmask.f32 7966
        %vm7054 = vmand %vm7052, %vm7053
        %v7055 = vld [vmem:[#allocation3 + $0x10] sm:$0x80]
        %v7056 = vsel %vm7054, 0, %v7055
        %7057 = vst [vmem:[#allocation3 + $0x10] sm:$0x80] %v7056
        %v7058 = vld [vmem:[#allocation3 + $0x58] sm:$0x80]
        %v7059 = vsel %vm7054, 0, %v7058
        %7060 = vst [vmem:[#allocation3 + $0x58] sm:$0x80] %v7059
        %v7061 = vld [vmem:[#allocation3 + $0xa0] sm:$0x80]
        %v7062 = vsel %vm7054, 0, %v7061
        %7063 = vst [vmem:[#allocation3 + $0xa0] sm:$0x80] %v7062
        %v7064 = vld [vmem:[#allocation3 + $0xe8] sm:$0x80]
        %v7065 = vsel %vm7054, 0, %v7064
        %7066 = vst [vmem:[#allocation3 + $0xe8] sm:$0x80] %v7065
        %v7067 = vld [vmem:[#allocation3 + $0x130] sm:$0x80]
        %v7068 = vsel %vm7054, 0, %v7067
        %7069 = vst [vmem:[#allocation3 + $0x130] sm:$0x80] %v7068
        %v7070 = vld [vmem:[#allocation3 + $0x178] sm:$0x80]
        %v7071 = vsel %vm7054, 0, %v7070
        %7072 = vst [vmem:[#allocation3 + $0x178] sm:$0x80] %v7071
        %v7073 = vld [vmem:[#allocation3 + $0x1c0] sm:$0x80]
        %v7074 = vsel %vm7054, 0, %v7073
        %7075 = vst [vmem:[#allocation3 + $0x1c0] sm:$0x80] %v7074
        %v7076 = vld [vmem:[#allocation3 + $0x208] sm:$0x80]
        %v7077 = vsel %vm7054, 0, %v7076
        %7078 = vst [vmem:[#allocation3 + $0x208] sm:$0x80] %v7077
        %v7079 = vld [vmem:[#allocation3 + $0x250] sm:$0x80]
        %v7080 = vsel %vm7054, 0, %v7079
        %7081 = vst [vmem:[#allocation3 + $0x250] sm:$0x80] %v7080
        %v7082 = vld [vmem:[#allocation3 + $0x298] sm:$0x80]
        %v7083 = vsel %vm7054, 0, %v7082
        %7084 = vst [vmem:[#allocation3 + $0x298] sm:$0x80] %v7083
        %v7085 = vld [vmem:[#allocation3 + $0x2e0] sm:$0x80]
        %v7086 = vsel %vm7054, 0, %v7085
        %7087 = vst [vmem:[#allocation3 + $0x2e0] sm:$0x80] %v7086
        %v7088 = vld [vmem:[#allocation3 + $0x328] sm:$0x80]
        %v7089 = vsel %vm7054, 0, %v7088
        %7090 = vst [vmem:[#allocation3 + $0x328] sm:$0x80] %v7089
        %v7091 = vld [vmem:[#allocation3 + $0x370] sm:$0x80]
        %v7092 = vsel %vm7054, 0, %v7091
        %7093 = vst [vmem:[#allocation3 + $0x370] sm:$0x80] %v7092
        %v7094 = vld [vmem:[#allocation3 + $0x3b8] sm:$0x80]
        %v7095 = vsel %vm7054, 0, %v7094
        %7096 = vst [vmem:[#allocation3 + $0x3b8] sm:$0x80] %v7095
        %v7097 = vld [vmem:[#allocation3 + $0x400] sm:$0x80]
        %v7098 = vsel %vm7054, 0, %v7097
        %7099 = vst [vmem:[#allocation3 + $0x400] sm:$0x80] %v7098
        %v7100 = vld [vmem:[#allocation3 + $0x448] sm:$0x80]
        %v7101 = vsel %vm7054, 0, %v7100
        %7102 = vst [vmem:[#allocation3 + $0x448] sm:$0x80] %v7101
        %v7103 = vrot.slane %v6870, 1
        %v7104 = vor.u32 %v6867, %v7103
        %v7105 = vrot.slane %v6877, 1
        %v7106 = vor.u32 %v6874, %v7105
        %v7107 = vrot.slane %v6884, 1
        %v7108 = vor.u32 %v6881, %v7107
        %v7109 = vrot.slane %v6891, 1
        %v7110 = vor.u32 %v6888, %v7109
        %v7111 = vrot.slane %v6898, 1
        %v7112 = vor.u32 %v6895, %v7111
        %v7113 = vrot.slane %v6905, 1
        %v7114 = vor.u32 %v6902, %v7113
        %v7115 = vrot.slane %v6912, 1
        %v7116 = vor.u32 %v6909, %v7115
        %v7117 = vrot.slane %v6919, 1
        %v7118 = vor.u32 %v6916, %v7117
        %v7119 = vrot.slane %v6926, 1
        %v7120 = vor.u32 %v6923, %v7119
        %v7121 = vrot.slane %v6933, 1
        %v7122 = vor.u32 %v6930, %v7121
        %v7123 = vrot.slane %v6940, 1
        %v7124 = vor.u32 %v6937, %v7123
        %v7125 = vrot.slane %v6947, 1
        %v7126 = vor.u32 %v6944, %v7125
        %v7127 = vrot.slane %v6954, 1
        %v7128 = vor.u32 %v6951, %v7127
        %v7129 = vrot.slane %v6961, 1
        %v7130 = vor.u32 %v6958, %v7129
        %v7131 = vrot.slane %v6968, 1
        %v7132 = vor.u32 %v6965, %v7131
        %vm7148 = vsmask.f32 7424
        %vm7149 = vmand %vm6987, %vm7148
        %v7150 = vld [vmem:[%s6986 + $0x10] sm:$0xff]
        %v7151 = vsel %vm7149, %v7104, %v7150
        %7152 = vst [vmem:[%s6986 + $0x10] sm:$0xff] %v7151
        %v7153 = vld [vmem:[%s6986 + $0x58] sm:$0xff]
        %v7154 = vsel %vm7149, %v7106, %v7153
        %7155 = vst [vmem:[%s6986 + $0x58] sm:$0xff] %v7154
        %v7156 = vld [vmem:[%s6986 + $0xa0] sm:$0xff]
        %v7157 = vsel %vm7149, %v7108, %v7156
        %7158 = vst [vmem:[%s6986 + $0xa0] sm:$0xff] %v7157
        %v7159 = vld [vmem:[%s6986 + $0xe8] sm:$0xff]
        %v7160 = vsel %vm7149, %v7110, %v7159
        %7161 = vst [vmem:[%s6986 + $0xe8] sm:$0xff] %v7160
        %v7162 = vld [vmem:[%s6986 + $0x130] sm:$0xff]
        %v7163 = vsel %vm7149, %v7112, %v7162
        %7164 = vst [vmem:[%s6986 + $0x130] sm:$0xff] %v7163
        %v7165 = vld [vmem:[%s6986 + $0x178] sm:$0xff]
        %v7166 = vsel %vm7149, %v7114, %v7165
        %7167 = vst [vmem:[%s6986 + $0x178] sm:$0xff] %v7166
        %v7168 = vld [vmem:[%s6986 + $0x1c0] sm:$0xff]
        %v7169 = vsel %vm7149, %v7116, %v7168
        %7170 = vst [vmem:[%s6986 + $0x1c0] sm:$0xff] %v7169
        %v7171 = vld [vmem:[%s6986 + $0x208] sm:$0xff]
        %v7172 = vsel %vm7149, %v7118, %v7171
        %7173 = vst [vmem:[%s6986 + $0x208] sm:$0xff] %v7172
        %v7174 = vld [vmem:[%s6986 + $0x250] sm:$0xff]
        %v7175 = vsel %vm7149, %v7120, %v7174
        %7176 = vst [vmem:[%s6986 + $0x250] sm:$0xff] %v7175
        %v7177 = vld [vmem:[%s6986 + $0x298] sm:$0xff]
        %v7178 = vsel %vm7149, %v7122, %v7177
        %7179 = vst [vmem:[%s6986 + $0x298] sm:$0xff] %v7178
        %v7180 = vld [vmem:[%s6986 + $0x2e0] sm:$0xff]
        %v7181 = vsel %vm7149, %v7124, %v7180
        %7182 = vst [vmem:[%s6986 + $0x2e0] sm:$0xff] %v7181
        %v7183 = vld [vmem:[%s6986 + $0x328] sm:$0xff]
        %v7184 = vsel %vm7149, %v7126, %v7183
        %7185 = vst [vmem:[%s6986 + $0x328] sm:$0xff] %v7184
        %v7186 = vld [vmem:[%s6986 + $0x370] sm:$0xff]
        %v7187 = vsel %vm7149, %v7128, %v7186
        %7188 = vst [vmem:[%s6986 + $0x370] sm:$0xff] %v7187
        %v7189 = vld [vmem:[%s6986 + $0x3b8] sm:$0xff]
        %v7190 = vsel %vm7149, %v7130, %v7189
        %7191 = vst [vmem:[%s6986 + $0x3b8] sm:$0xff] %v7190
        %v7192 = vld [vmem:[%s6986 + $0x400] sm:$0xff]
        %v7193 = vsel %vm7149, %v7132, %v7192
        %7194 = vst [vmem:[%s6986 + $0x400] sm:$0xff] %v7193
        %v7195 = vld [vmem:[#allocation3 + $0x18] sm:$0x1]
        %v7196 = vsel %vm6817, 0, %v7195
        %7197 = vst [vmem:[#allocation3 + $0x18] sm:$0x1] %v7196
        %v7198 = vld [vmem:[#allocation3 + $0x60] sm:$0x1]
        %v7199 = vsel %vm6817, 0, %v7198
        %7200 = vst [vmem:[#allocation3 + $0x60] sm:$0x1] %v7199
        %v7201 = vld [vmem:[#allocation3 + $0xa8] sm:$0x1]
        %v7202 = vsel %vm6817, 0, %v7201
        %7203 = vst [vmem:[#allocation3 + $0xa8] sm:$0x1] %v7202
        %v7204 = vld [vmem:[#allocation3 + $0xf0] sm:$0x1]
        %v7205 = vsel %vm6817, 0, %v7204
        %7206 = vst [vmem:[#allocation3 + $0xf0] sm:$0x1] %v7205
        %v7207 = vld [vmem:[#allocation3 + $0x138] sm:$0x1]
        %v7208 = vsel %vm6817, 0, %v7207
        %7209 = vst [vmem:[#allocation3 + $0x138] sm:$0x1] %v7208
        %v7210 = vld [vmem:[#allocation3 + $0x180] sm:$0x1]
        %v7211 = vsel %vm6817, 0, %v7210
        %7212 = vst [vmem:[#allocation3 + $0x180] sm:$0x1] %v7211
        %v7213 = vld [vmem:[#allocation3 + $0x1c8] sm:$0x1]
        %v7214 = vsel %vm6817, 0, %v7213
        %7215 = vst [vmem:[#allocation3 + $0x1c8] sm:$0x1] %v7214
        %v7216 = vld [vmem:[#allocation3 + $0x210] sm:$0x1]
        %v7217 = vsel %vm6817, 0, %v7216
        %7218 = vst [vmem:[#allocation3 + $0x210] sm:$0x1] %v7217
        %v7219 = vld [vmem:[#allocation3 + $0x258] sm:$0x1]
        %v7220 = vsel %vm6817, 0, %v7219
        %7221 = vst [vmem:[#allocation3 + $0x258] sm:$0x1] %v7220
        %v7222 = vld [vmem:[#allocation3 + $0x2a0] sm:$0x1]
        %v7223 = vsel %vm6817, 0, %v7222
        %7224 = vst [vmem:[#allocation3 + $0x2a0] sm:$0x1] %v7223
        %v7225 = vld [vmem:[#allocation3 + $0x2e8] sm:$0x1]
        %v7226 = vsel %vm6817, 0, %v7225
        %7227 = vst [vmem:[#allocation3 + $0x2e8] sm:$0x1] %v7226
        %v7228 = vld [vmem:[#allocation3 + $0x330] sm:$0x1]
        %v7229 = vsel %vm6817, 0, %v7228
        %7230 = vst [vmem:[#allocation3 + $0x330] sm:$0x1] %v7229
        %v7231 = vld [vmem:[#allocation3 + $0x378] sm:$0x1]
        %v7232 = vsel %vm6817, 0, %v7231
        %7233 = vst [vmem:[#allocation3 + $0x378] sm:$0x1] %v7232
        %v7234 = vld [vmem:[#allocation3 + $0x3c0] sm:$0x1]
        %v7235 = vsel %vm6817, 0, %v7234
        %7236 = vst [vmem:[#allocation3 + $0x3c0] sm:$0x1] %v7235
        %v7237 = vld [vmem:[#allocation3 + $0x408] sm:$0x1]
        %v7238 = vsel %vm6817, 0, %v7237
        %7239 = vst [vmem:[#allocation3 + $0x408] sm:$0x1] %v7238
        %v7240 = vld [vmem:[#allocation3 + $0x450] sm:$0x1]
        %v7241 = vsel %vm6817, 0, %v7240
        %7242 = vst [vmem:[#allocation3 + $0x450] sm:$0x1] %v7241
        %v7244 = vshrl.u32 %v6813, 16
        %v7246 = vrot.slane %v7244, 7
        %v7247 = vshll.u32 %v6813, 16
        %v7249 = vor.u32 %v7246, %v7247
        %v7251 = vld [vmem:[#allocation3 + $0x18] sm:$0xff]
        %v7252 = vsel %vm6989, %v6872, %v7251
        %7253 = vst [vmem:[#allocation3 + $0x18] sm:$0xff] %v7252
        %v7254 = vld [vmem:[#allocation3 + $0x60] sm:$0xff]
        %v7255 = vsel %vm6989, %v6879, %v7254
        %7256 = vst [vmem:[#allocation3 + $0x60] sm:$0xff] %v7255
        %v7257 = vld [vmem:[#allocation3 + $0xa8] sm:$0xff]
        %v7258 = vsel %vm6989, %v6886, %v7257
        %7259 = vst [vmem:[#allocation3 + $0xa8] sm:$0xff] %v7258
        %v7260 = vld [vmem:[#allocation3 + $0xf0] sm:$0xff]
        %v7261 = vsel %vm6989, %v6893, %v7260
        %7262 = vst [vmem:[#allocation3 + $0xf0] sm:$0xff] %v7261
        %v7263 = vld [vmem:[#allocation3 + $0x138] sm:$0xff]
        %v7264 = vsel %vm6989, %v6900, %v7263
        %7265 = vst [vmem:[#allocation3 + $0x138] sm:$0xff] %v7264
        %v7266 = vld [vmem:[#allocation3 + $0x180] sm:$0xff]
        %v7267 = vsel %vm6989, %v6907, %v7266
        %7268 = vst [vmem:[#allocation3 + $0x180] sm:$0xff] %v7267
        %v7269 = vld [vmem:[#allocation3 + $0x1c8] sm:$0xff]
        %v7270 = vsel %vm6989, %v6914, %v7269
        %7271 = vst [vmem:[#allocation3 + $0x1c8] sm:$0xff] %v7270
        %v7272 = vld [vmem:[#allocation3 + $0x210] sm:$0xff]
        %v7273 = vsel %vm6989, %v6921, %v7272
        %7274 = vst [vmem:[#allocation3 + $0x210] sm:$0xff] %v7273
        %v7275 = vld [vmem:[#allocation3 + $0x258] sm:$0xff]
        %v7276 = vsel %vm6989, %v6928, %v7275
        %7277 = vst [vmem:[#allocation3 + $0x258] sm:$0xff] %v7276
        %v7278 = vld [vmem:[#allocation3 + $0x2a0] sm:$0xff]
        %v7279 = vsel %vm6989, %v6935, %v7278
        %7280 = vst [vmem:[#allocation3 + $0x2a0] sm:$0xff] %v7279
        %v7281 = vld [vmem:[#allocation3 + $0x2e8] sm:$0xff]
        %v7282 = vsel %vm6989, %v6942, %v7281
        %7283 = vst [vmem:[#allocation3 + $0x2e8] sm:$0xff] %v7282
        %v7284 = vld [vmem:[#allocation3 + $0x330] sm:$0xff]
        %v7285 = vsel %vm6989, %v6949, %v7284
        %7286 = vst [vmem:[#allocation3 + $0x330] sm:$0xff] %v7285
        %v7287 = vld [vmem:[#allocation3 + $0x378] sm:$0xff]
        %v7288 = vsel %vm6989, %v6956, %v7287
        %7289 = vst [vmem:[#allocation3 + $0x378] sm:$0xff] %v7288
        %v7290 = vld [vmem:[#allocation3 + $0x3c0] sm:$0xff]
        %v7291 = vsel %vm6989, %v6963, %v7290
        %7292 = vst [vmem:[#allocation3 + $0x3c0] sm:$0xff] %v7291
        %v7293 = vld [vmem:[#allocation3 + $0x408] sm:$0xff]
        %v7294 = vsel %vm6989, %v6970, %v7293
        %7295 = vst [vmem:[#allocation3 + $0x408] sm:$0xff] %v7294
        %v7296 = vld [vmem:[#allocation3 + $0x450] sm:$0xff]
        %v7297 = vsel %vm6989, %v7249, %v7296
        %7298 = vst [vmem:[#allocation3 + $0x450] sm:$0xff] %v7297
        %7299 = vst [vmem:[#allocation3 + $0x20] sm:$0xff] %v6798
        %7300 = vst [vmem:[#allocation3 + $0x68] sm:$0xff] %v6799
        %7301 = vst [vmem:[#allocation3 + $0xb0] sm:$0xff] %v6800
        %7302 = vst [vmem:[#allocation3 + $0xf8] sm:$0xff] %v6801
        %7303 = vst [vmem:[#allocation3 + $0x140] sm:$0xff] %v6802
        %7304 = vst [vmem:[#allocation3 + $0x188] sm:$0xff] %v6803
        %7305 = vst [vmem:[#allocation3 + $0x1d0] sm:$0xff] %v6804
        %7306 = vst [vmem:[#allocation3 + $0x218] sm:$0xff] %v6805
        %7307 = vst [vmem:[#allocation3 + $0x260] sm:$0xff] %v6806
        %7308 = vst [vmem:[#allocation3 + $0x2a8] sm:$0xff] %v6807
        %7309 = vst [vmem:[#allocation3 + $0x2f0] sm:$0xff] %v6808
        %7310 = vst [vmem:[#allocation3 + $0x338] sm:$0xff] %v6809
        %7311 = vst [vmem:[#allocation3 + $0x380] sm:$0xff] %v6810
        %7312 = vst [vmem:[#allocation3 + $0x3c8] sm:$0xff] %v6811
        %7313 = vst [vmem:[#allocation3 + $0x410] sm:$0xff] %v6812
        %7314 = vst [vmem:[#allocation3 + $0x458] sm:$0xff] %v6813
        %v7315 = vld [vmem:[#allocation3 + $0x28] sm:$0x80]
        %v7316 = vsel %vm7054, 0, %v7315
        %7317 = vst [vmem:[#allocation3 + $0x28] sm:$0x80] %v7316
        %v7318 = vld [vmem:[#allocation3 + $0x70] sm:$0x80]
        %v7319 = vsel %vm7054, 0, %v7318
        %7320 = vst [vmem:[#allocation3 + $0x70] sm:$0x80] %v7319
        %v7321 = vld [vmem:[#allocation3 + $0xb8] sm:$0x80]
        %v7322 = vsel %vm7054, 0, %v7321
        %7323 = vst [vmem:[#allocation3 + $0xb8] sm:$0x80] %v7322
        %v7324 = vld [vmem:[#allocation3 + $0x100] sm:$0x80]
        %v7325 = vsel %vm7054, 0, %v7324
        %7326 = vst [vmem:[#allocation3 + $0x100] sm:$0x80] %v7325
        %v7327 = vld [vmem:[#allocation3 + $0x148] sm:$0x80]
        %v7328 = vsel %vm7054, 0, %v7327
        %7329 = vst [vmem:[#allocation3 + $0x148] sm:$0x80] %v7328
        %v7330 = vld [vmem:[#allocation3 + $0x190] sm:$0x80]
        %v7331 = vsel %vm7054, 0, %v7330
        %7332 = vst [vmem:[#allocation3 + $0x190] sm:$0x80] %v7331
        %v7333 = vld [vmem:[#allocation3 + $0x1d8] sm:$0x80]
        %v7334 = vsel %vm7054, 0, %v7333
        %7335 = vst [vmem:[#allocation3 + $0x1d8] sm:$0x80] %v7334
        %v7336 = vld [vmem:[#allocation3 + $0x220] sm:$0x80]
        %v7337 = vsel %vm7054, 0, %v7336
        %7338 = vst [vmem:[#allocation3 + $0x220] sm:$0x80] %v7337
        %v7339 = vld [vmem:[#allocation3 + $0x268] sm:$0x80]
        %v7340 = vsel %vm7054, 0, %v7339
        %7341 = vst [vmem:[#allocation3 + $0x268] sm:$0x80] %v7340
        %v7342 = vld [vmem:[#allocation3 + $0x2b0] sm:$0x80]
        %v7343 = vsel %vm7054, 0, %v7342
        %7344 = vst [vmem:[#allocation3 + $0x2b0] sm:$0x80] %v7343
        %v7345 = vld [vmem:[#allocation3 + $0x2f8] sm:$0x80]
        %v7346 = vsel %vm7054, 0, %v7345
        %7347 = vst [vmem:[#allocation3 + $0x2f8] sm:$0x80] %v7346
        %v7348 = vld [vmem:[#allocation3 + $0x340] sm:$0x80]
        %v7349 = vsel %vm7054, 0, %v7348
        %7350 = vst [vmem:[#allocation3 + $0x340] sm:$0x80] %v7349
        %v7351 = vld [vmem:[#allocation3 + $0x388] sm:$0x80]
        %v7352 = vsel %vm7054, 0, %v7351
        %7353 = vst [vmem:[#allocation3 + $0x388] sm:$0x80] %v7352
        %v7354 = vld [vmem:[#allocation3 + $0x3d0] sm:$0x80]
        %v7355 = vsel %vm7054, 0, %v7354
        %7356 = vst [vmem:[#allocation3 + $0x3d0] sm:$0x80] %v7355
        %v7357 = vld [vmem:[#allocation3 + $0x418] sm:$0x80]
        %v7358 = vsel %vm7054, 0, %v7357
        %7359 = vst [vmem:[#allocation3 + $0x418] sm:$0x80] %v7358
        %v7360 = vld [vmem:[#allocation3 + $0x460] sm:$0x80]
        %v7361 = vsel %vm7054, 0, %v7360
        %7362 = vst [vmem:[#allocation3 + $0x460] sm:$0x80] %v7361
        %v7363 = vrot.slane %v7247, 1
        %v7364 = vor.u32 %v7244, %v7363
        %v7366 = vld [vmem:[#allocation3 + $0x28] sm:$0xff]
        %v7367 = vsel %vm7149, %v7104, %v7366
        %7368 = vst [vmem:[#allocation3 + $0x28] sm:$0xff] %v7367
        %v7369 = vld [vmem:[#allocation3 + $0x70] sm:$0xff]
        %v7370 = vsel %vm7149, %v7106, %v7369
        %7371 = vst [vmem:[#allocation3 + $0x70] sm:$0xff] %v7370
        %v7372 = vld [vmem:[#allocation3 + $0xb8] sm:$0xff]
        %v7373 = vsel %vm7149, %v7108, %v7372
        %7374 = vst [vmem:[#allocation3 + $0xb8] sm:$0xff] %v7373
        %v7375 = vld [vmem:[#allocation3 + $0x100] sm:$0xff]
        %v7376 = vsel %vm7149, %v7110, %v7375
        %7377 = vst [vmem:[#allocation3 + $0x100] sm:$0xff] %v7376
        %v7378 = vld [vmem:[#allocation3 + $0x148] sm:$0xff]
        %v7379 = vsel %vm7149, %v7112, %v7378
        %7380 = vst [vmem:[#allocation3 + $0x148] sm:$0xff] %v7379
        %v7381 = vld [vmem:[#allocation3 + $0x190] sm:$0xff]
        %v7382 = vsel %vm7149, %v7114, %v7381
        %7383 = vst [vmem:[#allocation3 + $0x190] sm:$0xff] %v7382
        %v7384 = vld [vmem:[#allocation3 + $0x1d8] sm:$0xff]
        %v7385 = vsel %vm7149, %v7116, %v7384
        %7386 = vst [vmem:[#allocation3 + $0x1d8] sm:$0xff] %v7385
        %v7387 = vld [vmem:[#allocation3 + $0x220] sm:$0xff]
        %v7388 = vsel %vm7149, %v7118, %v7387
        %7389 = vst [vmem:[#allocation3 + $0x220] sm:$0xff] %v7388
        %v7390 = vld [vmem:[#allocation3 + $0x268] sm:$0xff]
        %v7391 = vsel %vm7149, %v7120, %v7390
        %7392 = vst [vmem:[#allocation3 + $0x268] sm:$0xff] %v7391
        %v7393 = vld [vmem:[#allocation3 + $0x2b0] sm:$0xff]
        %v7394 = vsel %vm7149, %v7122, %v7393
        %7395 = vst [vmem:[#allocation3 + $0x2b0] sm:$0xff] %v7394
        %v7396 = vld [vmem:[#allocation3 + $0x2f8] sm:$0xff]
        %v7397 = vsel %vm7149, %v7124, %v7396
        %7398 = vst [vmem:[#allocation3 + $0x2f8] sm:$0xff] %v7397
        %v7399 = vld [vmem:[#allocation3 + $0x340] sm:$0xff]
        %v7400 = vsel %vm7149, %v7126, %v7399
        %7401 = vst [vmem:[#allocation3 + $0x340] sm:$0xff] %v7400
        %v7402 = vld [vmem:[#allocation3 + $0x388] sm:$0xff]
        %v7403 = vsel %vm7149, %v7128, %v7402
        %7404 = vst [vmem:[#allocation3 + $0x388] sm:$0xff] %v7403
        %v7405 = vld [vmem:[#allocation3 + $0x3d0] sm:$0xff]
        %v7406 = vsel %vm7149, %v7130, %v7405
        %7407 = vst [vmem:[#allocation3 + $0x3d0] sm:$0xff] %v7406
        %v7408 = vld [vmem:[#allocation3 + $0x418] sm:$0xff]
        %v7409 = vsel %vm7149, %v7132, %v7408
        %7410 = vst [vmem:[#allocation3 + $0x418] sm:$0xff] %v7409
        %v7411 = vld [vmem:[#allocation3 + $0x460] sm:$0xff]
        %v7412 = vsel %vm7149, %v7364, %v7411
        %7413 = vst [vmem:[#allocation3 + $0x460] sm:$0xff] %v7412
        %s7414 = scalar_lea.vmem [#allocation3], 1080
        %7415 = vst [vmem:[%s7414 + $0x30] sm:$0xff] 0
        %v7416 = vld [vmem:[#allocation3 + $0x30] sm:$0x1]
        %v7417 = vsel %vm6817, 0, %v7416
        %7418 = vst [vmem:[#allocation3 + $0x30] sm:$0x1] %v7417
        %v7419 = vld [vmem:[#allocation3 + $0x78] sm:$0x1]
        %v7420 = vsel %vm6817, 0, %v7419
        %7421 = vst [vmem:[#allocation3 + $0x78] sm:$0x1] %v7420
        %v7422 = vld [vmem:[#allocation3 + $0xc0] sm:$0x1]
        %v7423 = vsel %vm6817, 0, %v7422
        %7424 = vst [vmem:[#allocation3 + $0xc0] sm:$0x1] %v7423
        %v7425 = vld [vmem:[#allocation3 + $0x108] sm:$0x1]
        %v7426 = vsel %vm6817, 0, %v7425
        %7427 = vst [vmem:[#allocation3 + $0x108] sm:$0x1] %v7426
        %v7428 = vld [vmem:[#allocation3 + $0x150] sm:$0x1]
        %v7429 = vsel %vm6817, 0, %v7428
        %7430 = vst [vmem:[#allocation3 + $0x150] sm:$0x1] %v7429
        %v7431 = vld [vmem:[#allocation3 + $0x198] sm:$0x1]
        %v7432 = vsel %vm6817, 0, %v7431
        %7433 = vst [vmem:[#allocation3 + $0x198] sm:$0x1] %v7432
        %v7434 = vld [vmem:[#allocation3 + $0x1e0] sm:$0x1]
        %v7435 = vsel %vm6817, 0, %v7434
        %7436 = vst [vmem:[#allocation3 + $0x1e0] sm:$0x1] %v7435
        %v7437 = vld [vmem:[#allocation3 + $0x228] sm:$0x1]
        %v7438 = vsel %vm6817, 0, %v7437
        %7439 = vst [vmem:[#allocation3 + $0x228] sm:$0x1] %v7438
        %v7440 = vld [vmem:[#allocation3 + $0x270] sm:$0x1]
        %v7441 = vsel %vm6817, 0, %v7440
        %7442 = vst [vmem:[#allocation3 + $0x270] sm:$0x1] %v7441
        %v7443 = vld [vmem:[#allocation3 + $0x2b8] sm:$0x1]
        %v7444 = vsel %vm6817, 0, %v7443
        %7445 = vst [vmem:[#allocation3 + $0x2b8] sm:$0x1] %v7444
        %v7446 = vld [vmem:[#allocation3 + $0x300] sm:$0x1]
        %v7447 = vsel %vm6817, 0, %v7446
        %7448 = vst [vmem:[#allocation3 + $0x300] sm:$0x1] %v7447
        %v7449 = vld [vmem:[#allocation3 + $0x348] sm:$0x1]
        %v7450 = vsel %vm6817, 0, %v7449
        %7451 = vst [vmem:[#allocation3 + $0x348] sm:$0x1] %v7450
        %v7452 = vld [vmem:[#allocation3 + $0x390] sm:$0x1]
        %v7453 = vsel %vm6817, 0, %v7452
        %7454 = vst [vmem:[#allocation3 + $0x390] sm:$0x1] %v7453
        %v7455 = vld [vmem:[#allocation3 + $0x3d8] sm:$0x1]
        %v7456 = vsel %vm6817, 0, %v7455
        %7457 = vst [vmem:[#allocation3 + $0x3d8] sm:$0x1] %v7456
        %v7458 = vld [vmem:[#allocation3 + $0x420] sm:$0x1]
        %v7459 = vsel %vm6817, 0, %v7458
        %7460 = vst [vmem:[#allocation3 + $0x420] sm:$0x1] %v7459
        %v7461 = vld [vmem:[#allocation3 + $0x468] sm:$0x1]
        %v7462 = vsel %vm6817, 0, %v7461
        %7463 = vst [vmem:[#allocation3 + $0x468] sm:$0x1] %v7462
        %v7464 = vld [vmem:[#allocation3 + $0x30] sm:$0xff]
        %v7465 = vsel %vm6989, %v6879, %v7464
        %7466 = vst [vmem:[#allocation3 + $0x30] sm:$0xff] %v7465
        %v7467 = vld [vmem:[#allocation3 + $0x78] sm:$0xff]
        %v7468 = vsel %vm6989, %v6886, %v7467
        %7469 = vst [vmem:[#allocation3 + $0x78] sm:$0xff] %v7468
        %v7470 = vld [vmem:[#allocation3 + $0xc0] sm:$0xff]
        %v7471 = vsel %vm6989, %v6893, %v7470
        %7472 = vst [vmem:[#allocation3 + $0xc0] sm:$0xff] %v7471
        %v7473 = vld [vmem:[#allocation3 + $0x108] sm:$0xff]
        %v7474 = vsel %vm6989, %v6900, %v7473
        %7475 = vst [vmem:[#allocation3 + $0x108] sm:$0xff] %v7474
        %v7476 = vld [vmem:[#allocation3 + $0x150] sm:$0xff]
        %v7477 = vsel %vm6989, %v6907, %v7476
        %7478 = vst [vmem:[#allocation3 + $0x150] sm:$0xff] %v7477
        %v7479 = vld [vmem:[#allocation3 + $0x198] sm:$0xff]
        %v7480 = vsel %vm6989, %v6914, %v7479
        %7481 = vst [vmem:[#allocation3 + $0x198] sm:$0xff] %v7480
        %v7482 = vld [vmem:[#allocation3 + $0x1e0] sm:$0xff]
        %v7483 = vsel %vm6989, %v6921, %v7482
        %7484 = vst [vmem:[#allocation3 + $0x1e0] sm:$0xff] %v7483
        %v7485 = vld [vmem:[#allocation3 + $0x228] sm:$0xff]
        %v7486 = vsel %vm6989, %v6928, %v7485
        %7487 = vst [vmem:[#allocation3 + $0x228] sm:$0xff] %v7486
        %v7488 = vld [vmem:[#allocation3 + $0x270] sm:$0xff]
        %v7489 = vsel %vm6989, %v6935, %v7488
        %7490 = vst [vmem:[#allocation3 + $0x270] sm:$0xff] %v7489
        %v7491 = vld [vmem:[#allocation3 + $0x2b8] sm:$0xff]
        %v7492 = vsel %vm6989, %v6942, %v7491
        %7493 = vst [vmem:[#allocation3 + $0x2b8] sm:$0xff] %v7492
        %v7494 = vld [vmem:[#allocation3 + $0x300] sm:$0xff]
        %v7495 = vsel %vm6989, %v6949, %v7494
        %7496 = vst [vmem:[#allocation3 + $0x300] sm:$0xff] %v7495
        %v7497 = vld [vmem:[#allocation3 + $0x348] sm:$0xff]
        %v7498 = vsel %vm6989, %v6956, %v7497
        %7499 = vst [vmem:[#allocation3 + $0x348] sm:$0xff] %v7498
        %v7500 = vld [vmem:[#allocation3 + $0x390] sm:$0xff]
        %v7501 = vsel %vm6989, %v6963, %v7500
        %7502 = vst [vmem:[#allocation3 + $0x390] sm:$0xff] %v7501
        %v7503 = vld [vmem:[#allocation3 + $0x3d8] sm:$0xff]
        %v7504 = vsel %vm6989, %v6970, %v7503
        %7505 = vst [vmem:[#allocation3 + $0x3d8] sm:$0xff] %v7504
        %v7506 = vld [vmem:[#allocation3 + $0x420] sm:$0xff]
        %v7507 = vsel %vm6989, %v7249, %v7506
        %7508 = vst [vmem:[#allocation3 + $0x420] sm:$0xff] %v7507
        %7509 = vst [vmem:[%s7414 + $0x38] sm:$0xff] 0
        %7510 = vst [vmem:[#allocation3 + $0x38] sm:$0xff] %v6799
        %7511 = vst [vmem:[#allocation3 + $0x80] sm:$0xff] %v6800
        %7512 = vst [vmem:[#allocation3 + $0xc8] sm:$0xff] %v6801
        %7513 = vst [vmem:[#allocation3 + $0x110] sm:$0xff] %v6802
        %7514 = vst [vmem:[#allocation3 + $0x158] sm:$0xff] %v6803
        %7515 = vst [vmem:[#allocation3 + $0x1a0] sm:$0xff] %v6804
        %7516 = vst [vmem:[#allocation3 + $0x1e8] sm:$0xff] %v6805
        %7517 = vst [vmem:[#allocation3 + $0x230] sm:$0xff] %v6806
        %7518 = vst [vmem:[#allocation3 + $0x278] sm:$0xff] %v6807
        %7519 = vst [vmem:[#allocation3 + $0x2c0] sm:$0xff] %v6808
        %7520 = vst [vmem:[#allocation3 + $0x308] sm:$0xff] %v6809
        %7521 = vst [vmem:[#allocation3 + $0x350] sm:$0xff] %v6810
        %7522 = vst [vmem:[#allocation3 + $0x398] sm:$0xff] %v6811
        %7523 = vst [vmem:[#allocation3 + $0x3e0] sm:$0xff] %v6812
        %7524 = vst [vmem:[#allocation3 + $0x428] sm:$0xff] %v6813
        %7525 = vst [vmem:[%s7414 + $0x40] sm:$0xff] 0
        %v7526 = vld [vmem:[#allocation3 + $0x40] sm:$0x80]
        %v7527 = vsel %vm7054, 0, %v7526
        %7528 = vst [vmem:[#allocation3 + $0x40] sm:$0x80] %v7527
        %v7529 = vld [vmem:[#allocation3 + $0x88] sm:$0x80]
        %v7530 = vsel %vm7054, 0, %v7529
        %7531 = vst [vmem:[#allocation3 + $0x88] sm:$0x80] %v7530
        %v7532 = vld [vmem:[#allocation3 + $0xd0] sm:$0x80]
        %v7533 = vsel %vm7054, 0, %v7532
        %7534 = vst [vmem:[#allocation3 + $0xd0] sm:$0x80] %v7533
        %v7535 = vld [vmem:[#allocation3 + $0x118] sm:$0x80]
        %v7536 = vsel %vm7054, 0, %v7535
        %7537 = vst [vmem:[#allocation3 + $0x118] sm:$0x80] %v7536
        %v7538 = vld [vmem:[#allocation3 + $0x160] sm:$0x80]
        %v7539 = vsel %vm7054, 0, %v7538
        %7540 = vst [vmem:[#allocation3 + $0x160] sm:$0x80] %v7539
        %v7541 = vld [vmem:[#allocation3 + $0x1a8] sm:$0x80]
        %v7542 = vsel %vm7054, 0, %v7541
        %7543 = vst [vmem:[#allocation3 + $0x1a8] sm:$0x80] %v7542
        %v7544 = vld [vmem:[#allocation3 + $0x1f0] sm:$0x80]
        %v7545 = vsel %vm7054, 0, %v7544
        %7546 = vst [vmem:[#allocation3 + $0x1f0] sm:$0x80] %v7545
        %v7547 = vld [vmem:[#allocation3 + $0x238] sm:$0x80]
        %v7548 = vsel %vm7054, 0, %v7547
        %7549 = vst [vmem:[#allocation3 + $0x238] sm:$0x80] %v7548
        %v7550 = vld [vmem:[#allocation3 + $0x280] sm:$0x80]
        %v7551 = vsel %vm7054, 0, %v7550
        %7552 = vst [vmem:[#allocation3 + $0x280] sm:$0x80] %v7551
        %v7553 = vld [vmem:[#allocation3 + $0x2c8] sm:$0x80]
        %v7554 = vsel %vm7054, 0, %v7553
        %7555 = vst [vmem:[#allocation3 + $0x2c8] sm:$0x80] %v7554
        %v7556 = vld [vmem:[#allocation3 + $0x310] sm:$0x80]
        %v7557 = vsel %vm7054, 0, %v7556
        %7558 = vst [vmem:[#allocation3 + $0x310] sm:$0x80] %v7557
        %v7559 = vld [vmem:[#allocation3 + $0x358] sm:$0x80]
        %v7560 = vsel %vm7054, 0, %v7559
        %7561 = vst [vmem:[#allocation3 + $0x358] sm:$0x80] %v7560
        %v7562 = vld [vmem:[#allocation3 + $0x3a0] sm:$0x80]
        %v7563 = vsel %vm7054, 0, %v7562
        %7564 = vst [vmem:[#allocation3 + $0x3a0] sm:$0x80] %v7563
        %v7565 = vld [vmem:[#allocation3 + $0x3e8] sm:$0x80]
        %v7566 = vsel %vm7054, 0, %v7565
        %7567 = vst [vmem:[#allocation3 + $0x3e8] sm:$0x80] %v7566
        %v7568 = vld [vmem:[#allocation3 + $0x430] sm:$0x80]
        %v7569 = vsel %vm7054, 0, %v7568
        %7570 = vst [vmem:[#allocation3 + $0x430] sm:$0x80] %v7569
        %v7571 = vld [vmem:[#allocation3 + $0x478] sm:$0x80]
        %v7572 = vsel %vm7054, 0, %v7571
        %7573 = vst [vmem:[#allocation3 + $0x478] sm:$0x80] %v7572
        %v7574 = vld [vmem:[#allocation3 + $0x40] sm:$0xff]
        %v7575 = vsel %vm7149, %v7106, %v7574
        %7576 = vst [vmem:[#allocation3 + $0x40] sm:$0xff] %v7575
        %v7577 = vld [vmem:[#allocation3 + $0x88] sm:$0xff]
        %v7578 = vsel %vm7149, %v7108, %v7577
        %7579 = vst [vmem:[#allocation3 + $0x88] sm:$0xff] %v7578
        %v7580 = vld [vmem:[#allocation3 + $0xd0] sm:$0xff]
        %v7581 = vsel %vm7149, %v7110, %v7580
        %7582 = vst [vmem:[#allocation3 + $0xd0] sm:$0xff] %v7581
        %v7583 = vld [vmem:[#allocation3 + $0x118] sm:$0xff]
        %v7584 = vsel %vm7149, %v7112, %v7583
        %7585 = vst [vmem:[#allocation3 + $0x118] sm:$0xff] %v7584
        %v7586 = vld [vmem:[#allocation3 + $0x160] sm:$0xff]
        %v7587 = vsel %vm7149, %v7114, %v7586
        %7588 = vst [vmem:[#allocation3 + $0x160] sm:$0xff] %v7587
        %v7589 = vld [vmem:[#allocation3 + $0x1a8] sm:$0xff]
        %v7590 = vsel %vm7149, %v7116, %v7589
        %7591 = vst [vmem:[#allocation3 + $0x1a8] sm:$0xff] %v7590
        %v7592 = vld [vmem:[#allocation3 + $0x1f0] sm:$0xff]
        %v7593 = vsel %vm7149, %v7118, %v7592
        %7594 = vst [vmem:[#allocation3 + $0x1f0] sm:$0xff] %v7593
        %v7595 = vld [vmem:[#allocation3 + $0x238] sm:$0xff]
        %v7596 = vsel %vm7149, %v7120, %v7595
        %7597 = vst [vmem:[#allocation3 + $0x238] sm:$0xff] %v7596
        %v7598 = vld [vmem:[#allocation3 + $0x280] sm:$0xff]
        %v7599 = vsel %vm7149, %v7122, %v7598
        %7600 = vst [vmem:[#allocation3 + $0x280] sm:$0xff] %v7599
        %v7601 = vld [vmem:[#allocation3 + $0x2c8] sm:$0xff]
        %v7602 = vsel %vm7149, %v7124, %v7601
        %7603 = vst [vmem:[#allocation3 + $0x2c8] sm:$0xff] %v7602
        %v7604 = vld [vmem:[#allocation3 + $0x310] sm:$0xff]
        %v7605 = vsel %vm7149, %v7126, %v7604
        %7606 = vst [vmem:[#allocation3 + $0x310] sm:$0xff] %v7605
        %v7607 = vld [vmem:[#allocation3 + $0x358] sm:$0xff]
        %v7608 = vsel %vm7149, %v7128, %v7607
        %7609 = vst [vmem:[#allocation3 + $0x358] sm:$0xff] %v7608
        %v7610 = vld [vmem:[#allocation3 + $0x3a0] sm:$0xff]
        %v7611 = vsel %vm7149, %v7130, %v7610
        %7612 = vst [vmem:[#allocation3 + $0x3a0] sm:$0xff] %v7611
        %v7613 = vld [vmem:[#allocation3 + $0x3e8] sm:$0xff]
        %v7614 = vsel %vm7149, %v7132, %v7613
        %7615 = vst [vmem:[#allocation3 + $0x3e8] sm:$0xff] %v7614
        %v7616 = vld [vmem:[#allocation3 + $0x430] sm:$0xff]
        %v7617 = vsel %vm7149, %v7364, %v7616
        %7618 = vst [vmem:[#allocation3 + $0x430] sm:$0xff] %v7617
        %v7619 = vld [vmem:[#allocation3] sm:$0xff]
        %v7620 = vld [vmem:[#allocation3 + $0x8] sm:$0xff]
        %v7621 = vld [vmem:[#allocation3 + $0x10] sm:$0xff]
        %v7622 = vld [vmem:[#allocation3 + $0x18] sm:$0xff]
        %v7623 = vld [vmem:[#allocation3 + $0x20] sm:$0xff]
        %v7624 = vld [vmem:[#allocation3 + $0x28] sm:$0xff]
        %v7625 = vld [vmem:[#allocation3 + $0x30] sm:$0xff]
        %v7626 = vld [vmem:[#allocation3 + $0x38] sm:$0xff]
        %v7627 = vld [vmem:[#allocation3 + $0x40] sm:$0xff]
        %v7628 = vld [vmem:[#allocation3 + $0x48] sm:$0xff]
        %v7629 = vld [vmem:[#allocation3 + $0x50] sm:$0xff]
        %v7630 = vld [vmem:[#allocation3 + $0x58] sm:$0xff]
        %v7631 = vld [vmem:[#allocation3 + $0x60] sm:$0xff]
        %v7632 = vld [vmem:[#allocation3 + $0x68] sm:$0xff]
        %v7633 = vld [vmem:[#allocation3 + $0x70] sm:$0xff]
        %v7634 = vld [vmem:[#allocation3 + $0x78] sm:$0xff]
        %v7635 = vld [vmem:[#allocation3 + $0x80] sm:$0xff]
        %v7636 = vld [vmem:[#allocation3 + $0x88] sm:$0xff]
        %v7637 = vld [vmem:[#allocation3 + $0x90] sm:$0xff]
        %v7638 = vld [vmem:[#allocation3 + $0x98] sm:$0xff]
        %v7639 = vld [vmem:[#allocation3 + $0xa0] sm:$0xff]
        %v7640 = vld [vmem:[#allocation3 + $0xa8] sm:$0xff]
        %v7641 = vld [vmem:[#allocation3 + $0xb0] sm:$0xff]
        %v7642 = vld [vmem:[#allocation3 + $0xb8] sm:$0xff]
        %v7643 = vld [vmem:[#allocation3 + $0xc0] sm:$0xff]
        %v7644 = vld [vmem:[#allocation3 + $0xc8] sm:$0xff]
        %v7645 = vld [vmem:[#allocation3 + $0xd0] sm:$0xff]
        %v7646 = vld [vmem:[#allocation3 + $0xd8] sm:$0xff]
        %v7647 = vld [vmem:[#allocation3 + $0xe0] sm:$0xff]
        %v7648 = vld [vmem:[#allocation3 + $0xe8] sm:$0xff]
        %v7649 = vld [vmem:[#allocation3 + $0xf0] sm:$0xff]
        %v7650 = vld [vmem:[#allocation3 + $0xf8] sm:$0xff]
        %v7651 = vld [vmem:[#allocation3 + $0x100] sm:$0xff]
        %v7652 = vld [vmem:[#allocation3 + $0x108] sm:$0xff]
        %v7653 = vld [vmem:[#allocation3 + $0x110] sm:$0xff]
        %v7654 = vld [vmem:[#allocation3 + $0x118] sm:$0xff]
        %v7655 = vld [vmem:[#allocation3 + $0x120] sm:$0xff]
        %v7656 = vld [vmem:[#allocation3 + $0x128] sm:$0xff]
        %v7657 = vld [vmem:[#allocation3 + $0x130] sm:$0xff]
        %v7658 = vld [vmem:[#allocation3 + $0x138] sm:$0xff]
        %v7659 = vld [vmem:[#allocation3 + $0x140] sm:$0xff]
        %v7660 = vld [vmem:[#allocation3 + $0x148] sm:$0xff]
        %v7661 = vld [vmem:[#allocation3 + $0x150] sm:$0xff]
        %v7662 = vld [vmem:[#allocation3 + $0x158] sm:$0xff]
        %v7663 = vld [vmem:[#allocation3 + $0x160] sm:$0xff]
        %v7664 = vld [vmem:[#allocation3 + $0x168] sm:$0xff]
        %v7665 = vld [vmem:[#allocation3 + $0x170] sm:$0xff]
        %v7666 = vld [vmem:[#allocation3 + $0x178] sm:$0xff]
        %v7667 = vld [vmem:[#allocation3 + $0x180] sm:$0xff]
        %v7668 = vld [vmem:[#allocation3 + $0x188] sm:$0xff]
        %v7669 = vld [vmem:[#allocation3 + $0x190] sm:$0xff]
        %v7670 = vld [vmem:[#allocation3 + $0x198] sm:$0xff]
        %v7671 = vld [vmem:[#allocation3 + $0x1a0] sm:$0xff]
        %v7672 = vld [vmem:[#allocation3 + $0x1a8] sm:$0xff]
        %v7673 = vld [vmem:[#allocation3 + $0x1b0] sm:$0xff]
        %v7674 = vld [vmem:[#allocation3 + $0x1b8] sm:$0xff]
        %v7675 = vld [vmem:[#allocation3 + $0x1c0] sm:$0xff]
        %v7676 = vld [vmem:[#allocation3 + $0x1c8] sm:$0xff]
        %v7677 = vld [vmem:[#allocation3 + $0x1d0] sm:$0xff]
        %v7678 = vld [vmem:[#allocation3 + $0x1d8] sm:$0xff]
        %v7679 = vld [vmem:[#allocation3 + $0x1e0] sm:$0xff]
        %v7680 = vld [vmem:[#allocation3 + $0x1e8] sm:$0xff]
        %v7681 = vld [vmem:[#allocation3 + $0x1f0] sm:$0xff]
        %v7682 = vld [vmem:[#allocation3 + $0x1f8] sm:$0xff]
        %v7683 = vld [vmem:[#allocation3 + $0x200] sm:$0xff]
        %v7684 = vld [vmem:[#allocation3 + $0x208] sm:$0xff]
        %v7685 = vld [vmem:[#allocation3 + $0x210] sm:$0xff]
        %v7686 = vld [vmem:[#allocation3 + $0x218] sm:$0xff]
        %v7687 = vld [vmem:[#allocation3 + $0x220] sm:$0xff]
        %v7688 = vld [vmem:[#allocation3 + $0x228] sm:$0xff]
        %v7689 = vld [vmem:[#allocation3 + $0x230] sm:$0xff]
        %v7690 = vld [vmem:[#allocation3 + $0x238] sm:$0xff]
        %v7691 = vld [vmem:[#allocation3 + $0x240] sm:$0xff]
        %v7692 = vld [vmem:[#allocation3 + $0x248] sm:$0xff]
        %v7693 = vld [vmem:[#allocation3 + $0x250] sm:$0xff]
        %v7694 = vld [vmem:[#allocation3 + $0x258] sm:$0xff]
        %v7695 = vld [vmem:[#allocation3 + $0x260] sm:$0xff]
        %v7696 = vld [vmem:[#allocation3 + $0x268] sm:$0xff]
        %v7697 = vld [vmem:[#allocation3 + $0x270] sm:$0xff]
        %v7698 = vld [vmem:[#allocation3 + $0x278] sm:$0xff]
        %v7699 = vld [vmem:[#allocation3 + $0x280] sm:$0xff]
        %v7700 = vld [vmem:[#allocation3 + $0x288] sm:$0xff]
        %v7701 = vld [vmem:[#allocation3 + $0x290] sm:$0xff]
        %v7702 = vld [vmem:[#allocation3 + $0x298] sm:$0xff]
        %v7703 = vld [vmem:[#allocation3 + $0x2a0] sm:$0xff]
        %v7704 = vld [vmem:[#allocation3 + $0x2a8] sm:$0xff]
        %v7705 = vld [vmem:[#allocation3 + $0x2b0] sm:$0xff]
        %v7706 = vld [vmem:[#allocation3 + $0x2b8] sm:$0xff]
        %v7707 = vld [vmem:[#allocation3 + $0x2c0] sm:$0xff]
        %v7708 = vld [vmem:[#allocation3 + $0x2c8] sm:$0xff]
        %v7709 = vld [vmem:[#allocation3 + $0x2d0] sm:$0xff]
        %v7710 = vld [vmem:[#allocation3 + $0x2d8] sm:$0xff]
        %v7711 = vld [vmem:[#allocation3 + $0x2e0] sm:$0xff]
        %v7712 = vld [vmem:[#allocation3 + $0x2e8] sm:$0xff]
        %v7713 = vld [vmem:[#allocation3 + $0x2f0] sm:$0xff]
        %v7714 = vld [vmem:[#allocation3 + $0x2f8] sm:$0xff]
        %v7715 = vld [vmem:[#allocation3 + $0x300] sm:$0xff]
        %v7716 = vld [vmem:[#allocation3 + $0x308] sm:$0xff]
        %v7717 = vld [vmem:[#allocation3 + $0x310] sm:$0xff]
        %v7718 = vld [vmem:[#allocation3 + $0x318] sm:$0xff]
        %v7719 = vld [vmem:[#allocation3 + $0x320] sm:$0xff]
        %v7720 = vld [vmem:[#allocation3 + $0x328] sm:$0xff]
        %v7721 = vld [vmem:[#allocation3 + $0x330] sm:$0xff]
        %v7722 = vld [vmem:[#allocation3 + $0x338] sm:$0xff]
        %v7723 = vld [vmem:[#allocation3 + $0x340] sm:$0xff]
        %v7724 = vld [vmem:[#allocation3 + $0x348] sm:$0xff]
        %v7725 = vld [vmem:[#allocation3 + $0x350] sm:$0xff]
        %v7726 = vld [vmem:[#allocation3 + $0x358] sm:$0xff]
        %v7727 = vld [vmem:[#allocation3 + $0x360] sm:$0xff]
        %v7728 = vld [vmem:[#allocation3 + $0x368] sm:$0xff]
        %v7729 = vld [vmem:[#allocation3 + $0x370] sm:$0xff]
        %v7730 = vld [vmem:[#allocation3 + $0x378] sm:$0xff]
        %v7731 = vld [vmem:[#allocation3 + $0x380] sm:$0xff]
        %v7732 = vld [vmem:[#allocation3 + $0x388] sm:$0xff]
        %v7733 = vld [vmem:[#allocation3 + $0x390] sm:$0xff]
        %v7734 = vld [vmem:[#allocation3 + $0x398] sm:$0xff]
        %v7735 = vld [vmem:[#allocation3 + $0x3a0] sm:$0xff]
        %v7736 = vld [vmem:[#allocation3 + $0x3a8] sm:$0xff]
        %v7737 = vld [vmem:[#allocation3 + $0x3b0] sm:$0xff]
        %v7738 = vld [vmem:[#allocation3 + $0x3b8] sm:$0xff]
        %v7739 = vld [vmem:[#allocation3 + $0x3c0] sm:$0xff]
        %v7740 = vld [vmem:[#allocation3 + $0x3c8] sm:$0xff]
        %v7741 = vld [vmem:[#allocation3 + $0x3d0] sm:$0xff]
        %v7742 = vld [vmem:[#allocation3 + $0x3d8] sm:$0xff]
        %v7743 = vld [vmem:[#allocation3 + $0x3e0] sm:$0xff]
        %v7744 = vld [vmem:[#allocation3 + $0x3e8] sm:$0xff]
        %v7745 = vld [vmem:[#allocation3 + $0x3f0] sm:$0xff]
        %v7746 = vld [vmem:[#allocation3 + $0x3f8] sm:$0xff]
        %v7747 = vld [vmem:[#allocation3 + $0x400] sm:$0xff]
        %v7748 = vld [vmem:[#allocation3 + $0x408] sm:$0xff]
        %v7749 = vld [vmem:[#allocation3 + $0x410] sm:$0xff]
        %v7750 = vld [vmem:[#allocation3 + $0x418] sm:$0xff]
        %v7751 = vld [vmem:[#allocation3 + $0x420] sm:$0xff]
        %v7752 = vld [vmem:[#allocation3 + $0x428] sm:$0xff]
        %v7753 = vld [vmem:[#allocation3 + $0x430] sm:$0xff]
        %v7754 = vld [vmem:[#allocation3 + $0x438] sm:$0xff]
        %v7755 = vld [vmem:[#allocation3 + $0x440] sm:$0xff]
        %v7756 = vld [vmem:[#allocation3 + $0x448] sm:$0xff]
        %v7757 = vld [vmem:[#allocation3 + $0x450] sm:$0xff]
        %v7758 = vld [vmem:[#allocation3 + $0x458] sm:$0xff]
        %v7759 = vld [vmem:[#allocation3 + $0x460] sm:$0xff]
        %v7760 = vld [vmem:[#allocation3 + $0x468] sm:$0xff]
        %v7761 = vld [vmem:[#allocation3 + $0x470] sm:$0xff]
        %v7762 = vld [vmem:[#allocation3 + $0x478] sm:$0xff]
        %v7763 = vld [vmem:[%s6] sm:$0xf]
        %v7764 = vld [vmem:[%s6 + $0x4] sm:$0xf]
        %v7765 = vld [vmem:[%s6 + $0x8] sm:$0xf]
        %v7766 = vld [vmem:[%s6 + $0xc] sm:$0xf]
        %v7767 = vld [vmem:[%s6 + $0x10] sm:$0xf]
        %v7768 = vld [vmem:[%s6 + $0x14] sm:$0xf]
        %v7769 = vld [vmem:[%s6 + $0x18] sm:$0xf]
        %v7770 = vld [vmem:[%s6 + $0x1c] sm:$0xf]
        %v7771 = vld [vmem:[%s6 + $0x20] sm:$0xf]
        %v7772 = vld [vmem:[%s6 + $0x24] sm:$0xf]
        %v7773 = vld [vmem:[%s6 + $0x28] sm:$0xf]
        %v7774 = vld [vmem:[%s6 + $0x2c] sm:$0xf]
        %v7775 = vld [vmem:[%s6 + $0x30] sm:$0xf]
        %v7776 = vld [vmem:[%s6 + $0x34] sm:$0xf]
        %v7777 = vld [vmem:[%s6 + $0x38] sm:$0xf]
        %v7778 = vld [vmem:[%s6 + $0x3c] sm:$0xf]
        %v7779 = vld [vmem:[%s6 + $0x40] sm:$0xf]
        %v7780 = vld [vmem:[%s6 + $0x44] sm:$0xf]
        %v7781 = vld [vmem:[%s6 + $0x48] sm:$0xf]
        %v7782 = vld [vmem:[%s6 + $0x4c] sm:$0xf]
        %v7783 = vld [vmem:[%s6 + $0x50] sm:$0xf]
        %v7784 = vld [vmem:[%s6 + $0x54] sm:$0xf]
        %v7785 = vld [vmem:[%s6 + $0x58] sm:$0xf]
        %v7786 = vld [vmem:[%s6 + $0x5c] sm:$0xf]
        %v7787 = vld [vmem:[%s6 + $0x60] sm:$0xf]
        %v7788 = vld [vmem:[%s6 + $0x64] sm:$0xf]
        %v7789 = vld [vmem:[%s6 + $0x68] sm:$0xf]
        %v7790 = vld [vmem:[%s6 + $0x6c] sm:$0xf]
        %v7791 = vld [vmem:[%s6 + $0x70] sm:$0xf]
        %v7792 = vld [vmem:[%s6 + $0x74] sm:$0xf]
        %v7793 = vld [vmem:[%s6 + $0x78] sm:$0xf]
        %v7794 = vld [vmem:[%s6 + $0x7c] sm:$0xf]
        %v7795 = vld [vmem:[%s6 + $0x80] sm:$0xf]
        %v7796 = vld [vmem:[%s6 + $0x84] sm:$0xf]
        %v7797 = vld [vmem:[%s6 + $0x88] sm:$0xf]
        %v7798 = vld [vmem:[%s6 + $0x8c] sm:$0xf]
        %v7799 = vld [vmem:[%s6 + $0x90] sm:$0xf]
        %v7800 = vld [vmem:[%s6 + $0x94] sm:$0xf]
        %v7801 = vld [vmem:[%s6 + $0x98] sm:$0xf]
        %v7802 = vld [vmem:[%s6 + $0x9c] sm:$0xf]
        %v7803 = vld [vmem:[%s6 + $0xa0] sm:$0xf]
        %v7804 = vld [vmem:[%s6 + $0xa4] sm:$0xf]
        %v7805 = vld [vmem:[%s6 + $0xa8] sm:$0xf]
        %v7806 = vld [vmem:[%s6 + $0xac] sm:$0xf]
        %v7807 = vld [vmem:[%s6 + $0xb0] sm:$0xf]
        %v7808 = vld [vmem:[%s6 + $0xb4] sm:$0xf]
        %v7809 = vld [vmem:[%s6 + $0xb8] sm:$0xf]
        %v7810 = vld [vmem:[%s6 + $0xbc] sm:$0xf]
        %v7811 = vld [vmem:[%s6 + $0xc0] sm:$0xf]
        %v7812 = vld [vmem:[%s6 + $0xc4] sm:$0xf]
        %v7813 = vld [vmem:[%s6 + $0xc8] sm:$0xf]
        %v7814 = vld [vmem:[%s6 + $0xcc] sm:$0xf]
        %v7815 = vld [vmem:[%s6 + $0xd0] sm:$0xf]
        %v7816 = vld [vmem:[%s6 + $0xd4] sm:$0xf]
        %v7817 = vld [vmem:[%s6 + $0xd8] sm:$0xf]
        %v7818 = vld [vmem:[%s6 + $0xdc] sm:$0xf]
        %v7819 = vld [vmem:[%s6 + $0xe0] sm:$0xf]
        %v7820 = vld [vmem:[%s6 + $0xe4] sm:$0xf]
        %v7821 = vld [vmem:[%s6 + $0xe8] sm:$0xf]
        %v7822 = vld [vmem:[%s6 + $0xec] sm:$0xf]
        %v7823 = vld [vmem:[%s6 + $0xf0] sm:$0xf]
        %v7824 = vld [vmem:[%s6 + $0xf4] sm:$0xf]
        %v7825 = vld [vmem:[%s6 + $0xf8] sm:$0xf]
        %v7826 = vld [vmem:[%s6 + $0xfc] sm:$0xf]
        %v7827 = vld [vmem:[%s6 + $0x100] sm:$0xf]
        %v7828 = vld [vmem:[%s6 + $0x104] sm:$0xf]
        %v7829 = vld [vmem:[%s6 + $0x108] sm:$0xf]
        %v7830 = vld [vmem:[%s6 + $0x10c] sm:$0xf]
        %v7831 = vld [vmem:[%s6 + $0x110] sm:$0xf]
        %v7832 = vld [vmem:[%s6 + $0x114] sm:$0xf]
        %v7833 = vld [vmem:[%s6 + $0x118] sm:$0xf]
        %v7834 = vld [vmem:[%s6 + $0x11c] sm:$0xf]
        %v7835 = vld [vmem:[%s6 + $0x120] sm:$0xf]
        %v7836 = vld [vmem:[%s6 + $0x124] sm:$0xf]
        %v7837 = vld [vmem:[%s6 + $0x128] sm:$0xf]
        %v7838 = vld [vmem:[%s6 + $0x12c] sm:$0xf]
        %v7839 = vld [vmem:[%s6 + $0x130] sm:$0xf]
        %v7840 = vld [vmem:[%s6 + $0x134] sm:$0xf]
        %v7841 = vld [vmem:[%s6 + $0x138] sm:$0xf]
        %v7842 = vld [vmem:[%s6 + $0x13c] sm:$0xf]
        %v7843 = vld [vmem:[%s6 + $0x140] sm:$0xf]
        %v7844 = vld [vmem:[%s6 + $0x144] sm:$0xf]
        %v7845 = vld [vmem:[%s6 + $0x148] sm:$0xf]
        %v7846 = vld [vmem:[%s6 + $0x14c] sm:$0xf]
        %v7847 = vld [vmem:[%s6 + $0x150] sm:$0xf]
        %v7848 = vld [vmem:[%s6 + $0x154] sm:$0xf]
        %v7849 = vld [vmem:[%s6 + $0x158] sm:$0xf]
        %v7850 = vld [vmem:[%s6 + $0x15c] sm:$0xf]
        %v7851 = vld [vmem:[%s6 + $0x160] sm:$0xf]
        %v7852 = vld [vmem:[%s6 + $0x164] sm:$0xf]
        %v7853 = vld [vmem:[%s6 + $0x168] sm:$0xf]
        %v7854 = vld [vmem:[%s6 + $0x16c] sm:$0xf]
        %v7855 = vld [vmem:[%s6 + $0x170] sm:$0xf]
        %v7856 = vld [vmem:[%s6 + $0x174] sm:$0xf]
        %v7857 = vld [vmem:[%s6 + $0x178] sm:$0xf]
        %v7858 = vld [vmem:[%s6 + $0x17c] sm:$0xf]
        %v7859 = vld [vmem:[%s6 + $0x180] sm:$0xf]
        %v7860 = vld [vmem:[%s6 + $0x184] sm:$0xf]
        %v7861 = vld [vmem:[%s6 + $0x188] sm:$0xf]
        %v7862 = vld [vmem:[%s6 + $0x18c] sm:$0xf]
        %v7863 = vld [vmem:[%s6 + $0x190] sm:$0xf]
        %v7864 = vld [vmem:[%s6 + $0x194] sm:$0xf]
        %v7865 = vld [vmem:[%s6 + $0x198] sm:$0xf]
        %v7866 = vld [vmem:[%s6 + $0x19c] sm:$0xf]
        %v7867 = vld [vmem:[%s6 + $0x1a0] sm:$0xf]
        %v7868 = vld [vmem:[%s6 + $0x1a4] sm:$0xf]
        %v7869 = vld [vmem:[%s6 + $0x1a8] sm:$0xf]
        %v7870 = vld [vmem:[%s6 + $0x1ac] sm:$0xf]
        %v7871 = vld [vmem:[%s6 + $0x1b0] sm:$0xf]
        %v7872 = vld [vmem:[%s6 + $0x1b4] sm:$0xf]
        %v7873 = vld [vmem:[%s6 + $0x1b8] sm:$0xf]
        %v7874 = vld [vmem:[%s6 + $0x1bc] sm:$0xf]
        %v7875 = vld [vmem:[%s6 + $0x1c0] sm:$0xf]
        %v7876 = vld [vmem:[%s6 + $0x1c4] sm:$0xf]
        %v7877 = vld [vmem:[%s6 + $0x1c8] sm:$0xf]
        %v7878 = vld [vmem:[%s6 + $0x1cc] sm:$0xf]
        %v7879 = vld [vmem:[%s6 + $0x1d0] sm:$0xf]
        %v7880 = vld [vmem:[%s6 + $0x1d4] sm:$0xf]
        %v7881 = vld [vmem:[%s6 + $0x1d8] sm:$0xf]
        %v7882 = vld [vmem:[%s6 + $0x1dc] sm:$0xf]
        %v7883 = vld [vmem:[%s6 + $0x1e0] sm:$0xf]
        %v7884 = vld [vmem:[%s6 + $0x1e4] sm:$0xf]
        %v7885 = vld [vmem:[%s6 + $0x1e8] sm:$0xf]
        %v7886 = vld [vmem:[%s6 + $0x1ec] sm:$0xf]
        %v7887 = vld [vmem:[%s6 + $0x1f0] sm:$0xf]
        %v7888 = vld [vmem:[%s6 + $0x1f4] sm:$0xf]
        %v7889 = vld [vmem:[%s6 + $0x1f8] sm:$0xf]
        %v7890 = vld [vmem:[%s6 + $0x1fc] sm:$0xf]
        %v7891 = vld [vmem:[%s6 + $0x200] sm:$0xf]
        %v7892 = vld [vmem:[%s6 + $0x204] sm:$0xf]
        %v7893 = vld [vmem:[%s6 + $0x208] sm:$0xf]
        %v7894 = vld [vmem:[%s6 + $0x20c] sm:$0xf]
        %v7895 = vld [vmem:[%s6 + $0x210] sm:$0xf]
        %v7896 = vld [vmem:[%s6 + $0x214] sm:$0xf]
        %v7897 = vld [vmem:[%s6 + $0x218] sm:$0xf]
        %v7898 = vld [vmem:[%s6 + $0x21c] sm:$0xf]
        %v7899 = vld [vmem:[%s6 + $0x220] sm:$0xf]
        %v7900 = vld [vmem:[%s6 + $0x224] sm:$0xf]
        %v7901 = vld [vmem:[%s6 + $0x228] sm:$0xf]
        %v7902 = vld [vmem:[%s6 + $0x22c] sm:$0xf]
        %v7903 = vld [vmem:[%s6 + $0x230] sm:$0xf]
        %v7904 = vld [vmem:[%s6 + $0x234] sm:$0xf]
        %v7905 = vld [vmem:[%s6 + $0x238] sm:$0xf]
        %v7906 = vld [vmem:[%s6 + $0x23c] sm:$0xf]
        %v7907 = vld [vmem:[%s8 + $0x6] sm:$0x1]
        %v7908 = vlaneseq
        %v7909 = vshrl.u32 %v7908, 7
        %v7910 = vsub.s32 0, %v7909
        %v7911 = vrot.slane %v7907, %v7910
        %v8056 = vunpack.c.l.b16 %v7763
        %v8057 = vunpack.c.l.b16 %v7764
        %v8058 = vunpack.c.l.b16 %v7765
        %v8059 = vunpack.c.l.b16 %v7766
        %v8060 = vunpack.c.l.b16 %v7767
        %v8061 = vunpack.c.l.b16 %v7768
        %v8062 = vunpack.c.l.b16 %v7769
        %v8063 = vunpack.c.l.b16 %v7770
        %v8064 = vunpack.c.l.b16 %v7771
        %v8065 = vunpack.c.l.b16 %v7772
        %v8066 = vunpack.c.l.b16 %v7773
        %v8067 = vunpack.c.l.b16 %v7774
        %v8068 = vunpack.c.l.b16 %v7775
        %v8069 = vunpack.c.l.b16 %v7776
        %v8070 = vunpack.c.l.b16 %v7777
        %v8071 = vunpack.c.l.b16 %v7778
        %v8072 = vunpack.c.l.b16 %v7779
        %v8073 = vunpack.c.l.b16 %v7780
        %v8074 = vunpack.c.l.b16 %v7781
        %v8075 = vunpack.c.l.b16 %v7782
        %v8076 = vunpack.c.l.b16 %v7783
        %v8077 = vunpack.c.l.b16 %v7784
        %v8078 = vunpack.c.l.b16 %v7785
        %v8079 = vunpack.c.l.b16 %v7786
        %v8080 = vunpack.c.l.b16 %v7787
        %v8081 = vunpack.c.l.b16 %v7788
        %v8082 = vunpack.c.l.b16 %v7789
        %v8083 = vunpack.c.l.b16 %v7790
        %v8084 = vunpack.c.l.b16 %v7791
        %v8085 = vunpack.c.l.b16 %v7792
        %v8086 = vunpack.c.l.b16 %v7793
        %v8087 = vunpack.c.l.b16 %v7794
        %v8088 = vunpack.c.l.b16 %v7795
        %v8089 = vunpack.c.l.b16 %v7796
        %v8090 = vunpack.c.l.b16 %v7797
        %v8091 = vunpack.c.l.b16 %v7798
        %v8092 = vunpack.c.l.b16 %v7799
        %v8093 = vunpack.c.l.b16 %v7800
        %v8094 = vunpack.c.l.b16 %v7801
        %v8095 = vunpack.c.l.b16 %v7802
        %v8096 = vunpack.c.l.b16 %v7803
        %v8097 = vunpack.c.l.b16 %v7804
        %v8098 = vunpack.c.l.b16 %v7805
        %v8099 = vunpack.c.l.b16 %v7806
        %v8100 = vunpack.c.l.b16 %v7807
        %v8101 = vunpack.c.l.b16 %v7808
        %v8102 = vunpack.c.l.b16 %v7809
        %v8103 = vunpack.c.l.b16 %v7810
        %v8104 = vunpack.c.l.b16 %v7811
        %v8105 = vunpack.c.l.b16 %v7812
        %v8106 = vunpack.c.l.b16 %v7813
        %v8107 = vunpack.c.l.b16 %v7814
        %v8108 = vunpack.c.l.b16 %v7815
        %v8109 = vunpack.c.l.b16 %v7816
        %v8110 = vunpack.c.l.b16 %v7817
        %v8111 = vunpack.c.l.b16 %v7818
        %v8112 = vunpack.c.l.b16 %v7819
        %v8113 = vunpack.c.l.b16 %v7820
        %v8114 = vunpack.c.l.b16 %v7821
        %v8115 = vunpack.c.l.b16 %v7822
        %v8116 = vunpack.c.l.b16 %v7823
        %v8117 = vunpack.c.l.b16 %v7824
        %v8118 = vunpack.c.l.b16 %v7825
        %v8119 = vunpack.c.l.b16 %v7826
        %v8120 = vunpack.c.l.b16 %v7827
        %v8121 = vunpack.c.l.b16 %v7828
        %v8122 = vunpack.c.l.b16 %v7829
        %v8123 = vunpack.c.l.b16 %v7830
        %v8124 = vunpack.c.l.b16 %v7831
        %v8125 = vunpack.c.l.b16 %v7832
        %v8126 = vunpack.c.l.b16 %v7833
        %v8127 = vunpack.c.l.b16 %v7834
        %v8128 = vunpack.c.l.b16 %v7835
        %v8129 = vunpack.c.l.b16 %v7836
        %v8130 = vunpack.c.l.b16 %v7837
        %v8131 = vunpack.c.l.b16 %v7838
        %v8132 = vunpack.c.l.b16 %v7839
        %v8133 = vunpack.c.l.b16 %v7840
        %v8134 = vunpack.c.l.b16 %v7841
        %v8135 = vunpack.c.l.b16 %v7842
        %v8136 = vunpack.c.l.b16 %v7843
        %v8137 = vunpack.c.l.b16 %v7844
        %v8138 = vunpack.c.l.b16 %v7845
        %v8139 = vunpack.c.l.b16 %v7846
        %v8140 = vunpack.c.l.b16 %v7847
        %v8141 = vunpack.c.l.b16 %v7848
        %v8142 = vunpack.c.l.b16 %v7849
        %v8143 = vunpack.c.l.b16 %v7850
        %v8144 = vunpack.c.l.b16 %v7851
        %v8145 = vunpack.c.l.b16 %v7852
        %v8146 = vunpack.c.l.b16 %v7853
        %v8147 = vunpack.c.l.b16 %v7854
        %v8148 = vunpack.c.l.b16 %v7855
        %v8149 = vunpack.c.l.b16 %v7856
        %v8150 = vunpack.c.l.b16 %v7857
        %v8151 = vunpack.c.l.b16 %v7858
        %v8152 = vunpack.c.l.b16 %v7859
        %v8153 = vunpack.c.l.b16 %v7860
        %v8154 = vunpack.c.l.b16 %v7861
        %v8155 = vunpack.c.l.b16 %v7862
        %v8156 = vunpack.c.l.b16 %v7863
        %v8157 = vunpack.c.l.b16 %v7864
        %v8158 = vunpack.c.l.b16 %v7865
        %v8159 = vunpack.c.l.b16 %v7866
        %v8160 = vunpack.c.l.b16 %v7867
        %v8161 = vunpack.c.l.b16 %v7868
        %v8162 = vunpack.c.l.b16 %v7869
        %v8163 = vunpack.c.l.b16 %v7870
        %v8164 = vunpack.c.l.b16 %v7871
        %v8165 = vunpack.c.l.b16 %v7872
        %v8166 = vunpack.c.l.b16 %v7873
        %v8167 = vunpack.c.l.b16 %v7874
        %v8168 = vunpack.c.l.b16 %v7875
        %v8169 = vunpack.c.l.b16 %v7876
        %v8170 = vunpack.c.l.b16 %v7877
        %v8171 = vunpack.c.l.b16 %v7878
        %v8172 = vunpack.c.l.b16 %v7879
        %v8173 = vunpack.c.l.b16 %v7880
        %v8174 = vunpack.c.l.b16 %v7881
        %v8175 = vunpack.c.l.b16 %v7882
        %v8176 = vunpack.c.l.b16 %v7883
        %v8177 = vunpack.c.l.b16 %v7884
        %v8178 = vunpack.c.l.b16 %v7885
        %v8179 = vunpack.c.l.b16 %v7886
        %v8180 = vunpack.c.l.b16 %v7887
        %v8181 = vunpack.c.l.b16 %v7888
        %v8182 = vunpack.c.l.b16 %v7889
        %v8183 = vunpack.c.l.b16 %v7890
        %v8184 = vunpack.c.l.b16 %v7891
        %v8185 = vunpack.c.l.b16 %v7892
        %v8186 = vunpack.c.l.b16 %v7893
        %v8187 = vunpack.c.l.b16 %v7894
        %v8188 = vunpack.c.l.b16 %v7895
        %v8189 = vunpack.c.l.b16 %v7896
        %v8190 = vunpack.c.l.b16 %v7897
        %v8191 = vunpack.c.l.b16 %v7898
        %v8192 = vunpack.c.l.b16 %v7899
        %v8193 = vunpack.c.l.b16 %v7900
        %v8194 = vunpack.c.l.b16 %v7901
        %v8195 = vunpack.c.l.b16 %v7902
        %v8196 = vunpack.c.l.b16 %v7903
        %v8197 = vunpack.c.l.b16 %v7904
        %v8198 = vunpack.c.l.b16 %v7905
        %v8199 = vunpack.c.l.b16 %v7906
        %v8200 = vpack.c.b16 %v8057, %v8056
        %v8201 = vpack.c.b16 %v8059, %v8058
        %v8202 = vpack.c.b16 %v8061, %v8060
        %v8203 = vpack.c.b16 %v8063, %v8062
        %v8204 = vpack.c.b16 %v8065, %v8064
        %v8205 = vpack.c.b16 %v8067, %v8066
        %v8206 = vpack.c.b16 %v8069, %v8068
        %v8207 = vpack.c.b16 %v8071, %v8070
        %v8208 = vpack.c.b16 %v8073, %v8072
        %v8209 = vpack.c.b16 %v8075, %v8074
        %v8210 = vpack.c.b16 %v8077, %v8076
        %v8211 = vpack.c.b16 %v8079, %v8078
        %v8212 = vpack.c.b16 %v8081, %v8080
        %v8213 = vpack.c.b16 %v8083, %v8082
        %v8214 = vpack.c.b16 %v8085, %v8084
        %v8215 = vpack.c.b16 %v8087, %v8086
        %v8216 = vpack.c.b16 %v8089, %v8088
        %v8217 = vpack.c.b16 %v8091, %v8090
        %v8218 = vpack.c.b16 %v8093, %v8092
        %v8219 = vpack.c.b16 %v8095, %v8094
        %v8220 = vpack.c.b16 %v8097, %v8096
        %v8221 = vpack.c.b16 %v8099, %v8098
        %v8222 = vpack.c.b16 %v8101, %v8100
        %v8223 = vpack.c.b16 %v8103, %v8102
        %v8224 = vpack.c.b16 %v8105, %v8104
        %v8225 = vpack.c.b16 %v8107, %v8106
        %v8226 = vpack.c.b16 %v8109, %v8108
        %v8227 = vpack.c.b16 %v8111, %v8110
        %v8228 = vpack.c.b16 %v8113, %v8112
        %v8229 = vpack.c.b16 %v8115, %v8114
        %v8230 = vpack.c.b16 %v8117, %v8116
        %v8231 = vpack.c.b16 %v8119, %v8118
        %v8232 = vpack.c.b16 %v8121, %v8120
        %v8233 = vpack.c.b16 %v8123, %v8122
        %v8234 = vpack.c.b16 %v8125, %v8124
        %v8235 = vpack.c.b16 %v8127, %v8126
        %v8236 = vpack.c.b16 %v8129, %v8128
        %v8237 = vpack.c.b16 %v8131, %v8130
        %v8238 = vpack.c.b16 %v8133, %v8132
        %v8239 = vpack.c.b16 %v8135, %v8134
        %v8240 = vpack.c.b16 %v8137, %v8136
        %v8241 = vpack.c.b16 %v8139, %v8138
        %v8242 = vpack.c.b16 %v8141, %v8140
        %v8243 = vpack.c.b16 %v8143, %v8142
        %v8244 = vpack.c.b16 %v8145, %v8144
        %v8245 = vpack.c.b16 %v8147, %v8146
        %v8246 = vpack.c.b16 %v8149, %v8148
        %v8247 = vpack.c.b16 %v8151, %v8150
        %v8248 = vpack.c.b16 %v8153, %v8152
        %v8249 = vpack.c.b16 %v8155, %v8154
        %v8250 = vpack.c.b16 %v8157, %v8156
        %v8251 = vpack.c.b16 %v8159, %v8158
        %v8252 = vpack.c.b16 %v8161, %v8160
        %v8253 = vpack.c.b16 %v8163, %v8162
        %v8254 = vpack.c.b16 %v8165, %v8164
        %v8255 = vpack.c.b16 %v8167, %v8166
        %v8256 = vpack.c.b16 %v8169, %v8168
        %v8257 = vpack.c.b16 %v8171, %v8170
        %v8258 = vpack.c.b16 %v8173, %v8172
        %v8259 = vpack.c.b16 %v8175, %v8174
        %v8260 = vpack.c.b16 %v8177, %v8176
        %v8261 = vpack.c.b16 %v8179, %v8178
        %v8262 = vpack.c.b16 %v8181, %v8180
        %v8263 = vpack.c.b16 %v8183, %v8182
        %v8264 = vpack.c.b16 %v8185, %v8184
        %v8265 = vpack.c.b16 %v8187, %v8186
        %v8266 = vpack.c.b16 %v8189, %v8188
        %v8267 = vpack.c.b16 %v8191, %v8190
        %v8268 = vpack.c.b16 %v8193, %v8192
        %v8269 = vpack.c.b16 %v8195, %v8194
        %v8270 = vpack.c.b16 %v8197, %v8196
        %v8271 = vpack.c.b16 %v8199, %v8198
        %8344 = vmatprep.subr.bf16.mxu0 0
        %8345 = vmatpush1.bf16.msra.mxu0 %v8200
        %8346 = vmatprep.subr.bf16.mxu0 0
        %8347 = vmatpush1.bf16.msra.mxu0 %v8201
        %8348 = vmatprep.subr.bf16.mxu0 0
        %8349 = vmatpush1.bf16.msra.mxu0 %v8202
        %8350 = vmatprep.subr.bf16.mxu0 0
        %8351 = vmatpush1.bf16.msra.mxu0 %v8203
        %8352 = vmatprep.subr.bf16.mxu0 0
        %8353 = vmatpush1.bf16.msra.mxu0 %v8204
        %8354 = vmatprep.subr.bf16.mxu0 0
        %8355 = vmatpush1.bf16.msra.mxu0 %v8205
        %8356 = vmatprep.subr.bf16.mxu0 0
        %8357 = vmatpush1.bf16.msra.mxu0 %v8206
        %8358 = vmatprep.subr.bf16.mxu0 0
        %8359 = vmatpush1.bf16.msra.mxu0 %v8207
        %8360 = vmatprep.subr.bf16.mxu0 0
        %8361 = vmatpush1.bf16.msra.mxu0 %v8208
        %8362 = vmatprep.subr.bf16.mxu0 0
        %8363 = vmatpush1.bf16.msra.mxu0 %v8209
        %8364 = vmatprep.subr.bf16.mxu0 0
        %8365 = vmatpush1.bf16.msra.mxu0 %v8210
        %8366 = vmatprep.subr.bf16.mxu0 0
        %8367 = vmatpush1.bf16.msra.mxu0 %v8211
        %8368 = vmatprep.subr.bf16.mxu0 0
        %8369 = vmatpush1.bf16.msra.mxu0 %v8212
        %8370 = vmatprep.subr.bf16.mxu0 0
        %8371 = vmatpush1.bf16.msra.mxu0 %v8213
        %8372 = vmatprep.subr.bf16.mxu0 0
        %8373 = vmatpush1.bf16.msra.mxu0 %v8214
        %8374 = vmatprep.subr.bf16.mxu0 0
        %8375 = vmatpush1.bf16.msra.mxu0 %v8215
        %8376 = vmatprep.mubr.bf16.mxu0 %v7620
        %8377 = vmatmul.mubr.bf16.gmra.mrb[0].mxu0 %v7619
        %v8378 = vpop.f32.mrb[0].mxu0
        %v8379 = vadd.f32 %v7911, %v8378
        %v8380 = vpop.f32.mrb[0].mxu0
        %v8381 = vpop.f32.mrb[0].mxu0
        %v8382 = vadd.f32 %v7911, %v8381
        %v8383 = vpop.f32.mrb[0].mxu0
        %8384 = vmatprep.mubr.bf16.mxu0 %v7629
        %8385 = vmatmul.mubr.bf16.gmra.mrb[0].mxu0 %v7628
        %v8386 = vpop.f32.mrb[0].mxu0
        %v8387 = vadd.f32 %v7911, %v8386
        %v8388 = vpop.f32.mrb[0].mxu0
        %v8389 = vpop.f32.mrb[0].mxu0
        %v8390 = vadd.f32 %v7911, %v8389
        %v8391 = vpop.f32.mrb[0].mxu0
        %8392 = vmatprep.mubr.bf16.mxu0 %v7638
        %8393 = vmatmul.mubr.bf16.gmra.mrb[0].mxu0 %v7637
        %v8394 = vpop.f32.mrb[0].mxu0
        %v8395 = vadd.f32 %v7911, %v8394
        %v8396 = vpop.f32.mrb[0].mxu0
        %v8397 = vpop.f32.mrb[0].mxu0
        %v8398 = vadd.f32 %v7911, %v8397
        %v8399 = vpop.f32.mrb[0].mxu0
        %8400 = vmatprep.mubr.bf16.mxu0 %v7647
        %8401 = vmatmul.mubr.bf16.gmra.mrb[0].mxu0 %v7646
        %v8402 = vpop.f32.mrb[0].mxu0
        %v8403 = vadd.f32 %v7911, %v8402
        %v8404 = vpop.f32.mrb[0].mxu0
        %v8405 = vpop.f32.mrb[0].mxu0
        %v8406 = vadd.f32 %v7911, %v8405
        %v8407 = vpop.f32.mrb[0].mxu0
        %8408 = vmatprep.mubr.bf16.mxu0 %v7656
        %8409 = vmatmul.mubr.bf16.gmra.mrb[0].mxu0 %v7655
        %v8410 = vpop.f32.mrb[0].mxu0
        %v8411 = vadd.f32 %v7911, %v8410
        %v8412 = vpop.f32.mrb[0].mxu0
        %v8413 = vpop.f32.mrb[0].mxu0
        %v8414 = vadd.f32 %v7911, %v8413
        %v8415 = vpop.f32.mrb[0].mxu0
        %8416 = vmatprep.mubr.bf16.mxu0 %v7665
        %8417 = vmatmul.mubr.bf16.gmra.mrb[0].mxu0 %v7664
        %v8418 = vpop.f32.mrb[0].mxu0
        %v8419 = vadd.f32 %v7911, %v8418
        %v8420 = vpop.f32.mrb[0].mxu0
        %v8421 = vpop.f32.mrb[0].mxu0
        %v8422 = vadd.f32 %v7911, %v8421
        %v8423 = vpop.f32.mrb[0].mxu0
        %8424 = vmatprep.mubr.bf16.mxu0 %v7674
        %8425 = vmatmul.mubr.bf16.gmra.mrb[0].mxu0 %v7673
        %v8426 = vpop.f32.mrb[0].mxu0
        %v8427 = vadd.f32 %v7911, %v8426
        %v8428 = vpop.f32.mrb[0].mxu0
        %v8429 = vpop.f32.mrb[0].mxu0
        %v8430 = vadd.f32 %v7911, %v8429
        %v8431 = vpop.f32.mrb[0].mxu0
        %8432 = vmatprep.mubr.bf16.mxu0 %v7683
        %8433 = vmatmul.mubr.bf16.gmra.mrb[0].mxu0 %v7682
        %v8434 = vpop.f32.mrb[0].mxu0
        %v8435 = vadd.f32 %v7911, %v8434
        %v8436 = vpop.f32.mrb[0].mxu0
        %v8437 = vpop.f32.mrb[0].mxu0
        %v8438 = vadd.f32 %v7911, %v8437
        %v8439 = vpop.f32.mrb[0].mxu0
        %8440 = vmatprep.mubr.bf16.mxu0 %v7692
        %8441 = vmatmul.mubr.bf16.gmra.mrb[0].mxu0 %v7691
        %v8442 = vpop.f32.mrb[0].mxu0
        %v8443 = vadd.f32 %v7911, %v8442
        %v8444 = vpop.f32.mrb[0].mxu0
        %v8445 = vpop.f32.mrb[0].mxu0
        %v8446 = vadd.f32 %v7911, %v8445
        %v8447 = vpop.f32.mrb[0].mxu0
        %8448 = vmatprep.mubr.bf16.mxu0 %v7701
        %8449 = vmatmul.mubr.bf16.gmra.mrb[0].mxu0 %v7700
        %v8450 = vpop.f32.mrb[0].mxu0
        %v8451 = vadd.f32 %v7911, %v8450
        %v8452 = vpop.f32.mrb[0].mxu0
        %v8453 = vpop.f32.mrb[0].mxu0
        %v8454 = vadd.f32 %v7911, %v8453
        %v8455 = vpop.f32.mrb[0].mxu0
        %8456 = vmatprep.mubr.bf16.mxu0 %v7710
        %8457 = vmatmul.mubr.bf16.gmra.mrb[0].mxu0 %v7709
        %v8458 = vpop.f32.mrb[0].mxu0
        %v8459 = vadd.f32 %v7911, %v8458
        %v8460 = vpop.f32.mrb[0].mxu0
        %v8461 = vpop.f32.mrb[0].mxu0
        %v8462 = vadd.f32 %v7911, %v8461
        %v8463 = vpop.f32.mrb[0].mxu0
        %8464 = vmatprep.mubr.bf16.mxu0 %v7719
        %8465 = vmatmul.mubr.bf16.gmra.mrb[0].mxu0 %v7718
        %v8466 = vpop.f32.mrb[0].mxu0
        %v8467 = vadd.f32 %v7911, %v8466
        %v8468 = vpop.f32.mrb[0].mxu0
        %v8469 = vpop.f32.mrb[0].mxu0
        %v8470 = vadd.f32 %v7911, %v8469
        %v8471 = vpop.f32.mrb[0].mxu0
        %8472 = vmatprep.mubr.bf16.mxu0 %v7728
        %8473 = vmatmul.mubr.bf16.gmra.mrb[0].mxu0 %v7727
        %v8474 = vpop.f32.mrb[0].mxu0
        %v8475 = vadd.f32 %v7911, %v8474
        %v8476 = vpop.f32.mrb[0].mxu0
        %v8477 = vpop.f32.mrb[0].mxu0
        %v8478 = vadd.f32 %v7911, %v8477
        %v8479 = vpop.f32.mrb[0].mxu0
        %8480 = vmatprep.mubr.bf16.mxu0 %v7737
        %8481 = vmatmul.mubr.bf16.gmra.mrb[0].mxu0 %v7736
        %v8482 = vpop.f32.mrb[0].mxu0
        %v8483 = vadd.f32 %v7911, %v8482
        %v8484 = vpop.f32.mrb[0].mxu0
        %v8485 = vpop.f32.mrb[0].mxu0
        %v8486 = vadd.f32 %v7911, %v8485
        %v8487 = vpop.f32.mrb[0].mxu0
        %8488 = vmatprep.mubr.bf16.mxu0 %v7746
        %8489 = vmatmul.mubr.bf16.gmra.mrb[0].mxu0 %v7745
        %v8490 = vpop.f32.mrb[0].mxu0
        %v8491 = vadd.f32 %v7911, %v8490
        %v8492 = vpop.f32.mrb[0].mxu0
        %v8493 = vpop.f32.mrb[0].mxu0
        %v8494 = vadd.f32 %v7911, %v8493
        %v8495 = vpop.f32.mrb[0].mxu0
        %8496 = vmatprep.mubr.bf16.mxu0 %v7755
        %8497 = vmatmul.mubr.bf16.gmra.mrb[0].mxu0 %v7754
        %v8498 = vpop.f32.mrb[0].mxu0
        %v8499 = vadd.f32 %v7911, %v8498
        %v8500 = vpop.f32.mrb[0].mxu0
        %v8501 = vpop.f32.mrb[0].mxu0
        %v8502 = vadd.f32 %v7911, %v8501
        %v8503 = vpop.f32.mrb[0].mxu0
        %8504 = vdwg.mxu0
        %8505 = vmatprep.subr.bf16.mxu0 0
        %8506 = vmatpush1.bf16.msra.mxu0 %v8216
        %8507 = vmatprep.subr.bf16.mxu0 0
        %8508 = vmatpush1.bf16.msra.mxu0 %v8217
        %8509 = vmatprep.subr.bf16.mxu0 0
        %8510 = vmatpush1.bf16.msra.mxu0 %v8218
        %8511 = vmatprep.subr.bf16.mxu0 0
        %8512 = vmatpush1.bf16.msra.mxu0 %v8219
        %8513 = vmatprep.subr.bf16.mxu0 0
        %8514 = vmatpush1.bf16.msra.mxu0 %v8220
        %8515 = vmatprep.subr.bf16.mxu0 0
        %8516 = vmatpush1.bf16.msra.mxu0 %v8221
        %8517 = vmatprep.subr.bf16.mxu0 0
        %8518 = vmatpush1.bf16.msra.mxu0 %v8222
        %8519 = vmatprep.subr.bf16.mxu0 0
        %8520 = vmatpush1.bf16.msra.mxu0 %v8223
        %8521 = vmatprep.subr.bf16.mxu0 0
        %8522 = vmatpush1.bf16.msra.mxu0 %v8224
        %8523 = vmatprep.subr.bf16.mxu0 0
        %8524 = vmatpush1.bf16.msra.mxu0 %v8225
        %8525 = vmatprep.subr.bf16.mxu0 0
        %8526 = vmatpush1.bf16.msra.mxu0 %v8226
        %8527 = vmatprep.subr.bf16.mxu0 0
        %8528 = vmatpush1.bf16.msra.mxu0 %v8227
        %8529 = vmatprep.subr.bf16.mxu0 0
        %8530 = vmatpush1.bf16.msra.mxu0 %v8228
        %8531 = vmatprep.subr.bf16.mxu0 0
        %8532 = vmatpush1.bf16.msra.mxu0 %v8229
        %8533 = vmatprep.subr.bf16.mxu0 0
        %8534 = vmatpush1.bf16.msra.mxu0 %v8230
        %8535 = vmatprep.subr.bf16.mxu0 0
        %8536 = vmatpush1.bf16.msra.mxu0 %v8231
        %8537 = vmatprep.mubr.bf16.mxu0 %v7622
        %8538 = vmatmul.mubr.bf16.gmra.mrb[0].mxu0 %v7621
        %v8539 = vpop.f32.mrb[0].mxu0
        %v8540 = vadd.f32 %v8379, %v8539
        %v8541 = vpop.f32.mrb[0].mxu0
        %v8542 = vpop.f32.mrb[0].mxu0
        %v8543 = vadd.f32 %v8382, %v8542
        %v8544 = vpop.f32.mrb[0].mxu0
        %8545 = vmatprep.mubr.bf16.mxu0 %v7631
        %8546 = vmatmul.mubr.bf16.gmra.mrb[0].mxu0 %v7630
        %v8547 = vpop.f32.mrb[0].mxu0
        %v8548 = vadd.f32 %v8387, %v8547
        %v8549 = vpop.f32.mrb[0].mxu0
        %v8550 = vpop.f32.mrb[0].mxu0
        %v8551 = vadd.f32 %v8390, %v8550
        %v8552 = vpop.f32.mrb[0].mxu0
        %8553 = vmatprep.mubr.bf16.mxu0 %v7640
        %8554 = vmatmul.mubr.bf16.gmra.mrb[0].mxu0 %v7639
        %v8555 = vpop.f32.mrb[0].mxu0
        %v8556 = vadd.f32 %v8395, %v8555
        %v8557 = vpop.f32.mrb[0].mxu0
        %v8558 = vpop.f32.mrb[0].mxu0
        %v8559 = vadd.f32 %v8398, %v8558
        %v8560 = vpop.f32.mrb[0].mxu0
        %8561 = vmatprep.mubr.bf16.mxu0 %v7649
        %8562 = vmatmul.mubr.bf16.gmra.mrb[0].mxu0 %v7648
        %v8563 = vpop.f32.mrb[0].mxu0
        %v8564 = vadd.f32 %v8403, %v8563
        %v8565 = vpop.f32.mrb[0].mxu0
        %v8566 = vpop.f32.mrb[0].mxu0
        %v8567 = vadd.f32 %v8406, %v8566
        %v8568 = vpop.f32.mrb[0].mxu0
        %8569 = vmatprep.mubr.bf16.mxu0 %v7658
        %8570 = vmatmul.mubr.bf16.gmra.mrb[0].mxu0 %v7657
        %v8571 = vpop.f32.mrb[0].mxu0
        %v8572 = vadd.f32 %v8411, %v8571
        %v8573 = vpop.f32.mrb[0].mxu0
        %v8574 = vpop.f32.mrb[0].mxu0
        %v8575 = vadd.f32 %v8414, %v8574
        %v8576 = vpop.f32.mrb[0].mxu0
        %8577 = vmatprep.mubr.bf16.mxu0 %v7667
        %8578 = vmatmul.mubr.bf16.gmra.mrb[0].mxu0 %v7666
        %v8579 = vpop.f32.mrb[0].mxu0
        %v8580 = vadd.f32 %v8419, %v8579
        %v8581 = vpop.f32.mrb[0].mxu0
        %v8582 = vpop.f32.mrb[0].mxu0
        %v8583 = vadd.f32 %v8422, %v8582
        %v8584 = vpop.f32.mrb[0].mxu0
        %8585 = vmatprep.mubr.bf16.mxu0 %v7676
        %8586 = vmatmul.mubr.bf16.gmra.mrb[0].mxu0 %v7675
        %v8587 = vpop.f32.mrb[0].mxu0
        %v8588 = vadd.f32 %v8427, %v8587
        %v8589 = vpop.f32.mrb[0].mxu0
        %v8590 = vpop.f32.mrb[0].mxu0
        %v8591 = vadd.f32 %v8430, %v8590
        %v8592 = vpop.f32.mrb[0].mxu0
        %8593 = vmatprep.mubr.bf16.mxu0 %v7685
        %8594 = vmatmul.mubr.bf16.gmra.mrb[0].mxu0 %v7684
        %v8595 = vpop.f32.mrb[0].mxu0
        %v8596 = vadd.f32 %v8435, %v8595
        %v8597 = vpop.f32.mrb[0].mxu0
        %v8598 = vpop.f32.mrb[0].mxu0
        %v8599 = vadd.f32 %v8438, %v8598
        %v8600 = vpop.f32.mrb[0].mxu0
        %8601 = vmatprep.mubr.bf16.mxu0 %v7694
        %8602 = vmatmul.mubr.bf16.gmra.mrb[0].mxu0 %v7693
        %v8603 = vpop.f32.mrb[0].mxu0
        %v8604 = vadd.f32 %v8443, %v8603
        %v8605 = vpop.f32.mrb[0].mxu0
        %v8606 = vpop.f32.mrb[0].mxu0
        %v8607 = vadd.f32 %v8446, %v8606
        %v8608 = vpop.f32.mrb[0].mxu0
        %8609 = vmatprep.mubr.bf16.mxu0 %v7703
        %8610 = vmatmul.mubr.bf16.gmra.mrb[0].mxu0 %v7702
        %v8611 = vpop.f32.mrb[0].mxu0
        %v8612 = vadd.f32 %v8451, %v8611
        %v8613 = vpop.f32.mrb[0].mxu0
        %v8614 = vpop.f32.mrb[0].mxu0
        %v8615 = vadd.f32 %v8454, %v8614
        %v8616 = vpop.f32.mrb[0].mxu0
        %8617 = vmatprep.mubr.bf16.mxu0 %v7712
        %8618 = vmatmul.mubr.bf16.gmra.mrb[0].mxu0 %v7711
        %v8619 = vpop.f32.mrb[0].mxu0
        %v8620 = vadd.f32 %v8459, %v8619
        %v8621 = vpop.f32.mrb[0].mxu0
        %v8622 = vpop.f32.mrb[0].mxu0
        %v8623 = vadd.f32 %v8462, %v8622
        %v8624 = vpop.f32.mrb[0].mxu0
        %8625 = vmatprep.mubr.bf16.mxu0 %v7721
        %8626 = vmatmul.mubr.bf16.gmra.mrb[0].mxu0 %v7720
        %v8627 = vpop.f32.mrb[0].mxu0
        %v8628 = vadd.f32 %v8467, %v8627
        %v8629 = vpop.f32.mrb[0].mxu0
        %v8630 = vpop.f32.mrb[0].mxu0
        %v8631 = vadd.f32 %v8470, %v8630
        %v8632 = vpop.f32.mrb[0].mxu0
        %8633 = vmatprep.mubr.bf16.mxu0 %v7730
        %8634 = vmatmul.mubr.bf16.gmra.mrb[0].mxu0 %v7729
        %v8635 = vpop.f32.mrb[0].mxu0
        %v8636 = vadd.f32 %v8475, %v8635
        %v8637 = vpop.f32.mrb[0].mxu0
        %v8638 = vpop.f32.mrb[0].mxu0
        %v8639 = vadd.f32 %v8478, %v8638
        %v8640 = vpop.f32.mrb[0].mxu0
        %8641 = vmatprep.mubr.bf16.mxu0 %v7739
        %8642 = vmatmul.mubr.bf16.gmra.mrb[0].mxu0 %v7738
        %v8643 = vpop.f32.mrb[0].mxu0
        %v8644 = vadd.f32 %v8483, %v8643
        %v8645 = vpop.f32.mrb[0].mxu0
        %v8646 = vpop.f32.mrb[0].mxu0
        %v8647 = vadd.f32 %v8486, %v8646
        %v8648 = vpop.f32.mrb[0].mxu0
        %8649 = vmatprep.mubr.bf16.mxu0 %v7748
        %8650 = vmatmul.mubr.bf16.gmra.mrb[0].mxu0 %v7747
        %v8651 = vpop.f32.mrb[0].mxu0
        %v8652 = vadd.f32 %v8491, %v8651
        %v8653 = vpop.f32.mrb[0].mxu0
        %v8654 = vpop.f32.mrb[0].mxu0
        %v8655 = vadd.f32 %v8494, %v8654
        %v8656 = vpop.f32.mrb[0].mxu0
        %8657 = vmatprep.mubr.bf16.mxu0 %v7757
        %8658 = vmatmul.mubr.bf16.gmra.mrb[0].mxu0 %v7756
        %v8659 = vpop.f32.mrb[0].mxu0
        %v8660 = vadd.f32 %v8499, %v8659
        %v8661 = vpop.f32.mrb[0].mxu0
        %v8662 = vpop.f32.mrb[0].mxu0
        %v8663 = vadd.f32 %v8502, %v8662
        %v8664 = vpop.f32.mrb[0].mxu0
        %8665 = vdwg.mxu0
        %8666 = vmatprep.subr.bf16.mxu0 0
        %8667 = vmatpush1.bf16.msra.mxu0 %v8232
        %8668 = vmatprep.subr.bf16.mxu0 0
        %8669 = vmatpush1.bf16.msra.mxu0 %v8233
        %8670 = vmatprep.subr.bf16.mxu0 0
        %8671 = vmatpush1.bf16.msra.mxu0 %v8234
        %8672 = vmatprep.subr.bf16.mxu0 0
        %8673 = vmatpush1.bf16.msra.mxu0 %v8235
        %8674 = vmatprep.subr.bf16.mxu0 0
        %8675 = vmatpush1.bf16.msra.mxu0 %v8236
        %8676 = vmatprep.subr.bf16.mxu0 0
        %8677 = vmatpush1.bf16.msra.mxu0 %v8237
        %8678 = vmatprep.subr.bf16.mxu0 0
        %8679 = vmatpush1.bf16.msra.mxu0 %v8238
        %8680 = vmatprep.subr.bf16.mxu0 0
        %8681 = vmatpush1.bf16.msra.mxu0 %v8239
        %8682 = vmatprep.subr.bf16.mxu0 0
        %8683 = vmatpush1.bf16.msra.mxu0 %v8240
        %8684 = vmatprep.subr.bf16.mxu0 0
        %8685 = vmatpush1.bf16.msra.mxu0 %v8241
        %8686 = vmatprep.subr.bf16.mxu0 0
        %8687 = vmatpush1.bf16.msra.mxu0 %v8242
        %8688 = vmatprep.subr.bf16.mxu0 0
        %8689 = vmatpush1.bf16.msra.mxu0 %v8243
        %8690 = vmatprep.subr.bf16.mxu0 0
        %8691 = vmatpush1.bf16.msra.mxu0 %v8244
        %8692 = vmatprep.subr.bf16.mxu0 0
        %8693 = vmatpush1.bf16.msra.mxu0 %v8245
        %8694 = vmatprep.subr.bf16.mxu0 0
        %8695 = vmatpush1.bf16.msra.mxu0 %v8246
        %8696 = vmatprep.subr.bf16.mxu0 0
        %8697 = vmatpush1.bf16.msra.mxu0 %v8247
        %8698 = vmatprep.mubr.bf16.mxu0 %v7624
        %8699 = vmatmul.mubr.bf16.gmra.mrb[0].mxu0 %v7623
        %v8700 = vpop.f32.mrb[0].mxu0
        %v8701 = vadd.f32 %v8540, %v8700
        %v8702 = vpop.f32.mrb[0].mxu0
        %v8703 = vpop.f32.mrb[0].mxu0
        %v8704 = vadd.f32 %v8543, %v8703
        %v8705 = vpop.f32.mrb[0].mxu0
        %8706 = vmatprep.mubr.bf16.mxu0 %v7633
        %8707 = vmatmul.mubr.bf16.gmra.mrb[0].mxu0 %v7632
        %v8708 = vpop.f32.mrb[0].mxu0
        %v8709 = vadd.f32 %v8548, %v8708
        %v8710 = vpop.f32.mrb[0].mxu0
        %v8711 = vpop.f32.mrb[0].mxu0
        %v8712 = vadd.f32 %v8551, %v8711
        %v8713 = vpop.f32.mrb[0].mxu0
        %8714 = vmatprep.mubr.bf16.mxu0 %v7642
        %8715 = vmatmul.mubr.bf16.gmra.mrb[0].mxu0 %v7641
        %v8716 = vpop.f32.mrb[0].mxu0
        %v8717 = vadd.f32 %v8556, %v8716
        %v8718 = vpop.f32.mrb[0].mxu0
        %v8719 = vpop.f32.mrb[0].mxu0
        %v8720 = vadd.f32 %v8559, %v8719
        %v8721 = vpop.f32.mrb[0].mxu0
        %8722 = vmatprep.mubr.bf16.mxu0 %v7651
        %8723 = vmatmul.mubr.bf16.gmra.mrb[0].mxu0 %v7650
        %v8724 = vpop.f32.mrb[0].mxu0
        %v8725 = vadd.f32 %v8564, %v8724
        %v8726 = vpop.f32.mrb[0].mxu0
        %v8727 = vpop.f32.mrb[0].mxu0
        %v8728 = vadd.f32 %v8567, %v8727
        %v8729 = vpop.f32.mrb[0].mxu0
        %8730 = vmatprep.mubr.bf16.mxu0 %v7660
        %8731 = vmatmul.mubr.bf16.gmra.mrb[0].mxu0 %v7659
        %v8732 = vpop.f32.mrb[0].mxu0
        %v8733 = vadd.f32 %v8572, %v8732
        %v8734 = vpop.f32.mrb[0].mxu0
        %v8735 = vpop.f32.mrb[0].mxu0
        %v8736 = vadd.f32 %v8575, %v8735
        %v8737 = vpop.f32.mrb[0].mxu0
        %8738 = vmatprep.mubr.bf16.mxu0 %v7669
        %8739 = vmatmul.mubr.bf16.gmra.mrb[0].mxu0 %v7668
        %v8740 = vpop.f32.mrb[0].mxu0
        %v8741 = vadd.f32 %v8580, %v8740
        %v8742 = vpop.f32.mrb[0].mxu0
        %v8743 = vpop.f32.mrb[0].mxu0
        %v8744 = vadd.f32 %v8583, %v8743
        %v8745 = vpop.f32.mrb[0].mxu0
        %8746 = vmatprep.mubr.bf16.mxu0 %v7678
        %8747 = vmatmul.mubr.bf16.gmra.mrb[0].mxu0 %v7677
        %v8748 = vpop.f32.mrb[0].mxu0
        %v8749 = vadd.f32 %v8588, %v8748
        %v8750 = vpop.f32.mrb[0].mxu0
        %v8751 = vpop.f32.mrb[0].mxu0
        %v8752 = vadd.f32 %v8591, %v8751
        %v8753 = vpop.f32.mrb[0].mxu0
        %8754 = vmatprep.mubr.bf16.mxu0 %v7687
        %8755 = vmatmul.mubr.bf16.gmra.mrb[0].mxu0 %v7686
        %v8756 = vpop.f32.mrb[0].mxu0
        %v8757 = vadd.f32 %v8596, %v8756
        %v8758 = vpop.f32.mrb[0].mxu0
        %v8759 = vpop.f32.mrb[0].mxu0
        %v8760 = vadd.f32 %v8599, %v8759
        %v8761 = vpop.f32.mrb[0].mxu0
        %8762 = vmatprep.mubr.bf16.mxu0 %v7696
        %8763 = vmatmul.mubr.bf16.gmra.mrb[0].mxu0 %v7695
        %v8764 = vpop.f32.mrb[0].mxu0
        %v8765 = vadd.f32 %v8604, %v8764
        %v8766 = vpop.f32.mrb[0].mxu0
        %v8767 = vpop.f32.mrb[0].mxu0
        %v8768 = vadd.f32 %v8607, %v8767
        %v8769 = vpop.f32.mrb[0].mxu0
        %8770 = vmatprep.mubr.bf16.mxu0 %v7705
        %8771 = vmatmul.mubr.bf16.gmra.mrb[0].mxu0 %v7704
        %v8772 = vpop.f32.mrb[0].mxu0
        %v8773 = vadd.f32 %v8612, %v8772
        %v8774 = vpop.f32.mrb[0].mxu0
        %v8775 = vpop.f32.mrb[0].mxu0
        %v8776 = vadd.f32 %v8615, %v8775
        %v8777 = vpop.f32.mrb[0].mxu0
        %8778 = vmatprep.mubr.bf16.mxu0 %v7714
        %8779 = vmatmul.mubr.bf16.gmra.mrb[0].mxu0 %v7713
        %v8780 = vpop.f32.mrb[0].mxu0
        %v8781 = vadd.f32 %v8620, %v8780
        %v8782 = vpop.f32.mrb[0].mxu0
        %v8783 = vpop.f32.mrb[0].mxu0
        %v8784 = vadd.f32 %v8623, %v8783
        %v8785 = vpop.f32.mrb[0].mxu0
        %8786 = vmatprep.mubr.bf16.mxu0 %v7723
        %8787 = vmatmul.mubr.bf16.gmra.mrb[0].mxu0 %v7722
        %v8788 = vpop.f32.mrb[0].mxu0
        %v8789 = vadd.f32 %v8628, %v8788
        %v8790 = vpop.f32.mrb[0].mxu0
        %v8791 = vpop.f32.mrb[0].mxu0
        %v8792 = vadd.f32 %v8631, %v8791
        %v8793 = vpop.f32.mrb[0].mxu0
        %8794 = vmatprep.mubr.bf16.mxu0 %v7732
        %8795 = vmatmul.mubr.bf16.gmra.mrb[0].mxu0 %v7731
        %v8796 = vpop.f32.mrb[0].mxu0
        %v8797 = vadd.f32 %v8636, %v8796
        %v8798 = vpop.f32.mrb[0].mxu0
        %v8799 = vpop.f32.mrb[0].mxu0
        %v8800 = vadd.f32 %v8639, %v8799
        %v8801 = vpop.f32.mrb[0].mxu0
        %8802 = vmatprep.mubr.bf16.mxu0 %v7741
        %8803 = vmatmul.mubr.bf16.gmra.mrb[0].mxu0 %v7740
        %v8804 = vpop.f32.mrb[0].mxu0
        %v8805 = vadd.f32 %v8644, %v8804
        %v8806 = vpop.f32.mrb[0].mxu0
        %v8807 = vpop.f32.mrb[0].mxu0
        %v8808 = vadd.f32 %v8647, %v8807
        %v8809 = vpop.f32.mrb[0].mxu0
        %8810 = vmatprep.mubr.bf16.mxu0 %v7750
        %8811 = vmatmul.mubr.bf16.gmra.mrb[0].mxu0 %v7749
        %v8812 = vpop.f32.mrb[0].mxu0
        %v8813 = vadd.f32 %v8652, %v8812
        %v8814 = vpop.f32.mrb[0].mxu0
        %v8815 = vpop.f32.mrb[0].mxu0
        %v8816 = vadd.f32 %v8655, %v8815
        %v8817 = vpop.f32.mrb[0].mxu0
        %8818 = vmatprep.mubr.bf16.mxu0 %v7759
        %8819 = vmatmul.mubr.bf16.gmra.mrb[0].mxu0 %v7758
        %v8820 = vpop.f32.mrb[0].mxu0
        %v8821 = vadd.f32 %v8660, %v8820
        %v8822 = vpop.f32.mrb[0].mxu0
        %v8823 = vpop.f32.mrb[0].mxu0
        %v8824 = vadd.f32 %v8663, %v8823
        %v8825 = vpop.f32.mrb[0].mxu0
        %8826 = vdwg.mxu0
        %8827 = vmatprep.subr.bf16.mxu0 0
        %8828 = vmatpush1.bf16.msra.mxu0 %v8248
        %8829 = vmatprep.subr.bf16.mxu0 0
        %8830 = vmatpush1.bf16.msra.mxu0 %v8249
        %8831 = vmatprep.subr.bf16.mxu0 0
        %8832 = vmatpush1.bf16.msra.mxu0 %v8250
        %8833 = vmatprep.subr.bf16.mxu0 0
        %8834 = vmatpush1.bf16.msra.mxu0 %v8251
        %8835 = vmatprep.subr.bf16.mxu0 0
        %8836 = vmatpush1.bf16.msra.mxu0 %v8252
        %8837 = vmatprep.subr.bf16.mxu0 0
        %8838 = vmatpush1.bf16.msra.mxu0 %v8253
        %8839 = vmatprep.subr.bf16.mxu0 0
        %8840 = vmatpush1.bf16.msra.mxu0 %v8254
        %8841 = vmatprep.subr.bf16.mxu0 0
        %8842 = vmatpush1.bf16.msra.mxu0 %v8255
        %8843 = vmatprep.subr.bf16.mxu0 0
        %8844 = vmatpush1.bf16.msra.mxu0 %v8256
        %8845 = vmatprep.subr.bf16.mxu0 0
        %8846 = vmatpush1.bf16.msra.mxu0 %v8257
        %8847 = vmatprep.subr.bf16.mxu0 0
        %8848 = vmatpush1.bf16.msra.mxu0 %v8258
        %8849 = vmatprep.subr.bf16.mxu0 0
        %8850 = vmatpush1.bf16.msra.mxu0 %v8259
        %8851 = vmatprep.subr.bf16.mxu0 0
        %8852 = vmatpush1.bf16.msra.mxu0 %v8260
        %8853 = vmatprep.subr.bf16.mxu0 0
        %8854 = vmatpush1.bf16.msra.mxu0 %v8261
        %8855 = vmatprep.subr.bf16.mxu0 0
        %8856 = vmatpush1.bf16.msra.mxu0 %v8262
        %8857 = vmatprep.subr.bf16.mxu0 0
        %8858 = vmatpush1.bf16.msra.mxu0 %v8263
        %8859 = vmatprep.mubr.bf16.mxu0 %v7626
        %8860 = vmatmul.mubr.bf16.gmra.mrb[0].mxu0 %v7625
        %v8861 = vpop.f32.mrb[0].mxu0
        %v8862 = vadd.f32 %v8701, %v8861
        %v8863 = vpop.f32.mrb[0].mxu0
        %v8864 = vpop.f32.mrb[0].mxu0
        %v8865 = vadd.f32 %v8704, %v8864
        %v8866 = vpop.f32.mrb[0].mxu0
        %8867 = vmatprep.mubr.bf16.mxu0 %v7635
        %8868 = vmatmul.mubr.bf16.gmra.mrb[0].mxu0 %v7634
        %v8869 = vpop.f32.mrb[0].mxu0
        %v8870 = vadd.f32 %v8709, %v8869
        %v8871 = vpop.f32.mrb[0].mxu0
        %v8872 = vpop.f32.mrb[0].mxu0
        %v8873 = vadd.f32 %v8712, %v8872
        %v8874 = vpop.f32.mrb[0].mxu0
        %8875 = vmatprep.mubr.bf16.mxu0 %v7644
        %8876 = vmatmul.mubr.bf16.gmra.mrb[0].mxu0 %v7643
        %v8877 = vpop.f32.mrb[0].mxu0
        %v8878 = vadd.f32 %v8717, %v8877
        %v8879 = vpop.f32.mrb[0].mxu0
        %v8880 = vpop.f32.mrb[0].mxu0
        %v8881 = vadd.f32 %v8720, %v8880
        %v8882 = vpop.f32.mrb[0].mxu0
        %8883 = vmatprep.mubr.bf16.mxu0 %v7653
        %8884 = vmatmul.mubr.bf16.gmra.mrb[0].mxu0 %v7652
        %v8885 = vpop.f32.mrb[0].mxu0
        %v8886 = vadd.f32 %v8725, %v8885
        %v8887 = vpop.f32.mrb[0].mxu0
        %v8888 = vpop.f32.mrb[0].mxu0
        %v8889 = vadd.f32 %v8728, %v8888
        %v8890 = vpop.f32.mrb[0].mxu0
        %8891 = vmatprep.mubr.bf16.mxu0 %v7662
        %8892 = vmatmul.mubr.bf16.gmra.mrb[0].mxu0 %v7661
        %v8893 = vpop.f32.mrb[0].mxu0
        %v8894 = vadd.f32 %v8733, %v8893
        %v8895 = vpop.f32.mrb[0].mxu0
        %v8896 = vpop.f32.mrb[0].mxu0
        %v8897 = vadd.f32 %v8736, %v8896
        %v8898 = vpop.f32.mrb[0].mxu0
        %8899 = vmatprep.mubr.bf16.mxu0 %v7671
        %8900 = vmatmul.mubr.bf16.gmra.mrb[0].mxu0 %v7670
        %v8901 = vpop.f32.mrb[0].mxu0
        %v8902 = vadd.f32 %v8741, %v8901
        %v8903 = vpop.f32.mrb[0].mxu0
        %v8904 = vpop.f32.mrb[0].mxu0
        %v8905 = vadd.f32 %v8744, %v8904
        %v8906 = vpop.f32.mrb[0].mxu0
        %8907 = vmatprep.mubr.bf16.mxu0 %v7680
        %8908 = vmatmul.mubr.bf16.gmra.mrb[0].mxu0 %v7679
        %v8909 = vpop.f32.mrb[0].mxu0
        %v8910 = vadd.f32 %v8749, %v8909
        %v8911 = vpop.f32.mrb[0].mxu0
        %v8912 = vpop.f32.mrb[0].mxu0
        %v8913 = vadd.f32 %v8752, %v8912
        %v8914 = vpop.f32.mrb[0].mxu0
        %8915 = vmatprep.mubr.bf16.mxu0 %v7689
        %8916 = vmatmul.mubr.bf16.gmra.mrb[0].mxu0 %v7688
        %v8917 = vpop.f32.mrb[0].mxu0
        %v8918 = vadd.f32 %v8757, %v8917
        %v8919 = vpop.f32.mrb[0].mxu0
        %v8920 = vpop.f32.mrb[0].mxu0
        %v8921 = vadd.f32 %v8760, %v8920
        %v8922 = vpop.f32.mrb[0].mxu0
        %8923 = vmatprep.mubr.bf16.mxu0 %v7698
        %8924 = vmatmul.mubr.bf16.gmra.mrb[0].mxu0 %v7697
        %v8925 = vpop.f32.mrb[0].mxu0
        %v8926 = vadd.f32 %v8765, %v8925
        %v8927 = vpop.f32.mrb[0].mxu0
        %v8928 = vpop.f32.mrb[0].mxu0
        %v8929 = vadd.f32 %v8768, %v8928
        %v8930 = vpop.f32.mrb[0].mxu0
        %8931 = vmatprep.mubr.bf16.mxu0 %v7707
        %8932 = vmatmul.mubr.bf16.gmra.mrb[0].mxu0 %v7706
        %v8933 = vpop.f32.mrb[0].mxu0
        %v8934 = vadd.f32 %v8773, %v8933
        %v8935 = vpop.f32.mrb[0].mxu0
        %v8936 = vpop.f32.mrb[0].mxu0
        %v8937 = vadd.f32 %v8776, %v8936
        %v8938 = vpop.f32.mrb[0].mxu0
        %8939 = vmatprep.mubr.bf16.mxu0 %v7716
        %8940 = vmatmul.mubr.bf16.gmra.mrb[0].mxu0 %v7715
        %v8941 = vpop.f32.mrb[0].mxu0
        %v8942 = vadd.f32 %v8781, %v8941
        %v8943 = vpop.f32.mrb[0].mxu0
        %v8944 = vpop.f32.mrb[0].mxu0
        %v8945 = vadd.f32 %v8784, %v8944
        %v8946 = vpop.f32.mrb[0].mxu0
        %8947 = vmatprep.mubr.bf16.mxu0 %v7725
        %8948 = vmatmul.mubr.bf16.gmra.mrb[0].mxu0 %v7724
        %v8949 = vpop.f32.mrb[0].mxu0
        %v8950 = vadd.f32 %v8789, %v8949
        %v8951 = vpop.f32.mrb[0].mxu0
        %v8952 = vpop.f32.mrb[0].mxu0
        %v8953 = vadd.f32 %v8792, %v8952
        %v8954 = vpop.f32.mrb[0].mxu0
        %8955 = vmatprep.mubr.bf16.mxu0 %v7734
        %8956 = vmatmul.mubr.bf16.gmra.mrb[0].mxu0 %v7733
        %v8957 = vpop.f32.mrb[0].mxu0
        %v8958 = vadd.f32 %v8797, %v8957
        %v8959 = vpop.f32.mrb[0].mxu0
        %v8960 = vpop.f32.mrb[0].mxu0
        %v8961 = vadd.f32 %v8800, %v8960
        %v8962 = vpop.f32.mrb[0].mxu0
        %8963 = vmatprep.mubr.bf16.mxu0 %v7743
        %8964 = vmatmul.mubr.bf16.gmra.mrb[0].mxu0 %v7742
        %v8965 = vpop.f32.mrb[0].mxu0
        %v8966 = vadd.f32 %v8805, %v8965
        %v8967 = vpop.f32.mrb[0].mxu0
        %v8968 = vpop.f32.mrb[0].mxu0
        %v8969 = vadd.f32 %v8808, %v8968
        %v8970 = vpop.f32.mrb[0].mxu0
        %8971 = vmatprep.mubr.bf16.mxu0 %v7752
        %8972 = vmatmul.mubr.bf16.gmra.mrb[0].mxu0 %v7751
        %v8973 = vpop.f32.mrb[0].mxu0
        %v8974 = vadd.f32 %v8813, %v8973
        %v8975 = vpop.f32.mrb[0].mxu0
        %v8976 = vpop.f32.mrb[0].mxu0
        %v8977 = vadd.f32 %v8816, %v8976
        %v8978 = vpop.f32.mrb[0].mxu0
        %8979 = vmatprep.mubr.bf16.mxu0 %v7761
        %8980 = vmatmul.mubr.bf16.gmra.mrb[0].mxu0 %v7760
        %v8981 = vpop.f32.mrb[0].mxu0
        %v8982 = vadd.f32 %v8821, %v8981
        %v8983 = vpop.f32.mrb[0].mxu0
        %v8984 = vpop.f32.mrb[0].mxu0
        %v8985 = vadd.f32 %v8824, %v8984
        %v8986 = vpop.f32.mrb[0].mxu0
        %8987 = vdwg.mxu0
        %8988 = vmatprep.subr.bf16.mxu0 0
        %8989 = vmatpush1.bf16.msra.mxu0 %v8264
        %8990 = vmatprep.subr.bf16.mxu0 0
        %8991 = vmatpush1.bf16.msra.mxu0 %v8265
        %8992 = vmatprep.subr.bf16.mxu0 0
        %8993 = vmatpush1.bf16.msra.mxu0 %v8266
        %8994 = vmatprep.subr.bf16.mxu0 0
        %8995 = vmatpush1.bf16.msra.mxu0 %v8267
        %8996 = vmatprep.subr.bf16.mxu0 0
        %8997 = vmatpush1.bf16.msra.mxu0 %v8268
        %8998 = vmatprep.subr.bf16.mxu0 0
        %8999 = vmatpush1.bf16.msra.mxu0 %v8269
        %9000 = vmatprep.subr.bf16.mxu0 0
        %9001 = vmatpush1.bf16.msra.mxu0 %v8270
        %9002 = vmatprep.subr.bf16.mxu0 0
        %9003 = vmatpush1.bf16.msra.mxu0 %v8271
        %9004 = vmatprep.subr.bf16.mxu0 0
        %9005 = vmatpush1.bf16.msra.mxu0 0
        %9006 = vmatprep.subr.bf16.mxu0 0
        %9007 = vmatpush1.bf16.msra.mxu0 0
        %9008 = vmatprep.subr.bf16.mxu0 0
        %9009 = vmatpush1.bf16.msra.mxu0 0
        %9010 = vmatprep.subr.bf16.mxu0 0
        %9011 = vmatpush1.bf16.msra.mxu0 0
        %9012 = vmatprep.subr.bf16.mxu0 0
        %9013 = vmatpush1.bf16.msra.mxu0 0
        %9014 = vmatprep.subr.bf16.mxu0 0
        %9015 = vmatpush1.bf16.msra.mxu0 0
        %9016 = vmatprep.subr.bf16.mxu0 0
        %9017 = vmatpush1.bf16.msra.mxu0 0
        %9018 = vmatprep.subr.bf16.mxu0 0
        %9019 = vmatpush1.bf16.msra.mxu0 0
        %9020 = vmatprep.mubr.bf16.mxu0 0
        %9021 = vmatmul.mubr.bf16.gmra.mrb[0].mxu0 %v7627
        %v9022 = vpop.f32.mrb[0].mxu0
        %v9023 = vadd.f32 %v8862, %v9022
        %v9024 = vpop.f32.mrb[0].mxu0
        %v9025 = vpop.f32.mrb[0].mxu0
        %v9026 = vadd.f32 %v8865, %v9025
        %v9027 = vpop.f32.mrb[0].mxu0
        %9028 = vmatprep.mubr.bf16.mxu0 0
        %9029 = vmatmul.mubr.bf16.gmra.mrb[0].mxu0 %v7636
        %v9030 = vpop.f32.mrb[0].mxu0
        %v9031 = vadd.f32 %v8870, %v9030
        %v9032 = vpop.f32.mrb[0].mxu0
        %v9033 = vpop.f32.mrb[0].mxu0
        %v9034 = vadd.f32 %v8873, %v9033
        %v9035 = vpop.f32.mrb[0].mxu0
        %9036 = vmatprep.mubr.bf16.mxu0 0
        %9037 = vmatmul.mubr.bf16.gmra.mrb[0].mxu0 %v7645
        %v9038 = vpop.f32.mrb[0].mxu0
        %v9039 = vadd.f32 %v8878, %v9038
        %v9040 = vpop.f32.mrb[0].mxu0
        %v9041 = vpop.f32.mrb[0].mxu0
        %v9042 = vadd.f32 %v8881, %v9041
        %v9043 = vpop.f32.mrb[0].mxu0
        %9044 = vmatprep.mubr.bf16.mxu0 0
        %9045 = vmatmul.mubr.bf16.gmra.mrb[0].mxu0 %v7654
        %v9046 = vpop.f32.mrb[0].mxu0
        %v9047 = vadd.f32 %v8886, %v9046
        %v9048 = vpop.f32.mrb[0].mxu0
        %v9049 = vpop.f32.mrb[0].mxu0
        %v9050 = vadd.f32 %v8889, %v9049
        %v9051 = vpop.f32.mrb[0].mxu0
        %9052 = vmatprep.mubr.bf16.mxu0 0
        %9053 = vmatmul.mubr.bf16.gmra.mrb[0].mxu0 %v7663
        %v9054 = vpop.f32.mrb[0].mxu0
        %v9055 = vadd.f32 %v8894, %v9054
        %v9056 = vpop.f32.mrb[0].mxu0
        %v9057 = vpop.f32.mrb[0].mxu0
        %v9058 = vadd.f32 %v8897, %v9057
        %v9059 = vpop.f32.mrb[0].mxu0
        %9060 = vmatprep.mubr.bf16.mxu0 0
        %9061 = vmatmul.mubr.bf16.gmra.mrb[0].mxu0 %v7672
        %v9062 = vpop.f32.mrb[0].mxu0
        %v9063 = vadd.f32 %v8902, %v9062
        %v9064 = vpop.f32.mrb[0].mxu0
        %v9065 = vpop.f32.mrb[0].mxu0
        %v9066 = vadd.f32 %v8905, %v9065
        %v9067 = vpop.f32.mrb[0].mxu0
        %9068 = vmatprep.mubr.bf16.mxu0 0
        %9069 = vmatmul.mubr.bf16.gmra.mrb[0].mxu0 %v7681
        %v9070 = vpop.f32.mrb[0].mxu0
        %v9071 = vadd.f32 %v8910, %v9070
        %v9072 = vpop.f32.mrb[0].mxu0
        %v9073 = vpop.f32.mrb[0].mxu0
        %v9074 = vadd.f32 %v8913, %v9073
        %v9075 = vpop.f32.mrb[0].mxu0
        %9076 = vmatprep.mubr.bf16.mxu0 0
        %9077 = vmatmul.mubr.bf16.gmra.mrb[0].mxu0 %v7690
        %v9078 = vpop.f32.mrb[0].mxu0
        %v9079 = vadd.f32 %v8918, %v9078
        %v9080 = vpop.f32.mrb[0].mxu0
        %v9081 = vpop.f32.mrb[0].mxu0
        %v9082 = vadd.f32 %v8921, %v9081
        %v9083 = vpop.f32.mrb[0].mxu0
        %9084 = vmatprep.mubr.bf16.mxu0 0
        %9085 = vmatmul.mubr.bf16.gmra.mrb[0].mxu0 %v7699
        %v9086 = vpop.f32.mrb[0].mxu0
        %v9087 = vadd.f32 %v8926, %v9086
        %v9088 = vpop.f32.mrb[0].mxu0
        %v9089 = vpop.f32.mrb[0].mxu0
        %v9090 = vadd.f32 %v8929, %v9089
        %v9091 = vpop.f32.mrb[0].mxu0
        %9092 = vmatprep.mubr.bf16.mxu0 0
        %9093 = vmatmul.mubr.bf16.gmra.mrb[0].mxu0 %v7708
        %v9094 = vpop.f32.mrb[0].mxu0
        %v9095 = vadd.f32 %v8934, %v9094
        %v9096 = vpop.f32.mrb[0].mxu0
        %v9097 = vpop.f32.mrb[0].mxu0
        %v9098 = vadd.f32 %v8937, %v9097
        %v9099 = vpop.f32.mrb[0].mxu0
        %9100 = vmatprep.mubr.bf16.mxu0 0
        %9101 = vmatmul.mubr.bf16.gmra.mrb[0].mxu0 %v7717
        %v9102 = vpop.f32.mrb[0].mxu0
        %v9103 = vadd.f32 %v8942, %v9102
        %v9104 = vpop.f32.mrb[0].mxu0
        %v9105 = vpop.f32.mrb[0].mxu0
        %v9106 = vadd.f32 %v8945, %v9105
        %v9107 = vpop.f32.mrb[0].mxu0
        %9108 = vmatprep.mubr.bf16.mxu0 0
        %9109 = vmatmul.mubr.bf16.gmra.mrb[0].mxu0 %v7726
        %v9110 = vpop.f32.mrb[0].mxu0
        %v9111 = vadd.f32 %v8950, %v9110
        %v9112 = vpop.f32.mrb[0].mxu0
        %v9113 = vpop.f32.mrb[0].mxu0
        %v9114 = vadd.f32 %v8953, %v9113
        %v9115 = vpop.f32.mrb[0].mxu0
        %9116 = vmatprep.mubr.bf16.mxu0 0
        %9117 = vmatmul.mubr.bf16.gmra.mrb[0].mxu0 %v7735
        %v9118 = vpop.f32.mrb[0].mxu0
        %v9119 = vadd.f32 %v8958, %v9118
        %v9120 = vpop.f32.mrb[0].mxu0
        %v9121 = vpop.f32.mrb[0].mxu0
        %v9122 = vadd.f32 %v8961, %v9121
        %v9123 = vpop.f32.mrb[0].mxu0
        %9124 = vmatprep.mubr.bf16.mxu0 0
        %9125 = vmatmul.mubr.bf16.gmra.mrb[0].mxu0 %v7744
        %v9126 = vpop.f32.mrb[0].mxu0
        %v9127 = vadd.f32 %v8966, %v9126
        %v9128 = vpop.f32.mrb[0].mxu0
        %v9129 = vpop.f32.mrb[0].mxu0
        %v9130 = vadd.f32 %v8969, %v9129
        %v9131 = vpop.f32.mrb[0].mxu0
        %9132 = vmatprep.mubr.bf16.mxu0 0
        %9133 = vmatmul.mubr.bf16.gmra.mrb[0].mxu0 %v7753
        %v9134 = vpop.f32.mrb[0].mxu0
        %v9135 = vadd.f32 %v8974, %v9134
        %v9136 = vpop.f32.mrb[0].mxu0
        %v9137 = vpop.f32.mrb[0].mxu0
        %v9138 = vadd.f32 %v8977, %v9137
        %v9139 = vpop.f32.mrb[0].mxu0
        %9140 = vmatprep.mubr.bf16.mxu0 0
        %9141 = vmatmul.mubr.bf16.gmra.mrb[0].mxu0 %v7762
        %v9142 = vpop.f32.mrb[0].mxu0
        %v9143 = vadd.f32 %v8982, %v9142
        %v9144 = vpop.f32.mrb[0].mxu0
        %v9145 = vpop.f32.mrb[0].mxu0
        %v9146 = vadd.f32 %v8985, %v9145
        %v9147 = vpop.f32.mrb[0].mxu0
        %9148 = vdwg.mxu0
        %v9149 = vmax.f32 %v9023, 0.0
        %v9150 = vmax.f32 %v9026, 0.0
        %v9151 = vmax.f32 %v9031, 0.0
        %v9152 = vmax.f32 %v9034, 0.0
        %v9153 = vmax.f32 %v9039, 0.0
        %v9154 = vmax.f32 %v9042, 0.0
        %v9155 = vmax.f32 %v9047, 0.0
        %v9156 = vmax.f32 %v9050, 0.0
        %v9157 = vmax.f32 %v9055, 0.0
        %v9158 = vmax.f32 %v9058, 0.0
        %v9159 = vmax.f32 %v9063, 0.0
        %v9160 = vmax.f32 %v9066, 0.0
        %v9161 = vmax.f32 %v9071, 0.0
        %v9162 = vmax.f32 %v9074, 0.0
        %v9163 = vmax.f32 %v9079, 0.0
        %v9164 = vmax.f32 %v9082, 0.0
        %v9165 = vmax.f32 %v9087, 0.0
        %v9166 = vmax.f32 %v9090, 0.0
        %v9167 = vmax.f32 %v9095, 0.0
        %v9168 = vmax.f32 %v9098, 0.0
        %v9169 = vmax.f32 %v9103, 0.0
        %v9170 = vmax.f32 %v9106, 0.0
        %v9171 = vmax.f32 %v9111, 0.0
        %v9172 = vmax.f32 %v9114, 0.0
        %v9173 = vmax.f32 %v9119, 0.0
        %v9174 = vmax.f32 %v9122, 0.0
        %v9175 = vmax.f32 %v9127, 0.0
        %v9176 = vmax.f32 %v9130, 0.0
        %v9177 = vmax.f32 %v9135, 0.0
        %v9178 = vmax.f32 %v9138, 0.0
        %v9179 = vmax.f32 %v9143, 0.0
        %v9180 = vmax.f32 %v9146, 0.0
        %9181 = vst [vmem:[%s373] sm:$0xff] %v9149
        %9182 = vst [vmem:[%s373 + $0x8] sm:$0xff] %v9150
        %9183 = vst [vmem:[%s373 + $0x10] sm:$0xff] %v9151
        %9184 = vst [vmem:[%s373 + $0x18] sm:$0xff] %v9152
        %9185 = vst [vmem:[%s373 + $0x20] sm:$0xff] %v9153
        %9186 = vst [vmem:[%s373 + $0x28] sm:$0xff] %v9154
        %9187 = vst [vmem:[%s373 + $0x30] sm:$0xff] %v9155
        %9188 = vst [vmem:[%s373 + $0x38] sm:$0xff] %v9156
        %9189 = vst [vmem:[%s373 + $0x40] sm:$0xff] %v9157
        %9190 = vst [vmem:[%s373 + $0x48] sm:$0xff] %v9158
        %9191 = vst [vmem:[%s373 + $0x50] sm:$0xff] %v9159
        %9192 = vst [vmem:[%s373 + $0x58] sm:$0xff] %v9160
        %9193 = vst [vmem:[%s373 + $0x60] sm:$0xff] %v9161
        %9194 = vst [vmem:[%s373 + $0x68] sm:$0xff] %v9162
        %9195 = vst [vmem:[%s373 + $0x70] sm:$0xff] %v9163
        %9196 = vst [vmem:[%s373 + $0x78] sm:$0xff] %v9164
        %9197 = vst [vmem:[%s373 + $0x80] sm:$0xff] %v9165
        %9198 = vst [vmem:[%s373 + $0x88] sm:$0xff] %v9166
        %9199 = vst [vmem:[%s373 + $0x90] sm:$0xff] %v9167
        %9200 = vst [vmem:[%s373 + $0x98] sm:$0xff] %v9168
        %9201 = vst [vmem:[%s373 + $0xa0] sm:$0xff] %v9169
        %9202 = vst [vmem:[%s373 + $0xa8] sm:$0xff] %v9170
        %9203 = vst [vmem:[%s373 + $0xb0] sm:$0xff] %v9171
        %9204 = vst [vmem:[%s373 + $0xb8] sm:$0xff] %v9172
        %9205 = vst [vmem:[%s373 + $0xc0] sm:$0xff] %v9173
        %9206 = vst [vmem:[%s373 + $0xc8] sm:$0xff] %v9174
        %9207 = vst [vmem:[%s373 + $0xd0] sm:$0xff] %v9175
        %9208 = vst [vmem:[%s373 + $0xd8] sm:$0xff] %v9176
        %9209 = vst [vmem:[%s373 + $0xe0] sm:$0xff] %v9177
        %9210 = vst [vmem:[%s373 + $0xe8] sm:$0xff] %v9178
        %9211 = vst [vmem:[%s373 + $0xf0] sm:$0xff] %v9179
        %9212 = vst [vmem:[%s373 + $0xf8] sm:$0xff] %v9180
        %v9213 = vpack.c.bf16 %v9150, %v9149
        %v9214 = vpack.c.bf16 %v9152, %v9151
        %v9215 = vpack.c.bf16 %v9154, %v9153
        %v9216 = vpack.c.bf16 %v9156, %v9155
        %v9217 = vpack.c.bf16 %v9158, %v9157
        %v9218 = vpack.c.bf16 %v9160, %v9159
        %v9219 = vpack.c.bf16 %v9162, %v9161
        %v9220 = vpack.c.bf16 %v9164, %v9163
        %v9221 = vpack.c.bf16 %v9166, %v9165
        %v9222 = vpack.c.bf16 %v9168, %v9167
        %v9223 = vpack.c.bf16 %v9170, %v9169
        %v9224 = vpack.c.bf16 %v9172, %v9171
        %v9225 = vpack.c.bf16 %v9174, %v9173
        %v9226 = vpack.c.bf16 %v9176, %v9175
        %v9227 = vpack.c.bf16 %v9178, %v9177
        %v9228 = vpack.c.bf16 %v9180, %v9179
        %v9229 = vld [vmem:[%s7] sm:$0xf]
        %v9230 = vld [vmem:[%s7 + $0x4] sm:$0xf]
        %v9231 = vld [vmem:[%s7 + $0x8] sm:$0xf]
        %v9232 = vld [vmem:[%s7 + $0xc] sm:$0xf]
        %v9233 = vld [vmem:[%s7 + $0x10] sm:$0xf]
        %v9234 = vld [vmem:[%s7 + $0x14] sm:$0xf]
        %v9235 = vld [vmem:[%s7 + $0x18] sm:$0xf]
        %v9236 = vld [vmem:[%s7 + $0x1c] sm:$0xf]
        %v9237 = vld [vmem:[%s7 + $0x20] sm:$0xf]
        %v9238 = vld [vmem:[%s7 + $0x24] sm:$0xf]
        %v9239 = vld [vmem:[%s7 + $0x28] sm:$0xf]
        %v9240 = vld [vmem:[%s7 + $0x2c] sm:$0xf]
        %v9241 = vld [vmem:[%s7 + $0x30] sm:$0xf]
        %v9242 = vld [vmem:[%s7 + $0x34] sm:$0xf]
        %v9243 = vld [vmem:[%s7 + $0x38] sm:$0xf]
        %v9244 = vld [vmem:[%s7 + $0x3c] sm:$0xf]
        %v9245 = vld [vmem:[%s8 + $0x7] sm:$0x1]
        %v9246 = vlaneseq
        %v9247 = vshrl.u32 %v9246, 7
        %v9248 = vsub.s32 0, %v9247
        %v9249 = vrot.slane %v9245, %v9248
        %v9266 = vunpack.c.l.b16 %v9229
        %v9267 = vunpack.c.l.b16 %v9230
        %v9268 = vunpack.c.l.b16 %v9231
        %v9269 = vunpack.c.l.b16 %v9232
        %v9270 = vunpack.c.l.b16 %v9233
        %v9271 = vunpack.c.l.b16 %v9234
        %v9272 = vunpack.c.l.b16 %v9235
        %v9273 = vunpack.c.l.b16 %v9236
        %v9274 = vunpack.c.l.b16 %v9237
        %v9275 = vunpack.c.l.b16 %v9238
        %v9276 = vunpack.c.l.b16 %v9239
        %v9277 = vunpack.c.l.b16 %v9240
        %v9278 = vunpack.c.l.b16 %v9241
        %v9279 = vunpack.c.l.b16 %v9242
        %v9280 = vunpack.c.l.b16 %v9243
        %v9281 = vunpack.c.l.b16 %v9244
        %v9282 = vpack.c.b16 %v9267, %v9266
        %v9283 = vpack.c.b16 %v9269, %v9268
        %v9284 = vpack.c.b16 %v9271, %v9270
        %v9285 = vpack.c.b16 %v9273, %v9272
        %v9286 = vpack.c.b16 %v9275, %v9274
        %v9287 = vpack.c.b16 %v9277, %v9276
        %v9288 = vpack.c.b16 %v9279, %v9278
        %v9289 = vpack.c.b16 %v9281, %v9280
        %9298 = vmatprep.subr.bf16.mxu0 0
        %9299 = vmatpush1.bf16.msra.mxu0 %v9282
        %9300 = vmatprep.subr.bf16.mxu0 0
        %9301 = vmatpush1.bf16.msra.mxu0 %v9283
        %9302 = vmatprep.subr.bf16.mxu0 0
        %9303 = vmatpush1.bf16.msra.mxu0 %v9284
        %9304 = vmatprep.subr.bf16.mxu0 0
        %9305 = vmatpush1.bf16.msra.mxu0 %v9285
        %9306 = vmatprep.subr.bf16.mxu0 0
        %9307 = vmatpush1.bf16.msra.mxu0 %v9286
        %9308 = vmatprep.subr.bf16.mxu0 0
        %9309 = vmatpush1.bf16.msra.mxu0 %v9287
        %9310 = vmatprep.subr.bf16.mxu0 0
        %9311 = vmatpush1.bf16.msra.mxu0 %v9288
        %9312 = vmatprep.subr.bf16.mxu0 0
        %9313 = vmatpush1.bf16.msra.mxu0 %v9289
        %9314 = vmatprep.subr.bf16.mxu0 0
        %9315 = vmatpush1.bf16.msra.mxu0 0
        %9316 = vmatprep.subr.bf16.mxu0 0
        %9317 = vmatpush1.bf16.msra.mxu0 0
        %9318 = vmatprep.subr.bf16.mxu0 0
        %9319 = vmatpush1.bf16.msra.mxu0 0
        %9320 = vmatprep.subr.bf16.mxu0 0
        %9321 = vmatpush1.bf16.msra.mxu0 0
        %9322 = vmatprep.subr.bf16.mxu0 0
        %9323 = vmatpush1.bf16.msra.mxu0 0
        %9324 = vmatprep.subr.bf16.mxu0 0
        %9325 = vmatpush1.bf16.msra.mxu0 0
        %9326 = vmatprep.subr.bf16.mxu0 0
        %9327 = vmatpush1.bf16.msra.mxu0 0
        %9328 = vmatprep.subr.bf16.mxu0 0
        %9329 = vmatpush1.bf16.msra.mxu0 0
        %9330 = vmatprep.mubr.bf16.mxu0 0
        %9331 = vmatmul.mubr.bf16.gmra.mrb[0].mxu0 %v9213
        %v9332 = vpop.f32.mrb[0].mxu0
        %v9333 = vadd.f32 %v9249, %v9332
        %v9334 = vpop.f32.mrb[0].mxu0
        %v9335 = vpop.f32.mrb[0].mxu0
        %v9336 = vadd.f32 %v9249, %v9335
        %v9337 = vpop.f32.mrb[0].mxu0
        %9338 = vmatprep.mubr.bf16.mxu0 0
        %9339 = vmatmul.mubr.bf16.gmra.mrb[0].mxu0 %v9214
        %v9340 = vpop.f32.mrb[0].mxu0
        %v9341 = vadd.f32 %v9249, %v9340
        %v9342 = vpop.f32.mrb[0].mxu0
        %v9343 = vpop.f32.mrb[0].mxu0
        %v9344 = vadd.f32 %v9249, %v9343
        %v9345 = vpop.f32.mrb[0].mxu0
        %9346 = vmatprep.mubr.bf16.mxu0 0
        %9347 = vmatmul.mubr.bf16.gmra.mrb[0].mxu0 %v9215
        %v9348 = vpop.f32.mrb[0].mxu0
        %v9349 = vadd.f32 %v9249, %v9348
        %v9350 = vpop.f32.mrb[0].mxu0
        %v9351 = vpop.f32.mrb[0].mxu0
        %v9352 = vadd.f32 %v9249, %v9351
        %v9353 = vpop.f32.mrb[0].mxu0
        %9354 = vmatprep.mubr.bf16.mxu0 0
        %9355 = vmatmul.mubr.bf16.gmra.mrb[0].mxu0 %v9216
        %v9356 = vpop.f32.mrb[0].mxu0
        %v9357 = vadd.f32 %v9249, %v9356
        %v9358 = vpop.f32.mrb[0].mxu0
        %v9359 = vpop.f32.mrb[0].mxu0
        %v9360 = vadd.f32 %v9249, %v9359
        %v9361 = vpop.f32.mrb[0].mxu0
        %9362 = vmatprep.mubr.bf16.mxu0 0
        %9363 = vmatmul.mubr.bf16.gmra.mrb[0].mxu0 %v9217
        %v9364 = vpop.f32.mrb[0].mxu0
        %v9365 = vadd.f32 %v9249, %v9364
        %v9366 = vpop.f32.mrb[0].mxu0
        %v9367 = vpop.f32.mrb[0].mxu0
        %v9368 = vadd.f32 %v9249, %v9367
        %v9369 = vpop.f32.mrb[0].mxu0
        %9370 = vmatprep.mubr.bf16.mxu0 0
        %9371 = vmatmul.mubr.bf16.gmra.mrb[0].mxu0 %v9218
        %v9372 = vpop.f32.mrb[0].mxu0
        %v9373 = vadd.f32 %v9249, %v9372
        %v9374 = vpop.f32.mrb[0].mxu0
        %v9375 = vpop.f32.mrb[0].mxu0
        %v9376 = vadd.f32 %v9249, %v9375
        %v9377 = vpop.f32.mrb[0].mxu0
        %9378 = vmatprep.mubr.bf16.mxu0 0
        %9379 = vmatmul.mubr.bf16.gmra.mrb[0].mxu0 %v9219
        %v9380 = vpop.f32.mrb[0].mxu0
        %v9381 = vadd.f32 %v9249, %v9380
        %v9382 = vpop.f32.mrb[0].mxu0
        %v9383 = vpop.f32.mrb[0].mxu0
        %v9384 = vadd.f32 %v9249, %v9383
        %v9385 = vpop.f32.mrb[0].mxu0
        %9386 = vmatprep.mubr.bf16.mxu0 0
        %9387 = vmatmul.mubr.bf16.gmra.mrb[0].mxu0 %v9220
        %v9388 = vpop.f32.mrb[0].mxu0
        %v9389 = vadd.f32 %v9249, %v9388
        %v9390 = vpop.f32.mrb[0].mxu0
        %v9391 = vpop.f32.mrb[0].mxu0
        %v9392 = vadd.f32 %v9249, %v9391
        %v9393 = vpop.f32.mrb[0].mxu0
        %9394 = vmatprep.mubr.bf16.mxu0 0
        %9395 = vmatmul.mubr.bf16.gmra.mrb[0].mxu0 %v9221
        %v9396 = vpop.f32.mrb[0].mxu0
        %v9397 = vadd.f32 %v9249, %v9396
        %v9398 = vpop.f32.mrb[0].mxu0
        %v9399 = vpop.f32.mrb[0].mxu0
        %v9400 = vadd.f32 %v9249, %v9399
        %v9401 = vpop.f32.mrb[0].mxu0
        %9402 = vmatprep.mubr.bf16.mxu0 0
        %9403 = vmatmul.mubr.bf16.gmra.mrb[0].mxu0 %v9222
        %v9404 = vpop.f32.mrb[0].mxu0
        %v9405 = vadd.f32 %v9249, %v9404
        %v9406 = vpop.f32.mrb[0].mxu0
        %v9407 = vpop.f32.mrb[0].mxu0
        %v9408 = vadd.f32 %v9249, %v9407
        %v9409 = vpop.f32.mrb[0].mxu0
        %9410 = vmatprep.mubr.bf16.mxu0 0
        %9411 = vmatmul.mubr.bf16.gmra.mrb[0].mxu0 %v9223
        %v9412 = vpop.f32.mrb[0].mxu0
        %v9413 = vadd.f32 %v9249, %v9412
        %v9414 = vpop.f32.mrb[0].mxu0
        %v9415 = vpop.f32.mrb[0].mxu0
        %v9416 = vadd.f32 %v9249, %v9415
        %v9417 = vpop.f32.mrb[0].mxu0
        %9418 = vmatprep.mubr.bf16.mxu0 0
        %9419 = vmatmul.mubr.bf16.gmra.mrb[0].mxu0 %v9224
        %v9420 = vpop.f32.mrb[0].mxu0
        %v9421 = vadd.f32 %v9249, %v9420
        %v9422 = vpop.f32.mrb[0].mxu0
        %v9423 = vpop.f32.mrb[0].mxu0
        %v9424 = vadd.f32 %v9249, %v9423
        %v9425 = vpop.f32.mrb[0].mxu0
        %9426 = vmatprep.mubr.bf16.mxu0 0
        %9427 = vmatmul.mubr.bf16.gmra.mrb[0].mxu0 %v9225
        %v9428 = vpop.f32.mrb[0].mxu0
        %v9429 = vadd.f32 %v9249, %v9428
        %v9430 = vpop.f32.mrb[0].mxu0
        %v9431 = vpop.f32.mrb[0].mxu0
        %v9432 = vadd.f32 %v9249, %v9431
        %v9433 = vpop.f32.mrb[0].mxu0
        %9434 = vmatprep.mubr.bf16.mxu0 0
        %9435 = vmatmul.mubr.bf16.gmra.mrb[0].mxu0 %v9226
        %v9436 = vpop.f32.mrb[0].mxu0
        %v9437 = vadd.f32 %v9249, %v9436
        %v9438 = vpop.f32.mrb[0].mxu0
        %v9439 = vpop.f32.mrb[0].mxu0
        %v9440 = vadd.f32 %v9249, %v9439
        %v9441 = vpop.f32.mrb[0].mxu0
        %9442 = vmatprep.mubr.bf16.mxu0 0
        %9443 = vmatmul.mubr.bf16.gmra.mrb[0].mxu0 %v9227
        %v9444 = vpop.f32.mrb[0].mxu0
        %v9445 = vadd.f32 %v9249, %v9444
        %v9446 = vpop.f32.mrb[0].mxu0
        %v9447 = vpop.f32.mrb[0].mxu0
        %v9448 = vadd.f32 %v9249, %v9447
        %v9449 = vpop.f32.mrb[0].mxu0
        %9450 = vmatprep.mubr.bf16.mxu0 0
        %9451 = vmatmul.mubr.bf16.gmra.mrb[0].mxu0 %v9228
        %v9452 = vpop.f32.mrb[0].mxu0
        %v9453 = vadd.f32 %v9249, %v9452
        %v9454 = vpop.f32.mrb[0].mxu0
        %v9455 = vpop.f32.mrb[0].mxu0
        %v9456 = vadd.f32 %v9249, %v9455
        %v9457 = vpop.f32.mrb[0].mxu0
        %9458 = vdwg.mxu0
        %9459 = vst [vmem:[%s387] sm:$0xff] %v9333
        %9460 = vst [vmem:[%s387 + $0x8] sm:$0xff] %v9336
        %9461 = vst [vmem:[%s387 + $0x10] sm:$0xff] %v9341
        %9462 = vst [vmem:[%s387 + $0x18] sm:$0xff] %v9344
        %9463 = vst [vmem:[%s387 + $0x20] sm:$0xff] %v9349
        %9464 = vst [vmem:[%s387 + $0x28] sm:$0xff] %v9352
        %9465 = vst [vmem:[%s387 + $0x30] sm:$0xff] %v9357
        %9466 = vst [vmem:[%s387 + $0x38] sm:$0xff] %v9360
        %9467 = vst [vmem:[%s387 + $0x40] sm:$0xff] %v9365
        %9468 = vst [vmem:[%s387 + $0x48] sm:$0xff] %v9368
        %9469 = vst [vmem:[%s387 + $0x50] sm:$0xff] %v9373
        %9470 = vst [vmem:[%s387 + $0x58] sm:$0xff] %v9376
        %9471 = vst [vmem:[%s387 + $0x60] sm:$0xff] %v9381
        %9472 = vst [vmem:[%s387 + $0x68] sm:$0xff] %v9384
        %9473 = vst [vmem:[%s387 + $0x70] sm:$0xff] %v9389
        %9474 = vst [vmem:[%s387 + $0x78] sm:$0xff] %v9392
        %9475 = vst [vmem:[%s387 + $0x80] sm:$0xff] %v9397
        %9476 = vst [vmem:[%s387 + $0x88] sm:$0xff] %v9400
        %9477 = vst [vmem:[%s387 + $0x90] sm:$0xff] %v9405
        %9478 = vst [vmem:[%s387 + $0x98] sm:$0xff] %v9408
        %9479 = vst [vmem:[%s387 + $0xa0] sm:$0xff] %v9413
        %9480 = vst [vmem:[%s387 + $0xa8] sm:$0xff] %v9416
        %9481 = vst [vmem:[%s387 + $0xb0] sm:$0xff] %v9421
        %9482 = vst [vmem:[%s387 + $0xb8] sm:$0xff] %v9424
        %9483 = vst [vmem:[%s387 + $0xc0] sm:$0xff] %v9429
        %9484 = vst [vmem:[%s387 + $0xc8] sm:$0xff] %v9432
        %9485 = vst [vmem:[%s387 + $0xd0] sm:$0xff] %v9437
        %9486 = vst [vmem:[%s387 + $0xd8] sm:$0xff] %v9440
        %9487 = vst [vmem:[%s387 + $0xe0] sm:$0xff] %v9445
        %9488 = vst [vmem:[%s387 + $0xe8] sm:$0xff] %v9448
        %9489 = vst [vmem:[%s387 + $0xf0] sm:$0xff] %v9453
        %9490 = vst [vmem:[%s387 + $0xf8] sm:$0xff] %v9456
        %p9491 = scmp.lt.s32.totalorder %s25, 1
        %s9492 = scalar_select %p9491, %s25, 1
        %s9493 = smul.addr %s9492, 32
        %s9494 = smul.addr %s9493, 8
        %s9495 = scalar_lea.vmem %s9, %s9494
        %s9496 = sand.u32 %s258, 1
        %s9497 = scalar_lea.sflag [#allocation5], %s9496
        %s9498 = sand.u32 %s258, 1
        %s9499 = smul.addr %s9498, 256
        %s9500 = scalar_lea.vmem [#allocation4], %s9499
        // Predicated region
        $region57: #{deeplab_head_forward.1} parent=55 // pred_check
          %p9501 = pneg %p242
        $region58: #{deeplab_head_forward.1} parent=55 // pred_check_branch
          %9503 = sbr.rel (%p9501) target = $region60
        $region59: #{deeplab_head_forward.1} parent=55 // pred_region
          _
        $region60: #{deeplab_head_forward.1} parent=55 // pred_fallthru
          _
        // Predicated region
        $region61: #{deeplab_head_forward.1} parent=55 // pred_check
          %p9504 = pneg %p268
        $region62: #{deeplab_head_forward.1} parent=55 // pred_check_branch
          %9506 = sbr.rel (%p9504) target = $region64
        $region63: #{deeplab_head_forward.1} parent=55 // pred_region
          %s9508 = ssub.s32 4096, 4096
          %9509 = vsyncadd %s9497, %s9508
          %s9510 = smul.addr %s25, 32
          %s9511 = smul.addr %s9510, 128
          %s9512 = scalar_lea.hbm %s10, %s9511
          %s9513 = sshll.u32 %s9500, 4
          %s9514 = int_to_ptr.vmem [resolvable:$true] %s9513
          %9519 = dma.vmem_to_hbm [thread:$0]  %s9514, 4096, %s9512, %s9497, 128, 128, 8
        $region64: #{deeplab_head_forward.1} parent=55 // pred_fallthru
          _
      $region56: #{deeplab_head_forward.1} parent=5 // pred_fallthru
        _
      %p9520 = scmp.le.s32.totalorder 2, %s20
      // Predicated region
      $region65: #{deeplab_head_forward.1} parent=5 // pred_check
        %p9521 = pneg %p9520
      $region66: #{deeplab_head_forward.1} parent=5 // pred_check_branch
        %9523 = sbr.rel (%p9521) target = $region68
      $region67: #{deeplab_head_forward.1} parent=5 // pred_region
        %s9524 = ssub.s32 %s20, 2
        // Predicated region
        $region69: #{deeplab_head_forward.1} parent=67 // pred_check
          %p9525 = pneg %p248
        $region70: #{deeplab_head_forward.1} parent=67 // pred_check_branch
          %9527 = sbr.rel (%p9525) target = $region72
        $region71: #{deeplab_head_forward.1} parent=67 // pred_region
          %p9528 = scmp.lt.s32.totalorder %s26, 1
          %s9529 = scalar_select %p9528, %s26, 1
          %s9530 = smul.addr %s9529, 32
          %s9531 = smul.addr %s9530, 8
          %s9532 = scalar_lea.vmem %s9, %s9531
        $region72: #{deeplab_head_forward.1} parent=67 // pred_fallthru
          _
        // Predicated region
        $region73: #{deeplab_head_forward.1} parent=67 // pred_check
          %p9533 = pneg %p274
        $region74: #{deeplab_head_forward.1} parent=67 // pred_check_branch
          %9535 = sbr.rel (%p9533) target = $region76
        $region75: #{deeplab_head_forward.1} parent=67 // pred_region
          %s9536 = sand.u32 %s259, 1
          %s9537 = scalar_lea.sflag [#allocation5], %s9536
          %s9538 = sand.u32 %s259, 1
          %s9539 = smul.addr %s9538, 256
          %s9540 = scalar_lea.vmem [#allocation4], %s9539
          %9541 = dma.done %s9537, 4096
        $region76: #{deeplab_head_forward.1} parent=67 // pred_fallthru
          _
      $region68: #{deeplab_head_forward.1} parent=5 // pred_fallthru
        _
    $region6: #{deeplab_head_forward.1} parent=1 // loop_footer
      %s24 = sadd.s32 1, %s20
    $region7: #{deeplab_head_forward.1} parent=1 // loop_footer_branch
      %19 = sbr.rel target = $region3
    $region8: #{deeplab_head_forward.1} parent=1 // loop_exit
      _
    %9542 = vsyncpa [#allocation5], 1
    %s9543 = scalar_lea.sflag [#allocation5], 1
    %9544 = vsyncpa %s9543, 1

</llo_original>
